<compile_context>
chip_gen: v6e
topology: v6e:2x2x1
jax: 0.10.0
libtpu: 0.0.40
codegen_flags: <defaults>
</compile_context>

<pallas_src>
import functools

import jax
import jax.numpy as jnp
from jax.experimental import pallas as pl
from jax.experimental.pallas import tpu as pltpu

EPS = 1e-5                  # nn.InstanceNorm3d default eps
NHIDDEN = 128               # SPADE hidden width
_SMALL_C_MAX = 16           # threshold for the M-packed (result-sliced) tap path


def _round_up(a, b):
    return (a + b - 1) // b * b


# generation-aware VMEM limit (guarded; falls back to a conservative default)
try:
    _VMEM_LIMIT = min(96 * 1024 * 1024,
                      int(pltpu.get_tpu_info().vmem_capacity_bytes) * 3 // 4)
except Exception:  # pragma: no cover - e.g. CPU interpret mode
    _VMEM_LIMIT = 48 * 1024 * 1024
_TD_BUDGET = max(16 * 1024 * 1024, _VMEM_LIMIT // 2)


# --------------------------- instance-norm statistics -------------------------

def _stats_kernel(x_ref, mu_ref, is_ref, sum_ref, sq_ref, *, inv_n):
    """Single-pass per-row (per sample, per channel) mean / inv-std."""
    j = pl.program_id(1)

    @pl.when(j == 0)
    def _():
        sum_ref[...] = jnp.zeros_like(sum_ref)
        sq_ref[...] = jnp.zeros_like(sq_ref)

    x = x_ref[...]
    sum_ref[...] += jnp.sum(x, axis=-1, keepdims=True)
    sq_ref[...] += jnp.sum(x * x, axis=-1, keepdims=True)

    @pl.when(j == pl.num_programs(1) - 1)
    def _():
        mean = sum_ref[...] * inv_n
        # biased variance (InstanceNorm); clamp >= 0 against catastrophic cancellation
        var = jnp.maximum(sq_ref[...] * inv_n - mean * mean, 0.0)
        mu_ref[...] = mean
        is_ref[...] = jax.lax.rsqrt(var + EPS)


def instance_norm_stats(x, n, c):
    """x: (N, C, D, H, W) f32 -> (mean, inv_std), each (N, C, 1) f32."""
    nc = n * c
    s = x.size // nc
    rows_blk = min(_round_up(nc, 8), 128)
    s_blk = min(_round_up(s, 128), 4096)
    rows_p = _round_up(nc, rows_blk)
    s_p = _round_up(s, s_blk)
    xr = x.reshape(nc, s)
    if (rows_p, s_p) != (nc, s):
        xr = jnp.pad(xr, ((0, rows_p - nc), (0, s_p - s)))   # zero pad: sums unaffected
    mu, istd = pl.pallas_call(
        functools.partial(_stats_kernel, inv_n=1.0 / float(s)),
        out_shape=(jax.ShapeDtypeStruct((rows_p, 1), jnp.float32),
                   jax.ShapeDtypeStruct((rows_p, 1), jnp.float32)),
        grid=(rows_p // rows_blk, s_p // s_blk),
        in_specs=[pl.BlockSpec((rows_blk, s_blk), lambda i, j: (i, j))],
        out_specs=(pl.BlockSpec((rows_blk, 1), lambda i, j: (i, 0)),
                   pl.BlockSpec((rows_blk, 1), lambda i, j: (i, 0))),
        scratch_shapes=[pltpu.VMEM((rows_blk, 1), jnp.float32),
                        pltpu.VMEM((rows_blk, 1), jnp.float32)],
        compiler_params=pltpu.CompilerParams(
            dimension_semantics=("parallel", "arbitrary")),
    )(xr)
    return mu[:nc].reshape(n, c, 1), istd[:nc].reshape(n, c, 1)


# ---------------- mlp_shared: conv3d + ReLU into the padded layout ------------

def _conv1_kernel(xc_ref, w_ref, b_ref, mask_ref, o_ref, *, WP, H):
    """One padded-depth slab of actv_pad.

    xc_ref  : (27*Cin, So) bf16   im2col slab of x at output depth dd-1
    w_ref   : (128, 27*Cin) bf16  resident
    b_ref   : (128, 1)      f32
    mask_ref: (1, So)       f32   zeroes the junk output columns (w >= W)
    o_ref   : (128, Sp)     bf16  padded slab at depth index dd
    """
    So = H * WP
    Sp = (H + 3) * WP
    dd = pl.program_id(1)
    interior = jnp.logical_and(dd > 0, dd < pl.num_programs(1) - 1)

    @pl.when(jnp.logical_not(interior))
    def _():                                   # depth halo slab -> all zeros
        o_ref[...] = jnp.zeros_like(o_ref)

    @pl.when(interior)
    def _():
        # single K = 27*Cin MXU matmul per slab (K-packed taps)
        y = jnp.dot(w_ref[...], xc_ref[...],
                    preferred_element_type=jnp.float32)          # (128, So)
        y = jnp.maximum(y + b_ref[...], 0.0) * mask_ref[...]     # bias + ReLU + mask
        # write straight into the zero-padded layout the gamma/beta conv reads
        o_ref[:, 0:WP + 1] = jnp.zeros((NHIDDEN, WP + 1), o_ref.dtype)
        o_ref[:, WP + 1:WP + 1 + So] = y.astype(o_ref.dtype)
        o_ref[:, WP + 1 + So:] = jnp.zeros((NHIDDEN, Sp - WP - 1 - So), o_ref.dtype)


def conv3d_relu_padded(xcol, w1, b1, col_mask, *, D, H, WP):
    """xcol: (N, D, 27*Cin, So) bf16 -> padded actv (N, D+2, 128, Sp) bf16."""
    N = xcol.shape[0]
    KC = xcol.shape[2]
    So = H * WP
    Sp = (H + 3) * WP
    return pl.pallas_call(
        functools.partial(_conv1_kernel, WP=WP, H=H),
        out_shape=jax.ShapeDtypeStruct((N, D + 2, NHIDDEN, Sp), jnp.bfloat16),
        grid=(N, D + 2),
        in_specs=[
            pl.BlockSpec((None, None, KC, So),
                         lambda n, dd: (n, jnp.maximum(jnp.minimum(dd - 1, D - 1), 0),
                                        0, 0)),
            pl.BlockSpec((NHIDDEN, KC), lambda n, dd: (0, 0)),
            pl.BlockSpec((NHIDDEN, 1), lambda n, dd: (0, 0)),
            pl.BlockSpec((1, So), lambda n, dd: (0, 0)),
        ],
        out_specs=pl.BlockSpec((None, None, NHIDDEN, Sp), lambda n, dd: (n, dd, 0, 0)),
        compiler_params=pltpu.CompilerParams(
            dimension_semantics=("parallel", "parallel"),
            vmem_limit_bytes=_VMEM_LIMIT),
    )(xcol, w1, b1, col_mask)


# -------- fused mlp_gamma / mlp_beta conv + instance-norm + SPADE affine -------

def _affine_kernel(*args, TD, WP, H, C, small_c):
    """Per grid step: TD output depths.

    args = a_0..a_{TD+1} (128, Sp) bf16 padded actv slabs,
           w_ref (3, 9*2C, 128) bf16, b_ref (2C, 1) f32,
           x_ref (TD, C, So) bf16, mu_ref (C, 1) f32, is_ref (C, 1) f32,
           o_ref (TD, C, So) f32.
    """
    So = H * WP
    slabs = args[:TD + 2]
    w_ref, b_ref, x_ref, mu_ref, is_ref, o_ref = args[TD + 2:]
    bias = b_ref[...]                    # (2C, 1)
    mu = mu_ref[...]                     # (C, 1)
    inv = is_ref[...]                    # (C, 1)

    for od in range(TD):                 # static unrolled loops; acc stays in registers
        acc = None
        for dz in range(3):
            a = slabs[od + dz][...]                                  # (128, Sp) bf16
            if small_c:
                # M-packed matmul over the whole padded slab: the big bf16 operand is
                # never re-laid-out; only the small (2C, So) result slices are shifted.
                y = jnp.dot(w_ref[dz], a,
                            preferred_element_type=jnp.float32)      # (9*2C, Sp)
                for t in range(9):
                    r0 = (t // 3) * WP + (t % 3)
                    contrib = y[t * 2 * C:(t + 1) * 2 * C, r0:r0 + So]
                    acc = contrib if acc is None else acc + contrib
            else:
                for t in range(9):
                    r0 = (t // 3) * WP + (t % 3)
                    w_tap = w_ref[dz, t * 2 * C:(t + 1) * 2 * C, :]  # (2C, 128)
                    contrib = jnp.dot(w_tap, a[:, r0:r0 + So],
                                      preferred_element_type=jnp.float32)
                    acc = contrib if acc is None else acc + contrib
        gb = acc + bias                                              # (2C, So)
        gamma = gb[:C, :]
        beta = gb[C:, :]
        xn = (x_ref[od].astype(jnp.float32) - mu) * inv              # (C, So)
        o_ref[od] = xn * (1.0 + gamma) + beta                        # lane-dense store


def _pick_depth_block(D, Sp, So, C):
    """Largest divisor of D (<= 8) whose per-step working set fits the VMEM budget."""
    small_c = C <= _SMALL_C_MAX
    best = 1
    for td in range(1, min(D, 8) + 1):
        if D % td:
            continue
        est = (2 * (td + 2) * NHIDDEN * Sp * 2      # double-buffered bf16 slabs
               + 2 * td * C * So * 2                # x blocks (bf16)
               + 2 * td * C * So * 4                # out blocks (f32)
               + 3 * 18 * C * NHIDDEN * 2           # packed gamma|beta weights
               + 4 * C * So * 4                     # live accumulator / result
               + (18 * C * Sp * 4 if small_c else 0))
        if est <= _TD_BUDGET:
            best = td
    return best


def spade_affine(actv_pad, w2, b2, x_cs, mu, istd, *, D, H, WP, C, TD):
    N = actv_pad.shape[0]
    Sp = actv_pad.shape[-1]
    So = H * WP
    small_c = C <= _SMALL_C_MAX
    ndb = D // TD

    # TD+2 overlapping depth-slab windows per step -> (TD+2)/TD fetch amplification
    slab_specs = [
        pl.BlockSpec((None, None, NHIDDEN, Sp),
                     lambda n, db, j=j: (n, db * TD + j, 0, 0))
        for j in range(TD + 2)
    ]
    return pl.pallas_call(
        functools.partial(_affine_kernel, TD=TD, WP=WP, H=H, C=C, small_c=small_c),
        out_shape=jax.ShapeDtypeStruct((N, D, C, So), jnp.float32),
        grid=(N, ndb),
        in_specs=slab_specs + [
            pl.BlockSpec((3, 18 * C, NHIDDEN), lambda n, db: (0, 0, 0)),
            pl.BlockSpec((2 * C, 1), lambda n, db: (0, 0)),
            pl.BlockSpec((None, TD, C, So), lambda n, db: (n, db, 0, 0)),
            pl.BlockSpec((None, C, 1), lambda n, db: (n, 0, 0)),
            pl.BlockSpec((None, C, 1), lambda n, db: (n, 0, 0)),
        ],
        out_specs=pl.BlockSpec((None, TD, C, So), lambda n, db: (n, db, 0, 0)),
        compiler_params=pltpu.CompilerParams(
            dimension_semantics=("parallel", "parallel"),
            vmem_limit_bytes=_VMEM_LIMIT),
    )(*([actv_pad] * (TD + 2)), w2, b2, x_cs, mu, istd)


# ------------------------------ JAX glue --------------------------------------

def _pack_w_shared(w):      # (128, Cin, 3, 3, 3) -> (128, 27*Cin), tap = dz*9+dy*3+dx
    nh, cin = w.shape[0], w.shape[1]
    return jnp.transpose(w, (0, 2, 3, 4, 1)).reshape(nh, 27 * cin)


def _pack_w_affine(wg, wb):  # each (C, 128, 3, 3, 3) -> (3, 9*2C, 128), [gamma | beta]
    c, nh = wg.shape[0], wg.shape[1]
    g = jnp.transpose(wg, (2, 3, 4, 0, 1)).reshape(27, c, nh)
    b = jnp.transpose(wb, (2, 3, 4, 0, 1)).reshape(27, c, nh)
    return jnp.concatenate([g, b], axis=1).reshape(3, 9 * 2 * c, nh)


def init_spade_params(key, norm_nc, label_nc, k=3):
    """Deterministic synthetic init mirroring the PyTorch parameter shapes."""
    assert k == 3, "only kernel_size=3 is implemented"
    ks = jax.random.split(key, 6)
    w1 = jax.random.normal(ks[0], (NHIDDEN, label_nc, k, k, k), jnp.float32) * 0.05
    b1 = jax.random.normal(ks[1], (NHIDDEN,), jnp.float32) * 0.05
    wg = jax.random.normal(ks[2], (norm_nc, NHIDDEN, k, k, k), jnp.float32) * 0.05
    bg = jax.random.normal(ks[3], (norm_nc,), jnp.float32) * 0.05
    wb = jax.random.normal(ks[4], (norm_nc, NHIDDEN, k, k, k), jnp.float32) * 0.05
    bb = jax.random.normal(ks[5], (norm_nc,), jnp.float32) * 0.05
    return {
        # packed kernel operands (bf16 weights for the MXU, f32 biases)
        "w1": _pack_w_shared(w1).astype(jnp.bfloat16),
        "b1": b1.reshape(NHIDDEN, 1),
        "w2": _pack_w_affine(wg, wb).astype(jnp.bfloat16),
        "b2": jnp.concatenate([bg, bb]).reshape(2 * norm_nc, 1),
        # raw torch-layout copies, used only by the pure-JAX reference check
        "raw": {"w1": w1, "b1": b1, "wg": wg, "bg": bg, "wb": wb, "bb": bb},
    }


def spade_forward(x, params):
    """Single SPADE block; x in PyTorch NCDHW layout, returns NCDHW f32."""
    N, C, D, H, W = x.shape
    x = x.astype(jnp.float32)
    WP = W + 2                  # width incl. left/right halo (flattened-row trick)
    So = H * WP                 # rows of one output slab
    Sp = (H + 3) * WP           # rows of one zero-padded slab

    # instance-norm statistics; normalization is applied inside the affine kernel
    mu, istd = instance_norm_stats(x, N, C)                       # (N, C, 1) each

    # --- channel-major operand layouts built once in HBM ---------------------
    # im2col of the (tiny) label-channel input for mlp_shared: K = 27*Cin
    xp = jnp.pad(x, ((0, 0), (0, 0), (1, 1), (1, 1), (1, 1)))
    cols = [xp[:, :, dz:dz + D, dy:dy + H, dx:dx + W]
            for dz in range(3) for dy in range(3) for dx in range(3)]
    xcol = jnp.concatenate(cols, axis=1)                          # (N, 27C, D, H, W)
    xcol = jnp.transpose(xcol, (0, 2, 1, 3, 4))
    xcol = jnp.pad(xcol, ((0, 0), (0, 0), (0, 0), (0, 0), (0, WP - W)))
    xcol = xcol.reshape(N, D, 27 * C, So).astype(jnp.bfloat16)

    # x for the normalization path (channel-major, bf16 halves the HBM stream)
    x_cs = jnp.pad(x, ((0, 0), (0, 0), (0, 0), (0, 0), (0, WP - W)))
    x_cs = jnp.transpose(x_cs, (0, 2, 1, 3, 4)).reshape(N, D, C, So)
    x_cs = x_cs.astype(jnp.bfloat16)

    # mask zeroing junk output columns so the padded actv layout stays valid
    col_mask = (jnp.arange(So, dtype=jnp.int32) % WP < W)
    col_mask = col_mask.astype(jnp.float32).reshape(1, So)

    # mlp_shared: Conv3d + ReLU written straight into the padded, channel-major layout
    # (F.interpolate to the input's own size is an identity op and is omitted)
    actv_pad = conv3d_relu_padded(xcol, params["w1"], params["b1"], col_mask,
                                  D=D, H=H, WP=WP)                # (N, D+2, 128, Sp)

    # fused mlp_gamma/mlp_beta conv + in-kernel instance normalization + affine
    TD = _pick_depth_block(D, Sp, So, C)
    out = spade_affine(actv_pad, params["w2"], params["b2"], x_cs, mu, istd,
                       D=D, H=H, WP=WP, C=C, TD=TD)               # (N, D, C, So) f32

    out = out.reshape(N, D, C, H, WP)[..., :W]
    return jnp.transpose(out, (0, 2, 1, 3, 4))


class SpadeMultimodal:
    """Four independent SPADE blocks; `modality` selects one (static Python dispatch)."""

    def __init__(self, norm_nc, label_nc, kernel_size=3, seed=42):
        keys = jax.random.split(jax.random.PRNGKey(seed), 4)
        self.params = {
            "t1":    init_spade_params(keys[0], norm_nc, label_nc, kernel_size),
            "t1ce":  init_spade_params(keys[1], norm_nc, label_nc, kernel_size),
            "t2":    init_spade_params(keys[2], norm_nc, label_nc, kernel_size),
            "flair": init_spade_params(keys[3], norm_nc, label_nc, kernel_size),
        }

    def __call__(self, x, modality):
        if modality not in self.params:
            raise ValueError(f"{modality} is not a recognized modality in SPADE_Block")
        return spade_forward(x, self.params[modality])


# --------------------------- pure-JAX reference --------------------------------

def _ref_forward(x, raw):
    dn = ("NCDHW", "OIDHW", "NCDHW")
    mean = jnp.mean(x, axis=(2, 3, 4), keepdims=True)
    var = jnp.var(x, axis=(2, 3, 4), keepdims=True)
    normalized = (x - mean) * jax.lax.rsqrt(var + EPS)

    def conv(inp, w, b):
        y = jax.lax.conv_general_dilated(inp, w, (1, 1, 1), "SAME",
                                         dimension_numbers=dn)
        return y + b.reshape(1, -1, 1, 1, 1)

    actv = jnp.maximum(conv(x, raw["w1"], raw["b1"]), 0.0)
    gamma = conv(actv, raw["wg"], raw["bg"])
    beta = conv(actv, raw["wb"], raw["bb"])
    return normalized * (1.0 + gamma) + beta


# ------------------------------- main -----------------------------------------

if __name__ == "__main__":
    # small shapes: batch=2, norm_nc=label_nc=4 channels, 8x8x8 volume
    N, C, D, H, W = 2, 4, 8, 8, 8
    x = jax.random.normal(jax.random.PRNGKey(0), (N, C, D, H, W), jnp.float32)

    model = SpadeMultimodal(norm_nc=C, label_nc=C, kernel_size=3)
    fwd = jax.jit(functools.partial(model.__call__, modality="t1"))
    out = fwd(x)
    jax.block_until_ready(out)
    assert out.shape == (N, C, D, H, W)

    # sanity check vs. a pure-JAX f32 reference (kernel matmuls use bf16 operands,
    # so the tolerance is loose but still far below any structural/indexing error)
    ref = _ref_forward(x, model.params["t1"]["raw"])
    err = float(jnp.max(jnp.abs(out - ref)))
    assert err < 0.3, f"max abs error vs reference: {err}"
    print("KERNEL_OK")
</pallas_src>

<mosaic_0001>
module attributes {stable_mosaic.version = 11 : i64} {
  func.func @_conv1_kernel(%arg0: i32, %arg1: i32, %arg2: memref<1x1x108x80xbf16, #tpu.memory_space<vmem>>, %arg3: memref<128x108xbf16, #tpu.memory_space<vmem>>, %arg4: memref<128x1xf32, #tpu.memory_space<vmem>>, %arg5: memref<1x80xf32, #tpu.memory_space<vmem>>, %arg6: memref<1x1x128x110xbf16, #tpu.memory_space<vmem>>) attributes {dimension_semantics = [#tpu.dimension_semantics<parallel>, #tpu.dimension_semantics<parallel>], iteration_bounds = array<i64: 2, 10>, scalar_prefetch = 0 : i64, scratch_operands = 0 : i64, tpu.core_type = #tpu.core_type<tc>, window_params = [{transform_indices = @transform_0, window_bounds = array<i64: 1, 1, 108, 80>}, {pipeline_mode = #tpu.pipeline_mode<synchronous>, transform_indices = @transform_1, window_bounds = array<i64: 128, 108>}, {pipeline_mode = #tpu.pipeline_mode<synchronous>, transform_indices = @transform_2, window_bounds = array<i64: 128, 1>}, {pipeline_mode = #tpu.pipeline_mode<synchronous>, transform_indices = @transform_3, window_bounds = array<i64: 1, 80>}, {transform_indices = @transform_4, window_bounds = array<i64: 1, 1, 128, 110>}]} {
    %c0_i32 = arith.constant 0 : i32
    %0 = arith.cmpi sgt, %arg1, %c0_i32 : i32
    %c9_i32 = arith.constant 9 : i32
    %1 = arith.cmpi slt, %arg1, %c9_i32 : i32
    %2 = arith.andi %0, %1 : i1
    %true = arith.constant true
    %3 = arith.xori %2, %true : i1
    %4 = arith.extui %3 : i1 to i32
    %c0_i32_0 = arith.constant 0 : i32
    %5 = arith.cmpi ne, %4, %c0_i32_0 : i32
    scf.if %5 {
      %cst = arith.constant 0.000000e+00 : bf16
      %8 = vector.broadcast %cst : bf16 to vector<128x110xbf16>
      %c0 = arith.constant 0 : index
      %c0_2 = arith.constant 0 : index
      %c0_3 = arith.constant 0 : index
      %c0_4 = arith.constant 0 : index
      %9 = vector.load %arg6[%c0, %c0_2, %c0_3, %c0_4] : memref<1x1x128x110xbf16, #tpu.memory_space<vmem>>, vector<1x1x128x110xbf16>
      %10 = vector.shape_cast %9 : vector<1x1x128x110xbf16> to vector<128x110xbf16>
      %11 = vector.shape_cast %8 : vector<128x110xbf16> to vector<1x1x128x110xbf16>
      tpu.vector_store %arg6[%c0, %c0_2, %c0_3, %c0_4], %11 {strides = array<i32>} : memref<1x1x128x110xbf16, #tpu.memory_space<vmem>>, vector<1x1x128x110xbf16>,
    } else {
    }
    %6 = arith.extui %2 : i1 to i32
    %c0_i32_1 = arith.constant 0 : i32
    %7 = arith.cmpi ne, %6, %c0_i32_1 : i32
    scf.if %7 {
      %c0 = arith.constant 0 : index
      %c0_2 = arith.constant 0 : index
      %8 = vector.load %arg3[%c0, %c0_2] : memref<128x108xbf16, #tpu.memory_space<vmem>>, vector<128x108xbf16>
      %c0_3 = arith.constant 0 : index
      %c0_4 = arith.constant 0 : index
      %c0_5 = arith.constant 0 : index
      %c0_6 = arith.constant 0 : index
      %9 = vector.load %arg2[%c0_3, %c0_4, %c0_5, %c0_6] : memref<1x1x108x80xbf16, #tpu.memory_space<vmem>>, vector<1x1x108x80xbf16>
      %10 = vector.shape_cast %9 : vector<1x1x108x80xbf16> to vector<108x80xbf16>
      %cst = arith.constant dense<0.000000e+00> : vector<128x80xf32>
      %11 = tpu.matmul %8, %10, %cst {dimension_numbers = #tpu.dot_dimension_numbers<[1], [0], [0], [1], [0, 0, 1, 1], [], []>} : vector<128x108xbf16>, vector<108x80xbf16>, vector<128x80xf32> -> vector<128x80xf32>
      %c0_7 = arith.constant 0 : index
      %c0_8 = arith.constant 0 : index
      %12 = vector.load %arg4[%c0_7, %c0_8] : memref<128x1xf32, #tpu.memory_space<vmem>>, vector<128x1xf32>
      %13 = vector.broadcast %12 : vector<128x1xf32> to vector<128x80xf32>
      %14 = arith.addf %11, %13 : vector<128x80xf32>
      %cst_9 = arith.constant 0.000000e+00 : f32
      %15 = vector.broadcast %cst_9 : f32 to vector<128x80xf32>
      %16 = arith.maximumf %14, %15 : vector<128x80xf32>
      %c0_10 = arith.constant 0 : index
      %c0_11 = arith.constant 0 : index
      %17 = vector.load %arg5[%c0_10, %c0_11] : memref<1x80xf32, #tpu.memory_space<vmem>>, vector<1x80xf32>
      %18 = vector.broadcast %17 : vector<1x80xf32> to vector<128x80xf32>
      %19 = arith.mulf %16, %18 : vector<128x80xf32>
      %cst_12 = arith.constant 0.000000e+00 : bf16
      %20 = vector.broadcast %cst_12 : bf16 to vector<128x11xbf16>
      %c0_13 = arith.constant 0 : index
      %c0_14 = arith.constant 0 : index
      %c0_15 = arith.constant 0 : index
      %c0_16 = arith.constant 0 : index
      %21 = vector.load %arg6[%c0_13, %c0_14, %c0_15, %c0_16] : memref<1x1x128x110xbf16, #tpu.memory_space<vmem>>, vector<1x1x128x11xbf16>
      %22 = vector.shape_cast %21 : vector<1x1x128x11xbf16> to vector<128x11xbf16>
      %23 = vector.shape_cast %20 : vector<128x11xbf16> to vector<1x1x128x11xbf16>
      tpu.vector_store %arg6[%c0_13, %c0_14, %c0_15, %c0_16], %23 {strides = array<i32>} : memref<1x1x128x110xbf16, #tpu.memory_space<vmem>>, vector<1x1x128x11xbf16>,
      %24 = arith.truncf %19 : vector<128x80xf32> to vector<128x80xbf16>
      %c0_17 = arith.constant 0 : index
      %c0_18 = arith.constant 0 : index
      %c0_19 = arith.constant 0 : index
      %c11 = arith.constant 11 : index
      %25 = vector.load %arg6[%c0_17, %c0_18, %c0_19, %c11] : memref<1x1x128x110xbf16, #tpu.memory_space<vmem>>, vector<1x1x128x80xbf16>
      %26 = vector.shape_cast %25 : vector<1x1x128x80xbf16> to vector<128x80xbf16>
      %27 = vector.shape_cast %24 : vector<128x80xbf16> to vector<1x1x128x80xbf16>
      tpu.vector_store %arg6[%c0_17, %c0_18, %c0_19, %c11], %27 {strides = array<i32>} : memref<1x1x128x110xbf16, #tpu.memory_space<vmem>>, vector<1x1x128x80xbf16>,
      %cst_20 = arith.constant 0.000000e+00 : bf16
      %28 = vector.broadcast %cst_20 : bf16 to vector<128x19xbf16>
      %c0_21 = arith.constant 0 : index
      %c0_22 = arith.constant 0 : index
      %c0_23 = arith.constant 0 : index
      %c91 = arith.constant 91 : index
      %29 = vector.load %arg6[%c0_21, %c0_22, %c0_23, %c91] : memref<1x1x128x110xbf16, #tpu.memory_space<vmem>>, vector<1x1x128x19xbf16>
      %30 = vector.shape_cast %29 : vector<1x1x128x19xbf16> to vector<128x19xbf16>
      %31 = vector.shape_cast %28 : vector<128x19xbf16> to vector<1x1x128x19xbf16>
      tpu.vector_store %arg6[%c0_21, %c0_22, %c0_23, %c91], %31 {strides = array<i32>} : memref<1x1x128x110xbf16, #tpu.memory_space<vmem>>, vector<1x1x128x19xbf16>,
    } else {
    }
    return
  }
  func.func @transform_0(%arg0: i32, %arg1: i32) -> (i32, i32, i32, i32) {
    %c1_i32 = arith.constant 1 : i32
    %0 = arith.subi %arg1, %c1_i32 : i32
    %c7_i32 = arith.constant 7 : i32
    %1 = arith.minsi %0, %c7_i32 : i32
    %c0_i32 = arith.constant 0 : i32
    %2 = arith.maxsi %1, %c0_i32 : i32
    %c0_i32_0 = arith.constant 0 : i32
    %c0_i32_1 = arith.constant 0 : i32
    %c0_i32_2 = arith.constant 0 : i32
    return %arg0, %2, %c0_i32_0, %c0_i32_1 : i32, i32, i32, i32
  }
  func.func @transform_1(%arg0: i32, %arg1: i32) -> (i32, i32) {
    %c0_i32 = arith.constant 0 : i32
    %c0_i32_0 = arith.constant 0 : i32
    %c0_i32_1 = arith.constant 0 : i32
    return %c0_i32, %c0_i32_0 : i32, i32
  }
  func.func @transform_2(%arg0: i32, %arg1: i32) -> (i32, i32) {
    %c0_i32 = arith.constant 0 : i32
    %c0_i32_0 = arith.constant 0 : i32
    %c0_i32_1 = arith.constant 0 : i32
    return %c0_i32, %c0_i32_0 : i32, i32
  }
  func.func @transform_3(%arg0: i32, %arg1: i32) -> (i32, i32) {
    %c0_i32 = arith.constant 0 : i32
    %c0_i32_0 = arith.constant 0 : i32
    %c0_i32_1 = arith.constant 0 : i32
    return %c0_i32, %c0_i32_0 : i32, i32
  }
  func.func @transform_4(%arg0: i32, %arg1: i32) -> (i32, i32, i32, i32) {
    %c0_i32 = arith.constant 0 : i32
    %c0_i32_0 = arith.constant 0 : i32
    %c0_i32_1 = arith.constant 0 : i32
    return %arg0, %arg1, %c0_i32, %c0_i32_0 : i32, i32, i32, i32
  }
}

module attributes {stable_mosaic.version = 11 : i64} {
  func.func @_stats_kernel(%arg0: i32, %arg1: i32, %arg2: memref<8x512xf32, #tpu.memory_space<vmem>>, %arg3: memref<8x1xf32, #tpu.memory_space<vmem>>, %arg4: memref<8x1xf32, #tpu.memory_space<vmem>>, %arg5: memref<8x1xf32, #tpu.memory_space<vmem>>, %arg6: memref<8x1xf32, #tpu.memory_space<vmem>>) attributes {dimension_semantics = [#tpu.dimension_semantics<parallel>, #tpu.dimension_semantics<arbitrary>], iteration_bounds = array<i64: 1, 1>, scalar_prefetch = 0 : i64, scratch_operands = 2 : i64, tpu.core_type = #tpu.core_type<tc>, window_params = [{transform_indices = @transform_0, window_bounds = array<i64: 8, 512>}, {transform_indices = @transform_1, window_bounds = array<i64: 8, 1>}, {transform_indices = @transform_2, window_bounds = array<i64: 8, 1>}]} {
    %c0_i32 = arith.constant 0 : i32
    %0 = arith.cmpi eq, %arg1, %c0_i32 : i32
    %1 = arith.extui %0 : i1 to i32
    %c0_i32_0 = arith.constant 0 : i32
    %2 = arith.cmpi ne, %1, %c0_i32_0 : i32
    scf.if %2 {
      %cst_13 = arith.constant 0.000000e+00 : f32
      %18 = vector.broadcast %cst_13 : f32 to vector<8x1xf32>
      %c0_14 = arith.constant 0 : index
      %c0_15 = arith.constant 0 : index
      %19 = vector.load %arg5[%c0_14, %c0_15] : memref<8x1xf32, #tpu.memory_space<vmem>>, vector<8x1xf32>
      tpu.vector_store %arg5[%c0_14, %c0_15], %18 {strides = array<i32>} : memref<8x1xf32, #tpu.memory_space<vmem>>, vector<8x1xf32>,
      %cst_16 = arith.constant 0.000000e+00 : f32
      %20 = vector.broadcast %cst_16 : f32 to vector<8x1xf32>
      %c0_17 = arith.constant 0 : index
      %c0_18 = arith.constant 0 : index
      %21 = vector.load %arg6[%c0_17, %c0_18] : memref<8x1xf32, #tpu.memory_space<vmem>>, vector<8x1xf32>
      tpu.vector_store %arg6[%c0_17, %c0_18], %20 {strides = array<i32>} : memref<8x1xf32, #tpu.memory_space<vmem>>, vector<8x1xf32>,
    } else {
    }
    %c0 = arith.constant 0 : index
    %c0_1 = arith.constant 0 : index
    %3 = vector.load %arg2[%c0, %c0_1] : memref<8x512xf32, #tpu.memory_space<vmem>>, vector<8x512xf32>
    %c0_2 = arith.constant 0 : index
    %c0_3 = arith.constant 0 : index
    %4 = vector.load %arg5[%c0_2, %c0_3] : memref<8x1xf32, #tpu.memory_space<vmem>>, vector<8x1xf32>
    %cst = arith.constant dense<0.000000e+00> : vector<8xf32>
    %5 = vector.multi_reduction <add>, %3, %cst [1] : vector<8x512xf32> to vector<8xf32>
    %6 = vector.shape_cast %5 : vector<8xf32> to vector<8x1xf32>
    %7 = arith.addf %4, %6 : vector<8x1xf32>
    %c0_4 = arith.constant 0 : index
    %c0_5 = arith.constant 0 : index
    %8 = vector.load %arg5[%c0_4, %c0_5] : memref<8x1xf32, #tpu.memory_space<vmem>>, vector<8x1xf32>
    tpu.vector_store %arg5[%c0_4, %c0_5], %7 {strides = array<i32>} : memref<8x1xf32, #tpu.memory_space<vmem>>, vector<8x1xf32>,
    %c0_6 = arith.constant 0 : index
    %c0_7 = arith.constant 0 : index
    %9 = vector.load %arg6[%c0_6, %c0_7] : memref<8x1xf32, #tpu.memory_space<vmem>>, vector<8x1xf32>
    %10 = arith.mulf %3, %3 : vector<8x512xf32>
    %cst_8 = arith.constant dense<0.000000e+00> : vector<8xf32>
    %11 = vector.multi_reduction <add>, %10, %cst_8 [1] : vector<8x512xf32> to vector<8xf32>
    %12 = vector.shape_cast %11 : vector<8xf32> to vector<8x1xf32>
    %13 = arith.addf %9, %12 : vector<8x1xf32>
    %c0_9 = arith.constant 0 : index
    %c0_10 = arith.constant 0 : index
    %14 = vector.load %arg6[%c0_9, %c0_10] : memref<8x1xf32, #tpu.memory_space<vmem>>, vector<8x1xf32>
    tpu.vector_store %arg6[%c0_9, %c0_10], %13 {strides = array<i32>} : memref<8x1xf32, #tpu.memory_space<vmem>>, vector<8x1xf32>,
    %c0_i32_11 = arith.constant 0 : i32
    %15 = arith.cmpi eq, %arg1, %c0_i32_11 : i32
    %16 = arith.extui %15 : i1 to i32
    %c0_i32_12 = arith.constant 0 : i32
    %17 = arith.cmpi ne, %16, %c0_i32_12 : i32
    scf.if %17 {
      %c0_13 = arith.constant 0 : index
      %c0_14 = arith.constant 0 : index
      %18 = vector.load %arg5[%c0_13, %c0_14] : memref<8x1xf32, #tpu.memory_space<vmem>>, vector<8x1xf32>
      %cst_15 = arith.constant 0.001953125 : f32
      %19 = vector.broadcast %cst_15 : f32 to vector<8x1xf32>
      %20 = arith.mulf %18, %19 : vector<8x1xf32>
      %c0_16 = arith.constant 0 : index
      %c0_17 = arith.constant 0 : index
      %21 = vector.load %arg6[%c0_16, %c0_17] : memref<8x1xf32, #tpu.memory_space<vmem>>, vector<8x1xf32>
      %cst_18 = arith.constant 0.001953125 : f32
      %22 = vector.broadcast %cst_18 : f32 to vector<8x1xf32>
      %23 = arith.mulf %21, %22 : vector<8x1xf32>
      %24 = arith.mulf %20, %20 : vector<8x1xf32>
      %25 = arith.subf %23, %24 : vector<8x1xf32>
      %cst_19 = arith.constant 0.000000e+00 : f32
      %26 = vector.broadcast %cst_19 : f32 to vector<8x1xf32>
      %27 = arith.maximumf %25, %26 : vector<8x1xf32>
      %c0_20 = arith.constant 0 : index
      %c0_21 = arith.constant 0 : index
      %28 = vector.load %arg3[%c0_20, %c0_21] : memref<8x1xf32, #tpu.memory_space<vmem>>, vector<8x1xf32>
      tpu.vector_store %arg3[%c0_20, %c0_21], %20 {strides = array<i32>} : memref<8x1xf32, #tpu.memory_space<vmem>>, vector<8x1xf32>,
      %cst_22 = arith.constant 9.99999974E-6 : f32
      %29 = vector.broadcast %cst_22 : f32 to vector<8x1xf32>
      %30 = arith.addf %27, %29 : vector<8x1xf32>
      %31 = math.rsqrt %30 : vector<8x1xf32>
      %c0_23 = arith.constant 0 : index
      %c0_24 = arith.constant 0 : index
      %32 = vector.load %arg4[%c0_23, %c0_24] : memref<8x1xf32, #tpu.memory_space<vmem>>, vector<8x1xf32>
      tpu.vector_store %arg4[%c0_23, %c0_24], %31 {strides = array<i32>} : memref<8x1xf32, #tpu.memory_space<vmem>>, vector<8x1xf32>,
    } else {
    }
    return
  }
  func.func @transform_0(%arg0: i32, %arg1: i32) -> (i32, i32) {
    %c0_i32 = arith.constant 0 : i32
    return %arg0, %arg1 : i32, i32
  }
  func.func @transform_1(%arg0: i32, %arg1: i32) -> (i32, i32) {
    %c0_i32 = arith.constant 0 : i32
    %c0_i32_0 = arith.constant 0 : i32
    return %arg0, %c0_i32 : i32, i32
  }
  func.func @transform_2(%arg0: i32, %arg1: i32) -> (i32, i32) {
    %c0_i32 = arith.constant 0 : i32
    %c0_i32_0 = arith.constant 0 : i32
    return %arg0, %c0_i32 : i32, i32
  }
}

module attributes {stable_mosaic.version = 11 : i64} {
  func.func @_affine_kernel(%arg0: i32, %arg1: i32, %arg2: memref<1x1x128x110xbf16, #tpu.memory_space<vmem>>, %arg3: memref<1x1x128x110xbf16, #tpu.memory_space<vmem>>, %arg4: memref<1x1x128x110xbf16, #tpu.memory_space<vmem>>, %arg5: memref<1x1x128x110xbf16, #tpu.memory_space<vmem>>, %arg6: memref<1x1x128x110xbf16, #tpu.memory_space<vmem>>, %arg7: memref<1x1x128x110xbf16, #tpu.memory_space<vmem>>, %arg8: memref<1x1x128x110xbf16, #tpu.memory_space<vmem>>, %arg9: memref<1x1x128x110xbf16, #tpu.memory_space<vmem>>, %arg10: memref<1x1x128x110xbf16, #tpu.memory_space<vmem>>, %arg11: memref<1x1x128x110xbf16, #tpu.memory_space<vmem>>, %arg12: memref<3x72x128xbf16, #tpu.memory_space<vmem>>, %arg13: memref<8x1xf32, #tpu.memory_space<vmem>>, %arg14: memref<1x8x4x80xbf16, #tpu.memory_space<vmem>>, %arg15: memref<1x4x1xf32, #tpu.memory_space<vmem>>, %arg16: memref<1x4x1xf32, #tpu.memory_space<vmem>>, %arg17: memref<1x8x4x80xf32, #tpu.memory_space<vmem>>) attributes {dimension_semantics = [#tpu.dimension_semantics<parallel>, #tpu.dimension_semantics<parallel>], iteration_bounds = array<i64: 2, 1>, scalar_prefetch = 0 : i64, scratch_operands = 0 : i64, tpu.core_type = #tpu.core_type<tc>, window_params = [{transform_indices = @transform_0, window_bounds = array<i64: 1, 1, 128, 110>}, {transform_indices = @transform_1, window_bounds = array<i64: 1, 1, 128, 110>}, {transform_indices = @transform_2, window_bounds = array<i64: 1, 1, 128, 110>}, {transform_indices = @transform_3, window_bounds = array<i64: 1, 1, 128, 110>}, {transform_indices = @transform_4, window_bounds = array<i64: 1, 1, 128, 110>}, {transform_indices = @transform_5, window_bounds = array<i64: 1, 1, 128, 110>}, {transform_indices = @transform_6, window_bounds = array<i64: 1, 1, 128, 110>}, {transform_indices = @transform_7, window_bounds = array<i64: 1, 1, 128, 110>}, {transform_indices = @transform_8, window_bounds = array<i64: 1, 1, 128, 110>}, {transform_indices = @transform_9, window_bounds = array<i64: 1, 1, 128, 110>}, {pipeline_mode = #tpu.pipeline_mode<synchronous>, transform_indices = @transform_10, window_bounds = array<i64: 3, 72, 128>}, {pipeline_mode = #tpu.pipeline_mode<synchronous>, transform_indices = @transform_11, window_bounds = array<i64: 8, 1>}, {transform_indices = @transform_12, window_bounds = array<i64: 1, 8, 4, 80>}, {transform_indices = @transform_13, window_bounds = array<i64: 1, 4, 1>}, {transform_indices = @transform_14, window_bounds = array<i64: 1, 4, 1>}, {transform_indices = @transform_15, window_bounds = array<i64: 1, 8, 4, 80>}]} {
    %c0 = arith.constant 0 : index
    %c0_0 = arith.constant 0 : index
    %0 = vector.load %arg13[%c0, %c0_0] : memref<8x1xf32, #tpu.memory_space<vmem>>, vector<8x1xf32>
    %c0_1 = arith.constant 0 : index
    %c0_2 = arith.constant 0 : index
    %c0_3 = arith.constant 0 : index
    %1 = vector.load %arg15[%c0_1, %c0_2, %c0_3] : memref<1x4x1xf32, #tpu.memory_space<vmem>>, vector<1x4x1xf32>
    %2 = vector.shape_cast %1 : vector<1x4x1xf32> to vector<4x1xf32>
    %c0_4 = arith.constant 0 : index
    %c0_5 = arith.constant 0 : index
    %c0_6 = arith.constant 0 : index
    %3 = vector.load %arg16[%c0_4, %c0_5, %c0_6] : memref<1x4x1xf32, #tpu.memory_space<vmem>>, vector<1x4x1xf32>
    %4 = vector.shape_cast %3 : vector<1x4x1xf32> to vector<4x1xf32>
    %c0_7 = arith.constant 0 : index
    %c0_8 = arith.constant 0 : index
    %c0_9 = arith.constant 0 : index
    %c0_10 = arith.constant 0 : index
    %5 = vector.load %arg2[%c0_7, %c0_8, %c0_9, %c0_10] : memref<1x1x128x110xbf16, #tpu.memory_space<vmem>>, vector<1x1x128x110xbf16>
    %6 = vector.shape_cast %5 : vector<1x1x128x110xbf16> to vector<128x110xbf16>
    %c0_11 = arith.constant 0 : index
    %c0_12 = arith.constant 0 : index
    %c0_13 = arith.constant 0 : index
    %7 = vector.load %arg12[%c0_11, %c0_12, %c0_13] : memref<3x72x128xbf16, #tpu.memory_space<vmem>>, vector<1x72x128xbf16>
    %8 = vector.shape_cast %7 : vector<1x72x128xbf16> to vector<72x128xbf16>
    %cst = arith.constant dense<0.000000e+00> : vector<72x110xf32>
    %9 = tpu.matmul %8, %6, %cst {dimension_numbers = #tpu.dot_dimension_numbers<[1], [0], [0], [1], [0, 0, 1, 1], [], []>} : vector<72x128xbf16>, vector<128x110xbf16>, vector<72x110xf32> -> vector<72x110xf32>
    %10 = vector.extract_strided_slice %9 {offsets = [0, 0], sizes = [8, 80], strides = [1, 1]} : vector<72x110xf32> to vector<8x80xf32>
    %11 = vector.extract_strided_slice %9 {offsets = [8, 1], sizes = [8, 80], strides = [1, 1]} : vector<72x110xf32> to vector<8x80xf32>
    %12 = arith.addf %10, %11 : vector<8x80xf32>
    %13 = vector.extract_strided_slice %9 {offsets = [16, 2], sizes = [8, 80], strides = [1, 1]} : vector<72x110xf32> to vector<8x80xf32>
    %14 = arith.addf %12, %13 : vector<8x80xf32>
    %15 = vector.extract_strided_slice %9 {offsets = [24, 10], sizes = [8, 80], strides = [1, 1]} : vector<72x110xf32> to vector<8x80xf32>
    %16 = arith.addf %14, %15 : vector<8x80xf32>
    %17 = vector.extract_strided_slice %9 {offsets = [32, 11], sizes = [8, 80], strides = [1, 1]} : vector<72x110xf32> to vector<8x80xf32>
    %18 = arith.addf %16, %17 : vector<8x80xf32>
    %19 = vector.extract_strided_slice %9 {offsets = [40, 12], sizes = [8, 80], strides = [1, 1]} : vector<72x110xf32> to vector<8x80xf32>
    %20 = arith.addf %18, %19 : vector<8x80xf32>
    %21 = vector.extract_strided_slice %9 {offsets = [48, 20], sizes = [8, 80], strides = [1, 1]} : vector<72x110xf32> to vector<8x80xf32>
    %22 = arith.addf %20, %21 : vector<8x80xf32>
    %23 = vector.extract_strided_slice %9 {offsets = [56, 21], sizes = [8, 80], strides = [1, 1]} : vector<72x110xf32> to vector<8x80xf32>
    %24 = arith.addf %22, %23 : vector<8x80xf32>
    %25 = vector.extract_strided_slice %9 {offsets = [64, 22], sizes = [8, 80], strides = [1, 1]} : vector<72x110xf32> to vector<8x80xf32>
    %26 = arith.addf %24, %25 : vector<8x80xf32>
    %c0_14 = arith.constant 0 : index
    %c0_15 = arith.constant 0 : index
    %c0_16 = arith.constant 0 : index
    %c0_17 = arith.constant 0 : index
    %27 = vector.load %arg3[%c0_14, %c0_15, %c0_16, %c0_17] : memref<1x1x128x110xbf16, #tpu.memory_space<vmem>>, vector<1x1x128x110xbf16>
    %28 = vector.shape_cast %27 : vector<1x1x128x110xbf16> to vector<128x110xbf16>
    %c1 = arith.constant 1 : index
    %c0_18 = arith.constant 0 : index
    %c0_19 = arith.constant 0 : index
    %29 = vector.load %arg12[%c1, %c0_18, %c0_19] : memref<3x72x128xbf16, #tpu.memory_space<vmem>>, vector<1x72x128xbf16>
    %30 = vector.shape_cast %29 : vector<1x72x128xbf16> to vector<72x128xbf16>
    %cst_20 = arith.constant dense<0.000000e+00> : vector<72x110xf32>
    %31 = tpu.matmul %30, %28, %cst_20 {dimension_numbers = #tpu.dot_dimension_numbers<[1], [0], [0], [1], [0, 0, 1, 1], [], []>} : vector<72x128xbf16>, vector<128x110xbf16>, vector<72x110xf32> -> vector<72x110xf32>
    %32 = vector.extract_strided_slice %31 {offsets = [0, 0], sizes = [8, 80], strides = [1, 1]} : vector<72x110xf32> to vector<8x80xf32>
    %33 = arith.addf %26, %32 : vector<8x80xf32>
    %34 = vector.extract_strided_slice %31 {offsets = [8, 1], sizes = [8, 80], strides = [1, 1]} : vector<72x110xf32> to vector<8x80xf32>
    %35 = arith.addf %33, %34 : vector<8x80xf32>
    %36 = vector.extract_strided_slice %31 {offsets = [16, 2], sizes = [8, 80], strides = [1, 1]} : vector<72x110xf32> to vector<8x80xf32>
    %37 = arith.addf %35, %36 : vector<8x80xf32>
    %38 = vector.extract_strided_slice %31 {offsets = [24, 10], sizes = [8, 80], strides = [1, 1]} : vector<72x110xf32> to vector<8x80xf32>
    %39 = arith.addf %37, %38 : vector<8x80xf32>
    %40 = vector.extract_strided_slice %31 {offsets = [32, 11], sizes = [8, 80], strides = [1, 1]} : vector<72x110xf32> to vector<8x80xf32>
    %41 = arith.addf %39, %40 : vector<8x80xf32>
    %42 = vector.extract_strided_slice %31 {offsets = [40, 12], sizes = [8, 80], strides = [1, 1]} : vector<72x110xf32> to vector<8x80xf32>
    %43 = arith.addf %41, %42 : vector<8x80xf32>
    %44 = vector.extract_strided_slice %31 {offsets = [48, 20], sizes = [8, 80], strides = [1, 1]} : vector<72x110xf32> to vector<8x80xf32>
    %45 = arith.addf %43, %44 : vector<8x80xf32>
    %46 = vector.extract_strided_slice %31 {offsets = [56, 21], sizes = [8, 80], strides = [1, 1]} : vector<72x110xf32> to vector<8x80xf32>
    %47 = arith.addf %45, %46 : vector<8x80xf32>
    %48 = vector.extract_strided_slice %31 {offsets = [64, 22], sizes = [8, 80], strides = [1, 1]} : vector<72x110xf32> to vector<8x80xf32>
    %49 = arith.addf %47, %48 : vector<8x80xf32>
    %c0_21 = arith.constant 0 : index
    %c0_22 = arith.constant 0 : index
    %c0_23 = arith.constant 0 : index
    %c0_24 = arith.constant 0 : index
    %50 = vector.load %arg4[%c0_21, %c0_22, %c0_23, %c0_24] : memref<1x1x128x110xbf16, #tpu.memory_space<vmem>>, vector<1x1x128x110xbf16>
    %51 = vector.shape_cast %50 : vector<1x1x128x110xbf16> to vector<128x110xbf16>
    %c2 = arith.constant 2 : index
    %c0_25 = arith.constant 0 : index
    %c0_26 = arith.constant 0 : index
    %52 = vector.load %arg12[%c2, %c0_25, %c0_26] : memref<3x72x128xbf16, #tpu.memory_space<vmem>>, vector<1x72x128xbf16>
    %53 = vector.shape_cast %52 : vector<1x72x128xbf16> to vector<72x128xbf16>
    %cst_27 = arith.constant dense<0.000000e+00> : vector<72x110xf32>
    %54 = tpu.matmul %53, %51, %cst_27 {dimension_numbers = #tpu.dot_dimension_numbers<[1], [0], [0], [1], [0, 0, 1, 1], [], []>} : vector<72x128xbf16>, vector<128x110xbf16>, vector<72x110xf32> -> vector<72x110xf32>
    %55 = vector.extract_strided_slice %54 {offsets = [0, 0], sizes = [8, 80], strides = [1, 1]} : vector<72x110xf32> to vector<8x80xf32>
    %56 = arith.addf %49, %55 : vector<8x80xf32>
    %57 = vector.extract_strided_slice %54 {offsets = [8, 1], sizes = [8, 80], strides = [1, 1]} : vector<72x110xf32> to vector<8x80xf32>
    %58 = arith.addf %56, %57 : vector<8x80xf32>
    %59 = vector.extract_strided_slice %54 {offsets = [16, 2], sizes = [8, 80], strides = [1, 1]} : vector<72x110xf32> to vector<8x80xf32>
    %60 = arith.addf %58, %59 : vector<8x80xf32>
    %61 = vector.extract_strided_slice %54 {offsets = [24, 10], sizes = [8, 80], strides = [1, 1]} : vector<72x110xf32> to vector<8x80xf32>
    %62 = arith.addf %60, %61 : vector<8x80xf32>
    %63 = vector.extract_strided_slice %54 {offsets = [32, 11], sizes = [8, 80], strides = [1, 1]} : vector<72x110xf32> to vector<8x80xf32>
    %64 = arith.addf %62, %63 : vector<8x80xf32>
    %65 = vector.extract_strided_slice %54 {offsets = [40, 12], sizes = [8, 80], strides = [1, 1]} : vector<72x110xf32> to vector<8x80xf32>
    %66 = arith.addf %64, %65 : vector<8x80xf32>
    %67 = vector.extract_strided_slice %54 {offsets = [48, 20], sizes = [8, 80], strides = [1, 1]} : vector<72x110xf32> to vector<8x80xf32>
    %68 = arith.addf %66, %67 : vector<8x80xf32>
    %69 = vector.extract_strided_slice %54 {offsets = [56, 21], sizes = [8, 80], strides = [1, 1]} : vector<72x110xf32> to vector<8x80xf32>
    %70 = arith.addf %68, %69 : vector<8x80xf32>
    %71 = vector.extract_strided_slice %54 {offsets = [64, 22], sizes = [8, 80], strides = [1, 1]} : vector<72x110xf32> to vector<8x80xf32>
    %72 = arith.addf %70, %71 : vector<8x80xf32>
    %73 = vector.broadcast %0 : vector<8x1xf32> to vector<8x80xf32>
    %74 = arith.addf %72, %73 : vector<8x80xf32>
    %75 = vector.extract_strided_slice %74 {offsets = [0, 0], sizes = [4, 80], strides = [1, 1]} : vector<8x80xf32> to vector<4x80xf32>
    %76 = vector.extract_strided_slice %74 {offsets = [4, 0], sizes = [4, 80], strides = [1, 1]} : vector<8x80xf32> to vector<4x80xf32>
    %c0_28 = arith.constant 0 : index
    %c0_29 = arith.constant 0 : index
    %c0_30 = arith.constant 0 : index
    %c0_31 = arith.constant 0 : index
    %77 = vector.load %arg14[%c0_28, %c0_29, %c0_30, %c0_31] : memref<1x8x4x80xbf16, #tpu.memory_space<vmem>>, vector<1x1x4x80xbf16>
    %78 = vector.shape_cast %77 : vector<1x1x4x80xbf16> to vector<4x80xbf16>
    %79 = arith.extf %78 : vector<4x80xbf16> to vector<4x80xf32>
    %80 = vector.broadcast %2 : vector<4x1xf32> to vector<4x80xf32>
    %81 = arith.subf %79, %80 : vector<4x80xf32>
    %82 = vector.broadcast %4 : vector<4x1xf32> to vector<4x80xf32>
    %83 = arith.mulf %81, %82 : vector<4x80xf32>
    %cst_32 = arith.constant 1.000000e+00 : f32
    %84 = vector.broadcast %cst_32 : f32 to vector<4x80xf32>
    %85 = arith.addf %84, %75 : vector<4x80xf32>
    %86 = arith.mulf %83, %85 : vector<4x80xf32>
    %87 = arith.addf %86, %76 : vector<4x80xf32>
    %c0_33 = arith.constant 0 : index
    %c0_34 = arith.constant 0 : index
    %c0_35 = arith.constant 0 : index
    %c0_36 = arith.constant 0 : index
    %88 = vector.load %arg17[%c0_33, %c0_34, %c0_35, %c0_36] : memref<1x8x4x80xf32, #tpu.memory_space<vmem>>, vector<1x1x4x80xf32>
    %89 = vector.shape_cast %88 : vector<1x1x4x80xf32> to vector<4x80xf32>
    %90 = vector.shape_cast %87 : vector<4x80xf32> to vector<1x1x4x80xf32>
    tpu.vector_store %arg17[%c0_33, %c0_34, %c0_35, %c0_36], %90 {strides = array<i32>} : memref<1x8x4x80xf32, #tpu.memory_space<vmem>>, vector<1x1x4x80xf32>,
    %c0_37 = arith.constant 0 : index
    %c0_38 = arith.constant 0 : index
    %c0_39 = arith.constant 0 : index
    %c0_40 = arith.constant 0 : index
    %91 = vector.load %arg3[%c0_37, %c0_38, %c0_39, %c0_40] : memref<1x1x128x110xbf16, #tpu.memory_space<vmem>>, vector<1x1x128x110xbf16>
    %92 = vector.shape_cast %91 : vector<1x1x128x110xbf16> to vector<128x110xbf16>
    %c0_41 = arith.constant 0 : index
    %c0_42 = arith.constant 0 : index
    %c0_43 = arith.constant 0 : index
    %93 = vector.load %arg12[%c0_41, %c0_42, %c0_43] : memref<3x72x128xbf16, #tpu.memory_space<vmem>>, vector<1x72x128xbf16>
    %94 = vector.shape_cast %93 : vector<1x72x128xbf16> to vector<72x128xbf16>
    %cst_44 = arith.constant dense<0.000000e+00> : vector<72x110xf32>
    %95 = tpu.matmul %94, %92, %cst_44 {dimension_numbers = #tpu.dot_dimension_numbers<[1], [0], [0], [1], [0, 0, 1, 1], [], []>} : vector<72x128xbf16>, vector<128x110xbf16>, vector<72x110xf32> -> vector<72x110xf32>
    %96 = vector.extract_strided_slice %95 {offsets = [0, 0], sizes = [8, 80], strides = [1, 1]} : vector<72x110xf32> to vector<8x80xf32>
    %97 = vector.extract_strided_slice %95 {offsets = [8, 1], sizes = [8, 80], strides = [1, 1]} : vector<72x110xf32> to vector<8x80xf32>
    %98 = arith.addf %96, %97 : vector<8x80xf32>
    %99 = vector.extract_strided_slice %95 {offsets = [16, 2], sizes = [8, 80], strides = [1, 1]} : vector<72x110xf32> to vector<8x80xf32>
    %100 = arith.addf %98, %99 : vector<8x80xf32>
    %101 = vector.extract_strided_slice %95 {offsets = [24, 10], sizes = [8, 80], strides = [1, 1]} : vector<72x110xf32> to vector<8x80xf32>
    %102 = arith.addf %100, %101 : vector<8x80xf32>
    %103 = vector.extract_strided_slice %95 {offsets = [32, 11], sizes = [8, 80], strides = [1, 1]} : vector<72x110xf32> to vector<8x80xf32>
    %104 = arith.addf %102, %103 : vector<8x80xf32>
    %105 = vector.extract_strided_slice %95 {offsets = [40, 12], sizes = [8, 80], strides = [1, 1]} : vector<72x110xf32> to vector<8x80xf32>
    %106 = arith.addf %104, %105 : vector<8x80xf32>
    %107 = vector.extract_strided_slice %95 {offsets = [48, 20], sizes = [8, 80], strides = [1, 1]} : vector<72x110xf32> to vector<8x80xf32>
    %108 = arith.addf %106, %107 : vector<8x80xf32>
    %109 = vector.extract_strided_slice %95 {offsets = [56, 21], sizes = [8, 80], strides = [1, 1]} : vector<72x110xf32> to vector<8x80xf32>
    %110 = arith.addf %108, %109 : vector<8x80xf32>
    %111 = vector.extract_strided_slice %95 {offsets = [64, 22], sizes = [8, 80], strides = [1, 1]} : vector<72x110xf32> to vector<8x80xf32>
    %112 = arith.addf %110, %111 : vector<8x80xf32>
    %c0_45 = arith.constant 0 : index
    %c0_46 = arith.constant 0 : index
    %c0_47 = arith.constant 0 : index
    %c0_48 = arith.constant 0 : index
    %113 = vector.load %arg4[%c0_45, %c0_46, %c0_47, %c0_48] : memref<1x1x128x110xbf16, #tpu.memory_space<vmem>>, vector<1x1x128x110xbf16>
    %114 = vector.shape_cast %113 : vector<1x1x128x110xbf16> to vector<128x110xbf16>
    %c1_49 = arith.constant 1 : index
    %c0_50 = arith.constant 0 : index
    %c0_51 = arith.constant 0 : index
    %115 = vector.load %arg12[%c1_49, %c0_50, %c0_51] : memref<3x72x128xbf16, #tpu.memory_space<vmem>>, vector<1x72x128xbf16>
    %116 = vector.shape_cast %115 : vector<1x72x128xbf16> to vector<72x128xbf16>
    %cst_52 = arith.constant dense<0.000000e+00> : vector<72x110xf32>
    %117 = tpu.matmul %116, %114, %cst_52 {dimension_numbers = #tpu.dot_dimension_numbers<[1], [0], [0], [1], [0, 0, 1, 1], [], []>} : vector<72x128xbf16>, vector<128x110xbf16>, vector<72x110xf32> -> vector<72x110xf32>
    %118 = vector.extract_strided_slice %117 {offsets = [0, 0], sizes = [8, 80], strides = [1, 1]} : vector<72x110xf32> to vector<8x80xf32>
    %119 = arith.addf %112, %118 : vector<8x80xf32>
    %120 = vector.extract_strided_slice %117 {offsets = [8, 1], sizes = [8, 80], strides = [1, 1]} : vector<72x110xf32> to vector<8x80xf32>
    %121 = arith.addf %119, %120 : vector<8x80xf32>
    %122 = vector.extract_strided_slice %117 {offsets = [16, 2], sizes = [8, 80], strides = [1, 1]} : vector<72x110xf32> to vector<8x80xf32>
    %123 = arith.addf %121, %122 : vector<8x80xf32>
    %124 = vector.extract_strided_slice %117 {offsets = [24, 10], sizes = [8, 80], strides = [1, 1]} : vector<72x110xf32> to vector<8x80xf32>
    %125 = arith.addf %123, %124 : vector<8x80xf32>
    %126 = vector.extract_strided_slice %117 {offsets = [32, 11], sizes = [8, 80], strides = [1, 1]} : vector<72x110xf32> to vector<8x80xf32>
    %127 = arith.addf %125, %126 : vector<8x80xf32>
    %128 = vector.extract_strided_slice %117 {offsets = [40, 12], sizes = [8, 80], strides = [1, 1]} : vector<72x110xf32> to vector<8x80xf32>
    %129 = arith.addf %127, %128 : vector<8x80xf32>
    %130 = vector.extract_strided_slice %117 {offsets = [48, 20], sizes = [8, 80], strides = [1, 1]} : vector<72x110xf32> to vector<8x80xf32>
    %131 = arith.addf %129, %130 : vector<8x80xf32>
    %132 = vector.extract_strided_slice %117 {offsets = [56, 21], sizes = [8, 80], strides = [1, 1]} : vector<72x110xf32> to vector<8x80xf32>
    %133 = arith.addf %131, %132 : vector<8x80xf32>
    %134 = vector.extract_strided_slice %117 {offsets = [64, 22], sizes = [8, 80], strides = [1, 1]} : vector<72x110xf32> to vector<8x80xf32>
    %135 = arith.addf %133, %134 : vector<8x80xf32>
    %c0_53 = arith.constant 0 : index
    %c0_54 = arith.constant 0 : index
    %c0_55 = arith.constant 0 : index
    %c0_56 = arith.constant 0 : index
    %136 = vector.load %arg5[%c0_53, %c0_54, %c0_55, %c0_56] : memref<1x1x128x110xbf16, #tpu.memory_space<vmem>>, vector<1x1x128x110xbf16>
    %137 = vector.shape_cast %136 : vector<1x1x128x110xbf16> to vector<128x110xbf16>
    %c2_57 = arith.constant 2 : index
    %c0_58 = arith.constant 0 : index
    %c0_59 = arith.constant 0 : index
    %138 = vector.load %arg12[%c2_57, %c0_58, %c0_59] : memref<3x72x128xbf16, #tpu.memory_space<vmem>>, vector<1x72x128xbf16>
    %139 = vector.shape_cast %138 : vector<1x72x128xbf16> to vector<72x128xbf16>
    %cst_60 = arith.constant dense<0.000000e+00> : vector<72x110xf32>
    %140 = tpu.matmul %139, %137, %cst_60 {dimension_numbers = #tpu.dot_dimension_numbers<[1], [0], [0], [1], [0, 0, 1, 1], [], []>} : vector<72x128xbf16>, vector<128x110xbf16>, vector<72x110xf32> -> vector<72x110xf32>
    %141 = vector.extract_strided_slice %140 {offsets = [0, 0], sizes = [8, 80], strides = [1, 1]} : vector<72x110xf32> to vector<8x80xf32>
    %142 = arith.addf %135, %141 : vector<8x80xf32>
    %143 = vector.extract_strided_slice %140 {offsets = [8, 1], sizes = [8, 80], strides = [1, 1]} : vector<72x110xf32> to vector<8x80xf32>
    %144 = arith.addf %142, %143 : vector<8x80xf32>
    %145 = vector.extract_strided_slice %140 {offsets = [16, 2], sizes = [8, 80], strides = [1, 1]} : vector<72x110xf32> to vector<8x80xf32>
    %146 = arith.addf %144, %145 : vector<8x80xf32>
    %147 = vector.extract_strided_slice %140 {offsets = [24, 10], sizes = [8, 80], strides = [1, 1]} : vector<72x110xf32> to vector<8x80xf32>
    %148 = arith.addf %146, %147 : vector<8x80xf32>
    %149 = vector.extract_strided_slice %140 {offsets = [32, 11], sizes = [8, 80], strides = [1, 1]} : vector<72x110xf32> to vector<8x80xf32>
    %150 = arith.addf %148, %149 : vector<8x80xf32>
    %151 = vector.extract_strided_slice %140 {offsets = [40, 12], sizes = [8, 80], strides = [1, 1]} : vector<72x110xf32> to vector<8x80xf32>
    %152 = arith.addf %150, %151 : vector<8x80xf32>
    %153 = vector.extract_strided_slice %140 {offsets = [48, 20], sizes = [8, 80], strides = [1, 1]} : vector<72x110xf32> to vector<8x80xf32>
    %154 = arith.addf %152, %153 : vector<8x80xf32>
    %155 = vector.extract_strided_slice %140 {offsets = [56, 21], sizes = [8, 80], strides = [1, 1]} : vector<72x110xf32> to vector<8x80xf32>
    %156 = arith.addf %154, %155 : vector<8x80xf32>
    %157 = vector.extract_strided_slice %140 {offsets = [64, 22], sizes = [8, 80], strides = [1, 1]} : vector<72x110xf32> to vector<8x80xf32>
    %158 = arith.addf %156, %157 : vector<8x80xf32>
    %159 = vector.broadcast %0 : vector<8x1xf32> to vector<8x80xf32>
    %160 = arith.addf %158, %159 : vector<8x80xf32>
    %161 = vector.extract_strided_slice %160 {offsets = [0, 0], sizes = [4, 80], strides = [1, 1]} : vector<8x80xf32> to vector<4x80xf32>
    %162 = vector.extract_strided_slice %160 {offsets = [4, 0], sizes = [4, 80], strides = [1, 1]} : vector<8x80xf32> to vector<4x80xf32>
    %c0_61 = arith.constant 0 : index
    %c1_62 = arith.constant 1 : index
    %c0_63 = arith.constant 0 : index
    %c0_64 = arith.constant 0 : index
    %163 = vector.load %arg14[%c0_61, %c1_62, %c0_63, %c0_64] : memref<1x8x4x80xbf16, #tpu.memory_space<vmem>>, vector<1x1x4x80xbf16>
    %164 = vector.shape_cast %163 : vector<1x1x4x80xbf16> to vector<4x80xbf16>
    %165 = arith.extf %164 : vector<4x80xbf16> to vector<4x80xf32>
    %166 = vector.broadcast %2 : vector<4x1xf32> to vector<4x80xf32>
    %167 = arith.subf %165, %166 : vector<4x80xf32>
    %168 = vector.broadcast %4 : vector<4x1xf32> to vector<4x80xf32>
    %169 = arith.mulf %167, %168 : vector<4x80xf32>
    %cst_65 = arith.constant 1.000000e+00 : f32
    %170 = vector.broadcast %cst_65 : f32 to vector<4x80xf32>
    %171 = arith.addf %170, %161 : vector<4x80xf32>
    %172 = arith.mulf %169, %171 : vector<4x80xf32>
    %173 = arith.addf %172, %162 : vector<4x80xf32>
    %c0_66 = arith.constant 0 : index
    %c1_67 = arith.constant 1 : index
    %c0_68 = arith.constant 0 : index
    %c0_69 = arith.constant 0 : index
    %174 = vector.load %arg17[%c0_66, %c1_67, %c0_68, %c0_69] : memref<1x8x4x80xf32, #tpu.memory_space<vmem>>, vector<1x1x4x80xf32>
    %175 = vector.shape_cast %174 : vector<1x1x4x80xf32> to vector<4x80xf32>
    %176 = vector.shape_cast %173 : vector<4x80xf32> to vector<1x1x4x80xf32>
    tpu.vector_store %arg17[%c0_66, %c1_67, %c0_68, %c0_69], %176 {strides = array<i32>} : memref<1x8x4x80xf32, #tpu.memory_space<vmem>>, vector<1x1x4x80xf32>,
    %c0_70 = arith.constant 0 : index
    %c0_71 = arith.constant 0 : index
    %c0_72 = arith.constant 0 : index
    %c0_73 = arith.constant 0 : index
    %177 = vector.load %arg4[%c0_70, %c0_71, %c0_72, %c0_73] : memref<1x1x128x110xbf16, #tpu.memory_space<vmem>>, vector<1x1x128x110xbf16>
    %178 = vector.shape_cast %177 : vector<1x1x128x110xbf16> to vector<128x110xbf16>
    %c0_74 = arith.constant 0 : index
    %c0_75 = arith.constant 0 : index
    %c0_76 = arith.constant 0 : index
    %179 = vector.load %arg12[%c0_74, %c0_75, %c0_76] : memref<3x72x128xbf16, #tpu.memory_space<vmem>>, vector<1x72x128xbf16>
    %180 = vector.shape_cast %179 : vector<1x72x128xbf16> to vector<72x128xbf16>
    %cst_77 = arith.constant dense<0.000000e+00> : vector<72x110xf32>
    %181 = tpu.matmul %180, %178, %cst_77 {dimension_numbers = #tpu.dot_dimension_numbers<[1], [0], [0], [1], [0, 0, 1, 1], [], []>} : vector<72x128xbf16>, vector<128x110xbf16>, vector<72x110xf32> -> vector<72x110xf32>
    %182 = vector.extract_strided_slice %181 {offsets = [0, 0], sizes = [8, 80], strides = [1, 1]} : vector<72x110xf32> to vector<8x80xf32>
    %183 = vector.extract_strided_slice %181 {offsets = [8, 1], sizes = [8, 80], strides = [1, 1]} : vector<72x110xf32> to vector<8x80xf32>
    %184 = arith.addf %182, %183 : vector<8x80xf32>
    %185 = vector.extract_strided_slice %181 {offsets = [16, 2], sizes = [8, 80], strides = [1, 1]} : vector<72x110xf32> to vector<8x80xf32>
    %186 = arith.addf %184, %185 : vector<8x80xf32>
    %187 = vector.extract_strided_slice %181 {offsets = [24, 10], sizes = [8, 80], strides = [1, 1]} : vector<72x110xf32> to vector<8x80xf32>
    %188 = arith.addf %186, %187 : vector<8x80xf32>
    %189 = vector.extract_strided_slice %181 {offsets = [32, 11], sizes = [8, 80], strides = [1, 1]} : vector<72x110xf32> to vector<8x80xf32>
    %190 = arith.addf %188, %189 : vector<8x80xf32>
    %191 = vector.extract_strided_slice %181 {offsets = [40, 12], sizes = [8, 80], strides = [1, 1]} : vector<72x110xf32> to vector<8x80xf32>
    %192 = arith.addf %190, %191 : vector<8x80xf32>
    %193 = vector.extract_strided_slice %181 {offsets = [48, 20], sizes = [8, 80], strides = [1, 1]} : vector<72x110xf32> to vector<8x80xf32>
    %194 = arith.addf %192, %193 : vector<8x80xf32>
    %195 = vector.extract_strided_slice %181 {offsets = [56, 21], sizes = [8, 80], strides = [1, 1]} : vector<72x110xf32> to vector<8x80xf32>
    %196 = arith.addf %194, %195 : vector<8x80xf32>
    %197 = vector.extract_strided_slice %181 {offsets = [64, 22], sizes = [8, 80], strides = [1, 1]} : vector<72x110xf32> to vector<8x80xf32>
    %198 = arith.addf %196, %197 : vector<8x80xf32>
    %c0_78 = arith.constant 0 : index
    %c0_79 = arith.constant 0 : index
    %c0_80 = arith.constant 0 : index
    %c0_81 = arith.constant 0 : index
    %199 = vector.load %arg5[%c0_78, %c0_79, %c0_80, %c0_81] : memref<1x1x128x110xbf16, #tpu.memory_space<vmem>>, vector<1x1x128x110xbf16>
    %200 = vector.shape_cast %199 : vector<1x1x128x110xbf16> to vector<128x110xbf16>
    %c1_82 = arith.constant 1 : index
    %c0_83 = arith.constant 0 : index
    %c0_84 = arith.constant 0 : index
    %201 = vector.load %arg12[%c1_82, %c0_83, %c0_84] : memref<3x72x128xbf16, #tpu.memory_space<vmem>>, vector<1x72x128xbf16>
    %202 = vector.shape_cast %201 : vector<1x72x128xbf16> to vector<72x128xbf16>
    %cst_85 = arith.constant dense<0.000000e+00> : vector<72x110xf32>
    %203 = tpu.matmul %202, %200, %cst_85 {dimension_numbers = #tpu.dot_dimension_numbers<[1], [0], [0], [1], [0, 0, 1, 1], [], []>} : vector<72x128xbf16>, vector<128x110xbf16>, vector<72x110xf32> -> vector<72x110xf32>
    %204 = vector.extract_strided_slice %203 {offsets = [0, 0], sizes = [8, 80], strides = [1, 1]} : vector<72x110xf32> to vector<8x80xf32>
    %205 = arith.addf %198, %204 : vector<8x80xf32>
    %206 = vector.extract_strided_slice %203 {offsets = [8, 1], sizes = [8, 80], strides = [1, 1]} : vector<72x110xf32> to vector<8x80xf32>
    %207 = arith.addf %205, %206 : vector<8x80xf32>
    %208 = vector.extract_strided_slice %203 {offsets = [16, 2], sizes = [8, 80], strides = [1, 1]} : vector<72x110xf32> to vector<8x80xf32>
    %209 = arith.addf %207, %208 : vector<8x80xf32>
    %210 = vector.extract_strided_slice %203 {offsets = [24, 10], sizes = [8, 80], strides = [1, 1]} : vector<72x110xf32> to vector<8x80xf32>
    %211 = arith.addf %209, %210 : vector<8x80xf32>
    %212 = vector.extract_strided_slice %203 {offsets = [32, 11], sizes = [8, 80], strides = [1, 1]} : vector<72x110xf32> to vector<8x80xf32>
    %213 = arith.addf %211, %212 : vector<8x80xf32>
    %214 = vector.extract_strided_slice %203 {offsets = [40, 12], sizes = [8, 80], strides = [1, 1]} : vector<72x110xf32> to vector<8x80xf32>
    %215 = arith.addf %213, %214 : vector<8x80xf32>
    %216 = vector.extract_strided_slice %203 {offsets = [48, 20], sizes = [8, 80], strides = [1, 1]} : vector<72x110xf32> to vector<8x80xf32>
    %217 = arith.addf %215, %216 : vector<8x80xf32>
    %218 = vector.extract_strided_slice %203 {offsets = [56, 21], sizes = [8, 80], strides = [1, 1]} : vector<72x110xf32> to vector<8x80xf32>
    %219 = arith.addf %217, %218 : vector<8x80xf32>
    %220 = vector.extract_strided_slice %203 {offsets = [64, 22], sizes = [8, 80], strides = [1, 1]} : vector<72x110xf32> to vector<8x80xf32>
    %221 = arith.addf %219, %220 : vector<8x80xf32>
    %c0_86 = arith.constant 0 : index
    %c0_87 = arith.constant 0 : index
    %c0_88 = arith.constant 0 : index
    %c0_89 = arith.constant 0 : index
    %222 = vector.load %arg6[%c0_86, %c0_87, %c0_88, %c0_89] : memref<1x1x128x110xbf16, #tpu.memory_space<vmem>>, vector<1x1x128x110xbf16>
    %223 = vector.shape_cast %222 : vector<1x1x128x110xbf16> to vector<128x110xbf16>
    %c2_90 = arith.constant 2 : index
    %c0_91 = arith.constant 0 : index
    %c0_92 = arith.constant 0 : index
    %224 = vector.load %arg12[%c2_90, %c0_91, %c0_92] : memref<3x72x128xbf16, #tpu.memory_space<vmem>>, vector<1x72x128xbf16>
    %225 = vector.shape_cast %224 : vector<1x72x128xbf16> to vector<72x128xbf16>
    %cst_93 = arith.constant dense<0.000000e+00> : vector<72x110xf32>
    %226 = tpu.matmul %225, %223, %cst_93 {dimension_numbers = #tpu.dot_dimension_numbers<[1], [0], [0], [1], [0, 0, 1, 1], [], []>} : vector<72x128xbf16>, vector<128x110xbf16>, vector<72x110xf32> -> vector<72x110xf32>
    %227 = vector.extract_strided_slice %226 {offsets = [0, 0], sizes = [8, 80], strides = [1, 1]} : vector<72x110xf32> to vector<8x80xf32>
    %228 = arith.addf %221, %227 : vector<8x80xf32>
    %229 = vector.extract_strided_slice %226 {offsets = [8, 1], sizes = [8, 80], strides = [1, 1]} : vector<72x110xf32> to vector<8x80xf32>
    %230 = arith.addf %228, %229 : vector<8x80xf32>
    %231 = vector.extract_strided_slice %226 {offsets = [16, 2], sizes = [8, 80], strides = [1, 1]} : vector<72x110xf32> to vector<8x80xf32>
    %232 = arith.addf %230, %231 : vector<8x80xf32>
    %233 = vector.extract_strided_slice %226 {offsets = [24, 10], sizes = [8, 80], strides = [1, 1]} : vector<72x110xf32> to vector<8x80xf32>
    %234 = arith.addf %232, %233 : vector<8x80xf32>
    %235 = vector.extract_strided_slice %226 {offsets = [32, 11], sizes = [8, 80], strides = [1, 1]} : vector<72x110xf32> to vector<8x80xf32>
    %236 = arith.addf %234, %235 : vector<8x80xf32>
    %237 = vector.extract_strided_slice %226 {offsets = [40, 12], sizes = [8, 80], strides = [1, 1]} : vector<72x110xf32> to vector<8x80xf32>
    %238 = arith.addf %236, %237 : vector<8x80xf32>
    %239 = vector.extract_strided_slice %226 {offsets = [48, 20], sizes = [8, 80], strides = [1, 1]} : vector<72x110xf32> to vector<8x80xf32>
    %240 = arith.addf %238, %239 : vector<8x80xf32>
    %241 = vector.extract_strided_slice %226 {offsets = [56, 21], sizes = [8, 80], strides = [1, 1]} : vector<72x110xf32> to vector<8x80xf32>
    %242 = arith.addf %240, %241 : vector<8x80xf32>
    %243 = vector.extract_strided_slice %226 {offsets = [64, 22], sizes = [8, 80], strides = [1, 1]} : vector<72x110xf32> to vector<8x80xf32>
    %244 = arith.addf %242, %243 : vector<8x80xf32>
    %245 = vector.broadcast %0 : vector<8x1xf32> to vector<8x80xf32>
    %246 = arith.addf %244, %245 : vector<8x80xf32>
    %247 = vector.extract_strided_slice %246 {offsets = [0, 0], sizes = [4, 80], strides = [1, 1]} : vector<8x80xf32> to vector<4x80xf32>
    %248 = vector.extract_strided_slice %246 {offsets = [4, 0], sizes = [4, 80], strides = [1, 1]} : vector<8x80xf32> to vector<4x80xf32>
    %c0_94 = arith.constant 0 : index
    %c2_95 = arith.constant 2 : index
    %c0_96 = arith.constant 0 : index
    %c0_97 = arith.constant 0 : index
    %249 = vector.load %arg14[%c0_94, %c2_95, %c0_96, %c0_97] : memref<1x8x4x80xbf16, #tpu.memory_space<vmem>>, vector<1x1x4x80xbf16>
    %250 = vector.shape_cast %249 : vector<1x1x4x80xbf16> to vector<4x80xbf16>
    %251 = arith.extf %250 : vector<4x80xbf16> to vector<4x80xf32>
    %252 = vector.broadcast %2 : vector<4x1xf32> to vector<4x80xf32>
    %253 = arith.subf %251, %252 : vector<4x80xf32>
    %254 = vector.broadcast %4 : vector<4x1xf32> to vector<4x80xf32>
    %255 = arith.mulf %253, %254 : vector<4x80xf32>
    %cst_98 = arith.constant 1.000000e+00 : f32
    %256 = vector.broadcast %cst_98 : f32 to vector<4x80xf32>
    %257 = arith.addf %256, %247 : vector<4x80xf32>
    %258 = arith.mulf %255, %257 : vector<4x80xf32>
    %259 = arith.addf %258, %248 : vector<4x80xf32>
    %c0_99 = arith.constant 0 : index
    %c2_100 = arith.constant 2 : index
    %c0_101 = arith.constant 0 : index
    %c0_102 = arith.constant 0 : index
    %260 = vector.load %arg17[%c0_99, %c2_100, %c0_101, %c0_102] : memref<1x8x4x80xf32, #tpu.memory_space<vmem>>, vector<1x1x4x80xf32>
    %261 = vector.shape_cast %260 : vector<1x1x4x80xf32> to vector<4x80xf32>
    %262 = vector.shape_cast %259 : vector<4x80xf32> to vector<1x1x4x80xf32>
    tpu.vector_store %arg17[%c0_99, %c2_100, %c0_101, %c0_102], %262 {strides = array<i32>} : memref<1x8x4x80xf32, #tpu.memory_space<vmem>>, vector<1x1x4x80xf32>,
    %c0_103 = arith.constant 0 : index
    %c0_104 = arith.constant 0 : index
    %c0_105 = arith.constant 0 : index
    %c0_106 = arith.constant 0 : index
    %263 = vector.load %arg5[%c0_103, %c0_104, %c0_105, %c0_106] : memref<1x1x128x110xbf16, #tpu.memory_space<vmem>>, vector<1x1x128x110xbf16>
    %264 = vector.shape_cast %263 : vector<1x1x128x110xbf16> to vector<128x110xbf16>
    %c0_107 = arith.constant 0 : index
    %c0_108 = arith.constant 0 : index
    %c0_109 = arith.constant 0 : index
    %265 = vector.load %arg12[%c0_107, %c0_108, %c0_109] : memref<3x72x128xbf16, #tpu.memory_space<vmem>>, vector<1x72x128xbf16>
    %266 = vector.shape_cast %265 : vector<1x72x128xbf16> to vector<72x128xbf16>
    %cst_110 = arith.constant dense<0.000000e+00> : vector<72x110xf32>
    %267 = tpu.matmul %266, %264, %cst_110 {dimension_numbers = #tpu.dot_dimension_numbers<[1], [0], [0], [1], [0, 0, 1, 1], [], []>} : vector<72x128xbf16>, vector<128x110xbf16>, vector<72x110xf32> -> vector<72x110xf32>
    %268 = vector.extract_strided_slice %267 {offsets = [0, 0], sizes = [8, 80], strides = [1, 1]} : vector<72x110xf32> to vector<8x80xf32>
    %269 = vector.extract_strided_slice %267 {offsets = [8, 1], sizes = [8, 80], strides = [1, 1]} : vector<72x110xf32> to vector<8x80xf32>
    %270 = arith.addf %268, %269 : vector<8x80xf32>
    %271 = vector.extract_strided_slice %267 {offsets = [16, 2], sizes = [8, 80], strides = [1, 1]} : vector<72x110xf32> to vector<8x80xf32>
    %272 = arith.addf %270, %271 : vector<8x80xf32>
    %273 = vector.extract_strided_slice %267 {offsets = [24, 10], sizes = [8, 80], strides = [1, 1]} : vector<72x110xf32> to vector<8x80xf32>
    %274 = arith.addf %272, %273 : vector<8x80xf32>
    %275 = vector.extract_strided_slice %267 {offsets = [32, 11], sizes = [8, 80], strides = [1, 1]} : vector<72x110xf32> to vector<8x80xf32>
    %276 = arith.addf %274, %275 : vector<8x80xf32>
    %277 = vector.extract_strided_slice %267 {offsets = [40, 12], sizes = [8, 80], strides = [1, 1]} : vector<72x110xf32> to vector<8x80xf32>
    %278 = arith.addf %276, %277 : vector<8x80xf32>
    %279 = vector.extract_strided_slice %267 {offsets = [48, 20], sizes = [8, 80], strides = [1, 1]} : vector<72x110xf32> to vector<8x80xf32>
    %280 = arith.addf %278, %279 : vector<8x80xf32>
    %281 = vector.extract_strided_slice %267 {offsets = [56, 21], sizes = [8, 80], strides = [1, 1]} : vector<72x110xf32> to vector<8x80xf32>
    %282 = arith.addf %280, %281 : vector<8x80xf32>
    %283 = vector.extract_strided_slice %267 {offsets = [64, 22], sizes = [8, 80], strides = [1, 1]} : vector<72x110xf32> to vector<8x80xf32>
    %284 = arith.addf %282, %283 : vector<8x80xf32>
    %c0_111 = arith.constant 0 : index
    %c0_112 = arith.constant 0 : index
    %c0_113 = arith.constant 0 : index
    %c0_114 = arith.constant 0 : index
    %285 = vector.load %arg6[%c0_111, %c0_112, %c0_113, %c0_114] : memref<1x1x128x110xbf16, #tpu.memory_space<vmem>>, vector<1x1x128x110xbf16>
    %286 = vector.shape_cast %285 : vector<1x1x128x110xbf16> to vector<128x110xbf16>
    %c1_115 = arith.constant 1 : index
    %c0_116 = arith.constant 0 : index
    %c0_117 = arith.constant 0 : index
    %287 = vector.load %arg12[%c1_115, %c0_116, %c0_117] : memref<3x72x128xbf16, #tpu.memory_space<vmem>>, vector<1x72x128xbf16>
    %288 = vector.shape_cast %287 : vector<1x72x128xbf16> to vector<72x128xbf16>
    %cst_118 = arith.constant dense<0.000000e+00> : vector<72x110xf32>
    %289 = tpu.matmul %288, %286, %cst_118 {dimension_numbers = #tpu.dot_dimension_numbers<[1], [0], [0], [1], [0, 0, 1, 1], [], []>} : vector<72x128xbf16>, vector<128x110xbf16>, vector<72x110xf32> -> vector<72x110xf32>
    %290 = vector.extract_strided_slice %289 {offsets = [0, 0], sizes = [8, 80], strides = [1, 1]} : vector<72x110xf32> to vector<8x80xf32>
    %291 = arith.addf %284, %290 : vector<8x80xf32>
    %292 = vector.extract_strided_slice %289 {offsets = [8, 1], sizes = [8, 80], strides = [1, 1]} : vector<72x110xf32> to vector<8x80xf32>
    %293 = arith.addf %291, %292 : vector<8x80xf32>
    %294 = vector.extract_strided_slice %289 {offsets = [16, 2], sizes = [8, 80], strides = [1, 1]} : vector<72x110xf32> to vector<8x80xf32>
    %295 = arith.addf %293, %294 : vector<8x80xf32>
    %296 = vector.extract_strided_slice %289 {offsets = [24, 10], sizes = [8, 80], strides = [1, 1]} : vector<72x110xf32> to vector<8x80xf32>
    %297 = arith.addf %295, %296 : vector<8x80xf32>
    %298 = vector.extract_strided_slice %289 {offsets = [32, 11], sizes = [8, 80], strides = [1, 1]} : vector<72x110xf32> to vector<8x80xf32>
    %299 = arith.addf %297, %298 : vector<8x80xf32>
    %300 = vector.extract_strided_slice %289 {offsets = [40, 12], sizes = [8, 80], strides = [1, 1]} : vector<72x110xf32> to vector<8x80xf32>
    %301 = arith.addf %299, %300 : vector<8x80xf32>
    %302 = vector.extract_strided_slice %289 {offsets = [48, 20], sizes = [8, 80], strides = [1, 1]} : vector<72x110xf32> to vector<8x80xf32>
    %303 = arith.addf %301, %302 : vector<8x80xf32>
    %304 = vector.extract_strided_slice %289 {offsets = [56, 21], sizes = [8, 80], strides = [1, 1]} : vector<72x110xf32> to vector<8x80xf32>
    %305 = arith.addf %303, %304 : vector<8x80xf32>
    %306 = vector.extract_strided_slice %289 {offsets = [64, 22], sizes = [8, 80], strides = [1, 1]} : vector<72x110xf32> to vector<8x80xf32>
    %307 = arith.addf %305, %306 : vector<8x80xf32>
    %c0_119 = arith.constant 0 : index
    %c0_120 = arith.constant 0 : index
    %c0_121 = arith.constant 0 : index
    %c0_122 = arith.constant 0 : index
    %308 = vector.load %arg7[%c0_119, %c0_120, %c0_121, %c0_122] : memref<1x1x128x110xbf16, #tpu.memory_space<vmem>>, vector<1x1x128x110xbf16>
    %309 = vector.shape_cast %308 : vector<1x1x128x110xbf16> to vector<128x110xbf16>
    %c2_123 = arith.constant 2 : index
    %c0_124 = arith.constant 0 : index
    %c0_125 = arith.constant 0 : index
    %310 = vector.load %arg12[%c2_123, %c0_124, %c0_125] : memref<3x72x128xbf16, #tpu.memory_space<vmem>>, vector<1x72x128xbf16>
    %311 = vector.shape_cast %310 : vector<1x72x128xbf16> to vector<72x128xbf16>
    %cst_126 = arith.constant dense<0.000000e+00> : vector<72x110xf32>
    %312 = tpu.matmul %311, %309, %cst_126 {dimension_numbers = #tpu.dot_dimension_numbers<[1], [0], [0], [1], [0, 0, 1, 1], [], []>} : vector<72x128xbf16>, vector<128x110xbf16>, vector<72x110xf32> -> vector<72x110xf32>
    %313 = vector.extract_strided_slice %312 {offsets = [0, 0], sizes = [8, 80], strides = [1, 1]} : vector<72x110xf32> to vector<8x80xf32>
    %314 = arith.addf %307, %313 : vector<8x80xf32>
    %315 = vector.extract_strided_slice %312 {offsets = [8, 1], sizes = [8, 80], strides = [1, 1]} : vector<72x110xf32> to vector<8x80xf32>
    %316 = arith.addf %314, %315 : vector<8x80xf32>
    %317 = vector.extract_strided_slice %312 {offsets = [16, 2], sizes = [8, 80], strides = [1, 1]} : vector<72x110xf32> to vector<8x80xf32>
    %318 = arith.addf %316, %317 : vector<8x80xf32>
    %319 = vector.extract_strided_slice %312 {offsets = [24, 10], sizes = [8, 80], strides = [1, 1]} : vector<72x110xf32> to vector<8x80xf32>
    %320 = arith.addf %318, %319 : vector<8x80xf32>
    %321 = vector.extract_strided_slice %312 {offsets = [32, 11], sizes = [8, 80], strides = [1, 1]} : vector<72x110xf32> to vector<8x80xf32>
    %322 = arith.addf %320, %321 : vector<8x80xf32>
    %323 = vector.extract_strided_slice %312 {offsets = [40, 12], sizes = [8, 80], strides = [1, 1]} : vector<72x110xf32> to vector<8x80xf32>
    %324 = arith.addf %322, %323 : vector<8x80xf32>
    %325 = vector.extract_strided_slice %312 {offsets = [48, 20], sizes = [8, 80], strides = [1, 1]} : vector<72x110xf32> to vector<8x80xf32>
    %326 = arith.addf %324, %325 : vector<8x80xf32>
    %327 = vector.extract_strided_slice %312 {offsets = [56, 21], sizes = [8, 80], strides = [1, 1]} : vector<72x110xf32> to vector<8x80xf32>
    %328 = arith.addf %326, %327 : vector<8x80xf32>
    %329 = vector.extract_strided_slice %312 {offsets = [64, 22], sizes = [8, 80], strides = [1, 1]} : vector<72x110xf32> to vector<8x80xf32>
    %330 = arith.addf %328, %329 : vector<8x80xf32>
    %331 = vector.broadcast %0 : vector<8x1xf32> to vector<8x80xf32>
    %332 = arith.addf %330, %331 : vector<8x80xf32>
    %333 = vector.extract_strided_slice %332 {offsets = [0, 0], sizes = [4, 80], strides = [1, 1]} : vector<8x80xf32> to vector<4x80xf32>
    %334 = vector.extract_strided_slice %332 {offsets = [4, 0], sizes = [4, 80], strides = [1, 1]} : vector<8x80xf32> to vector<4x80xf32>
    %c0_127 = arith.constant 0 : index
    %c3 = arith.constant 3 : index
    %c0_128 = arith.constant 0 : index
    %c0_129 = arith.constant 0 : index
    %335 = vector.load %arg14[%c0_127, %c3, %c0_128, %c0_129] : memref<1x8x4x80xbf16, #tpu.memory_space<vmem>>, vector<1x1x4x80xbf16>
    %336 = vector.shape_cast %335 : vector<1x1x4x80xbf16> to vector<4x80xbf16>
    %337 = arith.extf %336 : vector<4x80xbf16> to vector<4x80xf32>
    %338 = vector.broadcast %2 : vector<4x1xf32> to vector<4x80xf32>
    %339 = arith.subf %337, %338 : vector<4x80xf32>
    %340 = vector.broadcast %4 : vector<4x1xf32> to vector<4x80xf32>
    %341 = arith.mulf %339, %340 : vector<4x80xf32>
    %cst_130 = arith.constant 1.000000e+00 : f32
    %342 = vector.broadcast %cst_130 : f32 to vector<4x80xf32>
    %343 = arith.addf %342, %333 : vector<4x80xf32>
    %344 = arith.mulf %341, %343 : vector<4x80xf32>
    %345 = arith.addf %344, %334 : vector<4x80xf32>
    %c0_131 = arith.constant 0 : index
    %c3_132 = arith.constant 3 : index
    %c0_133 = arith.constant 0 : index
    %c0_134 = arith.constant 0 : index
    %346 = vector.load %arg17[%c0_131, %c3_132, %c0_133, %c0_134] : memref<1x8x4x80xf32, #tpu.memory_space<vmem>>, vector<1x1x4x80xf32>
    %347 = vector.shape_cast %346 : vector<1x1x4x80xf32> to vector<4x80xf32>
    %348 = vector.shape_cast %345 : vector<4x80xf32> to vector<1x1x4x80xf32>
    tpu.vector_store %arg17[%c0_131, %c3_132, %c0_133, %c0_134], %348 {strides = array<i32>} : memref<1x8x4x80xf32, #tpu.memory_space<vmem>>, vector<1x1x4x80xf32>,
    %c0_135 = arith.constant 0 : index
    %c0_136 = arith.constant 0 : index
    %c0_137 = arith.constant 0 : index
    %c0_138 = arith.constant 0 : index
    %349 = vector.load %arg6[%c0_135, %c0_136, %c0_137, %c0_138] : memref<1x1x128x110xbf16, #tpu.memory_space<vmem>>, vector<1x1x128x110xbf16>
    %350 = vector.shape_cast %349 : vector<1x1x128x110xbf16> to vector<128x110xbf16>
    %c0_139 = arith.constant 0 : index
    %c0_140 = arith.constant 0 : index
    %c0_141 = arith.constant 0 : index
    %351 = vector.load %arg12[%c0_139, %c0_140, %c0_141] : memref<3x72x128xbf16, #tpu.memory_space<vmem>>, vector<1x72x128xbf16>
    %352 = vector.shape_cast %351 : vector<1x72x128xbf16> to vector<72x128xbf16>
    %cst_142 = arith.constant dense<0.000000e+00> : vector<72x110xf32>
    %353 = tpu.matmul %352, %350, %cst_142 {dimension_numbers = #tpu.dot_dimension_numbers<[1], [0], [0], [1], [0, 0, 1, 1], [], []>} : vector<72x128xbf16>, vector<128x110xbf16>, vector<72x110xf32> -> vector<72x110xf32>
    %354 = vector.extract_strided_slice %353 {offsets = [0, 0], sizes = [8, 80], strides = [1, 1]} : vector<72x110xf32> to vector<8x80xf32>
    %355 = vector.extract_strided_slice %353 {offsets = [8, 1], sizes = [8, 80], strides = [1, 1]} : vector<72x110xf32> to vector<8x80xf32>
    %356 = arith.addf %354, %355 : vector<8x80xf32>
    %357 = vector.extract_strided_slice %353 {offsets = [16, 2], sizes = [8, 80], strides = [1, 1]} : vector<72x110xf32> to vector<8x80xf32>
    %358 = arith.addf %356, %357 : vector<8x80xf32>
    %359 = vector.extract_strided_slice %353 {offsets = [24, 10], sizes = [8, 80], strides = [1, 1]} : vector<72x110xf32> to vector<8x80xf32>
    %360 = arith.addf %358, %359 : vector<8x80xf32>
    %361 = vector.extract_strided_slice %353 {offsets = [32, 11], sizes = [8, 80], strides = [1, 1]} : vector<72x110xf32> to vector<8x80xf32>
    %362 = arith.addf %360, %361 : vector<8x80xf32>
    %363 = vector.extract_strided_slice %353 {offsets = [40, 12], sizes = [8, 80], strides = [1, 1]} : vector<72x110xf32> to vector<8x80xf32>
    %364 = arith.addf %362, %363 : vector<8x80xf32>
    %365 = vector.extract_strided_slice %353 {offsets = [48, 20], sizes = [8, 80], strides = [1, 1]} : vector<72x110xf32> to vector<8x80xf32>
    %366 = arith.addf %364, %365 : vector<8x80xf32>
    %367 = vector.extract_strided_slice %353 {offsets = [56, 21], sizes = [8, 80], strides = [1, 1]} : vector<72x110xf32> to vector<8x80xf32>
    %368 = arith.addf %366, %367 : vector<8x80xf32>
    %369 = vector.extract_strided_slice %353 {offsets = [64, 22], sizes = [8, 80], strides = [1, 1]} : vector<72x110xf32> to vector<8x80xf32>
    %370 = arith.addf %368, %369 : vector<8x80xf32>
    %c0_143 = arith.constant 0 : index
    %c0_144 = arith.constant 0 : index
    %c0_145 = arith.constant 0 : index
    %c0_146 = arith.constant 0 : index
    %371 = vector.load %arg7[%c0_143, %c0_144, %c0_145, %c0_146] : memref<1x1x128x110xbf16, #tpu.memory_space<vmem>>, vector<1x1x128x110xbf16>
    %372 = vector.shape_cast %371 : vector<1x1x128x110xbf16> to vector<128x110xbf16>
    %c1_147 = arith.constant 1 : index
    %c0_148 = arith.constant 0 : index
    %c0_149 = arith.constant 0 : index
    %373 = vector.load %arg12[%c1_147, %c0_148, %c0_149] : memref<3x72x128xbf16, #tpu.memory_space<vmem>>, vector<1x72x128xbf16>
    %374 = vector.shape_cast %373 : vector<1x72x128xbf16> to vector<72x128xbf16>
    %cst_150 = arith.constant dense<0.000000e+00> : vector<72x110xf32>
    %375 = tpu.matmul %374, %372, %cst_150 {dimension_numbers = #tpu.dot_dimension_numbers<[1], [0], [0], [1], [0, 0, 1, 1], [], []>} : vector<72x128xbf16>, vector<128x110xbf16>, vector<72x110xf32> -> vector<72x110xf32>
    %376 = vector.extract_strided_slice %375 {offsets = [0, 0], sizes = [8, 80], strides = [1, 1]} : vector<72x110xf32> to vector<8x80xf32>
    %377 = arith.addf %370, %376 : vector<8x80xf32>
    %378 = vector.extract_strided_slice %375 {offsets = [8, 1], sizes = [8, 80], strides = [1, 1]} : vector<72x110xf32> to vector<8x80xf32>
    %379 = arith.addf %377, %378 : vector<8x80xf32>
    %380 = vector.extract_strided_slice %375 {offsets = [16, 2], sizes = [8, 80], strides = [1, 1]} : vector<72x110xf32> to vector<8x80xf32>
    %381 = arith.addf %379, %380 : vector<8x80xf32>
    %382 = vector.extract_strided_slice %375 {offsets = [24, 10], sizes = [8, 80], strides = [1, 1]} : vector<72x110xf32> to vector<8x80xf32>
    %383 = arith.addf %381, %382 : vector<8x80xf32>
    %384 = vector.extract_strided_slice %375 {offsets = [32, 11], sizes = [8, 80], strides = [1, 1]} : vector<72x110xf32> to vector<8x80xf32>
    %385 = arith.addf %383, %384 : vector<8x80xf32>
    %386 = vector.extract_strided_slice %375 {offsets = [40, 12], sizes = [8, 80], strides = [1, 1]} : vector<72x110xf32> to vector<8x80xf32>
    %387 = arith.addf %385, %386 : vector<8x80xf32>
    %388 = vector.extract_strided_slice %375 {offsets = [48, 20], sizes = [8, 80], strides = [1, 1]} : vector<72x110xf32> to vector<8x80xf32>
    %389 = arith.addf %387, %388 : vector<8x80xf32>
    %390 = vector.extract_strided_slice %375 {offsets = [56, 21], sizes = [8, 80], strides = [1, 1]} : vector<72x110xf32> to vector<8x80xf32>
    %391 = arith.addf %389, %390 : vector<8x80xf32>
    %392 = vector.extract_strided_slice %375 {offsets = [64, 22], sizes = [8, 80], strides = [1, 1]} : vector<72x110xf32> to vector<8x80xf32>
    %393 = arith.addf %391, %392 : vector<8x80xf32>
    %c0_151 = arith.constant 0 : index
    %c0_152 = arith.constant 0 : index
    %c0_153 = arith.constant 0 : index
    %c0_154 = arith.constant 0 : index
    %394 = vector.load %arg8[%c0_151, %c0_152, %c0_153, %c0_154] : memref<1x1x128x110xbf16, #tpu.memory_space<vmem>>, vector<1x1x128x110xbf16>
    %395 = vector.shape_cast %394 : vector<1x1x128x110xbf16> to vector<128x110xbf16>
    %c2_155 = arith.constant 2 : index
    %c0_156 = arith.constant 0 : index
    %c0_157 = arith.constant 0 : index
    %396 = vector.load %arg12[%c2_155, %c0_156, %c0_157] : memref<3x72x128xbf16, #tpu.memory_space<vmem>>, vector<1x72x128xbf16>
    %397 = vector.shape_cast %396 : vector<1x72x128xbf16> to vector<72x128xbf16>
    %cst_158 = arith.constant dense<0.000000e+00> : vector<72x110xf32>
    %398 = tpu.matmul %397, %395, %cst_158 {dimension_numbers = #tpu.dot_dimension_numbers<[1], [0], [0], [1], [0, 0, 1, 1], [], []>} : vector<72x128xbf16>, vector<128x110xbf16>, vector<72x110xf32> -> vector<72x110xf32>
    %399 = vector.extract_strided_slice %398 {offsets = [0, 0], sizes = [8, 80], strides = [1, 1]} : vector<72x110xf32> to vector<8x80xf32>
    %400 = arith.addf %393, %399 : vector<8x80xf32>
    %401 = vector.extract_strided_slice %398 {offsets = [8, 1], sizes = [8, 80], strides = [1, 1]} : vector<72x110xf32> to vector<8x80xf32>
    %402 = arith.addf %400, %401 : vector<8x80xf32>
    %403 = vector.extract_strided_slice %398 {offsets = [16, 2], sizes = [8, 80], strides = [1, 1]} : vector<72x110xf32> to vector<8x80xf32>
    %404 = arith.addf %402, %403 : vector<8x80xf32>
    %405 = vector.extract_strided_slice %398 {offsets = [24, 10], sizes = [8, 80], strides = [1, 1]} : vector<72x110xf32> to vector<8x80xf32>
    %406 = arith.addf %404, %405 : vector<8x80xf32>
    %407 = vector.extract_strided_slice %398 {offsets = [32, 11], sizes = [8, 80], strides = [1, 1]} : vector<72x110xf32> to vector<8x80xf32>
    %408 = arith.addf %406, %407 : vector<8x80xf32>
    %409 = vector.extract_strided_slice %398 {offsets = [40, 12], sizes = [8, 80], strides = [1, 1]} : vector<72x110xf32> to vector<8x80xf32>
    %410 = arith.addf %408, %409 : vector<8x80xf32>
    %411 = vector.extract_strided_slice %398 {offsets = [48, 20], sizes = [8, 80], strides = [1, 1]} : vector<72x110xf32> to vector<8x80xf32>
    %412 = arith.addf %410, %411 : vector<8x80xf32>
    %413 = vector.extract_strided_slice %398 {offsets = [56, 21], sizes = [8, 80], strides = [1, 1]} : vector<72x110xf32> to vector<8x80xf32>
    %414 = arith.addf %412, %413 : vector<8x80xf32>
    %415 = vector.extract_strided_slice %398 {offsets = [64, 22], sizes = [8, 80], strides = [1, 1]} : vector<72x110xf32> to vector<8x80xf32>
    %416 = arith.addf %414, %415 : vector<8x80xf32>
    %417 = vector.broadcast %0 : vector<8x1xf32> to vector<8x80xf32>
    %418 = arith.addf %416, %417 : vector<8x80xf32>
    %419 = vector.extract_strided_slice %418 {offsets = [0, 0], sizes = [4, 80], strides = [1, 1]} : vector<8x80xf32> to vector<4x80xf32>
    %420 = vector.extract_strided_slice %418 {offsets = [4, 0], sizes = [4, 80], strides = [1, 1]} : vector<8x80xf32> to vector<4x80xf32>
    %c0_159 = arith.constant 0 : index
    %c4 = arith.constant 4 : index
    %c0_160 = arith.constant 0 : index
    %c0_161 = arith.constant 0 : index
    %421 = vector.load %arg14[%c0_159, %c4, %c0_160, %c0_161] : memref<1x8x4x80xbf16, #tpu.memory_space<vmem>>, vector<1x1x4x80xbf16>
    %422 = vector.shape_cast %421 : vector<1x1x4x80xbf16> to vector<4x80xbf16>
    %423 = arith.extf %422 : vector<4x80xbf16> to vector<4x80xf32>
    %424 = vector.broadcast %2 : vector<4x1xf32> to vector<4x80xf32>
    %425 = arith.subf %423, %424 : vector<4x80xf32>
    %426 = vector.broadcast %4 : vector<4x1xf32> to vector<4x80xf32>
    %427 = arith.mulf %425, %426 : vector<4x80xf32>
    %cst_162 = arith.constant 1.000000e+00 : f32
    %428 = vector.broadcast %cst_162 : f32 to vector<4x80xf32>
    %429 = arith.addf %428, %419 : vector<4x80xf32>
    %430 = arith.mulf %427, %429 : vector<4x80xf32>
    %431 = arith.addf %430, %420 : vector<4x80xf32>
    %c0_163 = arith.constant 0 : index
    %c4_164 = arith.constant 4 : index
    %c0_165 = arith.constant 0 : index
    %c0_166 = arith.constant 0 : index
    %432 = vector.load %arg17[%c0_163, %c4_164, %c0_165, %c0_166] : memref<1x8x4x80xf32, #tpu.memory_space<vmem>>, vector<1x1x4x80xf32>
    %433 = vector.shape_cast %432 : vector<1x1x4x80xf32> to vector<4x80xf32>
    %434 = vector.shape_cast %431 : vector<4x80xf32> to vector<1x1x4x80xf32>
    tpu.vector_store %arg17[%c0_163, %c4_164, %c0_165, %c0_166], %434 {strides = array<i32>} : memref<1x8x4x80xf32, #tpu.memory_space<vmem>>, vector<1x1x4x80xf32>,
    %c0_167 = arith.constant 0 : index
    %c0_168 = arith.constant 0 : index
    %c0_169 = arith.constant 0 : index
    %c0_170 = arith.constant 0 : index
    %435 = vector.load %arg7[%c0_167, %c0_168, %c0_169, %c0_170] : memref<1x1x128x110xbf16, #tpu.memory_space<vmem>>, vector<1x1x128x110xbf16>
    %436 = vector.shape_cast %435 : vector<1x1x128x110xbf16> to vector<128x110xbf16>
    %c0_171 = arith.constant 0 : index
    %c0_172 = arith.constant 0 : index
    %c0_173 = arith.constant 0 : index
    %437 = vector.load %arg12[%c0_171, %c0_172, %c0_173] : memref<3x72x128xbf16, #tpu.memory_space<vmem>>, vector<1x72x128xbf16>
    %438 = vector.shape_cast %437 : vector<1x72x128xbf16> to vector<72x128xbf16>
    %cst_174 = arith.constant dense<0.000000e+00> : vector<72x110xf32>
    %439 = tpu.matmul %438, %436, %cst_174 {dimension_numbers = #tpu.dot_dimension_numbers<[1], [0], [0], [1], [0, 0, 1, 1], [], []>} : vector<72x128xbf16>, vector<128x110xbf16>, vector<72x110xf32> -> vector<72x110xf32>
    %440 = vector.extract_strided_slice %439 {offsets = [0, 0], sizes = [8, 80], strides = [1, 1]} : vector<72x110xf32> to vector<8x80xf32>
    %441 = vector.extract_strided_slice %439 {offsets = [8, 1], sizes = [8, 80], strides = [1, 1]} : vector<72x110xf32> to vector<8x80xf32>
    %442 = arith.addf %440, %441 : vector<8x80xf32>
    %443 = vector.extract_strided_slice %439 {offsets = [16, 2], sizes = [8, 80], strides = [1, 1]} : vector<72x110xf32> to vector<8x80xf32>
    %444 = arith.addf %442, %443 : vector<8x80xf32>
    %445 = vector.extract_strided_slice %439 {offsets = [24, 10], sizes = [8, 80], strides = [1, 1]} : vector<72x110xf32> to vector<8x80xf32>
    %446 = arith.addf %444, %445 : vector<8x80xf32>
    %447 = vector.extract_strided_slice %439 {offsets = [32, 11], sizes = [8, 80], strides = [1, 1]} : vector<72x110xf32> to vector<8x80xf32>
    %448 = arith.addf %446, %447 : vector<8x80xf32>
    %449 = vector.extract_strided_slice %439 {offsets = [40, 12], sizes = [8, 80], strides = [1, 1]} : vector<72x110xf32> to vector<8x80xf32>
    %450 = arith.addf %448, %449 : vector<8x80xf32>
    %451 = vector.extract_strided_slice %439 {offsets = [48, 20], sizes = [8, 80], strides = [1, 1]} : vector<72x110xf32> to vector<8x80xf32>
    %452 = arith.addf %450, %451 : vector<8x80xf32>
    %453 = vector.extract_strided_slice %439 {offsets = [56, 21], sizes = [8, 80], strides = [1, 1]} : vector<72x110xf32> to vector<8x80xf32>
    %454 = arith.addf %452, %453 : vector<8x80xf32>
    %455 = vector.extract_strided_slice %439 {offsets = [64, 22], sizes = [8, 80], strides = [1, 1]} : vector<72x110xf32> to vector<8x80xf32>
    %456 = arith.addf %454, %455 : vector<8x80xf32>
    %c0_175 = arith.constant 0 : index
    %c0_176 = arith.constant 0 : index
    %c0_177 = arith.constant 0 : index
    %c0_178 = arith.constant 0 : index
    %457 = vector.load %arg8[%c0_175, %c0_176, %c0_177, %c0_178] : memref<1x1x128x110xbf16, #tpu.memory_space<vmem>>, vector<1x1x128x110xbf16>
    %458 = vector.shape_cast %457 : vector<1x1x128x110xbf16> to vector<128x110xbf16>
    %c1_179 = arith.constant 1 : index
    %c0_180 = arith.constant 0 : index
    %c0_181 = arith.constant 0 : index
    %459 = vector.load %arg12[%c1_179, %c0_180, %c0_181] : memref<3x72x128xbf16, #tpu.memory_space<vmem>>, vector<1x72x128xbf16>
    %460 = vector.shape_cast %459 : vector<1x72x128xbf16> to vector<72x128xbf16>
    %cst_182 = arith.constant dense<0.000000e+00> : vector<72x110xf32>
    %461 = tpu.matmul %460, %458, %cst_182 {dimension_numbers = #tpu.dot_dimension_numbers<[1], [0], [0], [1], [0, 0, 1, 1], [], []>} : vector<72x128xbf16>, vector<128x110xbf16>, vector<72x110xf32> -> vector<72x110xf32>
    %462 = vector.extract_strided_slice %461 {offsets = [0, 0], sizes = [8, 80], strides = [1, 1]} : vector<72x110xf32> to vector<8x80xf32>
    %463 = arith.addf %456, %462 : vector<8x80xf32>
    %464 = vector.extract_strided_slice %461 {offsets = [8, 1], sizes = [8, 80], strides = [1, 1]} : vector<72x110xf32> to vector<8x80xf32>
    %465 = arith.addf %463, %464 : vector<8x80xf32>
    %466 = vector.extract_strided_slice %461 {offsets = [16, 2], sizes = [8, 80], strides = [1, 1]} : vector<72x110xf32> to vector<8x80xf32>
    %467 = arith.addf %465, %466 : vector<8x80xf32>
    %468 = vector.extract_strided_slice %461 {offsets = [24, 10], sizes = [8, 80], strides = [1, 1]} : vector<72x110xf32> to vector<8x80xf32>
    %469 = arith.addf %467, %468 : vector<8x80xf32>
    %470 = vector.extract_strided_slice %461 {offsets = [32, 11], sizes = [8, 80], strides = [1, 1]} : vector<72x110xf32> to vector<8x80xf32>
    %471 = arith.addf %469, %470 : vector<8x80xf32>
    %472 = vector.extract_strided_slice %461 {offsets = [40, 12], sizes = [8, 80], strides = [1, 1]} : vector<72x110xf32> to vector<8x80xf32>
    %473 = arith.addf %471, %472 : vector<8x80xf32>
    %474 = vector.extract_strided_slice %461 {offsets = [48, 20], sizes = [8, 80], strides = [1, 1]} : vector<72x110xf32> to vector<8x80xf32>
    %475 = arith.addf %473, %474 : vector<8x80xf32>
    %476 = vector.extract_strided_slice %461 {offsets = [56, 21], sizes = [8, 80], strides = [1, 1]} : vector<72x110xf32> to vector<8x80xf32>
    %477 = arith.addf %475, %476 : vector<8x80xf32>
    %478 = vector.extract_strided_slice %461 {offsets = [64, 22], sizes = [8, 80], strides = [1, 1]} : vector<72x110xf32> to vector<8x80xf32>
    %479 = arith.addf %477, %478 : vector<8x80xf32>
    %c0_183 = arith.constant 0 : index
    %c0_184 = arith.constant 0 : index
    %c0_185 = arith.constant 0 : index
    %c0_186 = arith.constant 0 : index
    %480 = vector.load %arg9[%c0_183, %c0_184, %c0_185, %c0_186] : memref<1x1x128x110xbf16, #tpu.memory_space<vmem>>, vector<1x1x128x110xbf16>
    %481 = vector.shape_cast %480 : vector<1x1x128x110xbf16> to vector<128x110xbf16>
    %c2_187 = arith.constant 2 : index
    %c0_188 = arith.constant 0 : index
    %c0_189 = arith.constant 0 : index
    %482 = vector.load %arg12[%c2_187, %c0_188, %c0_189] : memref<3x72x128xbf16, #tpu.memory_space<vmem>>, vector<1x72x128xbf16>
    %483 = vector.shape_cast %482 : vector<1x72x128xbf16> to vector<72x128xbf16>
    %cst_190 = arith.constant dense<0.000000e+00> : vector<72x110xf32>
    %484 = tpu.matmul %483, %481, %cst_190 {dimension_numbers = #tpu.dot_dimension_numbers<[1], [0], [0], [1], [0, 0, 1, 1], [], []>} : vector<72x128xbf16>, vector<128x110xbf16>, vector<72x110xf32> -> vector<72x110xf32>
    %485 = vector.extract_strided_slice %484 {offsets = [0, 0], sizes = [8, 80], strides = [1, 1]} : vector<72x110xf32> to vector<8x80xf32>
    %486 = arith.addf %479, %485 : vector<8x80xf32>
    %487 = vector.extract_strided_slice %484 {offsets = [8, 1], sizes = [8, 80], strides = [1, 1]} : vector<72x110xf32> to vector<8x80xf32>
    %488 = arith.addf %486, %487 : vector<8x80xf32>
    %489 = vector.extract_strided_slice %484 {offsets = [16, 2], sizes = [8, 80], strides = [1, 1]} : vector<72x110xf32> to vector<8x80xf32>
    %490 = arith.addf %488, %489 : vector<8x80xf32>
    %491 = vector.extract_strided_slice %484 {offsets = [24, 10], sizes = [8, 80], strides = [1, 1]} : vector<72x110xf32> to vector<8x80xf32>
    %492 = arith.addf %490, %491 : vector<8x80xf32>
    %493 = vector.extract_strided_slice %484 {offsets = [32, 11], sizes = [8, 80], strides = [1, 1]} : vector<72x110xf32> to vector<8x80xf32>
    %494 = arith.addf %492, %493 : vector<8x80xf32>
    %495 = vector.extract_strided_slice %484 {offsets = [40, 12], sizes = [8, 80], strides = [1, 1]} : vector<72x110xf32> to vector<8x80xf32>
    %496 = arith.addf %494, %495 : vector<8x80xf32>
    %497 = vector.extract_strided_slice %484 {offsets = [48, 20], sizes = [8, 80], strides = [1, 1]} : vector<72x110xf32> to vector<8x80xf32>
    %498 = arith.addf %496, %497 : vector<8x80xf32>
    %499 = vector.extract_strided_slice %484 {offsets = [56, 21], sizes = [8, 80], strides = [1, 1]} : vector<72x110xf32> to vector<8x80xf32>
    %500 = arith.addf %498, %499 : vector<8x80xf32>
    %501 = vector.extract_strided_slice %484 {offsets = [64, 22], sizes = [8, 80], strides = [1, 1]} : vector<72x110xf32> to vector<8x80xf32>
    %502 = arith.addf %500, %501 : vector<8x80xf32>
    %503 = vector.broadcast %0 : vector<8x1xf32> to vector<8x80xf32>
    %504 = arith.addf %502, %503 : vector<8x80xf32>
    %505 = vector.extract_strided_slice %504 {offsets = [0, 0], sizes = [4, 80], strides = [1, 1]} : vector<8x80xf32> to vector<4x80xf32>
    %506 = vector.extract_strided_slice %504 {offsets = [4, 0], sizes = [4, 80], strides = [1, 1]} : vector<8x80xf32> to vector<4x80xf32>
    %c0_191 = arith.constant 0 : index
    %c5 = arith.constant 5 : index
    %c0_192 = arith.constant 0 : index
    %c0_193 = arith.constant 0 : index
    %507 = vector.load %arg14[%c0_191, %c5, %c0_192, %c0_193] : memref<1x8x4x80xbf16, #tpu.memory_space<vmem>>, vector<1x1x4x80xbf16>
    %508 = vector.shape_cast %507 : vector<1x1x4x80xbf16> to vector<4x80xbf16>
    %509 = arith.extf %508 : vector<4x80xbf16> to vector<4x80xf32>
    %510 = vector.broadcast %2 : vector<4x1xf32> to vector<4x80xf32>
    %511 = arith.subf %509, %510 : vector<4x80xf32>
    %512 = vector.broadcast %4 : vector<4x1xf32> to vector<4x80xf32>
    %513 = arith.mulf %511, %512 : vector<4x80xf32>
    %cst_194 = arith.constant 1.000000e+00 : f32
    %514 = vector.broadcast %cst_194 : f32 to vector<4x80xf32>
    %515 = arith.addf %514, %505 : vector<4x80xf32>
    %516 = arith.mulf %513, %515 : vector<4x80xf32>
    %517 = arith.addf %516, %506 : vector<4x80xf32>
    %c0_195 = arith.constant 0 : index
    %c5_196 = arith.constant 5 : index
    %c0_197 = arith.constant 0 : index
    %c0_198 = arith.constant 0 : index
    %518 = vector.load %arg17[%c0_195, %c5_196, %c0_197, %c0_198] : memref<1x8x4x80xf32, #tpu.memory_space<vmem>>, vector<1x1x4x80xf32>
    %519 = vector.shape_cast %518 : vector<1x1x4x80xf32> to vector<4x80xf32>
    %520 = vector.shape_cast %517 : vector<4x80xf32> to vector<1x1x4x80xf32>
    tpu.vector_store %arg17[%c0_195, %c5_196, %c0_197, %c0_198], %520 {strides = array<i32>} : memref<1x8x4x80xf32, #tpu.memory_space<vmem>>, vector<1x1x4x80xf32>,
    %c0_199 = arith.constant 0 : index
    %c0_200 = arith.constant 0 : index
    %c0_201 = arith.constant 0 : index
    %c0_202 = arith.constant 0 : index
    %521 = vector.load %arg8[%c0_199, %c0_200, %c0_201, %c0_202] : memref<1x1x128x110xbf16, #tpu.memory_space<vmem>>, vector<1x1x128x110xbf16>
    %522 = vector.shape_cast %521 : vector<1x1x128x110xbf16> to vector<128x110xbf16>
    %c0_203 = arith.constant 0 : index
    %c0_204 = arith.constant 0 : index
    %c0_205 = arith.constant 0 : index
    %523 = vector.load %arg12[%c0_203, %c0_204, %c0_205] : memref<3x72x128xbf16, #tpu.memory_space<vmem>>, vector<1x72x128xbf16>
    %524 = vector.shape_cast %523 : vector<1x72x128xbf16> to vector<72x128xbf16>
    %cst_206 = arith.constant dense<0.000000e+00> : vector<72x110xf32>
    %525 = tpu.matmul %524, %522, %cst_206 {dimension_numbers = #tpu.dot_dimension_numbers<[1], [0], [0], [1], [0, 0, 1, 1], [], []>} : vector<72x128xbf16>, vector<128x110xbf16>, vector<72x110xf32> -> vector<72x110xf32>
    %526 = vector.extract_strided_slice %525 {offsets = [0, 0], sizes = [8, 80], strides = [1, 1]} : vector<72x110xf32> to vector<8x80xf32>
    %527 = vector.extract_strided_slice %525 {offsets = [8, 1], sizes = [8, 80], strides = [1, 1]} : vector<72x110xf32> to vector<8x80xf32>
    %528 = arith.addf %526, %527 : vector<8x80xf32>
    %529 = vector.extract_strided_slice %525 {offsets = [16, 2], sizes = [8, 80], strides = [1, 1]} : vector<72x110xf32> to vector<8x80xf32>
    %530 = arith.addf %528, %529 : vector<8x80xf32>
    %531 = vector.extract_strided_slice %525 {offsets = [24, 10], sizes = [8, 80], strides = [1, 1]} : vector<72x110xf32> to vector<8x80xf32>
    %532 = arith.addf %530, %531 : vector<8x80xf32>
    %533 = vector.extract_strided_slice %525 {offsets = [32, 11], sizes = [8, 80], strides = [1, 1]} : vector<72x110xf32> to vector<8x80xf32>
    %534 = arith.addf %532, %533 : vector<8x80xf32>
    %535 = vector.extract_strided_slice %525 {offsets = [40, 12], sizes = [8, 80], strides = [1, 1]} : vector<72x110xf32> to vector<8x80xf32>
    %536 = arith.addf %534, %535 : vector<8x80xf32>
    %537 = vector.extract_strided_slice %525 {offsets = [48, 20], sizes = [8, 80], strides = [1, 1]} : vector<72x110xf32> to vector<8x80xf32>
    %538 = arith.addf %536, %537 : vector<8x80xf32>
    %539 = vector.extract_strided_slice %525 {offsets = [56, 21], sizes = [8, 80], strides = [1, 1]} : vector<72x110xf32> to vector<8x80xf32>
    %540 = arith.addf %538, %539 : vector<8x80xf32>
    %541 = vector.extract_strided_slice %525 {offsets = [64, 22], sizes = [8, 80], strides = [1, 1]} : vector<72x110xf32> to vector<8x80xf32>
    %542 = arith.addf %540, %541 : vector<8x80xf32>
    %c0_207 = arith.constant 0 : index
    %c0_208 = arith.constant 0 : index
    %c0_209 = arith.constant 0 : index
    %c0_210 = arith.constant 0 : index
    %543 = vector.load %arg9[%c0_207, %c0_208, %c0_209, %c0_210] : memref<1x1x128x110xbf16, #tpu.memory_space<vmem>>, vector<1x1x128x110xbf16>
    %544 = vector.shape_cast %543 : vector<1x1x128x110xbf16> to vector<128x110xbf16>
    %c1_211 = arith.constant 1 : index
    %c0_212 = arith.constant 0 : index
    %c0_213 = arith.constant 0 : index
    %545 = vector.load %arg12[%c1_211, %c0_212, %c0_213] : memref<3x72x128xbf16, #tpu.memory_space<vmem>>, vector<1x72x128xbf16>
    %546 = vector.shape_cast %545 : vector<1x72x128xbf16> to vector<72x128xbf16>
    %cst_214 = arith.constant dense<0.000000e+00> : vector<72x110xf32>
    %547 = tpu.matmul %546, %544, %cst_214 {dimension_numbers = #tpu.dot_dimension_numbers<[1], [0], [0], [1], [0, 0, 1, 1], [], []>} : vector<72x128xbf16>, vector<128x110xbf16>, vector<72x110xf32> -> vector<72x110xf32>
    %548 = vector.extract_strided_slice %547 {offsets = [0, 0], sizes = [8, 80], strides = [1, 1]} : vector<72x110xf32> to vector<8x80xf32>
    %549 = arith.addf %542, %548 : vector<8x80xf32>
    %550 = vector.extract_strided_slice %547 {offsets = [8, 1], sizes = [8, 80], strides = [1, 1]} : vector<72x110xf32> to vector<8x80xf32>
    %551 = arith.addf %549, %550 : vector<8x80xf32>
    %552 = vector.extract_strided_slice %547 {offsets = [16, 2], sizes = [8, 80], strides = [1, 1]} : vector<72x110xf32> to vector<8x80xf32>
    %553 = arith.addf %551, %552 : vector<8x80xf32>
    %554 = vector.extract_strided_slice %547 {offsets = [24, 10], sizes = [8, 80], strides = [1, 1]} : vector<72x110xf32> to vector<8x80xf32>
    %555 = arith.addf %553, %554 : vector<8x80xf32>
    %556 = vector.extract_strided_slice %547 {offsets = [32, 11], sizes = [8, 80], strides = [1, 1]} : vector<72x110xf32> to vector<8x80xf32>
    %557 = arith.addf %555, %556 : vector<8x80xf32>
    %558 = vector.extract_strided_slice %547 {offsets = [40, 12], sizes = [8, 80], strides = [1, 1]} : vector<72x110xf32> to vector<8x80xf32>
    %559 = arith.addf %557, %558 : vector<8x80xf32>
    %560 = vector.extract_strided_slice %547 {offsets = [48, 20], sizes = [8, 80], strides = [1, 1]} : vector<72x110xf32> to vector<8x80xf32>
    %561 = arith.addf %559, %560 : vector<8x80xf32>
    %562 = vector.extract_strided_slice %547 {offsets = [56, 21], sizes = [8, 80], strides = [1, 1]} : vector<72x110xf32> to vector<8x80xf32>
    %563 = arith.addf %561, %562 : vector<8x80xf32>
    %564 = vector.extract_strided_slice %547 {offsets = [64, 22], sizes = [8, 80], strides = [1, 1]} : vector<72x110xf32> to vector<8x80xf32>
    %565 = arith.addf %563, %564 : vector<8x80xf32>
    %c0_215 = arith.constant 0 : index
    %c0_216 = arith.constant 0 : index
    %c0_217 = arith.constant 0 : index
    %c0_218 = arith.constant 0 : index
    %566 = vector.load %arg10[%c0_215, %c0_216, %c0_217, %c0_218] : memref<1x1x128x110xbf16, #tpu.memory_space<vmem>>, vector<1x1x128x110xbf16>
    %567 = vector.shape_cast %566 : vector<1x1x128x110xbf16> to vector<128x110xbf16>
    %c2_219 = arith.constant 2 : index
    %c0_220 = arith.constant 0 : index
    %c0_221 = arith.constant 0 : index
    %568 = vector.load %arg12[%c2_219, %c0_220, %c0_221] : memref<3x72x128xbf16, #tpu.memory_space<vmem>>, vector<1x72x128xbf16>
    %569 = vector.shape_cast %568 : vector<1x72x128xbf16> to vector<72x128xbf16>
    %cst_222 = arith.constant dense<0.000000e+00> : vector<72x110xf32>
    %570 = tpu.matmul %569, %567, %cst_222 {dimension_numbers = #tpu.dot_dimension_numbers<[1], [0], [0], [1], [0, 0, 1, 1], [], []>} : vector<72x128xbf16>, vector<128x110xbf16>, vector<72x110xf32> -> vector<72x110xf32>
    %571 = vector.extract_strided_slice %570 {offsets = [0, 0], sizes = [8, 80], strides = [1, 1]} : vector<72x110xf32> to vector<8x80xf32>
    %572 = arith.addf %565, %571 : vector<8x80xf32>
    %573 = vector.extract_strided_slice %570 {offsets = [8, 1], sizes = [8, 80], strides = [1, 1]} : vector<72x110xf32> to vector<8x80xf32>
    %574 = arith.addf %572, %573 : vector<8x80xf32>
    %575 = vector.extract_strided_slice %570 {offsets = [16, 2], sizes = [8, 80], strides = [1, 1]} : vector<72x110xf32> to vector<8x80xf32>
    %576 = arith.addf %574, %575 : vector<8x80xf32>
    %577 = vector.extract_strided_slice %570 {offsets = [24, 10], sizes = [8, 80], strides = [1, 1]} : vector<72x110xf32> to vector<8x80xf32>
    %578 = arith.addf %576, %577 : vector<8x80xf32>
    %579 = vector.extract_strided_slice %570 {offsets = [32, 11], sizes = [8, 80], strides = [1, 1]} : vector<72x110xf32> to vector<8x80xf32>
    %580 = arith.addf %578, %579 : vector<8x80xf32>
    %581 = vector.extract_strided_slice %570 {offsets = [40, 12], sizes = [8, 80], strides = [1, 1]} : vector<72x110xf32> to vector<8x80xf32>
    %582 = arith.addf %580, %581 : vector<8x80xf32>
    %583 = vector.extract_strided_slice %570 {offsets = [48, 20], sizes = [8, 80], strides = [1, 1]} : vector<72x110xf32> to vector<8x80xf32>
    %584 = arith.addf %582, %583 : vector<8x80xf32>
    %585 = vector.extract_strided_slice %570 {offsets = [56, 21], sizes = [8, 80], strides = [1, 1]} : vector<72x110xf32> to vector<8x80xf32>
    %586 = arith.addf %584, %585 : vector<8x80xf32>
    %587 = vector.extract_strided_slice %570 {offsets = [64, 22], sizes = [8, 80], strides = [1, 1]} : vector<72x110xf32> to vector<8x80xf32>
    %588 = arith.addf %586, %587 : vector<8x80xf32>
    %589 = vector.broadcast %0 : vector<8x1xf32> to vector<8x80xf32>
    %590 = arith.addf %588, %589 : vector<8x80xf32>
    %591 = vector.extract_strided_slice %590 {offsets = [0, 0], sizes = [4, 80], strides = [1, 1]} : vector<8x80xf32> to vector<4x80xf32>
    %592 = vector.extract_strided_slice %590 {offsets = [4, 0], sizes = [4, 80], strides = [1, 1]} : vector<8x80xf32> to vector<4x80xf32>
    %c0_223 = arith.constant 0 : index
    %c6 = arith.constant 6 : index
    %c0_224 = arith.constant 0 : index
    %c0_225 = arith.constant 0 : index
    %593 = vector.load %arg14[%c0_223, %c6, %c0_224, %c0_225] : memref<1x8x4x80xbf16, #tpu.memory_space<vmem>>, vector<1x1x4x80xbf16>
    %594 = vector.shape_cast %593 : vector<1x1x4x80xbf16> to vector<4x80xbf16>
    %595 = arith.extf %594 : vector<4x80xbf16> to vector<4x80xf32>
    %596 = vector.broadcast %2 : vector<4x1xf32> to vector<4x80xf32>
    %597 = arith.subf %595, %596 : vector<4x80xf32>
    %598 = vector.broadcast %4 : vector<4x1xf32> to vector<4x80xf32>
    %599 = arith.mulf %597, %598 : vector<4x80xf32>
    %cst_226 = arith.constant 1.000000e+00 : f32
    %600 = vector.broadcast %cst_226 : f32 to vector<4x80xf32>
    %601 = arith.addf %600, %591 : vector<4x80xf32>
    %602 = arith.mulf %599, %601 : vector<4x80xf32>
    %603 = arith.addf %602, %592 : vector<4x80xf32>
    %c0_227 = arith.constant 0 : index
    %c6_228 = arith.constant 6 : index
    %c0_229 = arith.constant 0 : index
    %c0_230 = arith.constant 0 : index
    %604 = vector.load %arg17[%c0_227, %c6_228, %c0_229, %c0_230] : memref<1x8x4x80xf32, #tpu.memory_space<vmem>>, vector<1x1x4x80xf32>
    %605 = vector.shape_cast %604 : vector<1x1x4x80xf32> to vector<4x80xf32>
    %606 = vector.shape_cast %603 : vector<4x80xf32> to vector<1x1x4x80xf32>
    tpu.vector_store %arg17[%c0_227, %c6_228, %c0_229, %c0_230], %606 {strides = array<i32>} : memref<1x8x4x80xf32, #tpu.memory_space<vmem>>, vector<1x1x4x80xf32>,
    %c0_231 = arith.constant 0 : index
    %c0_232 = arith.constant 0 : index
    %c0_233 = arith.constant 0 : index
    %c0_234 = arith.constant 0 : index
    %607 = vector.load %arg9[%c0_231, %c0_232, %c0_233, %c0_234] : memref<1x1x128x110xbf16, #tpu.memory_space<vmem>>, vector<1x1x128x110xbf16>
    %608 = vector.shape_cast %607 : vector<1x1x128x110xbf16> to vector<128x110xbf16>
    %c0_235 = arith.constant 0 : index
    %c0_236 = arith.constant 0 : index
    %c0_237 = arith.constant 0 : index
    %609 = vector.load %arg12[%c0_235, %c0_236, %c0_237] : memref<3x72x128xbf16, #tpu.memory_space<vmem>>, vector<1x72x128xbf16>
    %610 = vector.shape_cast %609 : vector<1x72x128xbf16> to vector<72x128xbf16>
    %cst_238 = arith.constant dense<0.000000e+00> : vector<72x110xf32>
    %611 = tpu.matmul %610, %608, %cst_238 {dimension_numbers = #tpu.dot_dimension_numbers<[1], [0], [0], [1], [0, 0, 1, 1], [], []>} : vector<72x128xbf16>, vector<128x110xbf16>, vector<72x110xf32> -> vector<72x110xf32>
    %612 = vector.extract_strided_slice %611 {offsets = [0, 0], sizes = [8, 80], strides = [1, 1]} : vector<72x110xf32> to vector<8x80xf32>
    %613 = vector.extract_strided_slice %611 {offsets = [8, 1], sizes = [8, 80], strides = [1, 1]} : vector<72x110xf32> to vector<8x80xf32>
    %614 = arith.addf %612, %613 : vector<8x80xf32>
    %615 = vector.extract_strided_slice %611 {offsets = [16, 2], sizes = [8, 80], strides = [1, 1]} : vector<72x110xf32> to vector<8x80xf32>
    %616 = arith.addf %614, %615 : vector<8x80xf32>
    %617 = vector.extract_strided_slice %611 {offsets = [24, 10], sizes = [8, 80], strides = [1, 1]} : vector<72x110xf32> to vector<8x80xf32>
    %618 = arith.addf %616, %617 : vector<8x80xf32>
    %619 = vector.extract_strided_slice %611 {offsets = [32, 11], sizes = [8, 80], strides = [1, 1]} : vector<72x110xf32> to vector<8x80xf32>
    %620 = arith.addf %618, %619 : vector<8x80xf32>
    %621 = vector.extract_strided_slice %611 {offsets = [40, 12], sizes = [8, 80], strides = [1, 1]} : vector<72x110xf32> to vector<8x80xf32>
    %622 = arith.addf %620, %621 : vector<8x80xf32>
    %623 = vector.extract_strided_slice %611 {offsets = [48, 20], sizes = [8, 80], strides = [1, 1]} : vector<72x110xf32> to vector<8x80xf32>
    %624 = arith.addf %622, %623 : vector<8x80xf32>
    %625 = vector.extract_strided_slice %611 {offsets = [56, 21], sizes = [8, 80], strides = [1, 1]} : vector<72x110xf32> to vector<8x80xf32>
    %626 = arith.addf %624, %625 : vector<8x80xf32>
    %627 = vector.extract_strided_slice %611 {offsets = [64, 22], sizes = [8, 80], strides = [1, 1]} : vector<72x110xf32> to vector<8x80xf32>
    %628 = arith.addf %626, %627 : vector<8x80xf32>
    %c0_239 = arith.constant 0 : index
    %c0_240 = arith.constant 0 : index
    %c0_241 = arith.constant 0 : index
    %c0_242 = arith.constant 0 : index
    %629 = vector.load %arg10[%c0_239, %c0_240, %c0_241, %c0_242] : memref<1x1x128x110xbf16, #tpu.memory_space<vmem>>, vector<1x1x128x110xbf16>
    %630 = vector.shape_cast %629 : vector<1x1x128x110xbf16> to vector<128x110xbf16>
    %c1_243 = arith.constant 1 : index
    %c0_244 = arith.constant 0 : index
    %c0_245 = arith.constant 0 : index
    %631 = vector.load %arg12[%c1_243, %c0_244, %c0_245] : memref<3x72x128xbf16, #tpu.memory_space<vmem>>, vector<1x72x128xbf16>
    %632 = vector.shape_cast %631 : vector<1x72x128xbf16> to vector<72x128xbf16>
    %cst_246 = arith.constant dense<0.000000e+00> : vector<72x110xf32>
    %633 = tpu.matmul %632, %630, %cst_246 {dimension_numbers = #tpu.dot_dimension_numbers<[1], [0], [0], [1], [0, 0, 1, 1], [], []>} : vector<72x128xbf16>, vector<128x110xbf16>, vector<72x110xf32> -> vector<72x110xf32>
    %634 = vector.extract_strided_slice %633 {offsets = [0, 0], sizes = [8, 80], strides = [1, 1]} : vector<72x110xf32> to vector<8x80xf32>
    %635 = arith.addf %628, %634 : vector<8x80xf32>
    %636 = vector.extract_strided_slice %633 {offsets = [8, 1], sizes = [8, 80], strides = [1, 1]} : vector<72x110xf32> to vector<8x80xf32>
    %637 = arith.addf %635, %636 : vector<8x80xf32>
    %638 = vector.extract_strided_slice %633 {offsets = [16, 2], sizes = [8, 80], strides = [1, 1]} : vector<72x110xf32> to vector<8x80xf32>
    %639 = arith.addf %637, %638 : vector<8x80xf32>
    %640 = vector.extract_strided_slice %633 {offsets = [24, 10], sizes = [8, 80], strides = [1, 1]} : vector<72x110xf32> to vector<8x80xf32>
    %641 = arith.addf %639, %640 : vector<8x80xf32>
    %642 = vector.extract_strided_slice %633 {offsets = [32, 11], sizes = [8, 80], strides = [1, 1]} : vector<72x110xf32> to vector<8x80xf32>
    %643 = arith.addf %641, %642 : vector<8x80xf32>
    %644 = vector.extract_strided_slice %633 {offsets = [40, 12], sizes = [8, 80], strides = [1, 1]} : vector<72x110xf32> to vector<8x80xf32>
    %645 = arith.addf %643, %644 : vector<8x80xf32>
    %646 = vector.extract_strided_slice %633 {offsets = [48, 20], sizes = [8, 80], strides = [1, 1]} : vector<72x110xf32> to vector<8x80xf32>
    %647 = arith.addf %645, %646 : vector<8x80xf32>
    %648 = vector.extract_strided_slice %633 {offsets = [56, 21], sizes = [8, 80], strides = [1, 1]} : vector<72x110xf32> to vector<8x80xf32>
    %649 = arith.addf %647, %648 : vector<8x80xf32>
    %650 = vector.extract_strided_slice %633 {offsets = [64, 22], sizes = [8, 80], strides = [1, 1]} : vector<72x110xf32> to vector<8x80xf32>
    %651 = arith.addf %649, %650 : vector<8x80xf32>
    %c0_247 = arith.constant 0 : index
    %c0_248 = arith.constant 0 : index
    %c0_249 = arith.constant 0 : index
    %c0_250 = arith.constant 0 : index
    %652 = vector.load %arg11[%c0_247, %c0_248, %c0_249, %c0_250] : memref<1x1x128x110xbf16, #tpu.memory_space<vmem>>, vector<1x1x128x110xbf16>
    %653 = vector.shape_cast %652 : vector<1x1x128x110xbf16> to vector<128x110xbf16>
    %c2_251 = arith.constant 2 : index
    %c0_252 = arith.constant 0 : index
    %c0_253 = arith.constant 0 : index
    %654 = vector.load %arg12[%c2_251, %c0_252, %c0_253] : memref<3x72x128xbf16, #tpu.memory_space<vmem>>, vector<1x72x128xbf16>
    %655 = vector.shape_cast %654 : vector<1x72x128xbf16> to vector<72x128xbf16>
    %cst_254 = arith.constant dense<0.000000e+00> : vector<72x110xf32>
    %656 = tpu.matmul %655, %653, %cst_254 {dimension_numbers = #tpu.dot_dimension_numbers<[1], [0], [0], [1], [0, 0, 1, 1], [], []>} : vector<72x128xbf16>, vector<128x110xbf16>, vector<72x110xf32> -> vector<72x110xf32>
    %657 = vector.extract_strided_slice %656 {offsets = [0, 0], sizes = [8, 80], strides = [1, 1]} : vector<72x110xf32> to vector<8x80xf32>
    %658 = arith.addf %651, %657 : vector<8x80xf32>
    %659 = vector.extract_strided_slice %656 {offsets = [8, 1], sizes = [8, 80], strides = [1, 1]} : vector<72x110xf32> to vector<8x80xf32>
    %660 = arith.addf %658, %659 : vector<8x80xf32>
    %661 = vector.extract_strided_slice %656 {offsets = [16, 2], sizes = [8, 80], strides = [1, 1]} : vector<72x110xf32> to vector<8x80xf32>
    %662 = arith.addf %660, %661 : vector<8x80xf32>
    %663 = vector.extract_strided_slice %656 {offsets = [24, 10], sizes = [8, 80], strides = [1, 1]} : vector<72x110xf32> to vector<8x80xf32>
    %664 = arith.addf %662, %663 : vector<8x80xf32>
    %665 = vector.extract_strided_slice %656 {offsets = [32, 11], sizes = [8, 80], strides = [1, 1]} : vector<72x110xf32> to vector<8x80xf32>
    %666 = arith.addf %664, %665 : vector<8x80xf32>
    %667 = vector.extract_strided_slice %656 {offsets = [40, 12], sizes = [8, 80], strides = [1, 1]} : vector<72x110xf32> to vector<8x80xf32>
    %668 = arith.addf %666, %667 : vector<8x80xf32>
    %669 = vector.extract_strided_slice %656 {offsets = [48, 20], sizes = [8, 80], strides = [1, 1]} : vector<72x110xf32> to vector<8x80xf32>
    %670 = arith.addf %668, %669 : vector<8x80xf32>
    %671 = vector.extract_strided_slice %656 {offsets = [56, 21], sizes = [8, 80], strides = [1, 1]} : vector<72x110xf32> to vector<8x80xf32>
    %672 = arith.addf %670, %671 : vector<8x80xf32>
    %673 = vector.extract_strided_slice %656 {offsets = [64, 22], sizes = [8, 80], strides = [1, 1]} : vector<72x110xf32> to vector<8x80xf32>
    %674 = arith.addf %672, %673 : vector<8x80xf32>
    %675 = vector.broadcast %0 : vector<8x1xf32> to vector<8x80xf32>
    %676 = arith.addf %674, %675 : vector<8x80xf32>
    %677 = vector.extract_strided_slice %676 {offsets = [0, 0], sizes = [4, 80], strides = [1, 1]} : vector<8x80xf32> to vector<4x80xf32>
    %678 = vector.extract_strided_slice %676 {offsets = [4, 0], sizes = [4, 80], strides = [1, 1]} : vector<8x80xf32> to vector<4x80xf32>
    %c0_255 = arith.constant 0 : index
    %c7 = arith.constant 7 : index
    %c0_256 = arith.constant 0 : index
    %c0_257 = arith.constant 0 : index
    %679 = vector.load %arg14[%c0_255, %c7, %c0_256, %c0_257] : memref<1x8x4x80xbf16, #tpu.memory_space<vmem>>, vector<1x1x4x80xbf16>
    %680 = vector.shape_cast %679 : vector<1x1x4x80xbf16> to vector<4x80xbf16>
    %681 = arith.extf %680 : vector<4x80xbf16> to vector<4x80xf32>
    %682 = vector.broadcast %2 : vector<4x1xf32> to vector<4x80xf32>
    %683 = arith.subf %681, %682 : vector<4x80xf32>
    %684 = vector.broadcast %4 : vector<4x1xf32> to vector<4x80xf32>
    %685 = arith.mulf %683, %684 : vector<4x80xf32>
    %cst_258 = arith.constant 1.000000e+00 : f32
    %686 = vector.broadcast %cst_258 : f32 to vector<4x80xf32>
    %687 = arith.addf %686, %677 : vector<4x80xf32>
    %688 = arith.mulf %685, %687 : vector<4x80xf32>
    %689 = arith.addf %688, %678 : vector<4x80xf32>
    %c0_259 = arith.constant 0 : index
    %c7_260 = arith.constant 7 : index
    %c0_261 = arith.constant 0 : index
    %c0_262 = arith.constant 0 : index
    %690 = vector.load %arg17[%c0_259, %c7_260, %c0_261, %c0_262] : memref<1x8x4x80xf32, #tpu.memory_space<vmem>>, vector<1x1x4x80xf32>
    %691 = vector.shape_cast %690 : vector<1x1x4x80xf32> to vector<4x80xf32>
    %692 = vector.shape_cast %689 : vector<4x80xf32> to vector<1x1x4x80xf32>
    tpu.vector_store %arg17[%c0_259, %c7_260, %c0_261, %c0_262], %692 {strides = array<i32>} : memref<1x8x4x80xf32, #tpu.memory_space<vmem>>, vector<1x1x4x80xf32>,
    return
  }
  func.func @transform_0(%arg0: i32, %arg1: i32) -> (i32, i32, i32, i32) {
    %c8_i32 = arith.constant 8 : i32
    %0 = arith.muli %arg1, %c8_i32 : i32
    %c0_i32 = arith.constant 0 : i32
    %1 = arith.addi %0, %c0_i32 : i32
    %c0_i32_0 = arith.constant 0 : i32
    %c0_i32_1 = arith.constant 0 : i32
    %c0_i32_2 = arith.constant 0 : i32
    return %arg0, %1, %c0_i32_0, %c0_i32_1 : i32, i32, i32, i32
  }
  func.func @transform_1(%arg0: i32, %arg1: i32) -> (i32, i32, i32, i32) {
    %c8_i32 = arith.constant 8 : i32
    %0 = arith.muli %arg1, %c8_i32 : i32
    %c1_i32 = arith.constant 1 : i32
    %1 = arith.addi %0, %c1_i32 : i32
    %c0_i32 = arith.constant 0 : i32
    %c0_i32_0 = arith.constant 0 : i32
    %c0_i32_1 = arith.constant 0 : i32
    return %arg0, %1, %c0_i32, %c0_i32_0 : i32, i32, i32, i32
  }
  func.func @transform_2(%arg0: i32, %arg1: i32) -> (i32, i32, i32, i32) {
    %c8_i32 = arith.constant 8 : i32
    %0 = arith.muli %arg1, %c8_i32 : i32
    %c2_i32 = arith.constant 2 : i32
    %1 = arith.addi %0, %c2_i32 : i32
    %c0_i32 = arith.constant 0 : i32
    %c0_i32_0 = arith.constant 0 : i32
    %c0_i32_1 = arith.constant 0 : i32
    return %arg0, %1, %c0_i32, %c0_i32_0 : i32, i32, i32, i32
  }
  func.func @transform_3(%arg0: i32, %arg1: i32) -> (i32, i32, i32, i32) {
    %c8_i32 = arith.constant 8 : i32
    %0 = arith.muli %arg1, %c8_i32 : i32
    %c3_i32 = arith.constant 3 : i32
    %1 = arith.addi %0, %c3_i32 : i32
    %c0_i32 = arith.constant 0 : i32
    %c0_i32_0 = arith.constant 0 : i32
    %c0_i32_1 = arith.constant 0 : i32
    return %arg0, %1, %c0_i32, %c0_i32_0 : i32, i32, i32, i32
  }
  func.func @transform_4(%arg0: i32, %arg1: i32) -> (i32, i32, i32, i32) {
    %c8_i32 = arith.constant 8 : i32
    %0 = arith.muli %arg1, %c8_i32 : i32
    %c4_i32 = arith.constant 4 : i32
    %1 = arith.addi %0, %c4_i32 : i32
    %c0_i32 = arith.constant 0 : i32
    %c0_i32_0 = arith.constant 0 : i32
    %c0_i32_1 = arith.constant 0 : i32
    return %arg0, %1, %c0_i32, %c0_i32_0 : i32, i32, i32, i32
  }
  func.func @transform_5(%arg0: i32, %arg1: i32) -> (i32, i32, i32, i32) {
    %c8_i32 = arith.constant 8 : i32
    %0 = arith.muli %arg1, %c8_i32 : i32
    %c5_i32 = arith.constant 5 : i32
    %1 = arith.addi %0, %c5_i32 : i32
    %c0_i32 = arith.constant 0 : i32
    %c0_i32_0 = arith.constant 0 : i32
    %c0_i32_1 = arith.constant 0 : i32
    return %arg0, %1, %c0_i32, %c0_i32_0 : i32, i32, i32, i32
  }
  func.func @transform_6(%arg0: i32, %arg1: i32) -> (i32, i32, i32, i32) {
    %c8_i32 = arith.constant 8 : i32
    %0 = arith.muli %arg1, %c8_i32 : i32
    %c6_i32 = arith.constant 6 : i32
    %1 = arith.addi %0, %c6_i32 : i32
    %c0_i32 = arith.constant 0 : i32
    %c0_i32_0 = arith.constant 0 : i32
    %c0_i32_1 = arith.constant 0 : i32
    return %arg0, %1, %c0_i32, %c0_i32_0 : i32, i32, i32, i32
  }
  func.func @transform_7(%arg0: i32, %arg1: i32) -> (i32, i32, i32, i32) {
    %c8_i32 = arith.constant 8 : i32
    %0 = arith.muli %arg1, %c8_i32 : i32
    %c7_i32 = arith.constant 7 : i32
    %1 = arith.addi %0, %c7_i32 : i32
    %c0_i32 = arith.constant 0 : i32
    %c0_i32_0 = arith.constant 0 : i32
    %c0_i32_1 = arith.constant 0 : i32
    return %arg0, %1, %c0_i32, %c0_i32_0 : i32, i32, i32, i32
  }
  func.func @transform_8(%arg0: i32, %arg1: i32) -> (i32, i32, i32, i32) {
    %c8_i32 = arith.constant 8 : i32
    %0 = arith.muli %arg1, %c8_i32 : i32
    %c8_i32_0 = arith.constant 8 : i32
    %1 = arith.addi %0, %c8_i32_0 : i32
    %c0_i32 = arith.constant 0 : i32
    %c0_i32_1 = arith.constant 0 : i32
    %c0_i32_2 = arith.constant 0 : i32
    return %arg0, %1, %c0_i32, %c0_i32_1 : i32, i32, i32, i32
  }
  func.func @transform_9(%arg0: i32, %arg1: i32) -> (i32, i32, i32, i32) {
    %c8_i32 = arith.constant 8 : i32
    %0 = arith.muli %arg1, %c8_i32 : i32
    %c9_i32 = arith.constant 9 : i32
    %1 = arith.addi %0, %c9_i32 : i32
    %c0_i32 = arith.constant 0 : i32
    %c0_i32_0 = arith.constant 0 : i32
    %c0_i32_1 = arith.constant 0 : i32
    return %arg0, %1, %c0_i32, %c0_i32_0 : i32, i32, i32, i32
  }
  func.func @transform_10(%arg0: i32, %arg1: i32) -> (i32, i32, i32) {
    %c0_i32 = arith.constant 0 : i32
    %c0_i32_0 = arith.constant 0 : i32
    %c0_i32_1 = arith.constant 0 : i32
    %c0_i32_2 = arith.constant 0 : i32
    return %c0_i32, %c0_i32_0, %c0_i32_1 : i32, i32, i32
  }
  func.func @transform_11(%arg0: i32, %arg1: i32) -> (i32, i32) {
    %c0_i32 = arith.constant 0 : i32
    %c0_i32_0 = arith.constant 0 : i32
    %c0_i32_1 = arith.constant 0 : i32
    return %c0_i32, %c0_i32_0 : i32, i32
  }
  func.func @transform_12(%arg0: i32, %arg1: i32) -> (i32, i32, i32, i32) {
    %c0_i32 = arith.constant 0 : i32
    %c0_i32_0 = arith.constant 0 : i32
    %c0_i32_1 = arith.constant 0 : i32
    return %arg0, %arg1, %c0_i32, %c0_i32_0 : i32, i32, i32, i32
  }
  func.func @transform_13(%arg0: i32, %arg1: i32) -> (i32, i32, i32) {
    %c0_i32 = arith.constant 0 : i32
    %c0_i32_0 = arith.constant 0 : i32
    %c0_i32_1 = arith.constant 0 : i32
    return %arg0, %c0_i32, %c0_i32_0 : i32, i32, i32
  }
  func.func @transform_14(%arg0: i32, %arg1: i32) -> (i32, i32, i32) {
    %c0_i32 = arith.constant 0 : i32
    %c0_i32_0 = arith.constant 0 : i32
    %c0_i32_1 = arith.constant 0 : i32
    return %arg0, %c0_i32, %c0_i32_0 : i32, i32, i32
  }
  func.func @transform_15(%arg0: i32, %arg1: i32) -> (i32, i32, i32, i32) {
    %c0_i32 = arith.constant 0 : i32
    %c0_i32_0 = arith.constant 0 : i32
    %c0_i32_1 = arith.constant 0 : i32
    return %arg0, %arg1, %c0_i32, %c0_i32_0 : i32, i32, i32, i32
  }
}

</mosaic_0001>

<llo_original>
// kernel: a_call__.4
$region0: #{a_call__.4}
  #allocation0 [shape = 'u32[]', space=smem, size = 0x4, offset = 0x4, fixed_abs, tag = 'smem constant byte address 0x4 - core index']
  #allocation1 [shape = 'u32[144,128]{1,0:T(1,128)}', space=vmem, size = 0x12000, scoped, tag = 'internal scratch']
  %s0 = inlined_call_operand.vmem [shape: bf16[2,8,108,80], index: 0, kind: input, shape index: {}]
  %s1 = inlined_call_operand.vmem [shape: bf16[128,108], index: 1, kind: input, shape index: {}]
  %s2 = inlined_call_operand.vmem [shape: f32[128,1], index: 2, kind: input, shape index: {}]
  %s3 = inlined_call_operand.vmem [shape: f32[1,80], index: 3, kind: input, shape index: {}]
  %s4 = inlined_call_operand.vmem [shape: bf16[2,10,128,110], index: 4, kind: output, shape index: {}]
  %s5 = sld [smem:[#allocation0]]
  $region57: #{a_call__.4} parent=0
    _
  %s7 = ssub.s32 1, %s5
  %s8 = scalar_select 0, %s7, %s5
  loop: start=0, step=1, limit=22
  $region2: #{a_call__.4} parent=0 // loop_pre_header
    _
  $region3: #{a_call__.4} parent=0 // loop_header
    %s10 = sphi 0, %s14
    %p11 = scmp.ge.s32.totalorder %s10, 22
    %s17 = sphi 0, %s29
    %s18 = sphi 0, %s25
    %s19 = sphi 0, %s17
    %s20 = sphi 0, %s18
    %s21 = sphi 0, %s19
    %s22 = sphi 0, %s20
    %s44 = sphi 0, %s46
    %s47 = sphi 0, %s44
    %s48 = sphi 0, %s47
    %s64 = sphi 0, %s48
    %s68 = sphi 0, %s68
    %s70 = sphi 0, %s68
    %s71 = sphi 0, %s70
    %s85 = sphi 0, %s71
    %s89 = sphi 0, %s89
    %s91 = sphi 0, %s89
    %s92 = sphi 0, %s91
    %s106 = sphi 0, %s92
    %s110 = sphi 0, %s110
    %s112 = sphi 0, %s110
    %s113 = sphi 0, %s112
    %s127 = sphi 0, %s113
    %s135 = sphi 0, %s137
    %s138 = sphi 0, %s135
    %s139 = sphi 0, %s138
    %s155 = sphi 0, %s139
  $region4: #{a_call__.4} parent=0 // loop_header_branch
    %13 = sbr.rel (%p11) target = $region8
  $region5: #{a_call__.4} parent=0 // loop_body
    %s15 = ssub.s32 %s10, 1
    %s16 = ssub.s32 %s10, 2
    %s23 = sadd.s32 1, %s18
    %p24 = scmp.ge.s32.totalorder %s23, 10
    %s25 = scalar_select %p24, 0, %s23
    %s26 = sadd.s32 1, %s17
    %s27 = scalar_select %p24, %s26, %s17
    %p28 = scmp.ge.s32.totalorder %s27, 2
    %s29 = scalar_select %p28, 0, %s27
    %s30 = ssub.s32 %s18, 1
    %p31 = scmp.lt.s32.totalorder %s30, 7
    %s32 = scalar_select %p31, %s30, 7
    %p33 = scmp.gt.s32.totalorder %s32, 0
    %s34 = scalar_select %p33, %s32, 0
    %s35 = ssub.s32 %s25, 1
    %p36 = scmp.lt.s32.totalorder %s35, 7
    %s37 = scalar_select %p36, %s35, 7
    %p38 = scmp.gt.s32.totalorder %s37, 0
    %s39 = scalar_select %p38, %s37, 0
    %s40 = ssub.s32 %s17, %s29
    %s41 = ssub.s32 %s34, %s39
    %s42 = sor.u32 %s40, %s41
    %p43 = scmp.eq.s32.totalorder %s42, 0
    %s45 = sadd.s32 %s44, 1
    %s46 = scalar_select %p43, %s44, %s45
    %p49 = pneg %p43
    %p50 = scmp.eq.s32.totalorder %s10, 19
    %p51 = por %p49, %p50
    %p52 = scmp.ne.s32.totalorder %s44, %s47
    %p53 = scmp.eq.s32.totalorder %s10, 0
    %p54 = por %p52, %p53
    %p55 = scmp.ne.s32.totalorder %s44, %s47
    %p56 = scmp.eq.s32.totalorder %s15, 19
    %p57 = por %p55, %p56
    %p58 = scmp.ne.s32.totalorder %s47, %s48
    %p59 = scmp.eq.s32.totalorder %s15, 0
    %p60 = por %p58, %p59
    %p61 = scmp.ne.s32.totalorder %s47, %s48
    %p62 = scmp.eq.s32.totalorder %s16, 19
    %p63 = por %p61, %p62
    %p65 = scmp.ne.s32.totalorder %s48, %s64
    %p66 = scmp.eq.s32.totalorder %s16, 0
    %p67 = por %p65, %p66
    %s69 = sadd.s32 %s68, 1
    %p72 = scmp.eq.s32.totalorder %s10, 19
    %p73 = scmp.ne.s32.totalorder %s68, %s70
    %p74 = scmp.eq.s32.totalorder %s10, 0
    %p75 = por %p73, %p74
    %p76 = scmp.ne.s32.totalorder %s68, %s70
    %p77 = scmp.eq.s32.totalorder %s15, 19
    %p78 = por %p76, %p77
    %p79 = scmp.ne.s32.totalorder %s70, %s71
    %p80 = scmp.eq.s32.totalorder %s15, 0
    %p81 = por %p79, %p80
    %p82 = scmp.ne.s32.totalorder %s70, %s71
    %p83 = scmp.eq.s32.totalorder %s16, 19
    %p84 = por %p82, %p83
    %p86 = scmp.ne.s32.totalorder %s71, %s85
    %p87 = scmp.eq.s32.totalorder %s16, 0
    %p88 = por %p86, %p87
    %s90 = sadd.s32 %s89, 1
    %p93 = scmp.eq.s32.totalorder %s10, 19
    %p94 = scmp.ne.s32.totalorder %s89, %s91
    %p95 = scmp.eq.s32.totalorder %s10, 0
    %p96 = por %p94, %p95
    %p97 = scmp.ne.s32.totalorder %s89, %s91
    %p98 = scmp.eq.s32.totalorder %s15, 19
    %p99 = por %p97, %p98
    %p100 = scmp.ne.s32.totalorder %s91, %s92
    %p101 = scmp.eq.s32.totalorder %s15, 0
    %p102 = por %p100, %p101
    %p103 = scmp.ne.s32.totalorder %s91, %s92
    %p104 = scmp.eq.s32.totalorder %s16, 19
    %p105 = por %p103, %p104
    %p107 = scmp.ne.s32.totalorder %s92, %s106
    %p108 = scmp.eq.s32.totalorder %s16, 0
    %p109 = por %p107, %p108
    %s111 = sadd.s32 %s110, 1
    %p114 = scmp.eq.s32.totalorder %s10, 19
    %p115 = scmp.ne.s32.totalorder %s110, %s112
    %p116 = scmp.eq.s32.totalorder %s10, 0
    %p117 = por %p115, %p116
    %p118 = scmp.ne.s32.totalorder %s110, %s112
    %p119 = scmp.eq.s32.totalorder %s15, 19
    %p120 = por %p118, %p119
    %p121 = scmp.ne.s32.totalorder %s112, %s113
    %p122 = scmp.eq.s32.totalorder %s15, 0
    %p123 = por %p121, %p122
    %p124 = scmp.ne.s32.totalorder %s112, %s113
    %p125 = scmp.eq.s32.totalorder %s16, 19
    %p126 = por %p124, %p125
    %p128 = scmp.ne.s32.totalorder %s113, %s127
    %p129 = scmp.eq.s32.totalorder %s16, 0
    %p130 = por %p128, %p129
    %s131 = ssub.s32 %s17, %s29
    %s132 = ssub.s32 %s18, %s25
    %s133 = sor.u32 %s131, %s132
    %p134 = scmp.eq.s32.totalorder %s133, 0
    %s136 = sadd.s32 %s135, 1
    %s137 = scalar_select %p134, %s135, %s136
    %p140 = pneg %p134
    %p141 = scmp.eq.s32.totalorder %s10, 19
    %p142 = por %p140, %p141
    %p143 = scmp.ne.s32.totalorder %s135, %s138
    %p144 = scmp.eq.s32.totalorder %s10, 0
    %p145 = por %p143, %p144
    %p146 = scmp.ne.s32.totalorder %s135, %s138
    %p147 = scmp.eq.s32.totalorder %s15, 19
    %p148 = por %p146, %p147
    %p149 = scmp.ne.s32.totalorder %s138, %s139
    %p150 = scmp.eq.s32.totalorder %s15, 0
    %p151 = por %p149, %p150
    %p152 = scmp.ne.s32.totalorder %s138, %s139
    %p153 = scmp.eq.s32.totalorder %s16, 19
    %p154 = por %p152, %p153
    %p156 = scmp.ne.s32.totalorder %s139, %s155
    %p157 = scmp.eq.s32.totalorder %s16, 0
    %p158 = por %p156, %p157
    %p159 = scmp.le.s32.totalorder 1, %s10
    %p160 = scmp.lt.s32.totalorder %s10, 21
    %p161 = pnand %p159, %p160
    %p162 = pneg %p161
    // Predicated region
    $region9: #{a_call__.4} parent=5 // pred_check
      _
    $region10: #{a_call__.4} parent=5 // pred_check_branch
      %164 = sbr.rel (%p161) target = $region12
    $region11: #{a_call__.4} parent=5 // pred_region
      %s165 = ssub.s32 %s10, 1
      // Predicated region
      $region13: #{a_call__.4} parent=11 // pred_check
        %p166 = pneg %p81
      $region14: #{a_call__.4} parent=11 // pred_check_branch
        %168 = sbr.rel (%p166) target = $region16
      $region15: #{a_call__.4} parent=11 // pred_region
        _
      $region16: #{a_call__.4} parent=11 // pred_fallthru
        _
      // Predicated region
      $region17: #{a_call__.4} parent=11 // pred_check
        %p169 = pneg %p102
      $region18: #{a_call__.4} parent=11 // pred_check_branch
        %171 = sbr.rel (%p169) target = $region20
      $region19: #{a_call__.4} parent=11 // pred_region
        _
      $region20: #{a_call__.4} parent=11 // pred_fallthru
        _
      // Predicated region
      $region21: #{a_call__.4} parent=11 // pred_check
        %p172 = pneg %p123
      $region22: #{a_call__.4} parent=11 // pred_check_branch
        %174 = sbr.rel (%p172) target = $region24
      $region23: #{a_call__.4} parent=11 // pred_region
        _
      $region24: #{a_call__.4} parent=11 // pred_fallthru
        _
    $region12: #{a_call__.4} parent=5 // pred_fallthru
      _
    %p175 = scmp.lt.s32.totalorder %s10, 20
    // Predicated region
    $region25: #{a_call__.4} parent=5 // pred_check
      %p176 = pneg %p175
    $region26: #{a_call__.4} parent=5 // pred_check_branch
      %178 = sbr.rel (%p176) target = $region28
    $region27: #{a_call__.4} parent=5 // pred_region
      // Predicated region
      $region29: #{a_call__.4} parent=27 // pred_check
        %p179 = pneg %p54
      $region30: #{a_call__.4} parent=27 // pred_check_branch
        %181 = sbr.rel (%p179) target = $region32
      $region31: #{a_call__.4} parent=27 // pred_region
        %s182 = ssub.s32 %s18, 1
        %p183 = scmp.lt.s32.totalorder %s182, 7
        %s184 = scalar_select %p183, %s182, 7
        %p185 = scmp.gt.s32.totalorder %s184, 0
        %s186 = scalar_select %p185, %s184, 0
        %p187 = scmp.lt.s32.totalorder %s17, 1
        %s188 = scalar_select %p187, %s17, 1
        %p189 = scmp.lt.s32.totalorder %s186, 7
        %s190 = scalar_select %p189, %s186, 7
        %s191 = smul.addr %s190, 14
        %s192 = smul.addr %s188, 112
        %s193 = sadd.s32 %s191, %s192
        %s194 = smul.addr %s193, 4
        %s195 = scalar_lea.vmem %s0, %s194
        %s196 = ssub.s32 %s18, 1
        %p197 = scmp.lt.s32.totalorder %s196, 7
        %s198 = scalar_select %p197, %s196, 7
        %p199 = scmp.gt.s32.totalorder %s198, 0
        %s200 = scalar_select %p199, %s198, 0
      $region32: #{a_call__.4} parent=27 // pred_fallthru
        _
    $region28: #{a_call__.4} parent=5 // pred_fallthru
      _
    %p201 = scmp.le.s32.totalorder 1, %s10
    %p202 = scmp.lt.s32.totalorder %s10, 21
    %p203 = pnand %p201, %p202
    %p204 = pneg %p203
    // Predicated region
    $region33: #{a_call__.4} parent=5 // pred_check
      _
    $region34: #{a_call__.4} parent=5 // pred_check_branch
      %206 = sbr.rel (%p203) target = $region36
    $region35: #{a_call__.4} parent=5 // pred_region
      %s207 = ssub.s32 %s10, 1
      %s208 = ssub.s32 %s20, 1
      %p209 = scmp.lt.s32.totalorder %s208, 7
      %s210 = scalar_select %p209, %s208, 7
      %p211 = scmp.gt.s32.totalorder %s210, 0
      %s212 = scalar_select %p211, %s210, 0
      %p213 = scmp.lt.s32.totalorder %s19, 1
      %s214 = scalar_select %p213, %s19, 1
      %p215 = scmp.lt.s32.totalorder %s212, 7
      %s216 = scalar_select %p215, %s212, 7
      %s217 = smul.addr %s216, 14
      %s218 = smul.addr %s214, 112
      %s219 = sadd.s32 %s217, %s218
      %s220 = smul.addr %s219, 4
      %s221 = scalar_lea.vmem %s0, %s220
      %p222 = pneg %p60
      %p223 = pneg %p57
      %p224 = pneg %p81
      %p225 = pneg %p78
      %p226 = pneg %p102
      %p227 = pneg %p99
      %p228 = pneg %p123
      %p229 = pneg %p120
      %p230 = pneg %p151
      %p231 = pneg %p148
      %p232 = scmp.lt.s32.totalorder %s19, 1
      %s233 = scalar_select %p232, %s19, 1
      %p234 = scmp.lt.s32.totalorder %s20, 9
      %s235 = scalar_select %p234, %s20, 9
      %s236 = smul.addr %s235, 16
      %s237 = smul.addr %s233, 160
      %s238 = sadd.s32 %s236, %s237
      %s239 = smul.addr %s238, 4
      %s240 = scalar_lea.vmem %s4, %s239
      %s241 = ssub.s32 %s20, 1
      %p242 = scmp.lt.s32.totalorder %s241, 7
      %s243 = scalar_select %p242, %s241, 7
      %p244 = scmp.gt.s32.totalorder %s243, 0
      %s245 = scalar_select %p244, %s243, 0
      %p246 = scmp.lt.s32.totalorder %s19, 1
      %s247 = scalar_select %p246, %s19, 1
      %p248 = scmp.lt.s32.totalorder %s245, 7
      %s249 = scalar_select %p248, %s245, 7
      %s250 = smul.addr %s249, 14
      %s251 = smul.addr %s247, 112
      %s252 = sadd.s32 %s250, %s251
      %s253 = smul.addr %s252, 4
      %s254 = scalar_lea.vmem %s0, %s253
      %s255 = ssub.s32 %s20, 1
      %p256 = scmp.lt.s32.totalorder %s255, 7
      %s257 = scalar_select %p256, %s255, 7
      %p258 = scmp.gt.s32.totalorder %s257, 0
      %s259 = scalar_select %p258, %s257, 0
      %p260 = scmp.lt.s32.totalorder %s19, 1
      %s261 = scalar_select %p260, %s19, 1
      %p262 = scmp.lt.s32.totalorder %s20, 9
      %s263 = scalar_select %p262, %s20, 9
      %s264 = smul.addr %s263, 16
      %s265 = smul.addr %s261, 160
      %s266 = sadd.s32 %s264, %s265
      %s267 = smul.addr %s266, 4
      %s268 = scalar_lea.vmem %s4, %s267
      %p270 = scmp.gt.s32.totalorder %s20, 0
      %p271 = scmp.lt.s32.totalorder %s20, 9
      %p272 = pnand %p270, %p271
      %p273 = pneg %p272
      // Predicated region
      $region37: #{a_call__.4} parent=35 // pred_check
        _
      $region38: #{a_call__.4} parent=35 // pred_check_branch
        %275 = sbr.rel (%p272) target = $region40
      $region39: #{a_call__.4} parent=35 // pred_region
        %v276 = vld [vmem:[%s1] sm:$0xf]
        %v277 = vld [vmem:[%s1 + $0x4] sm:$0xf]
        %v278 = vld [vmem:[%s1 + $0x8] sm:$0xf]
        %v279 = vld [vmem:[%s1 + $0xc] sm:$0xf]
        %v280 = vld [vmem:[%s1 + $0x10] sm:$0xf]
        %v281 = vld [vmem:[%s1 + $0x14] sm:$0xf]
        %v282 = vld [vmem:[%s1 + $0x18] sm:$0xf]
        %v283 = vld [vmem:[%s1 + $0x1c] sm:$0xf]
        %v284 = vld [vmem:[%s1 + $0x20] sm:$0xf]
        %v285 = vld [vmem:[%s1 + $0x24] sm:$0xf]
        %v286 = vld [vmem:[%s1 + $0x28] sm:$0xf]
        %v287 = vld [vmem:[%s1 + $0x2c] sm:$0xf]
        %v288 = vld [vmem:[%s1 + $0x30] sm:$0xf]
        %v289 = vld [vmem:[%s1 + $0x34] sm:$0xf]
        %v290 = vld [vmem:[%s1 + $0x38] sm:$0xf]
        %v291 = vld [vmem:[%s1 + $0x3c] sm:$0xf]
        %v292 = vld [vmem:[%s254] sm:$0xf]
        %v293 = vld [vmem:[%s254 + $0x4] sm:$0xf]
        %v294 = vld [vmem:[%s254 + $0x8] sm:$0xf]
        %v295 = vld [vmem:[%s254 + $0xc] sm:$0xf]
        %v296 = vld [vmem:[%s254 + $0x10] sm:$0xf]
        %v297 = vld [vmem:[%s254 + $0x14] sm:$0xf]
        %v298 = vld [vmem:[%s254 + $0x18] sm:$0xf]
        %v299 = vld [vmem:[%s254 + $0x1c] sm:$0xf]
        %v300 = vld [vmem:[%s254 + $0x20] sm:$0xf]
        %v301 = vld [vmem:[%s254 + $0x24] sm:$0xf]
        %v302 = vld [vmem:[%s254 + $0x28] sm:$0xf]
        %v303 = vld [vmem:[%s254 + $0x2c] sm:$0xf]
        %v304 = vld [vmem:[%s254 + $0x30] sm:$0xf]
        %v305 = vld [vmem:[%s254 + $0x34] sm:$0x3]
        %v306 = vld [vmem:[%s2] sm:$0xff]
        %v307 = vld [vmem:[%s2 + $0x8] sm:$0xff]
        %v308 = vld [vmem:[%s2 + $0x10] sm:$0xff]
        %v309 = vld [vmem:[%s2 + $0x18] sm:$0xff]
        %v310 = vld [vmem:[%s2 + $0x20] sm:$0xff]
        %v311 = vld [vmem:[%s2 + $0x28] sm:$0xff]
        %v312 = vld [vmem:[%s2 + $0x30] sm:$0xff]
        %v313 = vld [vmem:[%s2 + $0x38] sm:$0xff]
        %v314 = vld [vmem:[%s2 + $0x40] sm:$0xff]
        %v315 = vld [vmem:[%s2 + $0x48] sm:$0xff]
        %v316 = vld [vmem:[%s2 + $0x50] sm:$0xff]
        %v317 = vld [vmem:[%s2 + $0x58] sm:$0xff]
        %v318 = vld [vmem:[%s2 + $0x60] sm:$0xff]
        %v319 = vld [vmem:[%s2 + $0x68] sm:$0xff]
        %v320 = vld [vmem:[%s2 + $0x70] sm:$0xff]
        %v321 = vld [vmem:[%s2 + $0x78] sm:$0xff]
        %323 = vset.pattern.permute.xlu0 0
        %324 = vperm.xlu0 %323, %v306
        %v325 = vpop.permute.xlu0 %324
        %328 = vset.pattern.permute.xlu0 0
        %329 = vperm.xlu0 %328, %v307
        %v330 = vpop.permute.xlu0 %329
        %333 = vset.pattern.permute.xlu0 0
        %334 = vperm.xlu0 %333, %v308
        %v335 = vpop.permute.xlu0 %334
        %338 = vset.pattern.permute.xlu0 0
        %339 = vperm.xlu0 %338, %v309
        %v340 = vpop.permute.xlu0 %339
        %343 = vset.pattern.permute.xlu0 0
        %344 = vperm.xlu0 %343, %v310
        %v345 = vpop.permute.xlu0 %344
        %348 = vset.pattern.permute.xlu0 0
        %349 = vperm.xlu0 %348, %v311
        %v350 = vpop.permute.xlu0 %349
        %353 = vset.pattern.permute.xlu0 0
        %354 = vperm.xlu0 %353, %v312
        %v355 = vpop.permute.xlu0 %354
        %358 = vset.pattern.permute.xlu0 0
        %359 = vperm.xlu0 %358, %v313
        %v360 = vpop.permute.xlu0 %359
        %363 = vset.pattern.permute.xlu0 0
        %364 = vperm.xlu0 %363, %v314
        %v365 = vpop.permute.xlu0 %364
        %368 = vset.pattern.permute.xlu0 0
        %369 = vperm.xlu0 %368, %v315
        %v370 = vpop.permute.xlu0 %369
        %373 = vset.pattern.permute.xlu0 0
        %374 = vperm.xlu0 %373, %v316
        %v375 = vpop.permute.xlu0 %374
        %378 = vset.pattern.permute.xlu0 0
        %379 = vperm.xlu0 %378, %v317
        %v380 = vpop.permute.xlu0 %379
        %383 = vset.pattern.permute.xlu0 0
        %384 = vperm.xlu0 %383, %v318
        %v385 = vpop.permute.xlu0 %384
        %388 = vset.pattern.permute.xlu0 0
        %389 = vperm.xlu0 %388, %v319
        %v390 = vpop.permute.xlu0 %389
        %393 = vset.pattern.permute.xlu0 0
        %394 = vperm.xlu0 %393, %v320
        %v395 = vpop.permute.xlu0 %394
        %398 = vset.pattern.permute.xlu0 0
        %399 = vperm.xlu0 %398, %v321
        %v400 = vpop.permute.xlu0 %399
        %v418 = vunpack.c.l.b16 %v276
        %v419 = vunpack.c.l.b16 %v277
        %v420 = vunpack.c.l.b16 %v278
        %v421 = vunpack.c.l.b16 %v279
        %v422 = vunpack.c.l.b16 %v280
        %v423 = vunpack.c.l.b16 %v281
        %v424 = vunpack.c.l.b16 %v282
        %v425 = vunpack.c.l.b16 %v283
        %v426 = vunpack.c.l.b16 %v284
        %v427 = vunpack.c.l.b16 %v285
        %v428 = vunpack.c.l.b16 %v286
        %v429 = vunpack.c.l.b16 %v287
        %v430 = vunpack.c.l.b16 %v288
        %v431 = vunpack.c.l.b16 %v289
        %v432 = vunpack.c.l.b16 %v290
        %v433 = vunpack.c.l.b16 %v291
        %v434 = vpack.c.b16 %v419, %v418
        %v435 = vpack.c.b16 %v421, %v420
        %v436 = vpack.c.b16 %v423, %v422
        %v437 = vpack.c.b16 %v425, %v424
        %v438 = vpack.c.b16 %v427, %v426
        %v439 = vpack.c.b16 %v429, %v428
        %v440 = vpack.c.b16 %v431, %v430
        %v441 = vpack.c.b16 %v433, %v432
        %v456 = vunpack.c.l.b16 %v292
        %v457 = vunpack.c.l.b16 %v293
        %v458 = vunpack.c.l.b16 %v294
        %v459 = vunpack.c.l.b16 %v295
        %v460 = vunpack.c.l.b16 %v296
        %v461 = vunpack.c.l.b16 %v297
        %v462 = vunpack.c.l.b16 %v298
        %v463 = vunpack.c.l.b16 %v299
        %v464 = vunpack.c.l.b16 %v300
        %v465 = vunpack.c.l.b16 %v301
        %v466 = vunpack.c.l.b16 %v302
        %v467 = vunpack.c.l.b16 %v303
        %v468 = vunpack.c.l.b16 %v304
        %v469 = vunpack.c.l.b16 %v305
        %v470 = vpack.c.b16 %v457, %v456
        %v471 = vpack.c.b16 %v459, %v458
        %v472 = vpack.c.b16 %v461, %v460
        %v473 = vpack.c.b16 %v463, %v462
        %v474 = vpack.c.b16 %v465, %v464
        %v475 = vpack.c.b16 %v467, %v466
        %v476 = vpack.c.b16 %v469, %v468
        %vm483 = vcmask 883712
        %v485 = vsel %vm483, %v434, 0
        %v488 = vsel %vm483, %v435, 0
        %v491 = vsel %vm483, %v436, 0
        %v494 = vsel %vm483, %v437, 0
        %v497 = vsel %vm483, %v438, 0
        %v500 = vsel %vm483, %v439, 0
        %v503 = vsel %vm483, %v440, 0
        %v506 = vsel %vm483, %v441, 0
        %vm508 = vcmask 1045504
        %v510 = vsel %vm508, %v476, 0
        %512 = vmatprep.subr.bf16.mxu0 0
        %513 = vmatpush1.bf16.msra.mxu0 0
        %514 = vmatprep.subr.bf16.mxu0 0
        %515 = vmatpush1.bf16.msra.mxu0 %v510
        %516 = vmatprep.subr.bf16.mxu0 0
        %517 = vmatpush1.bf16.msra.mxu0 %v475
        %518 = vmatprep.subr.bf16.mxu0 0
        %519 = vmatpush1.bf16.msra.mxu0 %v474
        %520 = vmatprep.subr.bf16.mxu0 0
        %521 = vmatpush1.bf16.msra.mxu0 %v473
        %522 = vmatprep.subr.bf16.mxu0 0
        %523 = vmatpush1.bf16.msra.mxu0 %v472
        %524 = vmatprep.subr.bf16.mxu0 0
        %525 = vmatpush1.bf16.msra.mxu0 %v471
        %526 = vmatprep.subr.bf16.mxu0 0
        %527 = vmatpush1.bf16.msra.mxu0 %v470
        %528 = vmatprep.subr.bf16.mxu0 0
        %529 = vmatpush2.bf16.msra.mxu0 0
        %530 = vmatprep.subr.bf16.mxu0 0
        %531 = vmatpush2.bf16.msra.mxu0 0
        %532 = vmatprep.subr.bf16.mxu0 0
        %533 = vmatpush2.bf16.msra.mxu0 0
        %534 = vmatprep.subr.bf16.mxu0 0
        %535 = vmatpush2.bf16.msra.mxu0 0
        %536 = vmatprep.subr.bf16.mxu0 0
        %537 = vmatpush2.bf16.msra.mxu0 0
        %538 = vmatprep.subr.bf16.mxu0 0
        %539 = vmatpush2.bf16.msra.mxu0 0
        %540 = vmatprep.subr.bf16.mxu0 0
        %541 = vmatpush2.bf16.msra.mxu0 0
        %542 = vmatprep.subr.bf16.mxu0 0
        %543 = vmatpush2.bf16.msra.mxu0 0
        %544 = vmatprep.mubr.bf16.mxu0 0
        %545 = vmatmul.mubr.bf16.gmra.mxu0 %v485
        %v546 = vpop.f32.mrf.mxu0
        %v547 = vadd.f32 %v325, %v546
        %v548 = vpop.f32.mrf.mxu0
        %v549 = vpop.f32.mrf.mxu0
        %v550 = vadd.f32 %v330, %v549
        %v551 = vpop.f32.mrf.mxu0
        %552 = vmatprep.mubr.bf16.mxu0 0
        %553 = vmatmul.mubr.bf16.gmra.mxu0 %v488
        %v554 = vpop.f32.mrf.mxu0
        %v555 = vadd.f32 %v335, %v554
        %v556 = vpop.f32.mrf.mxu0
        %v557 = vpop.f32.mrf.mxu0
        %v558 = vadd.f32 %v340, %v557
        %v559 = vpop.f32.mrf.mxu0
        %560 = vmatprep.mubr.bf16.mxu0 0
        %561 = vmatmul.mubr.bf16.gmra.mxu0 %v491
        %v562 = vpop.f32.mrf.mxu0
        %v563 = vadd.f32 %v345, %v562
        %v564 = vpop.f32.mrf.mxu0
        %v565 = vpop.f32.mrf.mxu0
        %v566 = vadd.f32 %v350, %v565
        %v567 = vpop.f32.mrf.mxu0
        %568 = vmatprep.mubr.bf16.mxu0 0
        %569 = vmatmul.mubr.bf16.gmra.mxu0 %v494
        %v570 = vpop.f32.mrf.mxu0
        %v571 = vadd.f32 %v355, %v570
        %v572 = vpop.f32.mrf.mxu0
        %v573 = vpop.f32.mrf.mxu0
        %v574 = vadd.f32 %v360, %v573
        %v575 = vpop.f32.mrf.mxu0
        %576 = vmatprep.mubr.bf16.mxu0 0
        %577 = vmatmul.mubr.bf16.gmra.mxu0 %v497
        %v578 = vpop.f32.mrf.mxu0
        %v579 = vadd.f32 %v365, %v578
        %v580 = vpop.f32.mrf.mxu0
        %v581 = vpop.f32.mrf.mxu0
        %v582 = vadd.f32 %v370, %v581
        %v583 = vpop.f32.mrf.mxu0
        %584 = vmatprep.mubr.bf16.mxu0 0
        %585 = vmatmul.mubr.bf16.gmra.mxu0 %v500
        %v586 = vpop.f32.mrf.mxu0
        %v587 = vadd.f32 %v375, %v586
        %v588 = vpop.f32.mrf.mxu0
        %v589 = vpop.f32.mrf.mxu0
        %v590 = vadd.f32 %v380, %v589
        %v591 = vpop.f32.mrf.mxu0
        %592 = vmatprep.mubr.bf16.mxu0 0
        %593 = vmatmul.mubr.bf16.gmra.mxu0 %v503
        %v594 = vpop.f32.mrf.mxu0
        %v595 = vadd.f32 %v385, %v594
        %v596 = vpop.f32.mrf.mxu0
        %v597 = vpop.f32.mrf.mxu0
        %v598 = vadd.f32 %v390, %v597
        %v599 = vpop.f32.mrf.mxu0
        %600 = vmatprep.mubr.bf16.mxu0 0
        %601 = vmatmul.mubr.bf16.gmra.mxu0 %v506
        %v602 = vpop.f32.mrf.mxu0
        %v603 = vadd.f32 %v395, %v602
        %v604 = vpop.f32.mrf.mxu0
        %v605 = vpop.f32.mrf.mxu0
        %v606 = vadd.f32 %v400, %v605
        %v607 = vpop.f32.mrf.mxu0
        %608 = vdwg.mxu0
        %v609 = vmax.f32 %v547, 0.0
        %v610 = vmax.f32 %v550, 0.0
        %v611 = vmax.f32 %v555, 0.0
        %v612 = vmax.f32 %v558, 0.0
        %v613 = vmax.f32 %v563, 0.0
        %v614 = vmax.f32 %v566, 0.0
        %v615 = vmax.f32 %v571, 0.0
        %v616 = vmax.f32 %v574, 0.0
        %v617 = vmax.f32 %v579, 0.0
        %v618 = vmax.f32 %v582, 0.0
        %v619 = vmax.f32 %v587, 0.0
        %v620 = vmax.f32 %v590, 0.0
        %v621 = vmax.f32 %v595, 0.0
        %v622 = vmax.f32 %v598, 0.0
        %v623 = vmax.f32 %v603, 0.0
        %v624 = vmax.f32 %v606, 0.0
        %v625 = vld [vmem:[%s3] sm:$0x1]
        %v627 = vlaneseq
        %v628 = vshrl.u32 %v627, 7
        %v629 = vsub.s32 0, %v628
        %v630 = vrot.slane %v625, %v629
        %v632 = vmul.f32 %v609, %v630
        %v633 = vmul.f32 %v610, %v630
        %v634 = vmul.f32 %v611, %v630
        %v635 = vmul.f32 %v612, %v630
        %v636 = vmul.f32 %v613, %v630
        %v637 = vmul.f32 %v614, %v630
        %v638 = vmul.f32 %v615, %v630
        %v639 = vmul.f32 %v616, %v630
        %v640 = vmul.f32 %v617, %v630
        %v641 = vmul.f32 %v618, %v630
        %v642 = vmul.f32 %v619, %v630
        %v643 = vmul.f32 %v620, %v630
        %v644 = vmul.f32 %v621, %v630
        %v645 = vmul.f32 %v622, %v630
        %v646 = vmul.f32 %v623, %v630
        %v647 = vmul.f32 %v624, %v630
        %vm648 = vcmask 84992
        %649 = vst.msk [vmem:[%s268] sm:$0xf] %vm648, 0
        %650 = vst.msk [vmem:[%s268 + $0x4] sm:$0xf] %vm648, 0
        %651 = vst.msk [vmem:[%s268 + $0x8] sm:$0xf] %vm648, 0
        %652 = vst.msk [vmem:[%s268 + $0xc] sm:$0xf] %vm648, 0
        %653 = vst.msk [vmem:[%s268 + $0x10] sm:$0xf] %vm648, 0
        %654 = vst.msk [vmem:[%s268 + $0x14] sm:$0xf] %vm648, 0
        %655 = vst.msk [vmem:[%s268 + $0x18] sm:$0xf] %vm648, 0
        %656 = vst.msk [vmem:[%s268 + $0x1c] sm:$0xf] %vm648, 0
        %657 = vst.msk [vmem:[%s268 + $0x20] sm:$0xf] %vm648, 0
        %658 = vst.msk [vmem:[%s268 + $0x24] sm:$0xf] %vm648, 0
        %659 = vst.msk [vmem:[%s268 + $0x28] sm:$0xf] %vm648, 0
        %660 = vst.msk [vmem:[%s268 + $0x2c] sm:$0xf] %vm648, 0
        %661 = vst.msk [vmem:[%s268 + $0x30] sm:$0xf] %vm648, 0
        %662 = vst.msk [vmem:[%s268 + $0x34] sm:$0xf] %vm648, 0
        %663 = vst.msk [vmem:[%s268 + $0x38] sm:$0xf] %vm648, 0
        %664 = vst.msk [vmem:[%s268 + $0x3c] sm:$0xf] %vm648, 0
        %v665 = vpack.c.bf16 %v633, %v632
        %v666 = vpack.c.bf16 %v635, %v634
        %v667 = vpack.c.bf16 %v637, %v636
        %v668 = vpack.c.bf16 %v639, %v638
        %v669 = vpack.c.bf16 %v641, %v640
        %v670 = vpack.c.bf16 %v643, %v642
        %v671 = vpack.c.bf16 %v645, %v644
        %v672 = vpack.c.bf16 %v647, %v646
        %v681 = vunpack.c.l.b16 %v665
        %v682 = vunpack.c.h.b16 %v665
        %v683 = vunpack.c.l.b16 %v666
        %v684 = vunpack.c.h.b16 %v666
        %v685 = vunpack.c.l.b16 %v667
        %v686 = vunpack.c.h.b16 %v667
        %v687 = vunpack.c.l.b16 %v668
        %v688 = vunpack.c.h.b16 %v668
        %v689 = vunpack.c.l.b16 %v669
        %v690 = vunpack.c.h.b16 %v669
        %v691 = vunpack.c.l.b16 %v670
        %v692 = vunpack.c.h.b16 %v670
        %v693 = vunpack.c.l.b16 %v671
        %v694 = vunpack.c.h.b16 %v671
        %v695 = vunpack.c.l.b16 %v672
        %v696 = vunpack.c.h.b16 %v672
        %v697 = vpack.c.b16 %v681, %v681
        %v698 = vpack.c.b16 %v682, %v682
        %v699 = vpack.c.b16 %v683, %v683
        %v700 = vpack.c.b16 %v684, %v684
        %v701 = vpack.c.b16 %v685, %v685
        %v702 = vpack.c.b16 %v686, %v686
        %v703 = vpack.c.b16 %v687, %v687
        %v704 = vpack.c.b16 %v688, %v688
        %v705 = vpack.c.b16 %v689, %v689
        %v706 = vpack.c.b16 %v690, %v690
        %v707 = vpack.c.b16 %v691, %v691
        %v708 = vpack.c.b16 %v692, %v692
        %v709 = vpack.c.b16 %v693, %v693
        %v710 = vpack.c.b16 %v694, %v694
        %v711 = vpack.c.b16 %v695, %v695
        %v712 = vpack.c.b16 %v696, %v696
        %713 = vrot.lane.b32.xlu0 %v697, 11
        %v714 = vpop.permute.xlu0 %713
        %715 = vrot.lane.b32.xlu0 %v698, 11
        %v716 = vpop.permute.xlu0 %715
        %717 = vrot.lane.b32.xlu0 %v699, 11
        %v718 = vpop.permute.xlu0 %717
        %719 = vrot.lane.b32.xlu0 %v700, 11
        %v720 = vpop.permute.xlu0 %719
        %721 = vrot.lane.b32.xlu0 %v701, 11
        %v722 = vpop.permute.xlu0 %721
        %723 = vrot.lane.b32.xlu0 %v702, 11
        %v724 = vpop.permute.xlu0 %723
        %725 = vrot.lane.b32.xlu0 %v703, 11
        %v726 = vpop.permute.xlu0 %725
        %727 = vrot.lane.b32.xlu0 %v704, 11
        %v728 = vpop.permute.xlu0 %727
        %729 = vrot.lane.b32.xlu0 %v705, 11
        %v730 = vpop.permute.xlu0 %729
        %731 = vrot.lane.b32.xlu0 %v706, 11
        %v732 = vpop.permute.xlu0 %731
        %733 = vrot.lane.b32.xlu0 %v707, 11
        %v734 = vpop.permute.xlu0 %733
        %735 = vrot.lane.b32.xlu0 %v708, 11
        %v736 = vpop.permute.xlu0 %735
        %737 = vrot.lane.b32.xlu0 %v709, 11
        %v738 = vpop.permute.xlu0 %737
        %739 = vrot.lane.b32.xlu0 %v710, 11
        %v740 = vpop.permute.xlu0 %739
        %741 = vrot.lane.b32.xlu0 %v711, 11
        %v742 = vpop.permute.xlu0 %741
        %743 = vrot.lane.b32.xlu0 %v712, 11
        %v744 = vpop.permute.xlu0 %743
        %vm761 = vcmask 740440
        %762 = vst.msk [vmem:[%s268] sm:$0xf] %vm761, %v714
        %763 = vst.msk [vmem:[%s268 + $0x4] sm:$0xf] %vm761, %v716
        %764 = vst.msk [vmem:[%s268 + $0x8] sm:$0xf] %vm761, %v718
        %765 = vst.msk [vmem:[%s268 + $0xc] sm:$0xf] %vm761, %v720
        %766 = vst.msk [vmem:[%s268 + $0x10] sm:$0xf] %vm761, %v722
        %767 = vst.msk [vmem:[%s268 + $0x14] sm:$0xf] %vm761, %v724
        %768 = vst.msk [vmem:[%s268 + $0x18] sm:$0xf] %vm761, %v726
        %769 = vst.msk [vmem:[%s268 + $0x1c] sm:$0xf] %vm761, %v728
        %770 = vst.msk [vmem:[%s268 + $0x20] sm:$0xf] %vm761, %v730
        %771 = vst.msk [vmem:[%s268 + $0x24] sm:$0xf] %vm761, %v732
        %772 = vst.msk [vmem:[%s268 + $0x28] sm:$0xf] %vm761, %v734
        %773 = vst.msk [vmem:[%s268 + $0x2c] sm:$0xf] %vm761, %v736
        %774 = vst.msk [vmem:[%s268 + $0x30] sm:$0xf] %vm761, %v738
        %775 = vst.msk [vmem:[%s268 + $0x34] sm:$0xf] %vm761, %v740
        %776 = vst.msk [vmem:[%s268 + $0x38] sm:$0xf] %vm761, %v742
        %777 = vst.msk [vmem:[%s268 + $0x3c] sm:$0xf] %vm761, %v744
        %vm778 = vcmask 896728
        %779 = vst.msk [vmem:[%s268] sm:$0xf] %vm778, 0
        %780 = vst.msk [vmem:[%s268 + $0x4] sm:$0xf] %vm778, 0
        %781 = vst.msk [vmem:[%s268 + $0x8] sm:$0xf] %vm778, 0
        %782 = vst.msk [vmem:[%s268 + $0xc] sm:$0xf] %vm778, 0
        %783 = vst.msk [vmem:[%s268 + $0x10] sm:$0xf] %vm778, 0
        %784 = vst.msk [vmem:[%s268 + $0x14] sm:$0xf] %vm778, 0
        %785 = vst.msk [vmem:[%s268 + $0x18] sm:$0xf] %vm778, 0
        %786 = vst.msk [vmem:[%s268 + $0x1c] sm:$0xf] %vm778, 0
        %787 = vst.msk [vmem:[%s268 + $0x20] sm:$0xf] %vm778, 0
        %788 = vst.msk [vmem:[%s268 + $0x24] sm:$0xf] %vm778, 0
        %789 = vst.msk [vmem:[%s268 + $0x28] sm:$0xf] %vm778, 0
        %790 = vst.msk [vmem:[%s268 + $0x2c] sm:$0xf] %vm778, 0
        %791 = vst.msk [vmem:[%s268 + $0x30] sm:$0xf] %vm778, 0
        %792 = vst.msk [vmem:[%s268 + $0x34] sm:$0xf] %vm778, 0
        %793 = vst.msk [vmem:[%s268 + $0x38] sm:$0xf] %vm778, 0
        %794 = vst.msk [vmem:[%s268 + $0x3c] sm:$0xf] %vm778, 0
      $region40: #{a_call__.4} parent=35 // pred_fallthru
        _
      // Predicated region
      $region41: #{a_call__.4} parent=35 // pred_check
        %p795 = pneg %p272
      $region42: #{a_call__.4} parent=35 // pred_check_branch
        %797 = sbr.rel (%p795) target = $region44
      $region43: #{a_call__.4} parent=35 // pred_region
        %vm798 = vcmask 896000
        %799 = vst.msk [vmem:[%s268] sm:$0xf] %vm798, 0
        %800 = vst.msk [vmem:[%s268 + $0x4] sm:$0xf] %vm798, 0
        %801 = vst.msk [vmem:[%s268 + $0x8] sm:$0xf] %vm798, 0
        %802 = vst.msk [vmem:[%s268 + $0xc] sm:$0xf] %vm798, 0
        %803 = vst.msk [vmem:[%s268 + $0x10] sm:$0xf] %vm798, 0
        %804 = vst.msk [vmem:[%s268 + $0x14] sm:$0xf] %vm798, 0
        %805 = vst.msk [vmem:[%s268 + $0x18] sm:$0xf] %vm798, 0
        %806 = vst.msk [vmem:[%s268 + $0x1c] sm:$0xf] %vm798, 0
        %807 = vst.msk [vmem:[%s268 + $0x20] sm:$0xf] %vm798, 0
        %808 = vst.msk [vmem:[%s268 + $0x24] sm:$0xf] %vm798, 0
        %809 = vst.msk [vmem:[%s268 + $0x28] sm:$0xf] %vm798, 0
        %810 = vst.msk [vmem:[%s268 + $0x2c] sm:$0xf] %vm798, 0
        %811 = vst.msk [vmem:[%s268 + $0x30] sm:$0xf] %vm798, 0
        %812 = vst.msk [vmem:[%s268 + $0x34] sm:$0xf] %vm798, 0
        %813 = vst.msk [vmem:[%s268 + $0x38] sm:$0xf] %vm798, 0
        %814 = vst.msk [vmem:[%s268 + $0x3c] sm:$0xf] %vm798, 0
      $region44: #{a_call__.4} parent=35 // pred_fallthru
        _
      %p815 = scmp.lt.s32.totalorder %s19, 1
      %s816 = scalar_select %p815, %s19, 1
      %p817 = scmp.lt.s32.totalorder %s20, 9
      %s818 = scalar_select %p817, %s20, 9
      %s819 = smul.addr %s818, 16
      %s820 = smul.addr %s816, 160
      %s821 = sadd.s32 %s819, %s820
      %s822 = smul.addr %s821, 4
      %s823 = scalar_lea.vmem %s4, %s822
      // Predicated region
      $region45: #{a_call__.4} parent=35 // pred_check
        %p824 = pneg %p148
      $region46: #{a_call__.4} parent=35 // pred_check_branch
        %826 = sbr.rel (%p824) target = $region48
      $region47: #{a_call__.4} parent=35 // pred_region
        _
      $region48: #{a_call__.4} parent=35 // pred_fallthru
        _
    $region36: #{a_call__.4} parent=5 // pred_fallthru
      _
    %p827 = scmp.le.s32.totalorder 2, %s10
    // Predicated region
    $region49: #{a_call__.4} parent=5 // pred_check
      %p828 = pneg %p827
    $region50: #{a_call__.4} parent=5 // pred_check_branch
      %830 = sbr.rel (%p828) target = $region52
    $region51: #{a_call__.4} parent=5 // pred_region
      %s831 = ssub.s32 %s10, 2
      // Predicated region
      $region53: #{a_call__.4} parent=51 // pred_check
        %p832 = pneg %p154
      $region54: #{a_call__.4} parent=51 // pred_check_branch
        %834 = sbr.rel (%p832) target = $region56
      $region55: #{a_call__.4} parent=51 // pred_region
        %p835 = scmp.lt.s32.totalorder %s21, 1
        %s836 = scalar_select %p835, %s21, 1
        %p837 = scmp.lt.s32.totalorder %s22, 9
        %s838 = scalar_select %p837, %s22, 9
        %s839 = smul.addr %s838, 16
        %s840 = smul.addr %s836, 160
        %s841 = sadd.s32 %s839, %s840
        %s842 = smul.addr %s841, 4
        %s843 = scalar_lea.vmem %s4, %s842
      $region56: #{a_call__.4} parent=51 // pred_fallthru
        _
    $region52: #{a_call__.4} parent=5 // pred_fallthru
      _
  $region6: #{a_call__.4} parent=0 // loop_footer
    %s14 = sadd.s32 1, %s10
  $region7: #{a_call__.4} parent=0 // loop_footer_branch
    %9 = sbr.rel target = $region3
  $region8: #{a_call__.4} parent=0 // loop_exit
    _

// kernel: a_call__.3
$region0: #{a_call__.3}
  #allocation0 [shape = 'u32[]', space=smem, size = 0x4, offset = 0x4, fixed_abs, tag = 'smem constant byte address 0x4 - core index']
  #allocation1 [shape = 'u32[144,128]{1,0:T(1,128)}', space=vmem, size = 0x12000, scoped, tag = 'internal scratch']
  #allocation2 [shape = 'f32[8,1]{1,0:T(8,128)}', space=vmem, size = 0x1000, scoped, tag = 'scratch operand']
  #allocation3 [shape = 'f32[8,1]{1,0:T(8,128)}', space=vmem, size = 0x1000, scoped, tag = 'scratch operand']
  %s0 = inlined_call_operand.vmem [shape: f32[8,512], index: 0, kind: input, shape index: {}]
  %s1 = inlined_call_operand.vmem [shape: f32[8,1], index: 1, kind: output, shape index: {0}]
  %s2 = inlined_call_operand.vmem [shape: f32[8,1], index: 2, kind: output, shape index: {1}]
  %3 = xla_tuple %s1, %s2
  %s4 = sld [smem:[#allocation0]]
  $region30: #{a_call__.3} parent=0
    _
  %s6 = ssub.s32 1, %s4
  %s7 = scalar_select 0, %s6, %s4
  // Predicated region
  $region2: #{a_call__.3} parent=0 // pred_check
    _
  $region3: #{a_call__.3} parent=0 // pred_check_branch
    %9 = sbr.rel (0) target = $region5
  $region4: #{a_call__.3} parent=0 // pred_region
    _
  $region5: #{a_call__.3} parent=0 // pred_fallthru
    _
  %p10 = scmp.eq.s32.totalorder 0, 0
  // Predicated region
  $region6: #{a_call__.3} parent=0 // pred_check
    %p11 = pneg %p10
  $region7: #{a_call__.3} parent=0 // pred_check_branch
    %13 = sbr.rel (%p11) target = $region9
  $region8: #{a_call__.3} parent=0 // pred_region
    %vm14 = vcmask 7168
    %15 = vst.msk [vmem:[#allocation2] sm:$0xff] %vm14, 0.0
    %16 = vst.msk [vmem:[#allocation3] sm:$0xff] %vm14, 0.0
  $region9: #{a_call__.3} parent=0 // pred_fallthru
    _
  %v17 = vld [vmem:[%s0] sm:$0xff]
  %v18 = vld [vmem:[%s0 + $0x8] sm:$0xff]
  %v19 = vld [vmem:[%s0 + $0x10] sm:$0xff]
  %v20 = vld [vmem:[%s0 + $0x18] sm:$0xff]
  %v21 = vld [vmem:[#allocation2] sm:$0xff]
  %v22 = vadd.f32 %v17, %v18
  %v23 = vadd.f32 %v22, %v19
  %v24 = vadd.f32 %v23, %v20
  %25 = vadd.xlane.f32.xlu0 %v24
  %v26 = vpop.xlane.xlu0 %25
  %v27 = vadd.f32 %v21, %v26
  %vm28 = vcmask 7168
  %29 = vst.msk [vmem:[#allocation2] sm:$0xff] %vm28, %v27
  %v30 = vld [vmem:[#allocation3] sm:$0xff]
  %v31 = vmul.f32 %v17, %v17
  %v32 = vmul.f32 %v18, %v18
  %v33 = vmul.f32 %v19, %v19
  %v34 = vmul.f32 %v20, %v20
  %v35 = vadd.f32 %v31, %v32
  %v36 = vadd.f32 %v35, %v33
  %v37 = vadd.f32 %v36, %v34
  %38 = vadd.xlane.f32.xlu0 %v37
  %v39 = vpop.xlane.xlu0 %38
  %v40 = vadd.f32 %v30, %v39
  %41 = vst.msk [vmem:[#allocation3] sm:$0xff] %vm28, %v40
  // Predicated region
  $region10: #{a_call__.3} parent=0 // pred_check
    %p42 = pneg %p10
  $region11: #{a_call__.3} parent=0 // pred_check_branch
    %44 = sbr.rel (%p42) target = $region13
  $region12: #{a_call__.3} parent=0 // pred_region
    %v45 = vld [vmem:[#allocation2] sm:$0xff]
    %v46 = vmul.f32 %v45, 0.001953125
    %v47 = vld [vmem:[#allocation3] sm:$0xff]
    %v48 = vmul.f32 %v47, 0.001953125
    %v49 = vmul.f32 %v46, %v46
    %v50 = vsub.f32 %v48, %v49
    %v51 = vmax.f32 %v50, 0.0
    %52 = vst.msk [vmem:[%s1] sm:$0xff] %vm28, %v46
    %v53 = vadd.f32 %v51, 1e-05
    %v54 = vrsqrt.pop %v53
    %55 = vst.msk [vmem:[%s2] sm:$0xff] %vm28, %v54
  $region13: #{a_call__.3} parent=0 // pred_fallthru
    _
  // Predicated region
  $region14: #{a_call__.3} parent=0 // pred_check
    _
  $region15: #{a_call__.3} parent=0 // pred_check_branch
    %57 = sbr.rel (0) target = $region17
  $region16: #{a_call__.3} parent=0 // pred_region
    _
  $region17: #{a_call__.3} parent=0 // pred_fallthru
    _
  // Predicated region
  $region18: #{a_call__.3} parent=0 // pred_check
    _
  $region19: #{a_call__.3} parent=0 // pred_check_branch
    %59 = sbr.rel (0) target = $region21
  $region20: #{a_call__.3} parent=0 // pred_region
    _
  $region21: #{a_call__.3} parent=0 // pred_fallthru
    _
  // Predicated region
  $region22: #{a_call__.3} parent=0 // pred_check
    _
  $region23: #{a_call__.3} parent=0 // pred_check_branch
    %61 = sbr.rel (0) target = $region25
  $region24: #{a_call__.3} parent=0 // pred_region
    _
  $region25: #{a_call__.3} parent=0 // pred_fallthru
    _
  // Predicated region
  $region26: #{a_call__.3} parent=0 // pred_check
    _
  $region27: #{a_call__.3} parent=0 // pred_check_branch
    %63 = sbr.rel (0) target = $region29
  $region28: #{a_call__.3} parent=0 // pred_region
    _
  $region29: #{a_call__.3} parent=0 // pred_fallthru
    _

// kernel: a_call__.5
$region0: #{a_call__.5}
  #allocation0 [shape = 'u32[]', space=smem, size = 0x4, offset = 0x4, fixed_abs, tag = 'smem constant byte address 0x4 - core index']
  #allocation1 [shape = 'u32[144,128]{1,0:T(1,128)}', space=vmem, size = 0x12000, scoped, tag = 'internal scratch']
  %s0 = inlined_call_operand.vmem [shape: bf16[2,10,128,110], index: 0, kind: input, shape index: {}, may-alias: {0,1,2,3,4,5,6,7,8,9}]
  %s1 = inlined_call_operand.vmem [shape: bf16[2,10,128,110], index: 1, kind: input, shape index: {}, may-alias: {0,1,2,3,4,5,6,7,8,9}]
  %s2 = inlined_call_operand.vmem [shape: bf16[2,10,128,110], index: 2, kind: input, shape index: {}, may-alias: {0,1,2,3,4,5,6,7,8,9}]
  %s3 = inlined_call_operand.vmem [shape: bf16[2,10,128,110], index: 3, kind: input, shape index: {}, may-alias: {0,1,2,3,4,5,6,7,8,9}]
  %s4 = inlined_call_operand.vmem [shape: bf16[2,10,128,110], index: 4, kind: input, shape index: {}, may-alias: {0,1,2,3,4,5,6,7,8,9}]
  %s5 = inlined_call_operand.vmem [shape: bf16[2,10,128,110], index: 5, kind: input, shape index: {}, may-alias: {0,1,2,3,4,5,6,7,8,9}]
  %s6 = inlined_call_operand.vmem [shape: bf16[2,10,128,110], index: 6, kind: input, shape index: {}, may-alias: {0,1,2,3,4,5,6,7,8,9}]
  %s7 = inlined_call_operand.vmem [shape: bf16[2,10,128,110], index: 7, kind: input, shape index: {}, may-alias: {0,1,2,3,4,5,6,7,8,9}]
  %s8 = inlined_call_operand.vmem [shape: bf16[2,10,128,110], index: 8, kind: input, shape index: {}, may-alias: {0,1,2,3,4,5,6,7,8,9}]
  %s9 = inlined_call_operand.vmem [shape: bf16[2,10,128,110], index: 9, kind: input, shape index: {}, may-alias: {0,1,2,3,4,5,6,7,8,9}]
  %s10 = inlined_call_operand.vmem [shape: bf16[3,72,128], index: 10, kind: input, shape index: {}]
  %s11 = inlined_call_operand.vmem [shape: f32[8,1], index: 11, kind: input, shape index: {}]
  %s12 = inlined_call_operand.vmem [shape: bf16[2,8,4,80], index: 12, kind: input, shape index: {}]
  %s13 = inlined_call_operand.vmem [shape: f32[2,4,1], index: 13, kind: input, shape index: {}]
  %s14 = inlined_call_operand.vmem [shape: f32[2,4,1], index: 14, kind: input, shape index: {}]
  %s15 = inlined_call_operand.vmem [shape: f32[2,8,4,80], index: 15, kind: output, shape index: {}]
  %s16 = sld [smem:[#allocation0]]
  $region93: #{a_call__.5} parent=0
    _
  %s18 = ssub.s32 1, %s16
  %s19 = scalar_select 0, %s18, %s16
  loop: start=0, step=1, limit=4
  $region2: #{a_call__.5} parent=0 // loop_pre_header
    _
  $region3: #{a_call__.5} parent=0 // loop_header
    %s21 = sphi 0, %s25
    %p22 = scmp.ge.s32.totalorder %s21, 4
    %s28 = sphi 0, %s40
    %s29 = sphi 0, %s36
    %s30 = sphi 0, %s28
    %s31 = sphi 0, %s29
    %s32 = sphi 0, %s30
    %s33 = sphi 0, %s31
    %s47 = sphi 0, %s49
    %s50 = sphi 0, %s47
    %s51 = sphi 0, %s50
    %s67 = sphi 0, %s51
    %s79 = sphi 0, %s81
    %s82 = sphi 0, %s79
    %s83 = sphi 0, %s82
    %s99 = sphi 0, %s83
    %s111 = sphi 0, %s113
    %s114 = sphi 0, %s111
    %s115 = sphi 0, %s114
    %s131 = sphi 0, %s115
    %s143 = sphi 0, %s145
    %s146 = sphi 0, %s143
    %s147 = sphi 0, %s146
    %s163 = sphi 0, %s147
    %s175 = sphi 0, %s177
    %s178 = sphi 0, %s175
    %s179 = sphi 0, %s178
    %s195 = sphi 0, %s179
    %s207 = sphi 0, %s209
    %s210 = sphi 0, %s207
    %s211 = sphi 0, %s210
    %s227 = sphi 0, %s211
    %s239 = sphi 0, %s241
    %s242 = sphi 0, %s239
    %s243 = sphi 0, %s242
    %s259 = sphi 0, %s243
    %s271 = sphi 0, %s273
    %s274 = sphi 0, %s271
    %s275 = sphi 0, %s274
    %s291 = sphi 0, %s275
    %s303 = sphi 0, %s305
    %s306 = sphi 0, %s303
    %s307 = sphi 0, %s306
    %s323 = sphi 0, %s307
    %s335 = sphi 0, %s337
    %s338 = sphi 0, %s335
    %s339 = sphi 0, %s338
    %s355 = sphi 0, %s339
    %s359 = sphi 0, %s359
    %s361 = sphi 0, %s359
    %s362 = sphi 0, %s361
    %s376 = sphi 0, %s362
    %s380 = sphi 0, %s380
    %s382 = sphi 0, %s380
    %s383 = sphi 0, %s382
    %s397 = sphi 0, %s383
    %s405 = sphi 0, %s407
    %s408 = sphi 0, %s405
    %s409 = sphi 0, %s408
    %s425 = sphi 0, %s409
    %s431 = sphi 0, %s433
    %s434 = sphi 0, %s431
    %s435 = sphi 0, %s434
    %s451 = sphi 0, %s435
    %s457 = sphi 0, %s459
    %s460 = sphi 0, %s457
    %s461 = sphi 0, %s460
    %s477 = sphi 0, %s461
    %s485 = sphi 0, %s487
    %s488 = sphi 0, %s485
    %s489 = sphi 0, %s488
    %s505 = sphi 0, %s489
  $region4: #{a_call__.5} parent=0 // loop_header_branch
    %24 = sbr.rel (%p22) target = $region8
  $region5: #{a_call__.5} parent=0 // loop_body
    %s26 = ssub.s32 %s21, 1
    %s27 = ssub.s32 %s21, 2
    %s34 = sadd.s32 1, %s29
    %p35 = scmp.ge.s32.totalorder %s34, 1
    %s36 = scalar_select %p35, 0, %s34
    %s37 = sadd.s32 1, %s28
    %s38 = scalar_select %p35, %s37, %s28
    %p39 = scmp.ge.s32.totalorder %s38, 2
    %s40 = scalar_select %p39, 0, %s38
    %s41 = smul.u32 %s29, 8
    %s42 = smul.u32 %s36, 8
    %s43 = ssub.s32 %s28, %s40
    %s44 = ssub.s32 %s41, %s42
    %s45 = sor.u32 %s43, %s44
    %p46 = scmp.eq.s32.totalorder %s45, 0
    %s48 = sadd.s32 %s47, 1
    %s49 = scalar_select %p46, %s47, %s48
    %p52 = pneg %p46
    %p53 = scmp.eq.s32.totalorder %s21, 1
    %p54 = por %p52, %p53
    %p55 = scmp.ne.s32.totalorder %s47, %s50
    %p56 = scmp.eq.s32.totalorder %s21, 0
    %p57 = por %p55, %p56
    %p58 = scmp.ne.s32.totalorder %s47, %s50
    %p59 = scmp.eq.s32.totalorder %s26, 1
    %p60 = por %p58, %p59
    %p61 = scmp.ne.s32.totalorder %s50, %s51
    %p62 = scmp.eq.s32.totalorder %s26, 0
    %p63 = por %p61, %p62
    %p64 = scmp.ne.s32.totalorder %s50, %s51
    %p65 = scmp.eq.s32.totalorder %s27, 1
    %p66 = por %p64, %p65
    %p68 = scmp.ne.s32.totalorder %s51, %s67
    %p69 = scmp.eq.s32.totalorder %s27, 0
    %p70 = por %p68, %p69
    %s71 = smul.u32 %s29, 8
    %s72 = sadd.s32 %s71, 1
    %s73 = smul.u32 %s36, 8
    %s74 = sadd.s32 %s73, 1
    %s75 = ssub.s32 %s28, %s40
    %s76 = ssub.s32 %s72, %s74
    %s77 = sor.u32 %s75, %s76
    %p78 = scmp.eq.s32.totalorder %s77, 0
    %s80 = sadd.s32 %s79, 1
    %s81 = scalar_select %p78, %s79, %s80
    %p84 = pneg %p78
    %p85 = scmp.eq.s32.totalorder %s21, 1
    %p86 = por %p84, %p85
    %p87 = scmp.ne.s32.totalorder %s79, %s82
    %p88 = scmp.eq.s32.totalorder %s21, 0
    %p89 = por %p87, %p88
    %p90 = scmp.ne.s32.totalorder %s79, %s82
    %p91 = scmp.eq.s32.totalorder %s26, 1
    %p92 = por %p90, %p91
    %p93 = scmp.ne.s32.totalorder %s82, %s83
    %p94 = scmp.eq.s32.totalorder %s26, 0
    %p95 = por %p93, %p94
    %p96 = scmp.ne.s32.totalorder %s82, %s83
    %p97 = scmp.eq.s32.totalorder %s27, 1
    %p98 = por %p96, %p97
    %p100 = scmp.ne.s32.totalorder %s83, %s99
    %p101 = scmp.eq.s32.totalorder %s27, 0
    %p102 = por %p100, %p101
    %s103 = smul.u32 %s29, 8
    %s104 = sadd.s32 %s103, 2
    %s105 = smul.u32 %s36, 8
    %s106 = sadd.s32 %s105, 2
    %s107 = ssub.s32 %s28, %s40
    %s108 = ssub.s32 %s104, %s106
    %s109 = sor.u32 %s107, %s108
    %p110 = scmp.eq.s32.totalorder %s109, 0
    %s112 = sadd.s32 %s111, 1
    %s113 = scalar_select %p110, %s111, %s112
    %p116 = pneg %p110
    %p117 = scmp.eq.s32.totalorder %s21, 1
    %p118 = por %p116, %p117
    %p119 = scmp.ne.s32.totalorder %s111, %s114
    %p120 = scmp.eq.s32.totalorder %s21, 0
    %p121 = por %p119, %p120
    %p122 = scmp.ne.s32.totalorder %s111, %s114
    %p123 = scmp.eq.s32.totalorder %s26, 1
    %p124 = por %p122, %p123
    %p125 = scmp.ne.s32.totalorder %s114, %s115
    %p126 = scmp.eq.s32.totalorder %s26, 0
    %p127 = por %p125, %p126
    %p128 = scmp.ne.s32.totalorder %s114, %s115
    %p129 = scmp.eq.s32.totalorder %s27, 1
    %p130 = por %p128, %p129
    %p132 = scmp.ne.s32.totalorder %s115, %s131
    %p133 = scmp.eq.s32.totalorder %s27, 0
    %p134 = por %p132, %p133
    %s135 = smul.u32 %s29, 8
    %s136 = sadd.s32 %s135, 3
    %s137 = smul.u32 %s36, 8
    %s138 = sadd.s32 %s137, 3
    %s139 = ssub.s32 %s28, %s40
    %s140 = ssub.s32 %s136, %s138
    %s141 = sor.u32 %s139, %s140
    %p142 = scmp.eq.s32.totalorder %s141, 0
    %s144 = sadd.s32 %s143, 1
    %s145 = scalar_select %p142, %s143, %s144
    %p148 = pneg %p142
    %p149 = scmp.eq.s32.totalorder %s21, 1
    %p150 = por %p148, %p149
    %p151 = scmp.ne.s32.totalorder %s143, %s146
    %p152 = scmp.eq.s32.totalorder %s21, 0
    %p153 = por %p151, %p152
    %p154 = scmp.ne.s32.totalorder %s143, %s146
    %p155 = scmp.eq.s32.totalorder %s26, 1
    %p156 = por %p154, %p155
    %p157 = scmp.ne.s32.totalorder %s146, %s147
    %p158 = scmp.eq.s32.totalorder %s26, 0
    %p159 = por %p157, %p158
    %p160 = scmp.ne.s32.totalorder %s146, %s147
    %p161 = scmp.eq.s32.totalorder %s27, 1
    %p162 = por %p160, %p161
    %p164 = scmp.ne.s32.totalorder %s147, %s163
    %p165 = scmp.eq.s32.totalorder %s27, 0
    %p166 = por %p164, %p165
    %s167 = smul.u32 %s29, 8
    %s168 = sadd.s32 %s167, 4
    %s169 = smul.u32 %s36, 8
    %s170 = sadd.s32 %s169, 4
    %s171 = ssub.s32 %s28, %s40
    %s172 = ssub.s32 %s168, %s170
    %s173 = sor.u32 %s171, %s172
    %p174 = scmp.eq.s32.totalorder %s173, 0
    %s176 = sadd.s32 %s175, 1
    %s177 = scalar_select %p174, %s175, %s176
    %p180 = pneg %p174
    %p181 = scmp.eq.s32.totalorder %s21, 1
    %p182 = por %p180, %p181
    %p183 = scmp.ne.s32.totalorder %s175, %s178
    %p184 = scmp.eq.s32.totalorder %s21, 0
    %p185 = por %p183, %p184
    %p186 = scmp.ne.s32.totalorder %s175, %s178
    %p187 = scmp.eq.s32.totalorder %s26, 1
    %p188 = por %p186, %p187
    %p189 = scmp.ne.s32.totalorder %s178, %s179
    %p190 = scmp.eq.s32.totalorder %s26, 0
    %p191 = por %p189, %p190
    %p192 = scmp.ne.s32.totalorder %s178, %s179
    %p193 = scmp.eq.s32.totalorder %s27, 1
    %p194 = por %p192, %p193
    %p196 = scmp.ne.s32.totalorder %s179, %s195
    %p197 = scmp.eq.s32.totalorder %s27, 0
    %p198 = por %p196, %p197
    %s199 = smul.u32 %s29, 8
    %s200 = sadd.s32 %s199, 5
    %s201 = smul.u32 %s36, 8
    %s202 = sadd.s32 %s201, 5
    %s203 = ssub.s32 %s28, %s40
    %s204 = ssub.s32 %s200, %s202
    %s205 = sor.u32 %s203, %s204
    %p206 = scmp.eq.s32.totalorder %s205, 0
    %s208 = sadd.s32 %s207, 1
    %s209 = scalar_select %p206, %s207, %s208
    %p212 = pneg %p206
    %p213 = scmp.eq.s32.totalorder %s21, 1
    %p214 = por %p212, %p213
    %p215 = scmp.ne.s32.totalorder %s207, %s210
    %p216 = scmp.eq.s32.totalorder %s21, 0
    %p217 = por %p215, %p216
    %p218 = scmp.ne.s32.totalorder %s207, %s210
    %p219 = scmp.eq.s32.totalorder %s26, 1
    %p220 = por %p218, %p219
    %p221 = scmp.ne.s32.totalorder %s210, %s211
    %p222 = scmp.eq.s32.totalorder %s26, 0
    %p223 = por %p221, %p222
    %p224 = scmp.ne.s32.totalorder %s210, %s211
    %p225 = scmp.eq.s32.totalorder %s27, 1
    %p226 = por %p224, %p225
    %p228 = scmp.ne.s32.totalorder %s211, %s227
    %p229 = scmp.eq.s32.totalorder %s27, 0
    %p230 = por %p228, %p229
    %s231 = smul.u32 %s29, 8
    %s232 = sadd.s32 %s231, 6
    %s233 = smul.u32 %s36, 8
    %s234 = sadd.s32 %s233, 6
    %s235 = ssub.s32 %s28, %s40
    %s236 = ssub.s32 %s232, %s234
    %s237 = sor.u32 %s235, %s236
    %p238 = scmp.eq.s32.totalorder %s237, 0
    %s240 = sadd.s32 %s239, 1
    %s241 = scalar_select %p238, %s239, %s240
    %p244 = pneg %p238
    %p245 = scmp.eq.s32.totalorder %s21, 1
    %p246 = por %p244, %p245
    %p247 = scmp.ne.s32.totalorder %s239, %s242
    %p248 = scmp.eq.s32.totalorder %s21, 0
    %p249 = por %p247, %p248
    %p250 = scmp.ne.s32.totalorder %s239, %s242
    %p251 = scmp.eq.s32.totalorder %s26, 1
    %p252 = por %p250, %p251
    %p253 = scmp.ne.s32.totalorder %s242, %s243
    %p254 = scmp.eq.s32.totalorder %s26, 0
    %p255 = por %p253, %p254
    %p256 = scmp.ne.s32.totalorder %s242, %s243
    %p257 = scmp.eq.s32.totalorder %s27, 1
    %p258 = por %p256, %p257
    %p260 = scmp.ne.s32.totalorder %s243, %s259
    %p261 = scmp.eq.s32.totalorder %s27, 0
    %p262 = por %p260, %p261
    %s263 = smul.u32 %s29, 8
    %s264 = sadd.s32 %s263, 7
    %s265 = smul.u32 %s36, 8
    %s266 = sadd.s32 %s265, 7
    %s267 = ssub.s32 %s28, %s40
    %s268 = ssub.s32 %s264, %s266
    %s269 = sor.u32 %s267, %s268
    %p270 = scmp.eq.s32.totalorder %s269, 0
    %s272 = sadd.s32 %s271, 1
    %s273 = scalar_select %p270, %s271, %s272
    %p276 = pneg %p270
    %p277 = scmp.eq.s32.totalorder %s21, 1
    %p278 = por %p276, %p277
    %p279 = scmp.ne.s32.totalorder %s271, %s274
    %p280 = scmp.eq.s32.totalorder %s21, 0
    %p281 = por %p279, %p280
    %p282 = scmp.ne.s32.totalorder %s271, %s274
    %p283 = scmp.eq.s32.totalorder %s26, 1
    %p284 = por %p282, %p283
    %p285 = scmp.ne.s32.totalorder %s274, %s275
    %p286 = scmp.eq.s32.totalorder %s26, 0
    %p287 = por %p285, %p286
    %p288 = scmp.ne.s32.totalorder %s274, %s275
    %p289 = scmp.eq.s32.totalorder %s27, 1
    %p290 = por %p288, %p289
    %p292 = scmp.ne.s32.totalorder %s275, %s291
    %p293 = scmp.eq.s32.totalorder %s27, 0
    %p294 = por %p292, %p293
    %s295 = smul.u32 %s29, 8
    %s296 = sadd.s32 %s295, 8
    %s297 = smul.u32 %s36, 8
    %s298 = sadd.s32 %s297, 8
    %s299 = ssub.s32 %s28, %s40
    %s300 = ssub.s32 %s296, %s298
    %s301 = sor.u32 %s299, %s300
    %p302 = scmp.eq.s32.totalorder %s301, 0
    %s304 = sadd.s32 %s303, 1
    %s305 = scalar_select %p302, %s303, %s304
    %p308 = pneg %p302
    %p309 = scmp.eq.s32.totalorder %s21, 1
    %p310 = por %p308, %p309
    %p311 = scmp.ne.s32.totalorder %s303, %s306
    %p312 = scmp.eq.s32.totalorder %s21, 0
    %p313 = por %p311, %p312
    %p314 = scmp.ne.s32.totalorder %s303, %s306
    %p315 = scmp.eq.s32.totalorder %s26, 1
    %p316 = por %p314, %p315
    %p317 = scmp.ne.s32.totalorder %s306, %s307
    %p318 = scmp.eq.s32.totalorder %s26, 0
    %p319 = por %p317, %p318
    %p320 = scmp.ne.s32.totalorder %s306, %s307
    %p321 = scmp.eq.s32.totalorder %s27, 1
    %p322 = por %p320, %p321
    %p324 = scmp.ne.s32.totalorder %s307, %s323
    %p325 = scmp.eq.s32.totalorder %s27, 0
    %p326 = por %p324, %p325
    %s327 = smul.u32 %s29, 8
    %s328 = sadd.s32 %s327, 9
    %s329 = smul.u32 %s36, 8
    %s330 = sadd.s32 %s329, 9
    %s331 = ssub.s32 %s28, %s40
    %s332 = ssub.s32 %s328, %s330
    %s333 = sor.u32 %s331, %s332
    %p334 = scmp.eq.s32.totalorder %s333, 0
    %s336 = sadd.s32 %s335, 1
    %s337 = scalar_select %p334, %s335, %s336
    %p340 = pneg %p334
    %p341 = scmp.eq.s32.totalorder %s21, 1
    %p342 = por %p340, %p341
    %p343 = scmp.ne.s32.totalorder %s335, %s338
    %p344 = scmp.eq.s32.totalorder %s21, 0
    %p345 = por %p343, %p344
    %p346 = scmp.ne.s32.totalorder %s335, %s338
    %p347 = scmp.eq.s32.totalorder %s26, 1
    %p348 = por %p346, %p347
    %p349 = scmp.ne.s32.totalorder %s338, %s339
    %p350 = scmp.eq.s32.totalorder %s26, 0
    %p351 = por %p349, %p350
    %p352 = scmp.ne.s32.totalorder %s338, %s339
    %p353 = scmp.eq.s32.totalorder %s27, 1
    %p354 = por %p352, %p353
    %p356 = scmp.ne.s32.totalorder %s339, %s355
    %p357 = scmp.eq.s32.totalorder %s27, 0
    %p358 = por %p356, %p357
    %s360 = sadd.s32 %s359, 1
    %p363 = scmp.eq.s32.totalorder %s21, 1
    %p364 = scmp.ne.s32.totalorder %s359, %s361
    %p365 = scmp.eq.s32.totalorder %s21, 0
    %p366 = por %p364, %p365
    %p367 = scmp.ne.s32.totalorder %s359, %s361
    %p368 = scmp.eq.s32.totalorder %s26, 1
    %p369 = por %p367, %p368
    %p370 = scmp.ne.s32.totalorder %s361, %s362
    %p371 = scmp.eq.s32.totalorder %s26, 0
    %p372 = por %p370, %p371
    %p373 = scmp.ne.s32.totalorder %s361, %s362
    %p374 = scmp.eq.s32.totalorder %s27, 1
    %p375 = por %p373, %p374
    %p377 = scmp.ne.s32.totalorder %s362, %s376
    %p378 = scmp.eq.s32.totalorder %s27, 0
    %p379 = por %p377, %p378
    %s381 = sadd.s32 %s380, 1
    %p384 = scmp.eq.s32.totalorder %s21, 1
    %p385 = scmp.ne.s32.totalorder %s380, %s382
    %p386 = scmp.eq.s32.totalorder %s21, 0
    %p387 = por %p385, %p386
    %p388 = scmp.ne.s32.totalorder %s380, %s382
    %p389 = scmp.eq.s32.totalorder %s26, 1
    %p390 = por %p388, %p389
    %p391 = scmp.ne.s32.totalorder %s382, %s383
    %p392 = scmp.eq.s32.totalorder %s26, 0
    %p393 = por %p391, %p392
    %p394 = scmp.ne.s32.totalorder %s382, %s383
    %p395 = scmp.eq.s32.totalorder %s27, 1
    %p396 = por %p394, %p395
    %p398 = scmp.ne.s32.totalorder %s383, %s397
    %p399 = scmp.eq.s32.totalorder %s27, 0
    %p400 = por %p398, %p399
    %s401 = ssub.s32 %s28, %s40
    %s402 = ssub.s32 %s29, %s36
    %s403 = sor.u32 %s401, %s402
    %p404 = scmp.eq.s32.totalorder %s403, 0
    %s406 = sadd.s32 %s405, 1
    %s407 = scalar_select %p404, %s405, %s406
    %p410 = pneg %p404
    %p411 = scmp.eq.s32.totalorder %s21, 1
    %p412 = por %p410, %p411
    %p413 = scmp.ne.s32.totalorder %s405, %s408
    %p414 = scmp.eq.s32.totalorder %s21, 0
    %p415 = por %p413, %p414
    %p416 = scmp.ne.s32.totalorder %s405, %s408
    %p417 = scmp.eq.s32.totalorder %s26, 1
    %p418 = por %p416, %p417
    %p419 = scmp.ne.s32.totalorder %s408, %s409
    %p420 = scmp.eq.s32.totalorder %s26, 0
    %p421 = por %p419, %p420
    %p422 = scmp.ne.s32.totalorder %s408, %s409
    %p423 = scmp.eq.s32.totalorder %s27, 1
    %p424 = por %p422, %p423
    %p426 = scmp.ne.s32.totalorder %s409, %s425
    %p427 = scmp.eq.s32.totalorder %s27, 0
    %p428 = por %p426, %p427
    %s429 = ssub.s32 %s28, %s40
    %p430 = scmp.eq.s32.totalorder %s429, 0
    %s432 = sadd.s32 %s431, 1
    %s433 = scalar_select %p430, %s431, %s432
    %p436 = pneg %p430
    %p437 = scmp.eq.s32.totalorder %s21, 1
    %p438 = por %p436, %p437
    %p439 = scmp.ne.s32.totalorder %s431, %s434
    %p440 = scmp.eq.s32.totalorder %s21, 0
    %p441 = por %p439, %p440
    %p442 = scmp.ne.s32.totalorder %s431, %s434
    %p443 = scmp.eq.s32.totalorder %s26, 1
    %p444 = por %p442, %p443
    %p445 = scmp.ne.s32.totalorder %s434, %s435
    %p446 = scmp.eq.s32.totalorder %s26, 0
    %p447 = por %p445, %p446
    %p448 = scmp.ne.s32.totalorder %s434, %s435
    %p449 = scmp.eq.s32.totalorder %s27, 1
    %p450 = por %p448, %p449
    %p452 = scmp.ne.s32.totalorder %s435, %s451
    %p453 = scmp.eq.s32.totalorder %s27, 0
    %p454 = por %p452, %p453
    %s455 = ssub.s32 %s28, %s40
    %p456 = scmp.eq.s32.totalorder %s455, 0
    %s458 = sadd.s32 %s457, 1
    %s459 = scalar_select %p456, %s457, %s458
    %p462 = pneg %p456
    %p463 = scmp.eq.s32.totalorder %s21, 1
    %p464 = por %p462, %p463
    %p465 = scmp.ne.s32.totalorder %s457, %s460
    %p466 = scmp.eq.s32.totalorder %s21, 0
    %p467 = por %p465, %p466
    %p468 = scmp.ne.s32.totalorder %s457, %s460
    %p469 = scmp.eq.s32.totalorder %s26, 1
    %p470 = por %p468, %p469
    %p471 = scmp.ne.s32.totalorder %s460, %s461
    %p472 = scmp.eq.s32.totalorder %s26, 0
    %p473 = por %p471, %p472
    %p474 = scmp.ne.s32.totalorder %s460, %s461
    %p475 = scmp.eq.s32.totalorder %s27, 1
    %p476 = por %p474, %p475
    %p478 = scmp.ne.s32.totalorder %s461, %s477
    %p479 = scmp.eq.s32.totalorder %s27, 0
    %p480 = por %p478, %p479
    %s481 = ssub.s32 %s28, %s40
    %s482 = ssub.s32 %s29, %s36
    %s483 = sor.u32 %s481, %s482
    %p484 = scmp.eq.s32.totalorder %s483, 0
    %s486 = sadd.s32 %s485, 1
    %s487 = scalar_select %p484, %s485, %s486
    %p490 = pneg %p484
    %p491 = scmp.eq.s32.totalorder %s21, 1
    %p492 = por %p490, %p491
    %p493 = scmp.ne.s32.totalorder %s485, %s488
    %p494 = scmp.eq.s32.totalorder %s21, 0
    %p495 = por %p493, %p494
    %p496 = scmp.ne.s32.totalorder %s485, %s488
    %p497 = scmp.eq.s32.totalorder %s26, 1
    %p498 = por %p496, %p497
    %p499 = scmp.ne.s32.totalorder %s488, %s489
    %p500 = scmp.eq.s32.totalorder %s26, 0
    %p501 = por %p499, %p500
    %p502 = scmp.ne.s32.totalorder %s488, %s489
    %p503 = scmp.eq.s32.totalorder %s27, 1
    %p504 = por %p502, %p503
    %p506 = scmp.ne.s32.totalorder %s489, %s505
    %p507 = scmp.eq.s32.totalorder %s27, 0
    %p508 = por %p506, %p507
    %p509 = scmp.le.s32.totalorder 1, %s21
    %p510 = scmp.lt.s32.totalorder %s21, 3
    %p511 = pnand %p509, %p510
    %p512 = pneg %p511
    // Predicated region
    $region9: #{a_call__.5} parent=5 // pred_check
      _
    $region10: #{a_call__.5} parent=5 // pred_check_branch
      %514 = sbr.rel (%p511) target = $region12
    $region11: #{a_call__.5} parent=5 // pred_region
      %s515 = ssub.s32 %s21, 1
      // Predicated region
      $region13: #{a_call__.5} parent=11 // pred_check
        %p516 = pneg %p372
      $region14: #{a_call__.5} parent=11 // pred_check_branch
        %518 = sbr.rel (%p516) target = $region16
      $region15: #{a_call__.5} parent=11 // pred_region
        _
      $region16: #{a_call__.5} parent=11 // pred_fallthru
        _
      // Predicated region
      $region17: #{a_call__.5} parent=11 // pred_check
        %p519 = pneg %p393
      $region18: #{a_call__.5} parent=11 // pred_check_branch
        %521 = sbr.rel (%p519) target = $region20
      $region19: #{a_call__.5} parent=11 // pred_region
        _
      $region20: #{a_call__.5} parent=11 // pred_fallthru
        _
    $region12: #{a_call__.5} parent=5 // pred_fallthru
      _
    %p522 = scmp.lt.s32.totalorder %s21, 2
    // Predicated region
    $region21: #{a_call__.5} parent=5 // pred_check
      %p523 = pneg %p522
    $region22: #{a_call__.5} parent=5 // pred_check_branch
      %525 = sbr.rel (%p523) target = $region24
    $region23: #{a_call__.5} parent=5 // pred_region
      // Predicated region
      $region25: #{a_call__.5} parent=23 // pred_check
        %p526 = pneg %p57
      $region26: #{a_call__.5} parent=23 // pred_check_branch
        %528 = sbr.rel (%p526) target = $region28
      $region27: #{a_call__.5} parent=23 // pred_region
        %s529 = smul.u32 %s29, 8
        %p530 = scmp.lt.s32.totalorder %s28, 1
        %s531 = scalar_select %p530, %s28, 1
        %p532 = scmp.lt.s32.totalorder %s529, 9
        %s533 = scalar_select %p532, %s529, 9
        %s534 = smul.addr %s533, 16
        %s535 = smul.addr %s531, 160
        %s536 = sadd.s32 %s534, %s535
        %s537 = smul.addr %s536, 4
        %s538 = scalar_lea.vmem %s0, %s537
        %s539 = smul.u32 %s29, 8
      $region28: #{a_call__.5} parent=23 // pred_fallthru
        _
      // Predicated region
      $region29: #{a_call__.5} parent=23 // pred_check
        %p540 = pneg %p89
      $region30: #{a_call__.5} parent=23 // pred_check_branch
        %542 = sbr.rel (%p540) target = $region32
      $region31: #{a_call__.5} parent=23 // pred_region
        %s543 = smul.u32 %s29, 8
        %s544 = sadd.s32 %s543, 1
        %p545 = scmp.lt.s32.totalorder %s28, 1
        %s546 = scalar_select %p545, %s28, 1
        %p547 = scmp.lt.s32.totalorder %s544, 9
        %s548 = scalar_select %p547, %s544, 9
        %s549 = smul.addr %s548, 16
        %s550 = smul.addr %s546, 160
        %s551 = sadd.s32 %s549, %s550
        %s552 = smul.addr %s551, 4
        %s553 = scalar_lea.vmem %s1, %s552
        %s554 = smul.u32 %s29, 8
        %s555 = sadd.s32 %s554, 1
      $region32: #{a_call__.5} parent=23 // pred_fallthru
        _
      // Predicated region
      $region33: #{a_call__.5} parent=23 // pred_check
        %p556 = pneg %p121
      $region34: #{a_call__.5} parent=23 // pred_check_branch
        %558 = sbr.rel (%p556) target = $region36
      $region35: #{a_call__.5} parent=23 // pred_region
        %s559 = smul.u32 %s29, 8
        %s560 = sadd.s32 %s559, 2
        %p561 = scmp.lt.s32.totalorder %s28, 1
        %s562 = scalar_select %p561, %s28, 1
        %p563 = scmp.lt.s32.totalorder %s560, 9
        %s564 = scalar_select %p563, %s560, 9
        %s565 = smul.addr %s564, 16
        %s566 = smul.addr %s562, 160
        %s567 = sadd.s32 %s565, %s566
        %s568 = smul.addr %s567, 4
        %s569 = scalar_lea.vmem %s2, %s568
        %s570 = smul.u32 %s29, 8
        %s571 = sadd.s32 %s570, 2
      $region36: #{a_call__.5} parent=23 // pred_fallthru
        _
      // Predicated region
      $region37: #{a_call__.5} parent=23 // pred_check
        %p572 = pneg %p153
      $region38: #{a_call__.5} parent=23 // pred_check_branch
        %574 = sbr.rel (%p572) target = $region40
      $region39: #{a_call__.5} parent=23 // pred_region
        %s575 = smul.u32 %s29, 8
        %s576 = sadd.s32 %s575, 3
        %p577 = scmp.lt.s32.totalorder %s28, 1
        %s578 = scalar_select %p577, %s28, 1
        %p579 = scmp.lt.s32.totalorder %s576, 9
        %s580 = scalar_select %p579, %s576, 9
        %s581 = smul.addr %s580, 16
        %s582 = smul.addr %s578, 160
        %s583 = sadd.s32 %s581, %s582
        %s584 = smul.addr %s583, 4
        %s585 = scalar_lea.vmem %s3, %s584
        %s586 = smul.u32 %s29, 8
        %s587 = sadd.s32 %s586, 3
      $region40: #{a_call__.5} parent=23 // pred_fallthru
        _
      // Predicated region
      $region41: #{a_call__.5} parent=23 // pred_check
        %p588 = pneg %p185
      $region42: #{a_call__.5} parent=23 // pred_check_branch
        %590 = sbr.rel (%p588) target = $region44
      $region43: #{a_call__.5} parent=23 // pred_region
        %s591 = smul.u32 %s29, 8
        %s592 = sadd.s32 %s591, 4
        %p593 = scmp.lt.s32.totalorder %s28, 1
        %s594 = scalar_select %p593, %s28, 1
        %p595 = scmp.lt.s32.totalorder %s592, 9
        %s596 = scalar_select %p595, %s592, 9
        %s597 = smul.addr %s596, 16
        %s598 = smul.addr %s594, 160
        %s599 = sadd.s32 %s597, %s598
        %s600 = smul.addr %s599, 4
        %s601 = scalar_lea.vmem %s4, %s600
        %s602 = smul.u32 %s29, 8
        %s603 = sadd.s32 %s602, 4
      $region44: #{a_call__.5} parent=23 // pred_fallthru
        _
      // Predicated region
      $region45: #{a_call__.5} parent=23 // pred_check
        %p604 = pneg %p217
      $region46: #{a_call__.5} parent=23 // pred_check_branch
        %606 = sbr.rel (%p604) target = $region48
      $region47: #{a_call__.5} parent=23 // pred_region
        %s607 = smul.u32 %s29, 8
        %s608 = sadd.s32 %s607, 5
        %p609 = scmp.lt.s32.totalorder %s28, 1
        %s610 = scalar_select %p609, %s28, 1
        %p611 = scmp.lt.s32.totalorder %s608, 9
        %s612 = scalar_select %p611, %s608, 9
        %s613 = smul.addr %s612, 16
        %s614 = smul.addr %s610, 160
        %s615 = sadd.s32 %s613, %s614
        %s616 = smul.addr %s615, 4
        %s617 = scalar_lea.vmem %s5, %s616
        %s618 = smul.u32 %s29, 8
        %s619 = sadd.s32 %s618, 5
      $region48: #{a_call__.5} parent=23 // pred_fallthru
        _
      // Predicated region
      $region49: #{a_call__.5} parent=23 // pred_check
        %p620 = pneg %p249
      $region50: #{a_call__.5} parent=23 // pred_check_branch
        %622 = sbr.rel (%p620) target = $region52
      $region51: #{a_call__.5} parent=23 // pred_region
        %s623 = smul.u32 %s29, 8
        %s624 = sadd.s32 %s623, 6
        %p625 = scmp.lt.s32.totalorder %s28, 1
        %s626 = scalar_select %p625, %s28, 1
        %p627 = scmp.lt.s32.totalorder %s624, 9
        %s628 = scalar_select %p627, %s624, 9
        %s629 = smul.addr %s628, 16
        %s630 = smul.addr %s626, 160
        %s631 = sadd.s32 %s629, %s630
        %s632 = smul.addr %s631, 4
        %s633 = scalar_lea.vmem %s6, %s632
        %s634 = smul.u32 %s29, 8
        %s635 = sadd.s32 %s634, 6
      $region52: #{a_call__.5} parent=23 // pred_fallthru
        _
      // Predicated region
      $region53: #{a_call__.5} parent=23 // pred_check
        %p636 = pneg %p281
      $region54: #{a_call__.5} parent=23 // pred_check_branch
        %638 = sbr.rel (%p636) target = $region56
      $region55: #{a_call__.5} parent=23 // pred_region
        %s639 = smul.u32 %s29, 8
        %s640 = sadd.s32 %s639, 7
        %p641 = scmp.lt.s32.totalorder %s28, 1
        %s642 = scalar_select %p641, %s28, 1
        %p643 = scmp.lt.s32.totalorder %s640, 9
        %s644 = scalar_select %p643, %s640, 9
        %s645 = smul.addr %s644, 16
        %s646 = smul.addr %s642, 160
        %s647 = sadd.s32 %s645, %s646
        %s648 = smul.addr %s647, 4
        %s649 = scalar_lea.vmem %s7, %s648
        %s650 = smul.u32 %s29, 8
        %s651 = sadd.s32 %s650, 7
      $region56: #{a_call__.5} parent=23 // pred_fallthru
        _
      // Predicated region
      $region57: #{a_call__.5} parent=23 // pred_check
        %p652 = pneg %p313
      $region58: #{a_call__.5} parent=23 // pred_check_branch
        %654 = sbr.rel (%p652) target = $region60
      $region59: #{a_call__.5} parent=23 // pred_region
        %s655 = smul.u32 %s29, 8
        %s656 = sadd.s32 %s655, 8
        %p657 = scmp.lt.s32.totalorder %s28, 1
        %s658 = scalar_select %p657, %s28, 1
        %p659 = scmp.lt.s32.totalorder %s656, 9
        %s660 = scalar_select %p659, %s656, 9
        %s661 = smul.addr %s660, 16
        %s662 = smul.addr %s658, 160
        %s663 = sadd.s32 %s661, %s662
        %s664 = smul.addr %s663, 4
        %s665 = scalar_lea.vmem %s8, %s664
        %s666 = smul.u32 %s29, 8
        %s667 = sadd.s32 %s666, 8
      $region60: #{a_call__.5} parent=23 // pred_fallthru
        _
      // Predicated region
      $region61: #{a_call__.5} parent=23 // pred_check
        %p668 = pneg %p345
      $region62: #{a_call__.5} parent=23 // pred_check_branch
        %670 = sbr.rel (%p668) target = $region64
      $region63: #{a_call__.5} parent=23 // pred_region
        %s671 = smul.u32 %s29, 8
        %s672 = sadd.s32 %s671, 9
        %p673 = scmp.lt.s32.totalorder %s28, 1
        %s674 = scalar_select %p673, %s28, 1
        %p675 = scmp.lt.s32.totalorder %s672, 9
        %s676 = scalar_select %p675, %s672, 9
        %s677 = smul.addr %s676, 16
        %s678 = smul.addr %s674, 160
        %s679 = sadd.s32 %s677, %s678
        %s680 = smul.addr %s679, 4
        %s681 = scalar_lea.vmem %s9, %s680
        %s682 = smul.u32 %s29, 8
        %s683 = sadd.s32 %s682, 9
      $region64: #{a_call__.5} parent=23 // pred_fallthru
        _
      // Predicated region
      $region65: #{a_call__.5} parent=23 // pred_check
        %p684 = pneg %p415
      $region66: #{a_call__.5} parent=23 // pred_check_branch
        %686 = sbr.rel (%p684) target = $region68
      $region67: #{a_call__.5} parent=23 // pred_region
        %s687 = smul.u32 8, %s29
        %p688 = scmp.lt.s32.totalorder %s28, 1
        %s689 = scalar_select %p688, %s28, 1
        %p690 = scmp.lt.s32.totalorder %s687, 7
        %s691 = scalar_select %p690, %s687, 7
        %s692 = smul.addr %s689, 8
        %s693 = sadd.s32 %s691, %s692
        %s694 = smul.addr %s693, 2
        %s695 = scalar_lea.vmem %s12, %s694
        %s696 = smul.u32 8, %s29
      $region68: #{a_call__.5} parent=23 // pred_fallthru
        _
      // Predicated region
      $region69: #{a_call__.5} parent=23 // pred_check
        %p697 = pneg %p441
      $region70: #{a_call__.5} parent=23 // pred_check_branch
        %699 = sbr.rel (%p697) target = $region72
      $region71: #{a_call__.5} parent=23 // pred_region
        %p700 = scmp.lt.s32.totalorder %s28, 1
        %s701 = scalar_select %p700, %s28, 1
        %s702 = smul.addr %s701, 4
        %s703 = scalar_lea.vmem %s13, %s702
      $region72: #{a_call__.5} parent=23 // pred_fallthru
        _
      // Predicated region
      $region73: #{a_call__.5} parent=23 // pred_check
        %p704 = pneg %p467
      $region74: #{a_call__.5} parent=23 // pred_check_branch
        %706 = sbr.rel (%p704) target = $region76
      $region75: #{a_call__.5} parent=23 // pred_region
        %p707 = scmp.lt.s32.totalorder %s28, 1
        %s708 = scalar_select %p707, %s28, 1
        %s709 = smul.addr %s708, 4
        %s710 = scalar_lea.vmem %s14, %s709
      $region76: #{a_call__.5} parent=23 // pred_fallthru
        _
    $region24: #{a_call__.5} parent=5 // pred_fallthru
      _
    %p711 = scmp.le.s32.totalorder 1, %s21
    %p712 = scmp.lt.s32.totalorder %s21, 3
    %p713 = pnand %p711, %p712
    %p714 = pneg %p713
    // Predicated region
    $region77: #{a_call__.5} parent=5 // pred_check
      _
    $region78: #{a_call__.5} parent=5 // pred_check_branch
      %716 = sbr.rel (%p713) target = $region80
    $region79: #{a_call__.5} parent=5 // pred_region
      %s717 = ssub.s32 %s21, 1
      %s718 = smul.u32 %s31, 8
      %p719 = scmp.lt.s32.totalorder %s30, 1
      %s720 = scalar_select %p719, %s30, 1
      %p721 = scmp.lt.s32.totalorder %s718, 9
      %s722 = scalar_select %p721, %s718, 9
      %s723 = smul.addr %s722, 16
      %s724 = smul.addr %s720, 160
      %s725 = sadd.s32 %s723, %s724
      %s726 = smul.addr %s725, 4
      %s727 = scalar_lea.vmem %s0, %s726
      %p728 = pneg %p63
      %p729 = pneg %p60
      %s730 = smul.u32 %s31, 8
      %s731 = sadd.s32 %s730, 1
      %p732 = scmp.lt.s32.totalorder %s30, 1
      %s733 = scalar_select %p732, %s30, 1
      %p734 = scmp.lt.s32.totalorder %s731, 9
      %s735 = scalar_select %p734, %s731, 9
      %s736 = smul.addr %s735, 16
      %s737 = smul.addr %s733, 160
      %s738 = sadd.s32 %s736, %s737
      %s739 = smul.addr %s738, 4
      %s740 = scalar_lea.vmem %s1, %s739
      %p741 = pneg %p95
      %p742 = pneg %p92
      %s743 = smul.u32 %s31, 8
      %s744 = sadd.s32 %s743, 2
      %p745 = scmp.lt.s32.totalorder %s30, 1
      %s746 = scalar_select %p745, %s30, 1
      %p747 = scmp.lt.s32.totalorder %s744, 9
      %s748 = scalar_select %p747, %s744, 9
      %s749 = smul.addr %s748, 16
      %s750 = smul.addr %s746, 160
      %s751 = sadd.s32 %s749, %s750
      %s752 = smul.addr %s751, 4
      %s753 = scalar_lea.vmem %s2, %s752
      %p754 = pneg %p127
      %p755 = pneg %p124
      %s756 = smul.u32 %s31, 8
      %s757 = sadd.s32 %s756, 3
      %p758 = scmp.lt.s32.totalorder %s30, 1
      %s759 = scalar_select %p758, %s30, 1
      %p760 = scmp.lt.s32.totalorder %s757, 9
      %s761 = scalar_select %p760, %s757, 9
      %s762 = smul.addr %s761, 16
      %s763 = smul.addr %s759, 160
      %s764 = sadd.s32 %s762, %s763
      %s765 = smul.addr %s764, 4
      %s766 = scalar_lea.vmem %s3, %s765
      %p767 = pneg %p159
      %p768 = pneg %p156
      %s769 = smul.u32 %s31, 8
      %s770 = sadd.s32 %s769, 4
      %p771 = scmp.lt.s32.totalorder %s30, 1
      %s772 = scalar_select %p771, %s30, 1
      %p773 = scmp.lt.s32.totalorder %s770, 9
      %s774 = scalar_select %p773, %s770, 9
      %s775 = smul.addr %s774, 16
      %s776 = smul.addr %s772, 160
      %s777 = sadd.s32 %s775, %s776
      %s778 = smul.addr %s777, 4
      %s779 = scalar_lea.vmem %s4, %s778
      %p780 = pneg %p191
      %p781 = pneg %p188
      %s782 = smul.u32 %s31, 8
      %s783 = sadd.s32 %s782, 5
      %p784 = scmp.lt.s32.totalorder %s30, 1
      %s785 = scalar_select %p784, %s30, 1
      %p786 = scmp.lt.s32.totalorder %s783, 9
      %s787 = scalar_select %p786, %s783, 9
      %s788 = smul.addr %s787, 16
      %s789 = smul.addr %s785, 160
      %s790 = sadd.s32 %s788, %s789
      %s791 = smul.addr %s790, 4
      %s792 = scalar_lea.vmem %s5, %s791
      %p793 = pneg %p223
      %p794 = pneg %p220
      %s795 = smul.u32 %s31, 8
      %s796 = sadd.s32 %s795, 6
      %p797 = scmp.lt.s32.totalorder %s30, 1
      %s798 = scalar_select %p797, %s30, 1
      %p799 = scmp.lt.s32.totalorder %s796, 9
      %s800 = scalar_select %p799, %s796, 9
      %s801 = smul.addr %s800, 16
      %s802 = smul.addr %s798, 160
      %s803 = sadd.s32 %s801, %s802
      %s804 = smul.addr %s803, 4
      %s805 = scalar_lea.vmem %s6, %s804
      %p806 = pneg %p255
      %p807 = pneg %p252
      %s808 = smul.u32 %s31, 8
      %s809 = sadd.s32 %s808, 7
      %p810 = scmp.lt.s32.totalorder %s30, 1
      %s811 = scalar_select %p810, %s30, 1
      %p812 = scmp.lt.s32.totalorder %s809, 9
      %s813 = scalar_select %p812, %s809, 9
      %s814 = smul.addr %s813, 16
      %s815 = smul.addr %s811, 160
      %s816 = sadd.s32 %s814, %s815
      %s817 = smul.addr %s816, 4
      %s818 = scalar_lea.vmem %s7, %s817
      %p819 = pneg %p287
      %p820 = pneg %p284
      %s821 = smul.u32 %s31, 8
      %s822 = sadd.s32 %s821, 8
      %p823 = scmp.lt.s32.totalorder %s30, 1
      %s824 = scalar_select %p823, %s30, 1
      %p825 = scmp.lt.s32.totalorder %s822, 9
      %s826 = scalar_select %p825, %s822, 9
      %s827 = smul.addr %s826, 16
      %s828 = smul.addr %s824, 160
      %s829 = sadd.s32 %s827, %s828
      %s830 = smul.addr %s829, 4
      %s831 = scalar_lea.vmem %s8, %s830
      %p832 = pneg %p319
      %p833 = pneg %p316
      %s834 = smul.u32 %s31, 8
      %s835 = sadd.s32 %s834, 9
      %p836 = scmp.lt.s32.totalorder %s30, 1
      %s837 = scalar_select %p836, %s30, 1
      %p838 = scmp.lt.s32.totalorder %s835, 9
      %s839 = scalar_select %p838, %s835, 9
      %s840 = smul.addr %s839, 16
      %s841 = smul.addr %s837, 160
      %s842 = sadd.s32 %s840, %s841
      %s843 = smul.addr %s842, 4
      %s844 = scalar_lea.vmem %s9, %s843
      %p845 = pneg %p351
      %p846 = pneg %p348
      %p847 = pneg %p372
      %p848 = pneg %p369
      %p849 = pneg %p393
      %p850 = pneg %p390
      %s851 = smul.u32 8, %s31
      %p852 = scmp.lt.s32.totalorder %s30, 1
      %s853 = scalar_select %p852, %s30, 1
      %p854 = scmp.lt.s32.totalorder %s851, 7
      %s855 = scalar_select %p854, %s851, 7
      %s856 = smul.addr %s853, 8
      %s857 = sadd.s32 %s855, %s856
      %s858 = smul.addr %s857, 2
      %s859 = scalar_lea.vmem %s12, %s858
      %p860 = pneg %p421
      %p861 = pneg %p418
      %p862 = scmp.lt.s32.totalorder %s30, 1
      %s863 = scalar_select %p862, %s30, 1
      %s864 = smul.addr %s863, 4
      %s865 = scalar_lea.vmem %s13, %s864
      %p866 = pneg %p447
      %p867 = pneg %p444
      %p868 = scmp.lt.s32.totalorder %s30, 1
      %s869 = scalar_select %p868, %s30, 1
      %s870 = smul.addr %s869, 4
      %s871 = scalar_lea.vmem %s14, %s870
      %p872 = pneg %p473
      %p873 = pneg %p470
      %p874 = pneg %p501
      %p875 = pneg %p498
      %s876 = smul.u32 8, %s31
      %p877 = scmp.lt.s32.totalorder %s30, 1
      %s878 = scalar_select %p877, %s30, 1
      %p879 = scmp.lt.s32.totalorder %s876, 7
      %s880 = scalar_select %p879, %s876, 7
      %s881 = smul.addr %s878, 8
      %s882 = sadd.s32 %s880, %s881
      %s883 = smul.addr %s882, 4
      %s884 = scalar_lea.vmem %s15, %s883
      %s885 = smul.u32 %s31, 8
      %p886 = scmp.lt.s32.totalorder %s30, 1
      %s887 = scalar_select %p886, %s30, 1
      %p888 = scmp.lt.s32.totalorder %s885, 9
      %s889 = scalar_select %p888, %s885, 9
      %s890 = smul.addr %s889, 16
      %s891 = smul.addr %s887, 160
      %s892 = sadd.s32 %s890, %s891
      %s893 = smul.addr %s892, 4
      %s894 = scalar_lea.vmem %s0, %s893
      %s895 = smul.u32 %s31, 8
      %s896 = smul.u32 %s31, 8
      %s897 = sadd.s32 %s896, 1
      %p898 = scmp.lt.s32.totalorder %s30, 1
      %s899 = scalar_select %p898, %s30, 1
      %p900 = scmp.lt.s32.totalorder %s897, 9
      %s901 = scalar_select %p900, %s897, 9
      %s902 = smul.addr %s901, 16
      %s903 = smul.addr %s899, 160
      %s904 = sadd.s32 %s902, %s903
      %s905 = smul.addr %s904, 4
      %s906 = scalar_lea.vmem %s1, %s905
      %s907 = smul.u32 %s31, 8
      %s908 = sadd.s32 %s907, 1
      %s909 = smul.u32 %s31, 8
      %s910 = sadd.s32 %s909, 2
      %p911 = scmp.lt.s32.totalorder %s30, 1
      %s912 = scalar_select %p911, %s30, 1
      %p913 = scmp.lt.s32.totalorder %s910, 9
      %s914 = scalar_select %p913, %s910, 9
      %s915 = smul.addr %s914, 16
      %s916 = smul.addr %s912, 160
      %s917 = sadd.s32 %s915, %s916
      %s918 = smul.addr %s917, 4
      %s919 = scalar_lea.vmem %s2, %s918
      %s920 = smul.u32 %s31, 8
      %s921 = sadd.s32 %s920, 2
      %s922 = smul.u32 %s31, 8
      %s923 = sadd.s32 %s922, 3
      %p924 = scmp.lt.s32.totalorder %s30, 1
      %s925 = scalar_select %p924, %s30, 1
      %p926 = scmp.lt.s32.totalorder %s923, 9
      %s927 = scalar_select %p926, %s923, 9
      %s928 = smul.addr %s927, 16
      %s929 = smul.addr %s925, 160
      %s930 = sadd.s32 %s928, %s929
      %s931 = smul.addr %s930, 4
      %s932 = scalar_lea.vmem %s3, %s931
      %s933 = smul.u32 %s31, 8
      %s934 = sadd.s32 %s933, 3
      %s935 = smul.u32 %s31, 8
      %s936 = sadd.s32 %s935, 4
      %p937 = scmp.lt.s32.totalorder %s30, 1
      %s938 = scalar_select %p937, %s30, 1
      %p939 = scmp.lt.s32.totalorder %s936, 9
      %s940 = scalar_select %p939, %s936, 9
      %s941 = smul.addr %s940, 16
      %s942 = smul.addr %s938, 160
      %s943 = sadd.s32 %s941, %s942
      %s944 = smul.addr %s943, 4
      %s945 = scalar_lea.vmem %s4, %s944
      %s946 = smul.u32 %s31, 8
      %s947 = sadd.s32 %s946, 4
      %s948 = smul.u32 %s31, 8
      %s949 = sadd.s32 %s948, 5
      %p950 = scmp.lt.s32.totalorder %s30, 1
      %s951 = scalar_select %p950, %s30, 1
      %p952 = scmp.lt.s32.totalorder %s949, 9
      %s953 = scalar_select %p952, %s949, 9
      %s954 = smul.addr %s953, 16
      %s955 = smul.addr %s951, 160
      %s956 = sadd.s32 %s954, %s955
      %s957 = smul.addr %s956, 4
      %s958 = scalar_lea.vmem %s5, %s957
      %s959 = smul.u32 %s31, 8
      %s960 = sadd.s32 %s959, 5
      %s961 = smul.u32 %s31, 8
      %s962 = sadd.s32 %s961, 6
      %p963 = scmp.lt.s32.totalorder %s30, 1
      %s964 = scalar_select %p963, %s30, 1
      %p965 = scmp.lt.s32.totalorder %s962, 9
      %s966 = scalar_select %p965, %s962, 9
      %s967 = smul.addr %s966, 16
      %s968 = smul.addr %s964, 160
      %s969 = sadd.s32 %s967, %s968
      %s970 = smul.addr %s969, 4
      %s971 = scalar_lea.vmem %s6, %s970
      %s972 = smul.u32 %s31, 8
      %s973 = sadd.s32 %s972, 6
      %s974 = smul.u32 %s31, 8
      %s975 = sadd.s32 %s974, 7
      %p976 = scmp.lt.s32.totalorder %s30, 1
      %s977 = scalar_select %p976, %s30, 1
      %p978 = scmp.lt.s32.totalorder %s975, 9
      %s979 = scalar_select %p978, %s975, 9
      %s980 = smul.addr %s979, 16
      %s981 = smul.addr %s977, 160
      %s982 = sadd.s32 %s980, %s981
      %s983 = smul.addr %s982, 4
      %s984 = scalar_lea.vmem %s7, %s983
      %s985 = smul.u32 %s31, 8
      %s986 = sadd.s32 %s985, 7
      %s987 = smul.u32 %s31, 8
      %s988 = sadd.s32 %s987, 8
      %p989 = scmp.lt.s32.totalorder %s30, 1
      %s990 = scalar_select %p989, %s30, 1
      %p991 = scmp.lt.s32.totalorder %s988, 9
      %s992 = scalar_select %p991, %s988, 9
      %s993 = smul.addr %s992, 16
      %s994 = smul.addr %s990, 160
      %s995 = sadd.s32 %s993, %s994
      %s996 = smul.addr %s995, 4
      %s997 = scalar_lea.vmem %s8, %s996
      %s998 = smul.u32 %s31, 8
      %s999 = sadd.s32 %s998, 8
      %s1000 = smul.u32 %s31, 8
      %s1001 = sadd.s32 %s1000, 9
      %p1002 = scmp.lt.s32.totalorder %s30, 1
      %s1003 = scalar_select %p1002, %s30, 1
      %p1004 = scmp.lt.s32.totalorder %s1001, 9
      %s1005 = scalar_select %p1004, %s1001, 9
      %s1006 = smul.addr %s1005, 16
      %s1007 = smul.addr %s1003, 160
      %s1008 = sadd.s32 %s1006, %s1007
      %s1009 = smul.addr %s1008, 4
      %s1010 = scalar_lea.vmem %s9, %s1009
      %s1011 = smul.u32 %s31, 8
      %s1012 = sadd.s32 %s1011, 9
      %s1013 = smul.u32 8, %s31
      %p1014 = scmp.lt.s32.totalorder %s30, 1
      %s1015 = scalar_select %p1014, %s30, 1
      %p1016 = scmp.lt.s32.totalorder %s1013, 7
      %s1017 = scalar_select %p1016, %s1013, 7
      %s1018 = smul.addr %s1015, 8
      %s1019 = sadd.s32 %s1017, %s1018
      %s1020 = smul.addr %s1019, 2
      %s1021 = scalar_lea.vmem %s12, %s1020
      %s1022 = smul.u32 8, %s31
      %p1023 = scmp.lt.s32.totalorder %s30, 1
      %s1024 = scalar_select %p1023, %s30, 1
      %s1025 = smul.addr %s1024, 4
      %s1026 = scalar_lea.vmem %s13, %s1025
      %p1027 = scmp.lt.s32.totalorder %s30, 1
      %s1028 = scalar_select %p1027, %s30, 1
      %s1029 = smul.addr %s1028, 4
      %s1030 = scalar_lea.vmem %s14, %s1029
      %s1031 = smul.u32 8, %s31
      %p1032 = scmp.lt.s32.totalorder %s30, 1
      %s1033 = scalar_select %p1032, %s30, 1
      %p1034 = scmp.lt.s32.totalorder %s1031, 7
      %s1035 = scalar_select %p1034, %s1031, 7
      %s1036 = smul.addr %s1033, 8
      %s1037 = sadd.s32 %s1035, %s1036
      %s1038 = smul.addr %s1037, 4
      %s1039 = scalar_lea.vmem %s15, %s1038
      %s1040 = smul.u32 8, %s31
      %v1042 = vld [vmem:[%s11] sm:$0xff]
      %v1043 = vld [vmem:[%s1026] sm:$0xf]
      %v1044 = vld [vmem:[%s1030] sm:$0xf]
      %v1045 = vld [vmem:[%s894] sm:$0xf]
      %v1046 = vld [vmem:[%s894 + $0x4] sm:$0xf]
      %v1047 = vld [vmem:[%s894 + $0x8] sm:$0xf]
      %v1048 = vld [vmem:[%s894 + $0xc] sm:$0xf]
      %v1049 = vld [vmem:[%s894 + $0x10] sm:$0xf]
      %v1050 = vld [vmem:[%s894 + $0x14] sm:$0xf]
      %v1051 = vld [vmem:[%s894 + $0x18] sm:$0xf]
      %v1052 = vld [vmem:[%s894 + $0x1c] sm:$0xf]
      %v1053 = vld [vmem:[%s894 + $0x20] sm:$0xf]
      %v1054 = vld [vmem:[%s894 + $0x24] sm:$0xf]
      %v1055 = vld [vmem:[%s894 + $0x28] sm:$0xf]
      %v1056 = vld [vmem:[%s894 + $0x2c] sm:$0xf]
      %v1057 = vld [vmem:[%s894 + $0x30] sm:$0xf]
      %v1058 = vld [vmem:[%s894 + $0x34] sm:$0xf]
      %v1059 = vld [vmem:[%s894 + $0x38] sm:$0xf]
      %v1060 = vld [vmem:[%s894 + $0x3c] sm:$0xf]
      %v1061 = vld [vmem:[%s10] sm:$0xf]
      %v1062 = vld [vmem:[%s10 + $0x4] sm:$0xf]
      %v1063 = vld [vmem:[%s10 + $0x8] sm:$0xf]
      %v1064 = vld [vmem:[%s10 + $0xc] sm:$0xf]
      %v1065 = vld [vmem:[%s10 + $0x10] sm:$0xf]
      %v1066 = vld [vmem:[%s10 + $0x14] sm:$0xf]
      %v1067 = vld [vmem:[%s10 + $0x18] sm:$0xf]
      %v1068 = vld [vmem:[%s10 + $0x1c] sm:$0xf]
      %v1069 = vld [vmem:[%s10 + $0x20] sm:$0xf]
      %v1079 = vunpack.c.l.b16 %v1061
      %v1080 = vunpack.c.l.b16 %v1062
      %v1081 = vunpack.c.l.b16 %v1063
      %v1082 = vunpack.c.l.b16 %v1064
      %v1083 = vunpack.c.l.b16 %v1065
      %v1084 = vunpack.c.l.b16 %v1066
      %v1085 = vunpack.c.l.b16 %v1067
      %v1086 = vunpack.c.l.b16 %v1068
      %v1087 = vunpack.c.l.b16 %v1069
      %v1088 = vpack.c.b16 %v1080, %v1079
      %v1089 = vpack.c.b16 %v1082, %v1081
      %v1090 = vpack.c.b16 %v1084, %v1083
      %v1091 = vpack.c.b16 %v1086, %v1085
      %v1092 = vpack.c.b16 %v1087, %v1087
      %v1114 = vunpack.c.l.b16 %v1045
      %v1115 = vunpack.c.l.b16 %v1046
      %v1116 = vunpack.c.l.b16 %v1047
      %v1117 = vunpack.c.l.b16 %v1048
      %v1118 = vunpack.c.l.b16 %v1049
      %v1119 = vunpack.c.l.b16 %v1050
      %v1120 = vunpack.c.l.b16 %v1051
      %v1121 = vunpack.c.l.b16 %v1052
      %v1122 = vunpack.c.l.b16 %v1053
      %v1123 = vunpack.c.l.b16 %v1054
      %v1124 = vunpack.c.l.b16 %v1055
      %v1125 = vunpack.c.l.b16 %v1056
      %v1126 = vunpack.c.l.b16 %v1057
      %v1127 = vunpack.c.l.b16 %v1058
      %v1128 = vunpack.c.l.b16 %v1059
      %v1129 = vunpack.c.l.b16 %v1060
      %v1130 = vpack.c.b16 %v1115, %v1114
      %v1131 = vpack.c.b16 %v1117, %v1116
      %v1132 = vpack.c.b16 %v1119, %v1118
      %v1133 = vpack.c.b16 %v1121, %v1120
      %v1134 = vpack.c.b16 %v1123, %v1122
      %v1135 = vpack.c.b16 %v1125, %v1124
      %v1136 = vpack.c.b16 %v1127, %v1126
      %v1137 = vpack.c.b16 %v1129, %v1128
      %1146 = vmatprep.subr.bf16.mxu0 0
      %1147 = vmatpush1.bf16.msra.mxu0 %v1137
      %1148 = vmatprep.subr.bf16.mxu0 0
      %1149 = vmatpush1.bf16.msra.mxu0 %v1136
      %1150 = vmatprep.subr.bf16.mxu0 0
      %1151 = vmatpush1.bf16.msra.mxu0 %v1135
      %1152 = vmatprep.subr.bf16.mxu0 0
      %1153 = vmatpush1.bf16.msra.mxu0 %v1134
      %1154 = vmatprep.subr.bf16.mxu0 0
      %1155 = vmatpush1.bf16.msra.mxu0 %v1133
      %1156 = vmatprep.subr.bf16.mxu0 0
      %1157 = vmatpush1.bf16.msra.mxu0 %v1132
      %1158 = vmatprep.subr.bf16.mxu0 0
      %1159 = vmatpush1.bf16.msra.mxu0 %v1131
      %1160 = vmatprep.subr.bf16.mxu0 0
      %1161 = vmatpush1.bf16.msra.mxu0 %v1130
      %1162 = vmatprep.subr.bf16.mxu0 0
      %1163 = vmatpush2.bf16.msra.mxu0 0
      %1164 = vmatprep.subr.bf16.mxu0 0
      %1165 = vmatpush2.bf16.msra.mxu0 0
      %1166 = vmatprep.subr.bf16.mxu0 0
      %1167 = vmatpush2.bf16.msra.mxu0 0
      %1168 = vmatprep.subr.bf16.mxu0 0
      %1169 = vmatpush2.bf16.msra.mxu0 0
      %1170 = vmatprep.subr.bf16.mxu0 0
      %1171 = vmatpush2.bf16.msra.mxu0 0
      %1172 = vmatprep.subr.bf16.mxu0 0
      %1173 = vmatpush2.bf16.msra.mxu0 0
      %1174 = vmatprep.subr.bf16.mxu0 0
      %1175 = vmatpush2.bf16.msra.mxu0 0
      %1176 = vmatprep.subr.bf16.mxu0 0
      %1177 = vmatpush2.bf16.msra.mxu0 0
      %1178 = vmatprep.mubr.bf16.mxu0 0
      %1179 = vmatmul.mubr.bf16.gmra.mxu0 %v1088
      %v1180 = vpop.f32.mrf.mxu0
      %v1181 = vadd.f32 0.0, %v1180
      %v1182 = vpop.f32.mrf.mxu0
      %v1183 = vpop.f32.mrf.mxu0
      %v1184 = vadd.f32 0.0, %v1183
      %v1185 = vpop.f32.mrf.mxu0
      %1186 = vmatprep.mubr.bf16.mxu0 0
      %1187 = vmatmul.mubr.bf16.gmra.mxu0 %v1089
      %v1188 = vpop.f32.mrf.mxu0
      %v1189 = vadd.f32 0.0, %v1188
      %v1190 = vpop.f32.mrf.mxu0
      %v1191 = vpop.f32.mrf.mxu0
      %v1192 = vadd.f32 0.0, %v1191
      %v1193 = vpop.f32.mrf.mxu0
      %1194 = vmatprep.mubr.bf16.mxu0 0
      %1195 = vmatmul.mubr.bf16.gmra.mxu0 %v1090
      %v1196 = vpop.f32.mrf.mxu0
      %v1197 = vadd.f32 0.0, %v1196
      %v1198 = vpop.f32.mrf.mxu0
      %v1199 = vpop.f32.mrf.mxu0
      %v1200 = vadd.f32 0.0, %v1199
      %v1201 = vpop.f32.mrf.mxu0
      %1202 = vmatprep.mubr.bf16.mxu0 0
      %1203 = vmatmul.mubr.bf16.gmra.mxu0 %v1091
      %v1204 = vpop.f32.mrf.mxu0
      %v1205 = vadd.f32 0.0, %v1204
      %v1206 = vpop.f32.mrf.mxu0
      %v1207 = vpop.f32.mrf.mxu0
      %v1208 = vadd.f32 0.0, %v1207
      %v1209 = vpop.f32.mrf.mxu0
      %1210 = vmatprep.mubr.bf16.mxu0 0
      %1211 = vmatmul.mubr.bf16.gmra.mxu0 %v1092
      %v1212 = vpop.f32.mrf.mxu0
      %v1213 = vadd.f32 0.0, %v1212
      %v1214 = vpop.f32.mrf.mxu0
      %v1215 = vpop.f32.mrf.mxu0
      %v1216 = vpop.f32.mrf.mxu0
      %1217 = vdwg.mxu0
      %1219 = vrot.lane.b32.xlu0 %v1184, 127
      %v1220 = vpop.permute.xlu0 %1219
      %v1222 = vadd.f32 %v1181, %v1220
      %1224 = vrot.lane.b32.xlu0 %v1189, 126
      %v1225 = vpop.permute.xlu0 %1224
      %v1227 = vadd.f32 %v1222, %v1225
      %1229 = vrot.lane.b32.xlu0 %v1192, 118
      %v1230 = vpop.permute.xlu0 %1229
      %v1232 = vadd.f32 %v1227, %v1230
      %1234 = vrot.lane.b32.xlu0 %v1197, 117
      %v1235 = vpop.permute.xlu0 %1234
      %v1237 = vadd.f32 %v1232, %v1235
      %1239 = vrot.lane.b32.xlu0 %v1200, 116
      %v1240 = vpop.permute.xlu0 %1239
      %v1242 = vadd.f32 %v1237, %v1240
      %1244 = vrot.lane.b32.xlu0 %v1205, 108
      %v1245 = vpop.permute.xlu0 %1244
      %v1247 = vadd.f32 %v1242, %v1245
      %1249 = vrot.lane.b32.xlu0 %v1208, 107
      %v1250 = vpop.permute.xlu0 %1249
      %v1252 = vadd.f32 %v1247, %v1250
      %1254 = vrot.lane.b32.xlu0 %v1213, 106
      %v1255 = vpop.permute.xlu0 %1254
      %v1257 = vadd.f32 %v1252, %v1255
      %v1258 = vld [vmem:[%s906] sm:$0xf]
      %v1259 = vld [vmem:[%s906 + $0x4] sm:$0xf]
      %v1260 = vld [vmem:[%s906 + $0x8] sm:$0xf]
      %v1261 = vld [vmem:[%s906 + $0xc] sm:$0xf]
      %v1262 = vld [vmem:[%s906 + $0x10] sm:$0xf]
      %v1263 = vld [vmem:[%s906 + $0x14] sm:$0xf]
      %v1264 = vld [vmem:[%s906 + $0x18] sm:$0xf]
      %v1265 = vld [vmem:[%s906 + $0x1c] sm:$0xf]
      %v1266 = vld [vmem:[%s906 + $0x20] sm:$0xf]
      %v1267 = vld [vmem:[%s906 + $0x24] sm:$0xf]
      %v1268 = vld [vmem:[%s906 + $0x28] sm:$0xf]
      %v1269 = vld [vmem:[%s906 + $0x2c] sm:$0xf]
      %v1270 = vld [vmem:[%s906 + $0x30] sm:$0xf]
      %v1271 = vld [vmem:[%s906 + $0x34] sm:$0xf]
      %v1272 = vld [vmem:[%s906 + $0x38] sm:$0xf]
      %v1273 = vld [vmem:[%s906 + $0x3c] sm:$0xf]
      %s1274 = scalar_lea.vmem %s10, 36
      %v1275 = vld [vmem:[%s1274] sm:$0xf]
      %v1276 = vld [vmem:[%s1274 + $0x4] sm:$0xf]
      %v1277 = vld [vmem:[%s1274 + $0x8] sm:$0xf]
      %v1278 = vld [vmem:[%s1274 + $0xc] sm:$0xf]
      %v1279 = vld [vmem:[%s1274 + $0x10] sm:$0xf]
      %v1280 = vld [vmem:[%s1274 + $0x14] sm:$0xf]
      %v1281 = vld [vmem:[%s1274 + $0x18] sm:$0xf]
      %v1282 = vld [vmem:[%s1274 + $0x1c] sm:$0xf]
      %v1283 = vld [vmem:[%s1274 + $0x20] sm:$0xf]
      %v1293 = vunpack.c.l.b16 %v1275
      %v1294 = vunpack.c.l.b16 %v1276
      %v1295 = vunpack.c.l.b16 %v1277
      %v1296 = vunpack.c.l.b16 %v1278
      %v1297 = vunpack.c.l.b16 %v1279
      %v1298 = vunpack.c.l.b16 %v1280
      %v1299 = vunpack.c.l.b16 %v1281
      %v1300 = vunpack.c.l.b16 %v1282
      %v1301 = vunpack.c.l.b16 %v1283
      %v1302 = vpack.c.b16 %v1294, %v1293
      %v1303 = vpack.c.b16 %v1296, %v1295
      %v1304 = vpack.c.b16 %v1298, %v1297
      %v1305 = vpack.c.b16 %v1300, %v1299
      %v1306 = vpack.c.b16 %v1301, %v1301
      %v1328 = vunpack.c.l.b16 %v1258
      %v1329 = vunpack.c.l.b16 %v1259
      %v1330 = vunpack.c.l.b16 %v1260
      %v1331 = vunpack.c.l.b16 %v1261
      %v1332 = vunpack.c.l.b16 %v1262
      %v1333 = vunpack.c.l.b16 %v1263
      %v1334 = vunpack.c.l.b16 %v1264
      %v1335 = vunpack.c.l.b16 %v1265
      %v1336 = vunpack.c.l.b16 %v1266
      %v1337 = vunpack.c.l.b16 %v1267
      %v1338 = vunpack.c.l.b16 %v1268
      %v1339 = vunpack.c.l.b16 %v1269
      %v1340 = vunpack.c.l.b16 %v1270
      %v1341 = vunpack.c.l.b16 %v1271
      %v1342 = vunpack.c.l.b16 %v1272
      %v1343 = vunpack.c.l.b16 %v1273
      %v1344 = vpack.c.b16 %v1329, %v1328
      %v1345 = vpack.c.b16 %v1331, %v1330
      %v1346 = vpack.c.b16 %v1333, %v1332
      %v1347 = vpack.c.b16 %v1335, %v1334
      %v1348 = vpack.c.b16 %v1337, %v1336
      %v1349 = vpack.c.b16 %v1339, %v1338
      %v1350 = vpack.c.b16 %v1341, %v1340
      %v1351 = vpack.c.b16 %v1343, %v1342
      %1360 = vmatprep.subr.bf16.mxu0 0
      %1361 = vmatpush1.bf16.msra.mxu0 %v1351
      %1362 = vmatprep.subr.bf16.mxu0 0
      %1363 = vmatpush1.bf16.msra.mxu0 %v1350
      %1364 = vmatprep.subr.bf16.mxu0 0
      %1365 = vmatpush1.bf16.msra.mxu0 %v1349
      %1366 = vmatprep.subr.bf16.mxu0 0
      %1367 = vmatpush1.bf16.msra.mxu0 %v1348
      %1368 = vmatprep.subr.bf16.mxu0 0
      %1369 = vmatpush1.bf16.msra.mxu0 %v1347
      %1370 = vmatprep.subr.bf16.mxu0 0
      %1371 = vmatpush1.bf16.msra.mxu0 %v1346
      %1372 = vmatprep.subr.bf16.mxu0 0
      %1373 = vmatpush1.bf16.msra.mxu0 %v1345
      %1374 = vmatprep.subr.bf16.mxu0 0
      %1375 = vmatpush1.bf16.msra.mxu0 %v1344
      %1376 = vmatprep.subr.bf16.mxu0 0
      %1377 = vmatpush2.bf16.msra.mxu0 0
      %1378 = vmatprep.subr.bf16.mxu0 0
      %1379 = vmatpush2.bf16.msra.mxu0 0
      %1380 = vmatprep.subr.bf16.mxu0 0
      %1381 = vmatpush2.bf16.msra.mxu0 0
      %1382 = vmatprep.subr.bf16.mxu0 0
      %1383 = vmatpush2.bf16.msra.mxu0 0
      %1384 = vmatprep.subr.bf16.mxu0 0
      %1385 = vmatpush2.bf16.msra.mxu0 0
      %1386 = vmatprep.subr.bf16.mxu0 0
      %1387 = vmatpush2.bf16.msra.mxu0 0
      %1388 = vmatprep.subr.bf16.mxu0 0
      %1389 = vmatpush2.bf16.msra.mxu0 0
      %1390 = vmatprep.subr.bf16.mxu0 0
      %1391 = vmatpush2.bf16.msra.mxu0 0
      %1392 = vmatprep.mubr.bf16.mxu0 0
      %1393 = vmatmul.mubr.bf16.gmra.mxu0 %v1302
      %v1394 = vpop.f32.mrf.mxu0
      %v1395 = vadd.f32 0.0, %v1394
      %v1396 = vpop.f32.mrf.mxu0
      %v1397 = vpop.f32.mrf.mxu0
      %v1398 = vadd.f32 0.0, %v1397
      %v1399 = vpop.f32.mrf.mxu0
      %1400 = vmatprep.mubr.bf16.mxu0 0
      %1401 = vmatmul.mubr.bf16.gmra.mxu0 %v1303
      %v1402 = vpop.f32.mrf.mxu0
      %v1403 = vadd.f32 0.0, %v1402
      %v1404 = vpop.f32.mrf.mxu0
      %v1405 = vpop.f32.mrf.mxu0
      %v1406 = vadd.f32 0.0, %v1405
      %v1407 = vpop.f32.mrf.mxu0
      %1408 = vmatprep.mubr.bf16.mxu0 0
      %1409 = vmatmul.mubr.bf16.gmra.mxu0 %v1304
      %v1410 = vpop.f32.mrf.mxu0
      %v1411 = vadd.f32 0.0, %v1410
      %v1412 = vpop.f32.mrf.mxu0
      %v1413 = vpop.f32.mrf.mxu0
      %v1414 = vadd.f32 0.0, %v1413
      %v1415 = vpop.f32.mrf.mxu0
      %1416 = vmatprep.mubr.bf16.mxu0 0
      %1417 = vmatmul.mubr.bf16.gmra.mxu0 %v1305
      %v1418 = vpop.f32.mrf.mxu0
      %v1419 = vadd.f32 0.0, %v1418
      %v1420 = vpop.f32.mrf.mxu0
      %v1421 = vpop.f32.mrf.mxu0
      %v1422 = vadd.f32 0.0, %v1421
      %v1423 = vpop.f32.mrf.mxu0
      %1424 = vmatprep.mubr.bf16.mxu0 0
      %1425 = vmatmul.mubr.bf16.gmra.mxu0 %v1306
      %v1426 = vpop.f32.mrf.mxu0
      %v1427 = vadd.f32 0.0, %v1426
      %v1428 = vpop.f32.mrf.mxu0
      %v1429 = vpop.f32.mrf.mxu0
      %v1430 = vpop.f32.mrf.mxu0
      %1431 = vdwg.mxu0
      %v1432 = vadd.f32 %v1257, %v1395
      %1434 = vrot.lane.b32.xlu0 %v1398, 127
      %v1435 = vpop.permute.xlu0 %1434
      %v1437 = vadd.f32 %v1432, %v1435
      %1439 = vrot.lane.b32.xlu0 %v1403, 126
      %v1440 = vpop.permute.xlu0 %1439
      %v1442 = vadd.f32 %v1437, %v1440
      %1444 = vrot.lane.b32.xlu0 %v1406, 118
      %v1445 = vpop.permute.xlu0 %1444
      %v1447 = vadd.f32 %v1442, %v1445
      %1449 = vrot.lane.b32.xlu0 %v1411, 117
      %v1450 = vpop.permute.xlu0 %1449
      %v1452 = vadd.f32 %v1447, %v1450
      %1454 = vrot.lane.b32.xlu0 %v1414, 116
      %v1455 = vpop.permute.xlu0 %1454
      %v1457 = vadd.f32 %v1452, %v1455
      %1459 = vrot.lane.b32.xlu0 %v1419, 108
      %v1460 = vpop.permute.xlu0 %1459
      %v1462 = vadd.f32 %v1457, %v1460
      %1464 = vrot.lane.b32.xlu0 %v1422, 107
      %v1465 = vpop.permute.xlu0 %1464
      %v1467 = vadd.f32 %v1462, %v1465
      %1469 = vrot.lane.b32.xlu0 %v1427, 106
      %v1470 = vpop.permute.xlu0 %1469
      %v1472 = vadd.f32 %v1467, %v1470
      %v1473 = vld [vmem:[%s919] sm:$0xf]
      %v1474 = vld [vmem:[%s919 + $0x4] sm:$0xf]
      %v1475 = vld [vmem:[%s919 + $0x8] sm:$0xf]
      %v1476 = vld [vmem:[%s919 + $0xc] sm:$0xf]
      %v1477 = vld [vmem:[%s919 + $0x10] sm:$0xf]
      %v1478 = vld [vmem:[%s919 + $0x14] sm:$0xf]
      %v1479 = vld [vmem:[%s919 + $0x18] sm:$0xf]
      %v1480 = vld [vmem:[%s919 + $0x1c] sm:$0xf]
      %v1481 = vld [vmem:[%s919 + $0x20] sm:$0xf]
      %v1482 = vld [vmem:[%s919 + $0x24] sm:$0xf]
      %v1483 = vld [vmem:[%s919 + $0x28] sm:$0xf]
      %v1484 = vld [vmem:[%s919 + $0x2c] sm:$0xf]
      %v1485 = vld [vmem:[%s919 + $0x30] sm:$0xf]
      %v1486 = vld [vmem:[%s919 + $0x34] sm:$0xf]
      %v1487 = vld [vmem:[%s919 + $0x38] sm:$0xf]
      %v1488 = vld [vmem:[%s919 + $0x3c] sm:$0xf]
      %s1489 = scalar_lea.vmem %s10, 72
      %v1490 = vld [vmem:[%s1489] sm:$0xf]
      %v1491 = vld [vmem:[%s1489 + $0x4] sm:$0xf]
      %v1492 = vld [vmem:[%s1489 + $0x8] sm:$0xf]
      %v1493 = vld [vmem:[%s1489 + $0xc] sm:$0xf]
      %v1494 = vld [vmem:[%s1489 + $0x10] sm:$0xf]
      %v1495 = vld [vmem:[%s1489 + $0x14] sm:$0xf]
      %v1496 = vld [vmem:[%s1489 + $0x18] sm:$0xf]
      %v1497 = vld [vmem:[%s1489 + $0x1c] sm:$0xf]
      %v1498 = vld [vmem:[%s1489 + $0x20] sm:$0xf]
      %v1508 = vunpack.c.l.b16 %v1490
      %v1509 = vunpack.c.l.b16 %v1491
      %v1510 = vunpack.c.l.b16 %v1492
      %v1511 = vunpack.c.l.b16 %v1493
      %v1512 = vunpack.c.l.b16 %v1494
      %v1513 = vunpack.c.l.b16 %v1495
      %v1514 = vunpack.c.l.b16 %v1496
      %v1515 = vunpack.c.l.b16 %v1497
      %v1516 = vunpack.c.l.b16 %v1498
      %v1517 = vpack.c.b16 %v1509, %v1508
      %v1518 = vpack.c.b16 %v1511, %v1510
      %v1519 = vpack.c.b16 %v1513, %v1512
      %v1520 = vpack.c.b16 %v1515, %v1514
      %v1521 = vpack.c.b16 %v1516, %v1516
      %v1543 = vunpack.c.l.b16 %v1473
      %v1544 = vunpack.c.l.b16 %v1474
      %v1545 = vunpack.c.l.b16 %v1475
      %v1546 = vunpack.c.l.b16 %v1476
      %v1547 = vunpack.c.l.b16 %v1477
      %v1548 = vunpack.c.l.b16 %v1478
      %v1549 = vunpack.c.l.b16 %v1479
      %v1550 = vunpack.c.l.b16 %v1480
      %v1551 = vunpack.c.l.b16 %v1481
      %v1552 = vunpack.c.l.b16 %v1482
      %v1553 = vunpack.c.l.b16 %v1483
      %v1554 = vunpack.c.l.b16 %v1484
      %v1555 = vunpack.c.l.b16 %v1485
      %v1556 = vunpack.c.l.b16 %v1486
      %v1557 = vunpack.c.l.b16 %v1487
      %v1558 = vunpack.c.l.b16 %v1488
      %v1559 = vpack.c.b16 %v1544, %v1543
      %v1560 = vpack.c.b16 %v1546, %v1545
      %v1561 = vpack.c.b16 %v1548, %v1547
      %v1562 = vpack.c.b16 %v1550, %v1549
      %v1563 = vpack.c.b16 %v1552, %v1551
      %v1564 = vpack.c.b16 %v1554, %v1553
      %v1565 = vpack.c.b16 %v1556, %v1555
      %v1566 = vpack.c.b16 %v1558, %v1557
      %1575 = vmatprep.subr.bf16.mxu0 0
      %1576 = vmatpush1.bf16.msra.mxu0 %v1566
      %1577 = vmatprep.subr.bf16.mxu0 0
      %1578 = vmatpush1.bf16.msra.mxu0 %v1565
      %1579 = vmatprep.subr.bf16.mxu0 0
      %1580 = vmatpush1.bf16.msra.mxu0 %v1564
      %1581 = vmatprep.subr.bf16.mxu0 0
      %1582 = vmatpush1.bf16.msra.mxu0 %v1563
      %1583 = vmatprep.subr.bf16.mxu0 0
      %1584 = vmatpush1.bf16.msra.mxu0 %v1562
      %1585 = vmatprep.subr.bf16.mxu0 0
      %1586 = vmatpush1.bf16.msra.mxu0 %v1561
      %1587 = vmatprep.subr.bf16.mxu0 0
      %1588 = vmatpush1.bf16.msra.mxu0 %v1560
      %1589 = vmatprep.subr.bf16.mxu0 0
      %1590 = vmatpush1.bf16.msra.mxu0 %v1559
      %1591 = vmatprep.subr.bf16.mxu0 0
      %1592 = vmatpush2.bf16.msra.mxu0 0
      %1593 = vmatprep.subr.bf16.mxu0 0
      %1594 = vmatpush2.bf16.msra.mxu0 0
      %1595 = vmatprep.subr.bf16.mxu0 0
      %1596 = vmatpush2.bf16.msra.mxu0 0
      %1597 = vmatprep.subr.bf16.mxu0 0
      %1598 = vmatpush2.bf16.msra.mxu0 0
      %1599 = vmatprep.subr.bf16.mxu0 0
      %1600 = vmatpush2.bf16.msra.mxu0 0
      %1601 = vmatprep.subr.bf16.mxu0 0
      %1602 = vmatpush2.bf16.msra.mxu0 0
      %1603 = vmatprep.subr.bf16.mxu0 0
      %1604 = vmatpush2.bf16.msra.mxu0 0
      %1605 = vmatprep.subr.bf16.mxu0 0
      %1606 = vmatpush2.bf16.msra.mxu0 0
      %1607 = vmatprep.mubr.bf16.mxu0 0
      %1608 = vmatmul.mubr.bf16.gmra.mxu0 %v1517
      %v1609 = vpop.f32.mrf.mxu0
      %v1610 = vadd.f32 0.0, %v1609
      %v1611 = vpop.f32.mrf.mxu0
      %v1612 = vpop.f32.mrf.mxu0
      %v1613 = vadd.f32 0.0, %v1612
      %v1614 = vpop.f32.mrf.mxu0
      %1615 = vmatprep.mubr.bf16.mxu0 0
      %1616 = vmatmul.mubr.bf16.gmra.mxu0 %v1518
      %v1617 = vpop.f32.mrf.mxu0
      %v1618 = vadd.f32 0.0, %v1617
      %v1619 = vpop.f32.mrf.mxu0
      %v1620 = vpop.f32.mrf.mxu0
      %v1621 = vadd.f32 0.0, %v1620
      %v1622 = vpop.f32.mrf.mxu0
      %1623 = vmatprep.mubr.bf16.mxu0 0
      %1624 = vmatmul.mubr.bf16.gmra.mxu0 %v1519
      %v1625 = vpop.f32.mrf.mxu0
      %v1626 = vadd.f32 0.0, %v1625
      %v1627 = vpop.f32.mrf.mxu0
      %v1628 = vpop.f32.mrf.mxu0
      %v1629 = vadd.f32 0.0, %v1628
      %v1630 = vpop.f32.mrf.mxu0
      %1631 = vmatprep.mubr.bf16.mxu0 0
      %1632 = vmatmul.mubr.bf16.gmra.mxu0 %v1520
      %v1633 = vpop.f32.mrf.mxu0
      %v1634 = vadd.f32 0.0, %v1633
      %v1635 = vpop.f32.mrf.mxu0
      %v1636 = vpop.f32.mrf.mxu0
      %v1637 = vadd.f32 0.0, %v1636
      %v1638 = vpop.f32.mrf.mxu0
      %1639 = vmatprep.mubr.bf16.mxu0 0
      %1640 = vmatmul.mubr.bf16.gmra.mxu0 %v1521
      %v1641 = vpop.f32.mrf.mxu0
      %v1642 = vadd.f32 0.0, %v1641
      %v1643 = vpop.f32.mrf.mxu0
      %v1644 = vpop.f32.mrf.mxu0
      %v1645 = vpop.f32.mrf.mxu0
      %1646 = vdwg.mxu0
      %v1647 = vadd.f32 %v1472, %v1610
      %1649 = vrot.lane.b32.xlu0 %v1613, 127
      %v1650 = vpop.permute.xlu0 %1649
      %v1652 = vadd.f32 %v1647, %v1650
      %1654 = vrot.lane.b32.xlu0 %v1618, 126
      %v1655 = vpop.permute.xlu0 %1654
      %v1657 = vadd.f32 %v1652, %v1655
      %1659 = vrot.lane.b32.xlu0 %v1621, 118
      %v1660 = vpop.permute.xlu0 %1659
      %v1662 = vadd.f32 %v1657, %v1660
      %1664 = vrot.lane.b32.xlu0 %v1626, 117
      %v1665 = vpop.permute.xlu0 %1664
      %v1667 = vadd.f32 %v1662, %v1665
      %1669 = vrot.lane.b32.xlu0 %v1629, 116
      %v1670 = vpop.permute.xlu0 %1669
      %v1672 = vadd.f32 %v1667, %v1670
      %1674 = vrot.lane.b32.xlu0 %v1634, 108
      %v1675 = vpop.permute.xlu0 %1674
      %v1677 = vadd.f32 %v1672, %v1675
      %1679 = vrot.lane.b32.xlu0 %v1637, 107
      %v1680 = vpop.permute.xlu0 %1679
      %v1682 = vadd.f32 %v1677, %v1680
      %1684 = vrot.lane.b32.xlu0 %v1642, 106
      %v1685 = vpop.permute.xlu0 %1684
      %v1687 = vadd.f32 %v1682, %v1685
      %1689 = vset.pattern.permute.xlu0 0
      %1690 = vperm.xlu0 %1689, %v1042
      %v1691 = vpop.permute.xlu0 %1690
      %v1693 = vadd.f32 %v1687, %v1691
      %v1694 = vld [vmem:[%s1021] sm:$0x3]
      %v1695 = vunpack.c.l.bf16 %v1694
      %1697 = vset.pattern.permute.xlu0 0
      %1698 = vperm.xlu0 %1697, %v1043
      %v1699 = vpop.permute.xlu0 %1698
      %v1701 = vsub.f32 %v1695, %v1699
      %1703 = vset.pattern.permute.xlu0 0
      %1704 = vperm.xlu0 %1703, %v1044
      %v1705 = vpop.permute.xlu0 %1704
      %v1707 = vmul.f32 %v1701, %v1705
      %v1708 = vadd.f32 %v1693, 1.0
      %v1709 = vmul.f32 %v1707, %v1708
      %v1711 = vcombine.high %v1693, %v1693
      %v1713 = vadd.f32 %v1709, %v1711
      %vm1714 = vcmask 650240
      %1715 = vst.msk [vmem:[%s1039] sm:$0xf] %vm1714, %v1713
      %v1716 = vld [vmem:[%s906] sm:$0xf]
      %v1717 = vld [vmem:[%s906 + $0x4] sm:$0xf]
      %v1718 = vld [vmem:[%s906 + $0x8] sm:$0xf]
      %v1719 = vld [vmem:[%s906 + $0xc] sm:$0xf]
      %v1720 = vld [vmem:[%s906 + $0x10] sm:$0xf]
      %v1721 = vld [vmem:[%s906 + $0x14] sm:$0xf]
      %v1722 = vld [vmem:[%s906 + $0x18] sm:$0xf]
      %v1723 = vld [vmem:[%s906 + $0x1c] sm:$0xf]
      %v1724 = vld [vmem:[%s906 + $0x20] sm:$0xf]
      %v1725 = vld [vmem:[%s906 + $0x24] sm:$0xf]
      %v1726 = vld [vmem:[%s906 + $0x28] sm:$0xf]
      %v1727 = vld [vmem:[%s906 + $0x2c] sm:$0xf]
      %v1728 = vld [vmem:[%s906 + $0x30] sm:$0xf]
      %v1729 = vld [vmem:[%s906 + $0x34] sm:$0xf]
      %v1730 = vld [vmem:[%s906 + $0x38] sm:$0xf]
      %v1731 = vld [vmem:[%s906 + $0x3c] sm:$0xf]
      %v1732 = vld [vmem:[%s10] sm:$0xf]
      %v1733 = vld [vmem:[%s10 + $0x4] sm:$0xf]
      %v1734 = vld [vmem:[%s10 + $0x8] sm:$0xf]
      %v1735 = vld [vmem:[%s10 + $0xc] sm:$0xf]
      %v1736 = vld [vmem:[%s10 + $0x10] sm:$0xf]
      %v1737 = vld [vmem:[%s10 + $0x14] sm:$0xf]
      %v1738 = vld [vmem:[%s10 + $0x18] sm:$0xf]
      %v1739 = vld [vmem:[%s10 + $0x1c] sm:$0xf]
      %v1740 = vld [vmem:[%s10 + $0x20] sm:$0xf]
      %v1750 = vunpack.c.l.b16 %v1732
      %v1751 = vunpack.c.l.b16 %v1733
      %v1752 = vunpack.c.l.b16 %v1734
      %v1753 = vunpack.c.l.b16 %v1735
      %v1754 = vunpack.c.l.b16 %v1736
      %v1755 = vunpack.c.l.b16 %v1737
      %v1756 = vunpack.c.l.b16 %v1738
      %v1757 = vunpack.c.l.b16 %v1739
      %v1758 = vunpack.c.l.b16 %v1740
      %v1759 = vpack.c.b16 %v1751, %v1750
      %v1760 = vpack.c.b16 %v1753, %v1752
      %v1761 = vpack.c.b16 %v1755, %v1754
      %v1762 = vpack.c.b16 %v1757, %v1756
      %v1763 = vpack.c.b16 %v1758, %v1758
      %v1785 = vunpack.c.l.b16 %v1716
      %v1786 = vunpack.c.l.b16 %v1717
      %v1787 = vunpack.c.l.b16 %v1718
      %v1788 = vunpack.c.l.b16 %v1719
      %v1789 = vunpack.c.l.b16 %v1720
      %v1790 = vunpack.c.l.b16 %v1721
      %v1791 = vunpack.c.l.b16 %v1722
      %v1792 = vunpack.c.l.b16 %v1723
      %v1793 = vunpack.c.l.b16 %v1724
      %v1794 = vunpack.c.l.b16 %v1725
      %v1795 = vunpack.c.l.b16 %v1726
      %v1796 = vunpack.c.l.b16 %v1727
      %v1797 = vunpack.c.l.b16 %v1728
      %v1798 = vunpack.c.l.b16 %v1729
      %v1799 = vunpack.c.l.b16 %v1730
      %v1800 = vunpack.c.l.b16 %v1731
      %v1801 = vpack.c.b16 %v1786, %v1785
      %v1802 = vpack.c.b16 %v1788, %v1787
      %v1803 = vpack.c.b16 %v1790, %v1789
      %v1804 = vpack.c.b16 %v1792, %v1791
      %v1805 = vpack.c.b16 %v1794, %v1793
      %v1806 = vpack.c.b16 %v1796, %v1795
      %v1807 = vpack.c.b16 %v1798, %v1797
      %v1808 = vpack.c.b16 %v1800, %v1799
      %1817 = vmatprep.subr.bf16.mxu0 0
      %1818 = vmatpush1.bf16.msra.mxu0 %v1808
      %1819 = vmatprep.subr.bf16.mxu0 0
      %1820 = vmatpush1.bf16.msra.mxu0 %v1807
      %1821 = vmatprep.subr.bf16.mxu0 0
      %1822 = vmatpush1.bf16.msra.mxu0 %v1806
      %1823 = vmatprep.subr.bf16.mxu0 0
      %1824 = vmatpush1.bf16.msra.mxu0 %v1805
      %1825 = vmatprep.subr.bf16.mxu0 0
      %1826 = vmatpush1.bf16.msra.mxu0 %v1804
      %1827 = vmatprep.subr.bf16.mxu0 0
      %1828 = vmatpush1.bf16.msra.mxu0 %v1803
      %1829 = vmatprep.subr.bf16.mxu0 0
      %1830 = vmatpush1.bf16.msra.mxu0 %v1802
      %1831 = vmatprep.subr.bf16.mxu0 0
      %1832 = vmatpush1.bf16.msra.mxu0 %v1801
      %1833 = vmatprep.subr.bf16.mxu0 0
      %1834 = vmatpush2.bf16.msra.mxu0 0
      %1835 = vmatprep.subr.bf16.mxu0 0
      %1836 = vmatpush2.bf16.msra.mxu0 0
      %1837 = vmatprep.subr.bf16.mxu0 0
      %1838 = vmatpush2.bf16.msra.mxu0 0
      %1839 = vmatprep.subr.bf16.mxu0 0
      %1840 = vmatpush2.bf16.msra.mxu0 0
      %1841 = vmatprep.subr.bf16.mxu0 0
      %1842 = vmatpush2.bf16.msra.mxu0 0
      %1843 = vmatprep.subr.bf16.mxu0 0
      %1844 = vmatpush2.bf16.msra.mxu0 0
      %1845 = vmatprep.subr.bf16.mxu0 0
      %1846 = vmatpush2.bf16.msra.mxu0 0
      %1847 = vmatprep.subr.bf16.mxu0 0
      %1848 = vmatpush2.bf16.msra.mxu0 0
      %1849 = vmatprep.mubr.bf16.mxu0 0
      %1850 = vmatmul.mubr.bf16.gmra.mxu0 %v1759
      %v1851 = vpop.f32.mrf.mxu0
      %v1852 = vadd.f32 0.0, %v1851
      %v1853 = vpop.f32.mrf.mxu0
      %v1854 = vpop.f32.mrf.mxu0
      %v1855 = vadd.f32 0.0, %v1854
      %v1856 = vpop.f32.mrf.mxu0
      %1857 = vmatprep.mubr.bf16.mxu0 0
      %1858 = vmatmul.mubr.bf16.gmra.mxu0 %v1760
      %v1859 = vpop.f32.mrf.mxu0
      %v1860 = vadd.f32 0.0, %v1859
      %v1861 = vpop.f32.mrf.mxu0
      %v1862 = vpop.f32.mrf.mxu0
      %v1863 = vadd.f32 0.0, %v1862
      %v1864 = vpop.f32.mrf.mxu0
      %1865 = vmatprep.mubr.bf16.mxu0 0
      %1866 = vmatmul.mubr.bf16.gmra.mxu0 %v1761
      %v1867 = vpop.f32.mrf.mxu0
      %v1868 = vadd.f32 0.0, %v1867
      %v1869 = vpop.f32.mrf.mxu0
      %v1870 = vpop.f32.mrf.mxu0
      %v1871 = vadd.f32 0.0, %v1870
      %v1872 = vpop.f32.mrf.mxu0
      %1873 = vmatprep.mubr.bf16.mxu0 0
      %1874 = vmatmul.mubr.bf16.gmra.mxu0 %v1762
      %v1875 = vpop.f32.mrf.mxu0
      %v1876 = vadd.f32 0.0, %v1875
      %v1877 = vpop.f32.mrf.mxu0
      %v1878 = vpop.f32.mrf.mxu0
      %v1879 = vadd.f32 0.0, %v1878
      %v1880 = vpop.f32.mrf.mxu0
      %1881 = vmatprep.mubr.bf16.mxu0 0
      %1882 = vmatmul.mubr.bf16.gmra.mxu0 %v1763
      %v1883 = vpop.f32.mrf.mxu0
      %v1884 = vadd.f32 0.0, %v1883
      %v1885 = vpop.f32.mrf.mxu0
      %v1886 = vpop.f32.mrf.mxu0
      %v1887 = vpop.f32.mrf.mxu0
      %1888 = vdwg.mxu0
      %1890 = vrot.lane.b32.xlu0 %v1855, 127
      %v1891 = vpop.permute.xlu0 %1890
      %v1893 = vadd.f32 %v1852, %v1891
      %1895 = vrot.lane.b32.xlu0 %v1860, 126
      %v1896 = vpop.permute.xlu0 %1895
      %v1898 = vadd.f32 %v1893, %v1896
      %1900 = vrot.lane.b32.xlu0 %v1863, 118
      %v1901 = vpop.permute.xlu0 %1900
      %v1903 = vadd.f32 %v1898, %v1901
      %1905 = vrot.lane.b32.xlu0 %v1868, 117
      %v1906 = vpop.permute.xlu0 %1905
      %v1908 = vadd.f32 %v1903, %v1906
      %1910 = vrot.lane.b32.xlu0 %v1871, 116
      %v1911 = vpop.permute.xlu0 %1910
      %v1913 = vadd.f32 %v1908, %v1911
      %1915 = vrot.lane.b32.xlu0 %v1876, 108
      %v1916 = vpop.permute.xlu0 %1915
      %v1918 = vadd.f32 %v1913, %v1916
      %1920 = vrot.lane.b32.xlu0 %v1879, 107
      %v1921 = vpop.permute.xlu0 %1920
      %v1923 = vadd.f32 %v1918, %v1921
      %1925 = vrot.lane.b32.xlu0 %v1884, 106
      %v1926 = vpop.permute.xlu0 %1925
      %v1928 = vadd.f32 %v1923, %v1926
      %v1929 = vld [vmem:[%s919] sm:$0xf]
      %v1930 = vld [vmem:[%s919 + $0x4] sm:$0xf]
      %v1931 = vld [vmem:[%s919 + $0x8] sm:$0xf]
      %v1932 = vld [vmem:[%s919 + $0xc] sm:$0xf]
      %v1933 = vld [vmem:[%s919 + $0x10] sm:$0xf]
      %v1934 = vld [vmem:[%s919 + $0x14] sm:$0xf]
      %v1935 = vld [vmem:[%s919 + $0x18] sm:$0xf]
      %v1936 = vld [vmem:[%s919 + $0x1c] sm:$0xf]
      %v1937 = vld [vmem:[%s919 + $0x20] sm:$0xf]
      %v1938 = vld [vmem:[%s919 + $0x24] sm:$0xf]
      %v1939 = vld [vmem:[%s919 + $0x28] sm:$0xf]
      %v1940 = vld [vmem:[%s919 + $0x2c] sm:$0xf]
      %v1941 = vld [vmem:[%s919 + $0x30] sm:$0xf]
      %v1942 = vld [vmem:[%s919 + $0x34] sm:$0xf]
      %v1943 = vld [vmem:[%s919 + $0x38] sm:$0xf]
      %v1944 = vld [vmem:[%s919 + $0x3c] sm:$0xf]
      %v1945 = vld [vmem:[%s1274] sm:$0xf]
      %v1946 = vld [vmem:[%s1274 + $0x4] sm:$0xf]
      %v1947 = vld [vmem:[%s1274 + $0x8] sm:$0xf]
      %v1948 = vld [vmem:[%s1274 + $0xc] sm:$0xf]
      %v1949 = vld [vmem:[%s1274 + $0x10] sm:$0xf]
      %v1950 = vld [vmem:[%s1274 + $0x14] sm:$0xf]
      %v1951 = vld [vmem:[%s1274 + $0x18] sm:$0xf]
      %v1952 = vld [vmem:[%s1274 + $0x1c] sm:$0xf]
      %v1953 = vld [vmem:[%s1274 + $0x20] sm:$0xf]
      %v1963 = vunpack.c.l.b16 %v1945
      %v1964 = vunpack.c.l.b16 %v1946
      %v1965 = vunpack.c.l.b16 %v1947
      %v1966 = vunpack.c.l.b16 %v1948
      %v1967 = vunpack.c.l.b16 %v1949
      %v1968 = vunpack.c.l.b16 %v1950
      %v1969 = vunpack.c.l.b16 %v1951
      %v1970 = vunpack.c.l.b16 %v1952
      %v1971 = vunpack.c.l.b16 %v1953
      %v1972 = vpack.c.b16 %v1964, %v1963
      %v1973 = vpack.c.b16 %v1966, %v1965
      %v1974 = vpack.c.b16 %v1968, %v1967
      %v1975 = vpack.c.b16 %v1970, %v1969
      %v1976 = vpack.c.b16 %v1971, %v1971
      %v1998 = vunpack.c.l.b16 %v1929
      %v1999 = vunpack.c.l.b16 %v1930
      %v2000 = vunpack.c.l.b16 %v1931
      %v2001 = vunpack.c.l.b16 %v1932
      %v2002 = vunpack.c.l.b16 %v1933
      %v2003 = vunpack.c.l.b16 %v1934
      %v2004 = vunpack.c.l.b16 %v1935
      %v2005 = vunpack.c.l.b16 %v1936
      %v2006 = vunpack.c.l.b16 %v1937
      %v2007 = vunpack.c.l.b16 %v1938
      %v2008 = vunpack.c.l.b16 %v1939
      %v2009 = vunpack.c.l.b16 %v1940
      %v2010 = vunpack.c.l.b16 %v1941
      %v2011 = vunpack.c.l.b16 %v1942
      %v2012 = vunpack.c.l.b16 %v1943
      %v2013 = vunpack.c.l.b16 %v1944
      %v2014 = vpack.c.b16 %v1999, %v1998
      %v2015 = vpack.c.b16 %v2001, %v2000
      %v2016 = vpack.c.b16 %v2003, %v2002
      %v2017 = vpack.c.b16 %v2005, %v2004
      %v2018 = vpack.c.b16 %v2007, %v2006
      %v2019 = vpack.c.b16 %v2009, %v2008
      %v2020 = vpack.c.b16 %v2011, %v2010
      %v2021 = vpack.c.b16 %v2013, %v2012
      %2030 = vmatprep.subr.bf16.mxu0 0
      %2031 = vmatpush1.bf16.msra.mxu0 %v2021
      %2032 = vmatprep.subr.bf16.mxu0 0
      %2033 = vmatpush1.bf16.msra.mxu0 %v2020
      %2034 = vmatprep.subr.bf16.mxu0 0
      %2035 = vmatpush1.bf16.msra.mxu0 %v2019
      %2036 = vmatprep.subr.bf16.mxu0 0
      %2037 = vmatpush1.bf16.msra.mxu0 %v2018
      %2038 = vmatprep.subr.bf16.mxu0 0
      %2039 = vmatpush1.bf16.msra.mxu0 %v2017
      %2040 = vmatprep.subr.bf16.mxu0 0
      %2041 = vmatpush1.bf16.msra.mxu0 %v2016
      %2042 = vmatprep.subr.bf16.mxu0 0
      %2043 = vmatpush1.bf16.msra.mxu0 %v2015
      %2044 = vmatprep.subr.bf16.mxu0 0
      %2045 = vmatpush1.bf16.msra.mxu0 %v2014
      %2046 = vmatprep.subr.bf16.mxu0 0
      %2047 = vmatpush2.bf16.msra.mxu0 0
      %2048 = vmatprep.subr.bf16.mxu0 0
      %2049 = vmatpush2.bf16.msra.mxu0 0
      %2050 = vmatprep.subr.bf16.mxu0 0
      %2051 = vmatpush2.bf16.msra.mxu0 0
      %2052 = vmatprep.subr.bf16.mxu0 0
      %2053 = vmatpush2.bf16.msra.mxu0 0
      %2054 = vmatprep.subr.bf16.mxu0 0
      %2055 = vmatpush2.bf16.msra.mxu0 0
      %2056 = vmatprep.subr.bf16.mxu0 0
      %2057 = vmatpush2.bf16.msra.mxu0 0
      %2058 = vmatprep.subr.bf16.mxu0 0
      %2059 = vmatpush2.bf16.msra.mxu0 0
      %2060 = vmatprep.subr.bf16.mxu0 0
      %2061 = vmatpush2.bf16.msra.mxu0 0
      %2062 = vmatprep.mubr.bf16.mxu0 0
      %2063 = vmatmul.mubr.bf16.gmra.mxu0 %v1972
      %v2064 = vpop.f32.mrf.mxu0
      %v2065 = vadd.f32 0.0, %v2064
      %v2066 = vpop.f32.mrf.mxu0
      %v2067 = vpop.f32.mrf.mxu0
      %v2068 = vadd.f32 0.0, %v2067
      %v2069 = vpop.f32.mrf.mxu0
      %2070 = vmatprep.mubr.bf16.mxu0 0
      %2071 = vmatmul.mubr.bf16.gmra.mxu0 %v1973
      %v2072 = vpop.f32.mrf.mxu0
      %v2073 = vadd.f32 0.0, %v2072
      %v2074 = vpop.f32.mrf.mxu0
      %v2075 = vpop.f32.mrf.mxu0
      %v2076 = vadd.f32 0.0, %v2075
      %v2077 = vpop.f32.mrf.mxu0
      %2078 = vmatprep.mubr.bf16.mxu0 0
      %2079 = vmatmul.mubr.bf16.gmra.mxu0 %v1974
      %v2080 = vpop.f32.mrf.mxu0
      %v2081 = vadd.f32 0.0, %v2080
      %v2082 = vpop.f32.mrf.mxu0
      %v2083 = vpop.f32.mrf.mxu0
      %v2084 = vadd.f32 0.0, %v2083
      %v2085 = vpop.f32.mrf.mxu0
      %2086 = vmatprep.mubr.bf16.mxu0 0
      %2087 = vmatmul.mubr.bf16.gmra.mxu0 %v1975
      %v2088 = vpop.f32.mrf.mxu0
      %v2089 = vadd.f32 0.0, %v2088
      %v2090 = vpop.f32.mrf.mxu0
      %v2091 = vpop.f32.mrf.mxu0
      %v2092 = vadd.f32 0.0, %v2091
      %v2093 = vpop.f32.mrf.mxu0
      %2094 = vmatprep.mubr.bf16.mxu0 0
      %2095 = vmatmul.mubr.bf16.gmra.mxu0 %v1976
      %v2096 = vpop.f32.mrf.mxu0
      %v2097 = vadd.f32 0.0, %v2096
      %v2098 = vpop.f32.mrf.mxu0
      %v2099 = vpop.f32.mrf.mxu0
      %v2100 = vpop.f32.mrf.mxu0
      %2101 = vdwg.mxu0
      %v2102 = vadd.f32 %v1928, %v2065
      %2104 = vrot.lane.b32.xlu0 %v2068, 127
      %v2105 = vpop.permute.xlu0 %2104
      %v2107 = vadd.f32 %v2102, %v2105
      %2109 = vrot.lane.b32.xlu0 %v2073, 126
      %v2110 = vpop.permute.xlu0 %2109
      %v2112 = vadd.f32 %v2107, %v2110
      %2114 = vrot.lane.b32.xlu0 %v2076, 118
      %v2115 = vpop.permute.xlu0 %2114
      %v2117 = vadd.f32 %v2112, %v2115
      %2119 = vrot.lane.b32.xlu0 %v2081, 117
      %v2120 = vpop.permute.xlu0 %2119
      %v2122 = vadd.f32 %v2117, %v2120
      %2124 = vrot.lane.b32.xlu0 %v2084, 116
      %v2125 = vpop.permute.xlu0 %2124
      %v2127 = vadd.f32 %v2122, %v2125
      %2129 = vrot.lane.b32.xlu0 %v2089, 108
      %v2130 = vpop.permute.xlu0 %2129
      %v2132 = vadd.f32 %v2127, %v2130
      %2134 = vrot.lane.b32.xlu0 %v2092, 107
      %v2135 = vpop.permute.xlu0 %2134
      %v2137 = vadd.f32 %v2132, %v2135
      %2139 = vrot.lane.b32.xlu0 %v2097, 106
      %v2140 = vpop.permute.xlu0 %2139
      %v2142 = vadd.f32 %v2137, %v2140
      %v2143 = vld [vmem:[%s932] sm:$0xf]
      %v2144 = vld [vmem:[%s932 + $0x4] sm:$0xf]
      %v2145 = vld [vmem:[%s932 + $0x8] sm:$0xf]
      %v2146 = vld [vmem:[%s932 + $0xc] sm:$0xf]
      %v2147 = vld [vmem:[%s932 + $0x10] sm:$0xf]
      %v2148 = vld [vmem:[%s932 + $0x14] sm:$0xf]
      %v2149 = vld [vmem:[%s932 + $0x18] sm:$0xf]
      %v2150 = vld [vmem:[%s932 + $0x1c] sm:$0xf]
      %v2151 = vld [vmem:[%s932 + $0x20] sm:$0xf]
      %v2152 = vld [vmem:[%s932 + $0x24] sm:$0xf]
      %v2153 = vld [vmem:[%s932 + $0x28] sm:$0xf]
      %v2154 = vld [vmem:[%s932 + $0x2c] sm:$0xf]
      %v2155 = vld [vmem:[%s932 + $0x30] sm:$0xf]
      %v2156 = vld [vmem:[%s932 + $0x34] sm:$0xf]
      %v2157 = vld [vmem:[%s932 + $0x38] sm:$0xf]
      %v2158 = vld [vmem:[%s932 + $0x3c] sm:$0xf]
      %v2159 = vld [vmem:[%s1489] sm:$0xf]
      %v2160 = vld [vmem:[%s1489 + $0x4] sm:$0xf]
      %v2161 = vld [vmem:[%s1489 + $0x8] sm:$0xf]
      %v2162 = vld [vmem:[%s1489 + $0xc] sm:$0xf]
      %v2163 = vld [vmem:[%s1489 + $0x10] sm:$0xf]
      %v2164 = vld [vmem:[%s1489 + $0x14] sm:$0xf]
      %v2165 = vld [vmem:[%s1489 + $0x18] sm:$0xf]
      %v2166 = vld [vmem:[%s1489 + $0x1c] sm:$0xf]
      %v2167 = vld [vmem:[%s1489 + $0x20] sm:$0xf]
      %v2177 = vunpack.c.l.b16 %v2159
      %v2178 = vunpack.c.l.b16 %v2160
      %v2179 = vunpack.c.l.b16 %v2161
      %v2180 = vunpack.c.l.b16 %v2162
      %v2181 = vunpack.c.l.b16 %v2163
      %v2182 = vunpack.c.l.b16 %v2164
      %v2183 = vunpack.c.l.b16 %v2165
      %v2184 = vunpack.c.l.b16 %v2166
      %v2185 = vunpack.c.l.b16 %v2167
      %v2186 = vpack.c.b16 %v2178, %v2177
      %v2187 = vpack.c.b16 %v2180, %v2179
      %v2188 = vpack.c.b16 %v2182, %v2181
      %v2189 = vpack.c.b16 %v2184, %v2183
      %v2190 = vpack.c.b16 %v2185, %v2185
      %v2212 = vunpack.c.l.b16 %v2143
      %v2213 = vunpack.c.l.b16 %v2144
      %v2214 = vunpack.c.l.b16 %v2145
      %v2215 = vunpack.c.l.b16 %v2146
      %v2216 = vunpack.c.l.b16 %v2147
      %v2217 = vunpack.c.l.b16 %v2148
      %v2218 = vunpack.c.l.b16 %v2149
      %v2219 = vunpack.c.l.b16 %v2150
      %v2220 = vunpack.c.l.b16 %v2151
      %v2221 = vunpack.c.l.b16 %v2152
      %v2222 = vunpack.c.l.b16 %v2153
      %v2223 = vunpack.c.l.b16 %v2154
      %v2224 = vunpack.c.l.b16 %v2155
      %v2225 = vunpack.c.l.b16 %v2156
      %v2226 = vunpack.c.l.b16 %v2157
      %v2227 = vunpack.c.l.b16 %v2158
      %v2228 = vpack.c.b16 %v2213, %v2212
      %v2229 = vpack.c.b16 %v2215, %v2214
      %v2230 = vpack.c.b16 %v2217, %v2216
      %v2231 = vpack.c.b16 %v2219, %v2218
      %v2232 = vpack.c.b16 %v2221, %v2220
      %v2233 = vpack.c.b16 %v2223, %v2222
      %v2234 = vpack.c.b16 %v2225, %v2224
      %v2235 = vpack.c.b16 %v2227, %v2226
      %2244 = vmatprep.subr.bf16.mxu0 0
      %2245 = vmatpush1.bf16.msra.mxu0 %v2235
      %2246 = vmatprep.subr.bf16.mxu0 0
      %2247 = vmatpush1.bf16.msra.mxu0 %v2234
      %2248 = vmatprep.subr.bf16.mxu0 0
      %2249 = vmatpush1.bf16.msra.mxu0 %v2233
      %2250 = vmatprep.subr.bf16.mxu0 0
      %2251 = vmatpush1.bf16.msra.mxu0 %v2232
      %2252 = vmatprep.subr.bf16.mxu0 0
      %2253 = vmatpush1.bf16.msra.mxu0 %v2231
      %2254 = vmatprep.subr.bf16.mxu0 0
      %2255 = vmatpush1.bf16.msra.mxu0 %v2230
      %2256 = vmatprep.subr.bf16.mxu0 0
      %2257 = vmatpush1.bf16.msra.mxu0 %v2229
      %2258 = vmatprep.subr.bf16.mxu0 0
      %2259 = vmatpush1.bf16.msra.mxu0 %v2228
      %2260 = vmatprep.subr.bf16.mxu0 0
      %2261 = vmatpush2.bf16.msra.mxu0 0
      %2262 = vmatprep.subr.bf16.mxu0 0
      %2263 = vmatpush2.bf16.msra.mxu0 0
      %2264 = vmatprep.subr.bf16.mxu0 0
      %2265 = vmatpush2.bf16.msra.mxu0 0
      %2266 = vmatprep.subr.bf16.mxu0 0
      %2267 = vmatpush2.bf16.msra.mxu0 0
      %2268 = vmatprep.subr.bf16.mxu0 0
      %2269 = vmatpush2.bf16.msra.mxu0 0
      %2270 = vmatprep.subr.bf16.mxu0 0
      %2271 = vmatpush2.bf16.msra.mxu0 0
      %2272 = vmatprep.subr.bf16.mxu0 0
      %2273 = vmatpush2.bf16.msra.mxu0 0
      %2274 = vmatprep.subr.bf16.mxu0 0
      %2275 = vmatpush2.bf16.msra.mxu0 0
      %2276 = vmatprep.mubr.bf16.mxu0 0
      %2277 = vmatmul.mubr.bf16.gmra.mxu0 %v2186
      %v2278 = vpop.f32.mrf.mxu0
      %v2279 = vadd.f32 0.0, %v2278
      %v2280 = vpop.f32.mrf.mxu0
      %v2281 = vpop.f32.mrf.mxu0
      %v2282 = vadd.f32 0.0, %v2281
      %v2283 = vpop.f32.mrf.mxu0
      %2284 = vmatprep.mubr.bf16.mxu0 0
      %2285 = vmatmul.mubr.bf16.gmra.mxu0 %v2187
      %v2286 = vpop.f32.mrf.mxu0
      %v2287 = vadd.f32 0.0, %v2286
      %v2288 = vpop.f32.mrf.mxu0
      %v2289 = vpop.f32.mrf.mxu0
      %v2290 = vadd.f32 0.0, %v2289
      %v2291 = vpop.f32.mrf.mxu0
      %2292 = vmatprep.mubr.bf16.mxu0 0
      %2293 = vmatmul.mubr.bf16.gmra.mxu0 %v2188
      %v2294 = vpop.f32.mrf.mxu0
      %v2295 = vadd.f32 0.0, %v2294
      %v2296 = vpop.f32.mrf.mxu0
      %v2297 = vpop.f32.mrf.mxu0
      %v2298 = vadd.f32 0.0, %v2297
      %v2299 = vpop.f32.mrf.mxu0
      %2300 = vmatprep.mubr.bf16.mxu0 0
      %2301 = vmatmul.mubr.bf16.gmra.mxu0 %v2189
      %v2302 = vpop.f32.mrf.mxu0
      %v2303 = vadd.f32 0.0, %v2302
      %v2304 = vpop.f32.mrf.mxu0
      %v2305 = vpop.f32.mrf.mxu0
      %v2306 = vadd.f32 0.0, %v2305
      %v2307 = vpop.f32.mrf.mxu0
      %2308 = vmatprep.mubr.bf16.mxu0 0
      %2309 = vmatmul.mubr.bf16.gmra.mxu0 %v2190
      %v2310 = vpop.f32.mrf.mxu0
      %v2311 = vadd.f32 0.0, %v2310
      %v2312 = vpop.f32.mrf.mxu0
      %v2313 = vpop.f32.mrf.mxu0
      %v2314 = vpop.f32.mrf.mxu0
      %2315 = vdwg.mxu0
      %v2316 = vadd.f32 %v2142, %v2279
      %2318 = vrot.lane.b32.xlu0 %v2282, 127
      %v2319 = vpop.permute.xlu0 %2318
      %v2321 = vadd.f32 %v2316, %v2319
      %2323 = vrot.lane.b32.xlu0 %v2287, 126
      %v2324 = vpop.permute.xlu0 %2323
      %v2326 = vadd.f32 %v2321, %v2324
      %2328 = vrot.lane.b32.xlu0 %v2290, 118
      %v2329 = vpop.permute.xlu0 %2328
      %v2331 = vadd.f32 %v2326, %v2329
      %2333 = vrot.lane.b32.xlu0 %v2295, 117
      %v2334 = vpop.permute.xlu0 %2333
      %v2336 = vadd.f32 %v2331, %v2334
      %2338 = vrot.lane.b32.xlu0 %v2298, 116
      %v2339 = vpop.permute.xlu0 %2338
      %v2341 = vadd.f32 %v2336, %v2339
      %2343 = vrot.lane.b32.xlu0 %v2303, 108
      %v2344 = vpop.permute.xlu0 %2343
      %v2346 = vadd.f32 %v2341, %v2344
      %2348 = vrot.lane.b32.xlu0 %v2306, 107
      %v2349 = vpop.permute.xlu0 %2348
      %v2351 = vadd.f32 %v2346, %v2349
      %2353 = vrot.lane.b32.xlu0 %v2311, 106
      %v2354 = vpop.permute.xlu0 %2353
      %v2356 = vadd.f32 %v2351, %v2354
      %v2357 = vadd.f32 %v2356, %v1691
      %s2358 = scalar_lea.vmem %s1021, 2
      %v2359 = vld [vmem:[%s2358] sm:$0x3]
      %v2360 = vunpack.c.l.bf16 %v2359
      %v2361 = vsub.f32 %v2360, %v1699
      %v2362 = vmul.f32 %v2361, %v1705
      %v2363 = vadd.f32 %v2357, 1.0
      %v2364 = vmul.f32 %v2362, %v2363
      %v2366 = vcombine.high %v2357, %v2357
      %v2368 = vadd.f32 %v2364, %v2366
      %s2369 = scalar_lea.vmem %s1039, 4
      %2370 = vst.msk [vmem:[%s2369] sm:$0xf] %vm1714, %v2368
      %v2371 = vld [vmem:[%s919] sm:$0xf]
      %v2372 = vld [vmem:[%s919 + $0x4] sm:$0xf]
      %v2373 = vld [vmem:[%s919 + $0x8] sm:$0xf]
      %v2374 = vld [vmem:[%s919 + $0xc] sm:$0xf]
      %v2375 = vld [vmem:[%s919 + $0x10] sm:$0xf]
      %v2376 = vld [vmem:[%s919 + $0x14] sm:$0xf]
      %v2377 = vld [vmem:[%s919 + $0x18] sm:$0xf]
      %v2378 = vld [vmem:[%s919 + $0x1c] sm:$0xf]
      %v2379 = vld [vmem:[%s919 + $0x20] sm:$0xf]
      %v2380 = vld [vmem:[%s919 + $0x24] sm:$0xf]
      %v2381 = vld [vmem:[%s919 + $0x28] sm:$0xf]
      %v2382 = vld [vmem:[%s919 + $0x2c] sm:$0xf]
      %v2383 = vld [vmem:[%s919 + $0x30] sm:$0xf]
      %v2384 = vld [vmem:[%s919 + $0x34] sm:$0xf]
      %v2385 = vld [vmem:[%s919 + $0x38] sm:$0xf]
      %v2386 = vld [vmem:[%s919 + $0x3c] sm:$0xf]
      %v2387 = vld [vmem:[%s10] sm:$0xf]
      %v2388 = vld [vmem:[%s10 + $0x4] sm:$0xf]
      %v2389 = vld [vmem:[%s10 + $0x8] sm:$0xf]
      %v2390 = vld [vmem:[%s10 + $0xc] sm:$0xf]
      %v2391 = vld [vmem:[%s10 + $0x10] sm:$0xf]
      %v2392 = vld [vmem:[%s10 + $0x14] sm:$0xf]
      %v2393 = vld [vmem:[%s10 + $0x18] sm:$0xf]
      %v2394 = vld [vmem:[%s10 + $0x1c] sm:$0xf]
      %v2395 = vld [vmem:[%s10 + $0x20] sm:$0xf]
      %v2405 = vunpack.c.l.b16 %v2387
      %v2406 = vunpack.c.l.b16 %v2388
      %v2407 = vunpack.c.l.b16 %v2389
      %v2408 = vunpack.c.l.b16 %v2390
      %v2409 = vunpack.c.l.b16 %v2391
      %v2410 = vunpack.c.l.b16 %v2392
      %v2411 = vunpack.c.l.b16 %v2393
      %v2412 = vunpack.c.l.b16 %v2394
      %v2413 = vunpack.c.l.b16 %v2395
      %v2414 = vpack.c.b16 %v2406, %v2405
      %v2415 = vpack.c.b16 %v2408, %v2407
      %v2416 = vpack.c.b16 %v2410, %v2409
      %v2417 = vpack.c.b16 %v2412, %v2411
      %v2418 = vpack.c.b16 %v2413, %v2413
      %v2440 = vunpack.c.l.b16 %v2371
      %v2441 = vunpack.c.l.b16 %v2372
      %v2442 = vunpack.c.l.b16 %v2373
      %v2443 = vunpack.c.l.b16 %v2374
      %v2444 = vunpack.c.l.b16 %v2375
      %v2445 = vunpack.c.l.b16 %v2376
      %v2446 = vunpack.c.l.b16 %v2377
      %v2447 = vunpack.c.l.b16 %v2378
      %v2448 = vunpack.c.l.b16 %v2379
      %v2449 = vunpack.c.l.b16 %v2380
      %v2450 = vunpack.c.l.b16 %v2381
      %v2451 = vunpack.c.l.b16 %v2382
      %v2452 = vunpack.c.l.b16 %v2383
      %v2453 = vunpack.c.l.b16 %v2384
      %v2454 = vunpack.c.l.b16 %v2385
      %v2455 = vunpack.c.l.b16 %v2386
      %v2456 = vpack.c.b16 %v2441, %v2440
      %v2457 = vpack.c.b16 %v2443, %v2442
      %v2458 = vpack.c.b16 %v2445, %v2444
      %v2459 = vpack.c.b16 %v2447, %v2446
      %v2460 = vpack.c.b16 %v2449, %v2448
      %v2461 = vpack.c.b16 %v2451, %v2450
      %v2462 = vpack.c.b16 %v2453, %v2452
      %v2463 = vpack.c.b16 %v2455, %v2454
      %2472 = vmatprep.subr.bf16.mxu0 0
      %2473 = vmatpush1.bf16.msra.mxu0 %v2463
      %2474 = vmatprep.subr.bf16.mxu0 0
      %2475 = vmatpush1.bf16.msra.mxu0 %v2462
      %2476 = vmatprep.subr.bf16.mxu0 0
      %2477 = vmatpush1.bf16.msra.mxu0 %v2461
      %2478 = vmatprep.subr.bf16.mxu0 0
      %2479 = vmatpush1.bf16.msra.mxu0 %v2460
      %2480 = vmatprep.subr.bf16.mxu0 0
      %2481 = vmatpush1.bf16.msra.mxu0 %v2459
      %2482 = vmatprep.subr.bf16.mxu0 0
      %2483 = vmatpush1.bf16.msra.mxu0 %v2458
      %2484 = vmatprep.subr.bf16.mxu0 0
      %2485 = vmatpush1.bf16.msra.mxu0 %v2457
      %2486 = vmatprep.subr.bf16.mxu0 0
      %2487 = vmatpush1.bf16.msra.mxu0 %v2456
      %2488 = vmatprep.subr.bf16.mxu0 0
      %2489 = vmatpush2.bf16.msra.mxu0 0
      %2490 = vmatprep.subr.bf16.mxu0 0
      %2491 = vmatpush2.bf16.msra.mxu0 0
      %2492 = vmatprep.subr.bf16.mxu0 0
      %2493 = vmatpush2.bf16.msra.mxu0 0
      %2494 = vmatprep.subr.bf16.mxu0 0
      %2495 = vmatpush2.bf16.msra.mxu0 0
      %2496 = vmatprep.subr.bf16.mxu0 0
      %2497 = vmatpush2.bf16.msra.mxu0 0
      %2498 = vmatprep.subr.bf16.mxu0 0
      %2499 = vmatpush2.bf16.msra.mxu0 0
      %2500 = vmatprep.subr.bf16.mxu0 0
      %2501 = vmatpush2.bf16.msra.mxu0 0
      %2502 = vmatprep.subr.bf16.mxu0 0
      %2503 = vmatpush2.bf16.msra.mxu0 0
      %2504 = vmatprep.mubr.bf16.mxu0 0
      %2505 = vmatmul.mubr.bf16.gmra.mxu0 %v2414
      %v2506 = vpop.f32.mrf.mxu0
      %v2507 = vadd.f32 0.0, %v2506
      %v2508 = vpop.f32.mrf.mxu0
      %v2509 = vpop.f32.mrf.mxu0
      %v2510 = vadd.f32 0.0, %v2509
      %v2511 = vpop.f32.mrf.mxu0
      %2512 = vmatprep.mubr.bf16.mxu0 0
      %2513 = vmatmul.mubr.bf16.gmra.mxu0 %v2415
      %v2514 = vpop.f32.mrf.mxu0
      %v2515 = vadd.f32 0.0, %v2514
      %v2516 = vpop.f32.mrf.mxu0
      %v2517 = vpop.f32.mrf.mxu0
      %v2518 = vadd.f32 0.0, %v2517
      %v2519 = vpop.f32.mrf.mxu0
      %2520 = vmatprep.mubr.bf16.mxu0 0
      %2521 = vmatmul.mubr.bf16.gmra.mxu0 %v2416
      %v2522 = vpop.f32.mrf.mxu0
      %v2523 = vadd.f32 0.0, %v2522
      %v2524 = vpop.f32.mrf.mxu0
      %v2525 = vpop.f32.mrf.mxu0
      %v2526 = vadd.f32 0.0, %v2525
      %v2527 = vpop.f32.mrf.mxu0
      %2528 = vmatprep.mubr.bf16.mxu0 0
      %2529 = vmatmul.mubr.bf16.gmra.mxu0 %v2417
      %v2530 = vpop.f32.mrf.mxu0
      %v2531 = vadd.f32 0.0, %v2530
      %v2532 = vpop.f32.mrf.mxu0
      %v2533 = vpop.f32.mrf.mxu0
      %v2534 = vadd.f32 0.0, %v2533
      %v2535 = vpop.f32.mrf.mxu0
      %2536 = vmatprep.mubr.bf16.mxu0 0
      %2537 = vmatmul.mubr.bf16.gmra.mxu0 %v2418
      %v2538 = vpop.f32.mrf.mxu0
      %v2539 = vadd.f32 0.0, %v2538
      %v2540 = vpop.f32.mrf.mxu0
      %v2541 = vpop.f32.mrf.mxu0
      %v2542 = vpop.f32.mrf.mxu0
      %2543 = vdwg.mxu0
      %2545 = vrot.lane.b32.xlu0 %v2510, 127
      %v2546 = vpop.permute.xlu0 %2545
      %v2548 = vadd.f32 %v2507, %v2546
      %2550 = vrot.lane.b32.xlu0 %v2515, 126
      %v2551 = vpop.permute.xlu0 %2550
      %v2553 = vadd.f32 %v2548, %v2551
      %2555 = vrot.lane.b32.xlu0 %v2518, 118
      %v2556 = vpop.permute.xlu0 %2555
      %v2558 = vadd.f32 %v2553, %v2556
      %2560 = vrot.lane.b32.xlu0 %v2523, 117
      %v2561 = vpop.permute.xlu0 %2560
      %v2563 = vadd.f32 %v2558, %v2561
      %2565 = vrot.lane.b32.xlu0 %v2526, 116
      %v2566 = vpop.permute.xlu0 %2565
      %v2568 = vadd.f32 %v2563, %v2566
      %2570 = vrot.lane.b32.xlu0 %v2531, 108
      %v2571 = vpop.permute.xlu0 %2570
      %v2573 = vadd.f32 %v2568, %v2571
      %2575 = vrot.lane.b32.xlu0 %v2534, 107
      %v2576 = vpop.permute.xlu0 %2575
      %v2578 = vadd.f32 %v2573, %v2576
      %2580 = vrot.lane.b32.xlu0 %v2539, 106
      %v2581 = vpop.permute.xlu0 %2580
      %v2583 = vadd.f32 %v2578, %v2581
      %v2584 = vld [vmem:[%s932] sm:$0xf]
      %v2585 = vld [vmem:[%s932 + $0x4] sm:$0xf]
      %v2586 = vld [vmem:[%s932 + $0x8] sm:$0xf]
      %v2587 = vld [vmem:[%s932 + $0xc] sm:$0xf]
      %v2588 = vld [vmem:[%s932 + $0x10] sm:$0xf]
      %v2589 = vld [vmem:[%s932 + $0x14] sm:$0xf]
      %v2590 = vld [vmem:[%s932 + $0x18] sm:$0xf]
      %v2591 = vld [vmem:[%s932 + $0x1c] sm:$0xf]
      %v2592 = vld [vmem:[%s932 + $0x20] sm:$0xf]
      %v2593 = vld [vmem:[%s932 + $0x24] sm:$0xf]
      %v2594 = vld [vmem:[%s932 + $0x28] sm:$0xf]
      %v2595 = vld [vmem:[%s932 + $0x2c] sm:$0xf]
      %v2596 = vld [vmem:[%s932 + $0x30] sm:$0xf]
      %v2597 = vld [vmem:[%s932 + $0x34] sm:$0xf]
      %v2598 = vld [vmem:[%s932 + $0x38] sm:$0xf]
      %v2599 = vld [vmem:[%s932 + $0x3c] sm:$0xf]
      %v2600 = vld [vmem:[%s1274] sm:$0xf]
      %v2601 = vld [vmem:[%s1274 + $0x4] sm:$0xf]
      %v2602 = vld [vmem:[%s1274 + $0x8] sm:$0xf]
      %v2603 = vld [vmem:[%s1274 + $0xc] sm:$0xf]
      %v2604 = vld [vmem:[%s1274 + $0x10] sm:$0xf]
      %v2605 = vld [vmem:[%s1274 + $0x14] sm:$0xf]
      %v2606 = vld [vmem:[%s1274 + $0x18] sm:$0xf]
      %v2607 = vld [vmem:[%s1274 + $0x1c] sm:$0xf]
      %v2608 = vld [vmem:[%s1274 + $0x20] sm:$0xf]
      %v2618 = vunpack.c.l.b16 %v2600
      %v2619 = vunpack.c.l.b16 %v2601
      %v2620 = vunpack.c.l.b16 %v2602
      %v2621 = vunpack.c.l.b16 %v2603
      %v2622 = vunpack.c.l.b16 %v2604
      %v2623 = vunpack.c.l.b16 %v2605
      %v2624 = vunpack.c.l.b16 %v2606
      %v2625 = vunpack.c.l.b16 %v2607
      %v2626 = vunpack.c.l.b16 %v2608
      %v2627 = vpack.c.b16 %v2619, %v2618
      %v2628 = vpack.c.b16 %v2621, %v2620
      %v2629 = vpack.c.b16 %v2623, %v2622
      %v2630 = vpack.c.b16 %v2625, %v2624
      %v2631 = vpack.c.b16 %v2626, %v2626
      %v2653 = vunpack.c.l.b16 %v2584
      %v2654 = vunpack.c.l.b16 %v2585
      %v2655 = vunpack.c.l.b16 %v2586
      %v2656 = vunpack.c.l.b16 %v2587
      %v2657 = vunpack.c.l.b16 %v2588
      %v2658 = vunpack.c.l.b16 %v2589
      %v2659 = vunpack.c.l.b16 %v2590
      %v2660 = vunpack.c.l.b16 %v2591
      %v2661 = vunpack.c.l.b16 %v2592
      %v2662 = vunpack.c.l.b16 %v2593
      %v2663 = vunpack.c.l.b16 %v2594
      %v2664 = vunpack.c.l.b16 %v2595
      %v2665 = vunpack.c.l.b16 %v2596
      %v2666 = vunpack.c.l.b16 %v2597
      %v2667 = vunpack.c.l.b16 %v2598
      %v2668 = vunpack.c.l.b16 %v2599
      %v2669 = vpack.c.b16 %v2654, %v2653
      %v2670 = vpack.c.b16 %v2656, %v2655
      %v2671 = vpack.c.b16 %v2658, %v2657
      %v2672 = vpack.c.b16 %v2660, %v2659
      %v2673 = vpack.c.b16 %v2662, %v2661
      %v2674 = vpack.c.b16 %v2664, %v2663
      %v2675 = vpack.c.b16 %v2666, %v2665
      %v2676 = vpack.c.b16 %v2668, %v2667
      %2685 = vmatprep.subr.bf16.mxu0 0
      %2686 = vmatpush1.bf16.msra.mxu0 %v2676
      %2687 = vmatprep.subr.bf16.mxu0 0
      %2688 = vmatpush1.bf16.msra.mxu0 %v2675
      %2689 = vmatprep.subr.bf16.mxu0 0
      %2690 = vmatpush1.bf16.msra.mxu0 %v2674
      %2691 = vmatprep.subr.bf16.mxu0 0
      %2692 = vmatpush1.bf16.msra.mxu0 %v2673
      %2693 = vmatprep.subr.bf16.mxu0 0
      %2694 = vmatpush1.bf16.msra.mxu0 %v2672
      %2695 = vmatprep.subr.bf16.mxu0 0
      %2696 = vmatpush1.bf16.msra.mxu0 %v2671
      %2697 = vmatprep.subr.bf16.mxu0 0
      %2698 = vmatpush1.bf16.msra.mxu0 %v2670
      %2699 = vmatprep.subr.bf16.mxu0 0
      %2700 = vmatpush1.bf16.msra.mxu0 %v2669
      %2701 = vmatprep.subr.bf16.mxu0 0
      %2702 = vmatpush2.bf16.msra.mxu0 0
      %2703 = vmatprep.subr.bf16.mxu0 0
      %2704 = vmatpush2.bf16.msra.mxu0 0
      %2705 = vmatprep.subr.bf16.mxu0 0
      %2706 = vmatpush2.bf16.msra.mxu0 0
      %2707 = vmatprep.subr.bf16.mxu0 0
      %2708 = vmatpush2.bf16.msra.mxu0 0
      %2709 = vmatprep.subr.bf16.mxu0 0
      %2710 = vmatpush2.bf16.msra.mxu0 0
      %2711 = vmatprep.subr.bf16.mxu0 0
      %2712 = vmatpush2.bf16.msra.mxu0 0
      %2713 = vmatprep.subr.bf16.mxu0 0
      %2714 = vmatpush2.bf16.msra.mxu0 0
      %2715 = vmatprep.subr.bf16.mxu0 0
      %2716 = vmatpush2.bf16.msra.mxu0 0
      %2717 = vmatprep.mubr.bf16.mxu0 0
      %2718 = vmatmul.mubr.bf16.gmra.mxu0 %v2627
      %v2719 = vpop.f32.mrf.mxu0
      %v2720 = vadd.f32 0.0, %v2719
      %v2721 = vpop.f32.mrf.mxu0
      %v2722 = vpop.f32.mrf.mxu0
      %v2723 = vadd.f32 0.0, %v2722
      %v2724 = vpop.f32.mrf.mxu0
      %2725 = vmatprep.mubr.bf16.mxu0 0
      %2726 = vmatmul.mubr.bf16.gmra.mxu0 %v2628
      %v2727 = vpop.f32.mrf.mxu0
      %v2728 = vadd.f32 0.0, %v2727
      %v2729 = vpop.f32.mrf.mxu0
      %v2730 = vpop.f32.mrf.mxu0
      %v2731 = vadd.f32 0.0, %v2730
      %v2732 = vpop.f32.mrf.mxu0
      %2733 = vmatprep.mubr.bf16.mxu0 0
      %2734 = vmatmul.mubr.bf16.gmra.mxu0 %v2629
      %v2735 = vpop.f32.mrf.mxu0
      %v2736 = vadd.f32 0.0, %v2735
      %v2737 = vpop.f32.mrf.mxu0
      %v2738 = vpop.f32.mrf.mxu0
      %v2739 = vadd.f32 0.0, %v2738
      %v2740 = vpop.f32.mrf.mxu0
      %2741 = vmatprep.mubr.bf16.mxu0 0
      %2742 = vmatmul.mubr.bf16.gmra.mxu0 %v2630
      %v2743 = vpop.f32.mrf.mxu0
      %v2744 = vadd.f32 0.0, %v2743
      %v2745 = vpop.f32.mrf.mxu0
      %v2746 = vpop.f32.mrf.mxu0
      %v2747 = vadd.f32 0.0, %v2746
      %v2748 = vpop.f32.mrf.mxu0
      %2749 = vmatprep.mubr.bf16.mxu0 0
      %2750 = vmatmul.mubr.bf16.gmra.mxu0 %v2631
      %v2751 = vpop.f32.mrf.mxu0
      %v2752 = vadd.f32 0.0, %v2751
      %v2753 = vpop.f32.mrf.mxu0
      %v2754 = vpop.f32.mrf.mxu0
      %v2755 = vpop.f32.mrf.mxu0
      %2756 = vdwg.mxu0
      %v2757 = vadd.f32 %v2583, %v2720
      %2759 = vrot.lane.b32.xlu0 %v2723, 127
      %v2760 = vpop.permute.xlu0 %2759
      %v2762 = vadd.f32 %v2757, %v2760
      %2764 = vrot.lane.b32.xlu0 %v2728, 126
      %v2765 = vpop.permute.xlu0 %2764
      %v2767 = vadd.f32 %v2762, %v2765
      %2769 = vrot.lane.b32.xlu0 %v2731, 118
      %v2770 = vpop.permute.xlu0 %2769
      %v2772 = vadd.f32 %v2767, %v2770
      %2774 = vrot.lane.b32.xlu0 %v2736, 117
      %v2775 = vpop.permute.xlu0 %2774
      %v2777 = vadd.f32 %v2772, %v2775
      %2779 = vrot.lane.b32.xlu0 %v2739, 116
      %v2780 = vpop.permute.xlu0 %2779
      %v2782 = vadd.f32 %v2777, %v2780
      %2784 = vrot.lane.b32.xlu0 %v2744, 108
      %v2785 = vpop.permute.xlu0 %2784
      %v2787 = vadd.f32 %v2782, %v2785
      %2789 = vrot.lane.b32.xlu0 %v2747, 107
      %v2790 = vpop.permute.xlu0 %2789
      %v2792 = vadd.f32 %v2787, %v2790
      %2794 = vrot.lane.b32.xlu0 %v2752, 106
      %v2795 = vpop.permute.xlu0 %2794
      %v2797 = vadd.f32 %v2792, %v2795
      %v2798 = vld [vmem:[%s945] sm:$0xf]
      %v2799 = vld [vmem:[%s945 + $0x4] sm:$0xf]
      %v2800 = vld [vmem:[%s945 + $0x8] sm:$0xf]
      %v2801 = vld [vmem:[%s945 + $0xc] sm:$0xf]
      %v2802 = vld [vmem:[%s945 + $0x10] sm:$0xf]
      %v2803 = vld [vmem:[%s945 + $0x14] sm:$0xf]
      %v2804 = vld [vmem:[%s945 + $0x18] sm:$0xf]
      %v2805 = vld [vmem:[%s945 + $0x1c] sm:$0xf]
      %v2806 = vld [vmem:[%s945 + $0x20] sm:$0xf]
      %v2807 = vld [vmem:[%s945 + $0x24] sm:$0xf]
      %v2808 = vld [vmem:[%s945 + $0x28] sm:$0xf]
      %v2809 = vld [vmem:[%s945 + $0x2c] sm:$0xf]
      %v2810 = vld [vmem:[%s945 + $0x30] sm:$0xf]
      %v2811 = vld [vmem:[%s945 + $0x34] sm:$0xf]
      %v2812 = vld [vmem:[%s945 + $0x38] sm:$0xf]
      %v2813 = vld [vmem:[%s945 + $0x3c] sm:$0xf]
      %v2814 = vld [vmem:[%s1489] sm:$0xf]
      %v2815 = vld [vmem:[%s1489 + $0x4] sm:$0xf]
      %v2816 = vld [vmem:[%s1489 + $0x8] sm:$0xf]
      %v2817 = vld [vmem:[%s1489 + $0xc] sm:$0xf]
      %v2818 = vld [vmem:[%s1489 + $0x10] sm:$0xf]
      %v2819 = vld [vmem:[%s1489 + $0x14] sm:$0xf]
      %v2820 = vld [vmem:[%s1489 + $0x18] sm:$0xf]
      %v2821 = vld [vmem:[%s1489 + $0x1c] sm:$0xf]
      %v2822 = vld [vmem:[%s1489 + $0x20] sm:$0xf]
      %v2832 = vunpack.c.l.b16 %v2814
      %v2833 = vunpack.c.l.b16 %v2815
      %v2834 = vunpack.c.l.b16 %v2816
      %v2835 = vunpack.c.l.b16 %v2817
      %v2836 = vunpack.c.l.b16 %v2818
      %v2837 = vunpack.c.l.b16 %v2819
      %v2838 = vunpack.c.l.b16 %v2820
      %v2839 = vunpack.c.l.b16 %v2821
      %v2840 = vunpack.c.l.b16 %v2822
      %v2841 = vpack.c.b16 %v2833, %v2832
      %v2842 = vpack.c.b16 %v2835, %v2834
      %v2843 = vpack.c.b16 %v2837, %v2836
      %v2844 = vpack.c.b16 %v2839, %v2838
      %v2845 = vpack.c.b16 %v2840, %v2840
      %v2867 = vunpack.c.l.b16 %v2798
      %v2868 = vunpack.c.l.b16 %v2799
      %v2869 = vunpack.c.l.b16 %v2800
      %v2870 = vunpack.c.l.b16 %v2801
      %v2871 = vunpack.c.l.b16 %v2802
      %v2872 = vunpack.c.l.b16 %v2803
      %v2873 = vunpack.c.l.b16 %v2804
      %v2874 = vunpack.c.l.b16 %v2805
      %v2875 = vunpack.c.l.b16 %v2806
      %v2876 = vunpack.c.l.b16 %v2807
      %v2877 = vunpack.c.l.b16 %v2808
      %v2878 = vunpack.c.l.b16 %v2809
      %v2879 = vunpack.c.l.b16 %v2810
      %v2880 = vunpack.c.l.b16 %v2811
      %v2881 = vunpack.c.l.b16 %v2812
      %v2882 = vunpack.c.l.b16 %v2813
      %v2883 = vpack.c.b16 %v2868, %v2867
      %v2884 = vpack.c.b16 %v2870, %v2869
      %v2885 = vpack.c.b16 %v2872, %v2871
      %v2886 = vpack.c.b16 %v2874, %v2873
      %v2887 = vpack.c.b16 %v2876, %v2875
      %v2888 = vpack.c.b16 %v2878, %v2877
      %v2889 = vpack.c.b16 %v2880, %v2879
      %v2890 = vpack.c.b16 %v2882, %v2881
      %2899 = vmatprep.subr.bf16.mxu0 0
      %2900 = vmatpush1.bf16.msra.mxu0 %v2890
      %2901 = vmatprep.subr.bf16.mxu0 0
      %2902 = vmatpush1.bf16.msra.mxu0 %v2889
      %2903 = vmatprep.subr.bf16.mxu0 0
      %2904 = vmatpush1.bf16.msra.mxu0 %v2888
      %2905 = vmatprep.subr.bf16.mxu0 0
      %2906 = vmatpush1.bf16.msra.mxu0 %v2887
      %2907 = vmatprep.subr.bf16.mxu0 0
      %2908 = vmatpush1.bf16.msra.mxu0 %v2886
      %2909 = vmatprep.subr.bf16.mxu0 0
      %2910 = vmatpush1.bf16.msra.mxu0 %v2885
      %2911 = vmatprep.subr.bf16.mxu0 0
      %2912 = vmatpush1.bf16.msra.mxu0 %v2884
      %2913 = vmatprep.subr.bf16.mxu0 0
      %2914 = vmatpush1.bf16.msra.mxu0 %v2883
      %2915 = vmatprep.subr.bf16.mxu0 0
      %2916 = vmatpush2.bf16.msra.mxu0 0
      %2917 = vmatprep.subr.bf16.mxu0 0
      %2918 = vmatpush2.bf16.msra.mxu0 0
      %2919 = vmatprep.subr.bf16.mxu0 0
      %2920 = vmatpush2.bf16.msra.mxu0 0
      %2921 = vmatprep.subr.bf16.mxu0 0
      %2922 = vmatpush2.bf16.msra.mxu0 0
      %2923 = vmatprep.subr.bf16.mxu0 0
      %2924 = vmatpush2.bf16.msra.mxu0 0
      %2925 = vmatprep.subr.bf16.mxu0 0
      %2926 = vmatpush2.bf16.msra.mxu0 0
      %2927 = vmatprep.subr.bf16.mxu0 0
      %2928 = vmatpush2.bf16.msra.mxu0 0
      %2929 = vmatprep.subr.bf16.mxu0 0
      %2930 = vmatpush2.bf16.msra.mxu0 0
      %2931 = vmatprep.mubr.bf16.mxu0 0
      %2932 = vmatmul.mubr.bf16.gmra.mxu0 %v2841
      %v2933 = vpop.f32.mrf.mxu0
      %v2934 = vadd.f32 0.0, %v2933
      %v2935 = vpop.f32.mrf.mxu0
      %v2936 = vpop.f32.mrf.mxu0
      %v2937 = vadd.f32 0.0, %v2936
      %v2938 = vpop.f32.mrf.mxu0
      %2939 = vmatprep.mubr.bf16.mxu0 0
      %2940 = vmatmul.mubr.bf16.gmra.mxu0 %v2842
      %v2941 = vpop.f32.mrf.mxu0
      %v2942 = vadd.f32 0.0, %v2941
      %v2943 = vpop.f32.mrf.mxu0
      %v2944 = vpop.f32.mrf.mxu0
      %v2945 = vadd.f32 0.0, %v2944
      %v2946 = vpop.f32.mrf.mxu0
      %2947 = vmatprep.mubr.bf16.mxu0 0
      %2948 = vmatmul.mubr.bf16.gmra.mxu0 %v2843
      %v2949 = vpop.f32.mrf.mxu0
      %v2950 = vadd.f32 0.0, %v2949
      %v2951 = vpop.f32.mrf.mxu0
      %v2952 = vpop.f32.mrf.mxu0
      %v2953 = vadd.f32 0.0, %v2952
      %v2954 = vpop.f32.mrf.mxu0
      %2955 = vmatprep.mubr.bf16.mxu0 0
      %2956 = vmatmul.mubr.bf16.gmra.mxu0 %v2844
      %v2957 = vpop.f32.mrf.mxu0
      %v2958 = vadd.f32 0.0, %v2957
      %v2959 = vpop.f32.mrf.mxu0
      %v2960 = vpop.f32.mrf.mxu0
      %v2961 = vadd.f32 0.0, %v2960
      %v2962 = vpop.f32.mrf.mxu0
      %2963 = vmatprep.mubr.bf16.mxu0 0
      %2964 = vmatmul.mubr.bf16.gmra.mxu0 %v2845
      %v2965 = vpop.f32.mrf.mxu0
      %v2966 = vadd.f32 0.0, %v2965
      %v2967 = vpop.f32.mrf.mxu0
      %v2968 = vpop.f32.mrf.mxu0
      %v2969 = vpop.f32.mrf.mxu0
      %2970 = vdwg.mxu0
      %v2971 = vadd.f32 %v2797, %v2934
      %2973 = vrot.lane.b32.xlu0 %v2937, 127
      %v2974 = vpop.permute.xlu0 %2973
      %v2976 = vadd.f32 %v2971, %v2974
      %2978 = vrot.lane.b32.xlu0 %v2942, 126
      %v2979 = vpop.permute.xlu0 %2978
      %v2981 = vadd.f32 %v2976, %v2979
      %2983 = vrot.lane.b32.xlu0 %v2945, 118
      %v2984 = vpop.permute.xlu0 %2983
      %v2986 = vadd.f32 %v2981, %v2984
      %2988 = vrot.lane.b32.xlu0 %v2950, 117
      %v2989 = vpop.permute.xlu0 %2988
      %v2991 = vadd.f32 %v2986, %v2989
      %2993 = vrot.lane.b32.xlu0 %v2953, 116
      %v2994 = vpop.permute.xlu0 %2993
      %v2996 = vadd.f32 %v2991, %v2994
      %2998 = vrot.lane.b32.xlu0 %v2958, 108
      %v2999 = vpop.permute.xlu0 %2998
      %v3001 = vadd.f32 %v2996, %v2999
      %3003 = vrot.lane.b32.xlu0 %v2961, 107
      %v3004 = vpop.permute.xlu0 %3003
      %v3006 = vadd.f32 %v3001, %v3004
      %3008 = vrot.lane.b32.xlu0 %v2966, 106
      %v3009 = vpop.permute.xlu0 %3008
      %v3011 = vadd.f32 %v3006, %v3009
      %v3012 = vadd.f32 %v3011, %v1691
      %s3013 = scalar_lea.vmem %s1021, 4
      %v3014 = vld [vmem:[%s3013] sm:$0x3]
      %v3015 = vunpack.c.l.bf16 %v3014
      %v3016 = vsub.f32 %v3015, %v1699
      %v3017 = vmul.f32 %v3016, %v1705
      %v3018 = vadd.f32 %v3012, 1.0
      %v3019 = vmul.f32 %v3017, %v3018
      %v3021 = vcombine.high %v3012, %v3012
      %v3023 = vadd.f32 %v3019, %v3021
      %s3024 = scalar_lea.vmem %s1039, 8
      %3025 = vst.msk [vmem:[%s3024] sm:$0xf] %vm1714, %v3023
      %v3026 = vld [vmem:[%s932] sm:$0xf]
      %v3027 = vld [vmem:[%s932 + $0x4] sm:$0xf]
      %v3028 = vld [vmem:[%s932 + $0x8] sm:$0xf]
      %v3029 = vld [vmem:[%s932 + $0xc] sm:$0xf]
      %v3030 = vld [vmem:[%s932 + $0x10] sm:$0xf]
      %v3031 = vld [vmem:[%s932 + $0x14] sm:$0xf]
      %v3032 = vld [vmem:[%s932 + $0x18] sm:$0xf]
      %v3033 = vld [vmem:[%s932 + $0x1c] sm:$0xf]
      %v3034 = vld [vmem:[%s932 + $0x20] sm:$0xf]
      %v3035 = vld [vmem:[%s932 + $0x24] sm:$0xf]
      %v3036 = vld [vmem:[%s932 + $0x28] sm:$0xf]
      %v3037 = vld [vmem:[%s932 + $0x2c] sm:$0xf]
      %v3038 = vld [vmem:[%s932 + $0x30] sm:$0xf]
      %v3039 = vld [vmem:[%s932 + $0x34] sm:$0xf]
      %v3040 = vld [vmem:[%s932 + $0x38] sm:$0xf]
      %v3041 = vld [vmem:[%s932 + $0x3c] sm:$0xf]
      %v3042 = vld [vmem:[%s10] sm:$0xf]
      %v3043 = vld [vmem:[%s10 + $0x4] sm:$0xf]
      %v3044 = vld [vmem:[%s10 + $0x8] sm:$0xf]
      %v3045 = vld [vmem:[%s10 + $0xc] sm:$0xf]
      %v3046 = vld [vmem:[%s10 + $0x10] sm:$0xf]
      %v3047 = vld [vmem:[%s10 + $0x14] sm:$0xf]
      %v3048 = vld [vmem:[%s10 + $0x18] sm:$0xf]
      %v3049 = vld [vmem:[%s10 + $0x1c] sm:$0xf]
      %v3050 = vld [vmem:[%s10 + $0x20] sm:$0xf]
      %v3060 = vunpack.c.l.b16 %v3042
      %v3061 = vunpack.c.l.b16 %v3043
      %v3062 = vunpack.c.l.b16 %v3044
      %v3063 = vunpack.c.l.b16 %v3045
      %v3064 = vunpack.c.l.b16 %v3046
      %v3065 = vunpack.c.l.b16 %v3047
      %v3066 = vunpack.c.l.b16 %v3048
      %v3067 = vunpack.c.l.b16 %v3049
      %v3068 = vunpack.c.l.b16 %v3050
      %v3069 = vpack.c.b16 %v3061, %v3060
      %v3070 = vpack.c.b16 %v3063, %v3062
      %v3071 = vpack.c.b16 %v3065, %v3064
      %v3072 = vpack.c.b16 %v3067, %v3066
      %v3073 = vpack.c.b16 %v3068, %v3068
      %v3095 = vunpack.c.l.b16 %v3026
      %v3096 = vunpack.c.l.b16 %v3027
      %v3097 = vunpack.c.l.b16 %v3028
      %v3098 = vunpack.c.l.b16 %v3029
      %v3099 = vunpack.c.l.b16 %v3030
      %v3100 = vunpack.c.l.b16 %v3031
      %v3101 = vunpack.c.l.b16 %v3032
      %v3102 = vunpack.c.l.b16 %v3033
      %v3103 = vunpack.c.l.b16 %v3034
      %v3104 = vunpack.c.l.b16 %v3035
      %v3105 = vunpack.c.l.b16 %v3036
      %v3106 = vunpack.c.l.b16 %v3037
      %v3107 = vunpack.c.l.b16 %v3038
      %v3108 = vunpack.c.l.b16 %v3039
      %v3109 = vunpack.c.l.b16 %v3040
      %v3110 = vunpack.c.l.b16 %v3041
      %v3111 = vpack.c.b16 %v3096, %v3095
      %v3112 = vpack.c.b16 %v3098, %v3097
      %v3113 = vpack.c.b16 %v3100, %v3099
      %v3114 = vpack.c.b16 %v3102, %v3101
      %v3115 = vpack.c.b16 %v3104, %v3103
      %v3116 = vpack.c.b16 %v3106, %v3105
      %v3117 = vpack.c.b16 %v3108, %v3107
      %v3118 = vpack.c.b16 %v3110, %v3109
      %3127 = vmatprep.subr.bf16.mxu0 0
      %3128 = vmatpush1.bf16.msra.mxu0 %v3118
      %3129 = vmatprep.subr.bf16.mxu0 0
      %3130 = vmatpush1.bf16.msra.mxu0 %v3117
      %3131 = vmatprep.subr.bf16.mxu0 0
      %3132 = vmatpush1.bf16.msra.mxu0 %v3116
      %3133 = vmatprep.subr.bf16.mxu0 0
      %3134 = vmatpush1.bf16.msra.mxu0 %v3115
      %3135 = vmatprep.subr.bf16.mxu0 0
      %3136 = vmatpush1.bf16.msra.mxu0 %v3114
      %3137 = vmatprep.subr.bf16.mxu0 0
      %3138 = vmatpush1.bf16.msra.mxu0 %v3113
      %3139 = vmatprep.subr.bf16.mxu0 0
      %3140 = vmatpush1.bf16.msra.mxu0 %v3112
      %3141 = vmatprep.subr.bf16.mxu0 0
      %3142 = vmatpush1.bf16.msra.mxu0 %v3111
      %3143 = vmatprep.subr.bf16.mxu0 0
      %3144 = vmatpush2.bf16.msra.mxu0 0
      %3145 = vmatprep.subr.bf16.mxu0 0
      %3146 = vmatpush2.bf16.msra.mxu0 0
      %3147 = vmatprep.subr.bf16.mxu0 0
      %3148 = vmatpush2.bf16.msra.mxu0 0
      %3149 = vmatprep.subr.bf16.mxu0 0
      %3150 = vmatpush2.bf16.msra.mxu0 0
      %3151 = vmatprep.subr.bf16.mxu0 0
      %3152 = vmatpush2.bf16.msra.mxu0 0
      %3153 = vmatprep.subr.bf16.mxu0 0
      %3154 = vmatpush2.bf16.msra.mxu0 0
      %3155 = vmatprep.subr.bf16.mxu0 0
      %3156 = vmatpush2.bf16.msra.mxu0 0
      %3157 = vmatprep.subr.bf16.mxu0 0
      %3158 = vmatpush2.bf16.msra.mxu0 0
      %3159 = vmatprep.mubr.bf16.mxu0 0
      %3160 = vmatmul.mubr.bf16.gmra.mxu0 %v3069
      %v3161 = vpop.f32.mrf.mxu0
      %v3162 = vadd.f32 0.0, %v3161
      %v3163 = vpop.f32.mrf.mxu0
      %v3164 = vpop.f32.mrf.mxu0
      %v3165 = vadd.f32 0.0, %v3164
      %v3166 = vpop.f32.mrf.mxu0
      %3167 = vmatprep.mubr.bf16.mxu0 0
      %3168 = vmatmul.mubr.bf16.gmra.mxu0 %v3070
      %v3169 = vpop.f32.mrf.mxu0
      %v3170 = vadd.f32 0.0, %v3169
      %v3171 = vpop.f32.mrf.mxu0
      %v3172 = vpop.f32.mrf.mxu0
      %v3173 = vadd.f32 0.0, %v3172
      %v3174 = vpop.f32.mrf.mxu0
      %3175 = vmatprep.mubr.bf16.mxu0 0
      %3176 = vmatmul.mubr.bf16.gmra.mxu0 %v3071
      %v3177 = vpop.f32.mrf.mxu0
      %v3178 = vadd.f32 0.0, %v3177
      %v3179 = vpop.f32.mrf.mxu0
      %v3180 = vpop.f32.mrf.mxu0
      %v3181 = vadd.f32 0.0, %v3180
      %v3182 = vpop.f32.mrf.mxu0
      %3183 = vmatprep.mubr.bf16.mxu0 0
      %3184 = vmatmul.mubr.bf16.gmra.mxu0 %v3072
      %v3185 = vpop.f32.mrf.mxu0
      %v3186 = vadd.f32 0.0, %v3185
      %v3187 = vpop.f32.mrf.mxu0
      %v3188 = vpop.f32.mrf.mxu0
      %v3189 = vadd.f32 0.0, %v3188
      %v3190 = vpop.f32.mrf.mxu0
      %3191 = vmatprep.mubr.bf16.mxu0 0
      %3192 = vmatmul.mubr.bf16.gmra.mxu0 %v3073
      %v3193 = vpop.f32.mrf.mxu0
      %v3194 = vadd.f32 0.0, %v3193
      %v3195 = vpop.f32.mrf.mxu0
      %v3196 = vpop.f32.mrf.mxu0
      %v3197 = vpop.f32.mrf.mxu0
      %3198 = vdwg.mxu0
      %3200 = vrot.lane.b32.xlu0 %v3165, 127
      %v3201 = vpop.permute.xlu0 %3200
      %v3203 = vadd.f32 %v3162, %v3201
      %3205 = vrot.lane.b32.xlu0 %v3170, 126
      %v3206 = vpop.permute.xlu0 %3205
      %v3208 = vadd.f32 %v3203, %v3206
      %3210 = vrot.lane.b32.xlu0 %v3173, 118
      %v3211 = vpop.permute.xlu0 %3210
      %v3213 = vadd.f32 %v3208, %v3211
      %3215 = vrot.lane.b32.xlu0 %v3178, 117
      %v3216 = vpop.permute.xlu0 %3215
      %v3218 = vadd.f32 %v3213, %v3216
      %3220 = vrot.lane.b32.xlu0 %v3181, 116
      %v3221 = vpop.permute.xlu0 %3220
      %v3223 = vadd.f32 %v3218, %v3221
      %3225 = vrot.lane.b32.xlu0 %v3186, 108
      %v3226 = vpop.permute.xlu0 %3225
      %v3228 = vadd.f32 %v3223, %v3226
      %3230 = vrot.lane.b32.xlu0 %v3189, 107
      %v3231 = vpop.permute.xlu0 %3230
      %v3233 = vadd.f32 %v3228, %v3231
      %3235 = vrot.lane.b32.xlu0 %v3194, 106
      %v3236 = vpop.permute.xlu0 %3235
      %v3238 = vadd.f32 %v3233, %v3236
      %v3239 = vld [vmem:[%s945] sm:$0xf]
      %v3240 = vld [vmem:[%s945 + $0x4] sm:$0xf]
      %v3241 = vld [vmem:[%s945 + $0x8] sm:$0xf]
      %v3242 = vld [vmem:[%s945 + $0xc] sm:$0xf]
      %v3243 = vld [vmem:[%s945 + $0x10] sm:$0xf]
      %v3244 = vld [vmem:[%s945 + $0x14] sm:$0xf]
      %v3245 = vld [vmem:[%s945 + $0x18] sm:$0xf]
      %v3246 = vld [vmem:[%s945 + $0x1c] sm:$0xf]
      %v3247 = vld [vmem:[%s945 + $0x20] sm:$0xf]
      %v3248 = vld [vmem:[%s945 + $0x24] sm:$0xf]
      %v3249 = vld [vmem:[%s945 + $0x28] sm:$0xf]
      %v3250 = vld [vmem:[%s945 + $0x2c] sm:$0xf]
      %v3251 = vld [vmem:[%s945 + $0x30] sm:$0xf]
      %v3252 = vld [vmem:[%s945 + $0x34] sm:$0xf]
      %v3253 = vld [vmem:[%s945 + $0x38] sm:$0xf]
      %v3254 = vld [vmem:[%s945 + $0x3c] sm:$0xf]
      %v3255 = vld [vmem:[%s1274] sm:$0xf]
      %v3256 = vld [vmem:[%s1274 + $0x4] sm:$0xf]
      %v3257 = vld [vmem:[%s1274 + $0x8] sm:$0xf]
      %v3258 = vld [vmem:[%s1274 + $0xc] sm:$0xf]
      %v3259 = vld [vmem:[%s1274 + $0x10] sm:$0xf]
      %v3260 = vld [vmem:[%s1274 + $0x14] sm:$0xf]
      %v3261 = vld [vmem:[%s1274 + $0x18] sm:$0xf]
      %v3262 = vld [vmem:[%s1274 + $0x1c] sm:$0xf]
      %v3263 = vld [vmem:[%s1274 + $0x20] sm:$0xf]
      %v3273 = vunpack.c.l.b16 %v3255
      %v3274 = vunpack.c.l.b16 %v3256
      %v3275 = vunpack.c.l.b16 %v3257
      %v3276 = vunpack.c.l.b16 %v3258
      %v3277 = vunpack.c.l.b16 %v3259
      %v3278 = vunpack.c.l.b16 %v3260
      %v3279 = vunpack.c.l.b16 %v3261
      %v3280 = vunpack.c.l.b16 %v3262
      %v3281 = vunpack.c.l.b16 %v3263
      %v3282 = vpack.c.b16 %v3274, %v3273
      %v3283 = vpack.c.b16 %v3276, %v3275
      %v3284 = vpack.c.b16 %v3278, %v3277
      %v3285 = vpack.c.b16 %v3280, %v3279
      %v3286 = vpack.c.b16 %v3281, %v3281
      %v3308 = vunpack.c.l.b16 %v3239
      %v3309 = vunpack.c.l.b16 %v3240
      %v3310 = vunpack.c.l.b16 %v3241
      %v3311 = vunpack.c.l.b16 %v3242
      %v3312 = vunpack.c.l.b16 %v3243
      %v3313 = vunpack.c.l.b16 %v3244
      %v3314 = vunpack.c.l.b16 %v3245
      %v3315 = vunpack.c.l.b16 %v3246
      %v3316 = vunpack.c.l.b16 %v3247
      %v3317 = vunpack.c.l.b16 %v3248
      %v3318 = vunpack.c.l.b16 %v3249
      %v3319 = vunpack.c.l.b16 %v3250
      %v3320 = vunpack.c.l.b16 %v3251
      %v3321 = vunpack.c.l.b16 %v3252
      %v3322 = vunpack.c.l.b16 %v3253
      %v3323 = vunpack.c.l.b16 %v3254
      %v3324 = vpack.c.b16 %v3309, %v3308
      %v3325 = vpack.c.b16 %v3311, %v3310
      %v3326 = vpack.c.b16 %v3313, %v3312
      %v3327 = vpack.c.b16 %v3315, %v3314
      %v3328 = vpack.c.b16 %v3317, %v3316
      %v3329 = vpack.c.b16 %v3319, %v3318
      %v3330 = vpack.c.b16 %v3321, %v3320
      %v3331 = vpack.c.b16 %v3323, %v3322
      %3340 = vmatprep.subr.bf16.mxu0 0
      %3341 = vmatpush1.bf16.msra.mxu0 %v3331
      %3342 = vmatprep.subr.bf16.mxu0 0
      %3343 = vmatpush1.bf16.msra.mxu0 %v3330
      %3344 = vmatprep.subr.bf16.mxu0 0
      %3345 = vmatpush1.bf16.msra.mxu0 %v3329
      %3346 = vmatprep.subr.bf16.mxu0 0
      %3347 = vmatpush1.bf16.msra.mxu0 %v3328
      %3348 = vmatprep.subr.bf16.mxu0 0
      %3349 = vmatpush1.bf16.msra.mxu0 %v3327
      %3350 = vmatprep.subr.bf16.mxu0 0
      %3351 = vmatpush1.bf16.msra.mxu0 %v3326
      %3352 = vmatprep.subr.bf16.mxu0 0
      %3353 = vmatpush1.bf16.msra.mxu0 %v3325
      %3354 = vmatprep.subr.bf16.mxu0 0
      %3355 = vmatpush1.bf16.msra.mxu0 %v3324
      %3356 = vmatprep.subr.bf16.mxu0 0
      %3357 = vmatpush2.bf16.msra.mxu0 0
      %3358 = vmatprep.subr.bf16.mxu0 0
      %3359 = vmatpush2.bf16.msra.mxu0 0
      %3360 = vmatprep.subr.bf16.mxu0 0
      %3361 = vmatpush2.bf16.msra.mxu0 0
      %3362 = vmatprep.subr.bf16.mxu0 0
      %3363 = vmatpush2.bf16.msra.mxu0 0
      %3364 = vmatprep.subr.bf16.mxu0 0
      %3365 = vmatpush2.bf16.msra.mxu0 0
      %3366 = vmatprep.subr.bf16.mxu0 0
      %3367 = vmatpush2.bf16.msra.mxu0 0
      %3368 = vmatprep.subr.bf16.mxu0 0
      %3369 = vmatpush2.bf16.msra.mxu0 0
      %3370 = vmatprep.subr.bf16.mxu0 0
      %3371 = vmatpush2.bf16.msra.mxu0 0
      %3372 = vmatprep.mubr.bf16.mxu0 0
      %3373 = vmatmul.mubr.bf16.gmra.mxu0 %v3282
      %v3374 = vpop.f32.mrf.mxu0
      %v3375 = vadd.f32 0.0, %v3374
      %v3376 = vpop.f32.mrf.mxu0
      %v3377 = vpop.f32.mrf.mxu0
      %v3378 = vadd.f32 0.0, %v3377
      %v3379 = vpop.f32.mrf.mxu0
      %3380 = vmatprep.mubr.bf16.mxu0 0
      %3381 = vmatmul.mubr.bf16.gmra.mxu0 %v3283
      %v3382 = vpop.f32.mrf.mxu0
      %v3383 = vadd.f32 0.0, %v3382
      %v3384 = vpop.f32.mrf.mxu0
      %v3385 = vpop.f32.mrf.mxu0
      %v3386 = vadd.f32 0.0, %v3385
      %v3387 = vpop.f32.mrf.mxu0
      %3388 = vmatprep.mubr.bf16.mxu0 0
      %3389 = vmatmul.mubr.bf16.gmra.mxu0 %v3284
      %v3390 = vpop.f32.mrf.mxu0
      %v3391 = vadd.f32 0.0, %v3390
      %v3392 = vpop.f32.mrf.mxu0
      %v3393 = vpop.f32.mrf.mxu0
      %v3394 = vadd.f32 0.0, %v3393
      %v3395 = vpop.f32.mrf.mxu0
      %3396 = vmatprep.mubr.bf16.mxu0 0
      %3397 = vmatmul.mubr.bf16.gmra.mxu0 %v3285
      %v3398 = vpop.f32.mrf.mxu0
      %v3399 = vadd.f32 0.0, %v3398
      %v3400 = vpop.f32.mrf.mxu0
      %v3401 = vpop.f32.mrf.mxu0
      %v3402 = vadd.f32 0.0, %v3401
      %v3403 = vpop.f32.mrf.mxu0
      %3404 = vmatprep.mubr.bf16.mxu0 0
      %3405 = vmatmul.mubr.bf16.gmra.mxu0 %v3286
      %v3406 = vpop.f32.mrf.mxu0
      %v3407 = vadd.f32 0.0, %v3406
      %v3408 = vpop.f32.mrf.mxu0
      %v3409 = vpop.f32.mrf.mxu0
      %v3410 = vpop.f32.mrf.mxu0
      %3411 = vdwg.mxu0
      %v3412 = vadd.f32 %v3238, %v3375
      %3414 = vrot.lane.b32.xlu0 %v3378, 127
      %v3415 = vpop.permute.xlu0 %3414
      %v3417 = vadd.f32 %v3412, %v3415
      %3419 = vrot.lane.b32.xlu0 %v3383, 126
      %v3420 = vpop.permute.xlu0 %3419
      %v3422 = vadd.f32 %v3417, %v3420
      %3424 = vrot.lane.b32.xlu0 %v3386, 118
      %v3425 = vpop.permute.xlu0 %3424
      %v3427 = vadd.f32 %v3422, %v3425
      %3429 = vrot.lane.b32.xlu0 %v3391, 117
      %v3430 = vpop.permute.xlu0 %3429
      %v3432 = vadd.f32 %v3427, %v3430
      %3434 = vrot.lane.b32.xlu0 %v3394, 116
      %v3435 = vpop.permute.xlu0 %3434
      %v3437 = vadd.f32 %v3432, %v3435
      %3439 = vrot.lane.b32.xlu0 %v3399, 108
      %v3440 = vpop.permute.xlu0 %3439
      %v3442 = vadd.f32 %v3437, %v3440
      %3444 = vrot.lane.b32.xlu0 %v3402, 107
      %v3445 = vpop.permute.xlu0 %3444
      %v3447 = vadd.f32 %v3442, %v3445
      %3449 = vrot.lane.b32.xlu0 %v3407, 106
      %v3450 = vpop.permute.xlu0 %3449
      %v3452 = vadd.f32 %v3447, %v3450
      %v3453 = vld [vmem:[%s958] sm:$0xf]
      %v3454 = vld [vmem:[%s958 + $0x4] sm:$0xf]
      %v3455 = vld [vmem:[%s958 + $0x8] sm:$0xf]
      %v3456 = vld [vmem:[%s958 + $0xc] sm:$0xf]
      %v3457 = vld [vmem:[%s958 + $0x10] sm:$0xf]
      %v3458 = vld [vmem:[%s958 + $0x14] sm:$0xf]
      %v3459 = vld [vmem:[%s958 + $0x18] sm:$0xf]
      %v3460 = vld [vmem:[%s958 + $0x1c] sm:$0xf]
      %v3461 = vld [vmem:[%s958 + $0x20] sm:$0xf]
      %v3462 = vld [vmem:[%s958 + $0x24] sm:$0xf]
      %v3463 = vld [vmem:[%s958 + $0x28] sm:$0xf]
      %v3464 = vld [vmem:[%s958 + $0x2c] sm:$0xf]
      %v3465 = vld [vmem:[%s958 + $0x30] sm:$0xf]
      %v3466 = vld [vmem:[%s958 + $0x34] sm:$0xf]
      %v3467 = vld [vmem:[%s958 + $0x38] sm:$0xf]
      %v3468 = vld [vmem:[%s958 + $0x3c] sm:$0xf]
      %v3469 = vld [vmem:[%s1489] sm:$0xf]
      %v3470 = vld [vmem:[%s1489 + $0x4] sm:$0xf]
      %v3471 = vld [vmem:[%s1489 + $0x8] sm:$0xf]
      %v3472 = vld [vmem:[%s1489 + $0xc] sm:$0xf]
      %v3473 = vld [vmem:[%s1489 + $0x10] sm:$0xf]
      %v3474 = vld [vmem:[%s1489 + $0x14] sm:$0xf]
      %v3475 = vld [vmem:[%s1489 + $0x18] sm:$0xf]
      %v3476 = vld [vmem:[%s1489 + $0x1c] sm:$0xf]
      %v3477 = vld [vmem:[%s1489 + $0x20] sm:$0xf]
      %v3487 = vunpack.c.l.b16 %v3469
      %v3488 = vunpack.c.l.b16 %v3470
      %v3489 = vunpack.c.l.b16 %v3471
      %v3490 = vunpack.c.l.b16 %v3472
      %v3491 = vunpack.c.l.b16 %v3473
      %v3492 = vunpack.c.l.b16 %v3474
      %v3493 = vunpack.c.l.b16 %v3475
      %v3494 = vunpack.c.l.b16 %v3476
      %v3495 = vunpack.c.l.b16 %v3477
      %v3496 = vpack.c.b16 %v3488, %v3487
      %v3497 = vpack.c.b16 %v3490, %v3489
      %v3498 = vpack.c.b16 %v3492, %v3491
      %v3499 = vpack.c.b16 %v3494, %v3493
      %v3500 = vpack.c.b16 %v3495, %v3495
      %v3522 = vunpack.c.l.b16 %v3453
      %v3523 = vunpack.c.l.b16 %v3454
      %v3524 = vunpack.c.l.b16 %v3455
      %v3525 = vunpack.c.l.b16 %v3456
      %v3526 = vunpack.c.l.b16 %v3457
      %v3527 = vunpack.c.l.b16 %v3458
      %v3528 = vunpack.c.l.b16 %v3459
      %v3529 = vunpack.c.l.b16 %v3460
      %v3530 = vunpack.c.l.b16 %v3461
      %v3531 = vunpack.c.l.b16 %v3462
      %v3532 = vunpack.c.l.b16 %v3463
      %v3533 = vunpack.c.l.b16 %v3464
      %v3534 = vunpack.c.l.b16 %v3465
      %v3535 = vunpack.c.l.b16 %v3466
      %v3536 = vunpack.c.l.b16 %v3467
      %v3537 = vunpack.c.l.b16 %v3468
      %v3538 = vpack.c.b16 %v3523, %v3522
      %v3539 = vpack.c.b16 %v3525, %v3524
      %v3540 = vpack.c.b16 %v3527, %v3526
      %v3541 = vpack.c.b16 %v3529, %v3528
      %v3542 = vpack.c.b16 %v3531, %v3530
      %v3543 = vpack.c.b16 %v3533, %v3532
      %v3544 = vpack.c.b16 %v3535, %v3534
      %v3545 = vpack.c.b16 %v3537, %v3536
      %3554 = vmatprep.subr.bf16.mxu0 0
      %3555 = vmatpush1.bf16.msra.mxu0 %v3545
      %3556 = vmatprep.subr.bf16.mxu0 0
      %3557 = vmatpush1.bf16.msra.mxu0 %v3544
      %3558 = vmatprep.subr.bf16.mxu0 0
      %3559 = vmatpush1.bf16.msra.mxu0 %v3543
      %3560 = vmatprep.subr.bf16.mxu0 0
      %3561 = vmatpush1.bf16.msra.mxu0 %v3542
      %3562 = vmatprep.subr.bf16.mxu0 0
      %3563 = vmatpush1.bf16.msra.mxu0 %v3541
      %3564 = vmatprep.subr.bf16.mxu0 0
      %3565 = vmatpush1.bf16.msra.mxu0 %v3540
      %3566 = vmatprep.subr.bf16.mxu0 0
      %3567 = vmatpush1.bf16.msra.mxu0 %v3539
      %3568 = vmatprep.subr.bf16.mxu0 0
      %3569 = vmatpush1.bf16.msra.mxu0 %v3538
      %3570 = vmatprep.subr.bf16.mxu0 0
      %3571 = vmatpush2.bf16.msra.mxu0 0
      %3572 = vmatprep.subr.bf16.mxu0 0
      %3573 = vmatpush2.bf16.msra.mxu0 0
      %3574 = vmatprep.subr.bf16.mxu0 0
      %3575 = vmatpush2.bf16.msra.mxu0 0
      %3576 = vmatprep.subr.bf16.mxu0 0
      %3577 = vmatpush2.bf16.msra.mxu0 0
      %3578 = vmatprep.subr.bf16.mxu0 0
      %3579 = vmatpush2.bf16.msra.mxu0 0
      %3580 = vmatprep.subr.bf16.mxu0 0
      %3581 = vmatpush2.bf16.msra.mxu0 0
      %3582 = vmatprep.subr.bf16.mxu0 0
      %3583 = vmatpush2.bf16.msra.mxu0 0
      %3584 = vmatprep.subr.bf16.mxu0 0
      %3585 = vmatpush2.bf16.msra.mxu0 0
      %3586 = vmatprep.mubr.bf16.mxu0 0
      %3587 = vmatmul.mubr.bf16.gmra.mxu0 %v3496
      %v3588 = vpop.f32.mrf.mxu0
      %v3589 = vadd.f32 0.0, %v3588
      %v3590 = vpop.f32.mrf.mxu0
      %v3591 = vpop.f32.mrf.mxu0
      %v3592 = vadd.f32 0.0, %v3591
      %v3593 = vpop.f32.mrf.mxu0
      %3594 = vmatprep.mubr.bf16.mxu0 0
      %3595 = vmatmul.mubr.bf16.gmra.mxu0 %v3497
      %v3596 = vpop.f32.mrf.mxu0
      %v3597 = vadd.f32 0.0, %v3596
      %v3598 = vpop.f32.mrf.mxu0
      %v3599 = vpop.f32.mrf.mxu0
      %v3600 = vadd.f32 0.0, %v3599
      %v3601 = vpop.f32.mrf.mxu0
      %3602 = vmatprep.mubr.bf16.mxu0 0
      %3603 = vmatmul.mubr.bf16.gmra.mxu0 %v3498
      %v3604 = vpop.f32.mrf.mxu0
      %v3605 = vadd.f32 0.0, %v3604
      %v3606 = vpop.f32.mrf.mxu0
      %v3607 = vpop.f32.mrf.mxu0
      %v3608 = vadd.f32 0.0, %v3607
      %v3609 = vpop.f32.mrf.mxu0
      %3610 = vmatprep.mubr.bf16.mxu0 0
      %3611 = vmatmul.mubr.bf16.gmra.mxu0 %v3499
      %v3612 = vpop.f32.mrf.mxu0
      %v3613 = vadd.f32 0.0, %v3612
      %v3614 = vpop.f32.mrf.mxu0
      %v3615 = vpop.f32.mrf.mxu0
      %v3616 = vadd.f32 0.0, %v3615
      %v3617 = vpop.f32.mrf.mxu0
      %3618 = vmatprep.mubr.bf16.mxu0 0
      %3619 = vmatmul.mubr.bf16.gmra.mxu0 %v3500
      %v3620 = vpop.f32.mrf.mxu0
      %v3621 = vadd.f32 0.0, %v3620
      %v3622 = vpop.f32.mrf.mxu0
      %v3623 = vpop.f32.mrf.mxu0
      %v3624 = vpop.f32.mrf.mxu0
      %3625 = vdwg.mxu0
      %v3626 = vadd.f32 %v3452, %v3589
      %3628 = vrot.lane.b32.xlu0 %v3592, 127
      %v3629 = vpop.permute.xlu0 %3628
      %v3631 = vadd.f32 %v3626, %v3629
      %3633 = vrot.lane.b32.xlu0 %v3597, 126
      %v3634 = vpop.permute.xlu0 %3633
      %v3636 = vadd.f32 %v3631, %v3634
      %3638 = vrot.lane.b32.xlu0 %v3600, 118
      %v3639 = vpop.permute.xlu0 %3638
      %v3641 = vadd.f32 %v3636, %v3639
      %3643 = vrot.lane.b32.xlu0 %v3605, 117
      %v3644 = vpop.permute.xlu0 %3643
      %v3646 = vadd.f32 %v3641, %v3644
      %3648 = vrot.lane.b32.xlu0 %v3608, 116
      %v3649 = vpop.permute.xlu0 %3648
      %v3651 = vadd.f32 %v3646, %v3649
      %3653 = vrot.lane.b32.xlu0 %v3613, 108
      %v3654 = vpop.permute.xlu0 %3653
      %v3656 = vadd.f32 %v3651, %v3654
      %3658 = vrot.lane.b32.xlu0 %v3616, 107
      %v3659 = vpop.permute.xlu0 %3658
      %v3661 = vadd.f32 %v3656, %v3659
      %3663 = vrot.lane.b32.xlu0 %v3621, 106
      %v3664 = vpop.permute.xlu0 %3663
      %v3666 = vadd.f32 %v3661, %v3664
      %v3667 = vadd.f32 %v3666, %v1691
      %s3668 = scalar_lea.vmem %s1021, 6
      %v3669 = vld [vmem:[%s3668] sm:$0x3]
      %v3670 = vunpack.c.l.bf16 %v3669
      %v3671 = vsub.f32 %v3670, %v1699
      %v3672 = vmul.f32 %v3671, %v1705
      %v3673 = vadd.f32 %v3667, 1.0
      %v3674 = vmul.f32 %v3672, %v3673
      %v3676 = vcombine.high %v3667, %v3667
      %v3678 = vadd.f32 %v3674, %v3676
      %s3679 = scalar_lea.vmem %s1039, 12
      %3680 = vst.msk [vmem:[%s3679] sm:$0xf] %vm1714, %v3678
      %v3681 = vld [vmem:[%s945] sm:$0xf]
      %v3682 = vld [vmem:[%s945 + $0x4] sm:$0xf]
      %v3683 = vld [vmem:[%s945 + $0x8] sm:$0xf]
      %v3684 = vld [vmem:[%s945 + $0xc] sm:$0xf]
      %v3685 = vld [vmem:[%s945 + $0x10] sm:$0xf]
      %v3686 = vld [vmem:[%s945 + $0x14] sm:$0xf]
      %v3687 = vld [vmem:[%s945 + $0x18] sm:$0xf]
      %v3688 = vld [vmem:[%s945 + $0x1c] sm:$0xf]
      %v3689 = vld [vmem:[%s945 + $0x20] sm:$0xf]
      %v3690 = vld [vmem:[%s945 + $0x24] sm:$0xf]
      %v3691 = vld [vmem:[%s945 + $0x28] sm:$0xf]
      %v3692 = vld [vmem:[%s945 + $0x2c] sm:$0xf]
      %v3693 = vld [vmem:[%s945 + $0x30] sm:$0xf]
      %v3694 = vld [vmem:[%s945 + $0x34] sm:$0xf]
      %v3695 = vld [vmem:[%s945 + $0x38] sm:$0xf]
      %v3696 = vld [vmem:[%s945 + $0x3c] sm:$0xf]
      %v3697 = vld [vmem:[%s10] sm:$0xf]
      %v3698 = vld [vmem:[%s10 + $0x4] sm:$0xf]
      %v3699 = vld [vmem:[%s10 + $0x8] sm:$0xf]
      %v3700 = vld [vmem:[%s10 + $0xc] sm:$0xf]
      %v3701 = vld [vmem:[%s10 + $0x10] sm:$0xf]
      %v3702 = vld [vmem:[%s10 + $0x14] sm:$0xf]
      %v3703 = vld [vmem:[%s10 + $0x18] sm:$0xf]
      %v3704 = vld [vmem:[%s10 + $0x1c] sm:$0xf]
      %v3705 = vld [vmem:[%s10 + $0x20] sm:$0xf]
      %v3715 = vunpack.c.l.b16 %v3697
      %v3716 = vunpack.c.l.b16 %v3698
      %v3717 = vunpack.c.l.b16 %v3699
      %v3718 = vunpack.c.l.b16 %v3700
      %v3719 = vunpack.c.l.b16 %v3701
      %v3720 = vunpack.c.l.b16 %v3702
      %v3721 = vunpack.c.l.b16 %v3703
      %v3722 = vunpack.c.l.b16 %v3704
      %v3723 = vunpack.c.l.b16 %v3705
      %v3724 = vpack.c.b16 %v3716, %v3715
      %v3725 = vpack.c.b16 %v3718, %v3717
      %v3726 = vpack.c.b16 %v3720, %v3719
      %v3727 = vpack.c.b16 %v3722, %v3721
      %v3728 = vpack.c.b16 %v3723, %v3723
      %v3750 = vunpack.c.l.b16 %v3681
      %v3751 = vunpack.c.l.b16 %v3682
      %v3752 = vunpack.c.l.b16 %v3683
      %v3753 = vunpack.c.l.b16 %v3684
      %v3754 = vunpack.c.l.b16 %v3685
      %v3755 = vunpack.c.l.b16 %v3686
      %v3756 = vunpack.c.l.b16 %v3687
      %v3757 = vunpack.c.l.b16 %v3688
      %v3758 = vunpack.c.l.b16 %v3689
      %v3759 = vunpack.c.l.b16 %v3690
      %v3760 = vunpack.c.l.b16 %v3691
      %v3761 = vunpack.c.l.b16 %v3692
      %v3762 = vunpack.c.l.b16 %v3693
      %v3763 = vunpack.c.l.b16 %v3694
      %v3764 = vunpack.c.l.b16 %v3695
      %v3765 = vunpack.c.l.b16 %v3696
      %v3766 = vpack.c.b16 %v3751, %v3750
      %v3767 = vpack.c.b16 %v3753, %v3752
      %v3768 = vpack.c.b16 %v3755, %v3754
      %v3769 = vpack.c.b16 %v3757, %v3756
      %v3770 = vpack.c.b16 %v3759, %v3758
      %v3771 = vpack.c.b16 %v3761, %v3760
      %v3772 = vpack.c.b16 %v3763, %v3762
      %v3773 = vpack.c.b16 %v3765, %v3764
      %3782 = vmatprep.subr.bf16.mxu0 0
      %3783 = vmatpush1.bf16.msra.mxu0 %v3773
      %3784 = vmatprep.subr.bf16.mxu0 0
      %3785 = vmatpush1.bf16.msra.mxu0 %v3772
      %3786 = vmatprep.subr.bf16.mxu0 0
      %3787 = vmatpush1.bf16.msra.mxu0 %v3771
      %3788 = vmatprep.subr.bf16.mxu0 0
      %3789 = vmatpush1.bf16.msra.mxu0 %v3770
      %3790 = vmatprep.subr.bf16.mxu0 0
      %3791 = vmatpush1.bf16.msra.mxu0 %v3769
      %3792 = vmatprep.subr.bf16.mxu0 0
      %3793 = vmatpush1.bf16.msra.mxu0 %v3768
      %3794 = vmatprep.subr.bf16.mxu0 0
      %3795 = vmatpush1.bf16.msra.mxu0 %v3767
      %3796 = vmatprep.subr.bf16.mxu0 0
      %3797 = vmatpush1.bf16.msra.mxu0 %v3766
      %3798 = vmatprep.subr.bf16.mxu0 0
      %3799 = vmatpush2.bf16.msra.mxu0 0
      %3800 = vmatprep.subr.bf16.mxu0 0
      %3801 = vmatpush2.bf16.msra.mxu0 0
      %3802 = vmatprep.subr.bf16.mxu0 0
      %3803 = vmatpush2.bf16.msra.mxu0 0
      %3804 = vmatprep.subr.bf16.mxu0 0
      %3805 = vmatpush2.bf16.msra.mxu0 0
      %3806 = vmatprep.subr.bf16.mxu0 0
      %3807 = vmatpush2.bf16.msra.mxu0 0
      %3808 = vmatprep.subr.bf16.mxu0 0
      %3809 = vmatpush2.bf16.msra.mxu0 0
      %3810 = vmatprep.subr.bf16.mxu0 0
      %3811 = vmatpush2.bf16.msra.mxu0 0
      %3812 = vmatprep.subr.bf16.mxu0 0
      %3813 = vmatpush2.bf16.msra.mxu0 0
      %3814 = vmatprep.mubr.bf16.mxu0 0
      %3815 = vmatmul.mubr.bf16.gmra.mxu0 %v3724
      %v3816 = vpop.f32.mrf.mxu0
      %v3817 = vadd.f32 0.0, %v3816
      %v3818 = vpop.f32.mrf.mxu0
      %v3819 = vpop.f32.mrf.mxu0
      %v3820 = vadd.f32 0.0, %v3819
      %v3821 = vpop.f32.mrf.mxu0
      %3822 = vmatprep.mubr.bf16.mxu0 0
      %3823 = vmatmul.mubr.bf16.gmra.mxu0 %v3725
      %v3824 = vpop.f32.mrf.mxu0
      %v3825 = vadd.f32 0.0, %v3824
      %v3826 = vpop.f32.mrf.mxu0
      %v3827 = vpop.f32.mrf.mxu0
      %v3828 = vadd.f32 0.0, %v3827
      %v3829 = vpop.f32.mrf.mxu0
      %3830 = vmatprep.mubr.bf16.mxu0 0
      %3831 = vmatmul.mubr.bf16.gmra.mxu0 %v3726
      %v3832 = vpop.f32.mrf.mxu0
      %v3833 = vadd.f32 0.0, %v3832
      %v3834 = vpop.f32.mrf.mxu0
      %v3835 = vpop.f32.mrf.mxu0
      %v3836 = vadd.f32 0.0, %v3835
      %v3837 = vpop.f32.mrf.mxu0
      %3838 = vmatprep.mubr.bf16.mxu0 0
      %3839 = vmatmul.mubr.bf16.gmra.mxu0 %v3727
      %v3840 = vpop.f32.mrf.mxu0
      %v3841 = vadd.f32 0.0, %v3840
      %v3842 = vpop.f32.mrf.mxu0
      %v3843 = vpop.f32.mrf.mxu0
      %v3844 = vadd.f32 0.0, %v3843
      %v3845 = vpop.f32.mrf.mxu0
      %3846 = vmatprep.mubr.bf16.mxu0 0
      %3847 = vmatmul.mubr.bf16.gmra.mxu0 %v3728
      %v3848 = vpop.f32.mrf.mxu0
      %v3849 = vadd.f32 0.0, %v3848
      %v3850 = vpop.f32.mrf.mxu0
      %v3851 = vpop.f32.mrf.mxu0
      %v3852 = vpop.f32.mrf.mxu0
      %3853 = vdwg.mxu0
      %3855 = vrot.lane.b32.xlu0 %v3820, 127
      %v3856 = vpop.permute.xlu0 %3855
      %v3858 = vadd.f32 %v3817, %v3856
      %3860 = vrot.lane.b32.xlu0 %v3825, 126
      %v3861 = vpop.permute.xlu0 %3860
      %v3863 = vadd.f32 %v3858, %v3861
      %3865 = vrot.lane.b32.xlu0 %v3828, 118
      %v3866 = vpop.permute.xlu0 %3865
      %v3868 = vadd.f32 %v3863, %v3866
      %3870 = vrot.lane.b32.xlu0 %v3833, 117
      %v3871 = vpop.permute.xlu0 %3870
      %v3873 = vadd.f32 %v3868, %v3871
      %3875 = vrot.lane.b32.xlu0 %v3836, 116
      %v3876 = vpop.permute.xlu0 %3875
      %v3878 = vadd.f32 %v3873, %v3876
      %3880 = vrot.lane.b32.xlu0 %v3841, 108
      %v3881 = vpop.permute.xlu0 %3880
      %v3883 = vadd.f32 %v3878, %v3881
      %3885 = vrot.lane.b32.xlu0 %v3844, 107
      %v3886 = vpop.permute.xlu0 %3885
      %v3888 = vadd.f32 %v3883, %v3886
      %3890 = vrot.lane.b32.xlu0 %v3849, 106
      %v3891 = vpop.permute.xlu0 %3890
      %v3893 = vadd.f32 %v3888, %v3891
      %v3894 = vld [vmem:[%s958] sm:$0xf]
      %v3895 = vld [vmem:[%s958 + $0x4] sm:$0xf]
      %v3896 = vld [vmem:[%s958 + $0x8] sm:$0xf]
      %v3897 = vld [vmem:[%s958 + $0xc] sm:$0xf]
      %v3898 = vld [vmem:[%s958 + $0x10] sm:$0xf]
      %v3899 = vld [vmem:[%s958 + $0x14] sm:$0xf]
      %v3900 = vld [vmem:[%s958 + $0x18] sm:$0xf]
      %v3901 = vld [vmem:[%s958 + $0x1c] sm:$0xf]
      %v3902 = vld [vmem:[%s958 + $0x20] sm:$0xf]
      %v3903 = vld [vmem:[%s958 + $0x24] sm:$0xf]
      %v3904 = vld [vmem:[%s958 + $0x28] sm:$0xf]
      %v3905 = vld [vmem:[%s958 + $0x2c] sm:$0xf]
      %v3906 = vld [vmem:[%s958 + $0x30] sm:$0xf]
      %v3907 = vld [vmem:[%s958 + $0x34] sm:$0xf]
      %v3908 = vld [vmem:[%s958 + $0x38] sm:$0xf]
      %v3909 = vld [vmem:[%s958 + $0x3c] sm:$0xf]
      %v3910 = vld [vmem:[%s1274] sm:$0xf]
      %v3911 = vld [vmem:[%s1274 + $0x4] sm:$0xf]
      %v3912 = vld [vmem:[%s1274 + $0x8] sm:$0xf]
      %v3913 = vld [vmem:[%s1274 + $0xc] sm:$0xf]
      %v3914 = vld [vmem:[%s1274 + $0x10] sm:$0xf]
      %v3915 = vld [vmem:[%s1274 + $0x14] sm:$0xf]
      %v3916 = vld [vmem:[%s1274 + $0x18] sm:$0xf]
      %v3917 = vld [vmem:[%s1274 + $0x1c] sm:$0xf]
      %v3918 = vld [vmem:[%s1274 + $0x20] sm:$0xf]
      %v3928 = vunpack.c.l.b16 %v3910
      %v3929 = vunpack.c.l.b16 %v3911
      %v3930 = vunpack.c.l.b16 %v3912
      %v3931 = vunpack.c.l.b16 %v3913
      %v3932 = vunpack.c.l.b16 %v3914
      %v3933 = vunpack.c.l.b16 %v3915
      %v3934 = vunpack.c.l.b16 %v3916
      %v3935 = vunpack.c.l.b16 %v3917
      %v3936 = vunpack.c.l.b16 %v3918
      %v3937 = vpack.c.b16 %v3929, %v3928
      %v3938 = vpack.c.b16 %v3931, %v3930
      %v3939 = vpack.c.b16 %v3933, %v3932
      %v3940 = vpack.c.b16 %v3935, %v3934
      %v3941 = vpack.c.b16 %v3936, %v3936
      %v3963 = vunpack.c.l.b16 %v3894
      %v3964 = vunpack.c.l.b16 %v3895
      %v3965 = vunpack.c.l.b16 %v3896
      %v3966 = vunpack.c.l.b16 %v3897
      %v3967 = vunpack.c.l.b16 %v3898
      %v3968 = vunpack.c.l.b16 %v3899
      %v3969 = vunpack.c.l.b16 %v3900
      %v3970 = vunpack.c.l.b16 %v3901
      %v3971 = vunpack.c.l.b16 %v3902
      %v3972 = vunpack.c.l.b16 %v3903
      %v3973 = vunpack.c.l.b16 %v3904
      %v3974 = vunpack.c.l.b16 %v3905
      %v3975 = vunpack.c.l.b16 %v3906
      %v3976 = vunpack.c.l.b16 %v3907
      %v3977 = vunpack.c.l.b16 %v3908
      %v3978 = vunpack.c.l.b16 %v3909
      %v3979 = vpack.c.b16 %v3964, %v3963
      %v3980 = vpack.c.b16 %v3966, %v3965
      %v3981 = vpack.c.b16 %v3968, %v3967
      %v3982 = vpack.c.b16 %v3970, %v3969
      %v3983 = vpack.c.b16 %v3972, %v3971
      %v3984 = vpack.c.b16 %v3974, %v3973
      %v3985 = vpack.c.b16 %v3976, %v3975
      %v3986 = vpack.c.b16 %v3978, %v3977
      %3995 = vmatprep.subr.bf16.mxu0 0
      %3996 = vmatpush1.bf16.msra.mxu0 %v3986
      %3997 = vmatprep.subr.bf16.mxu0 0
      %3998 = vmatpush1.bf16.msra.mxu0 %v3985
      %3999 = vmatprep.subr.bf16.mxu0 0
      %4000 = vmatpush1.bf16.msra.mxu0 %v3984
      %4001 = vmatprep.subr.bf16.mxu0 0
      %4002 = vmatpush1.bf16.msra.mxu0 %v3983
      %4003 = vmatprep.subr.bf16.mxu0 0
      %4004 = vmatpush1.bf16.msra.mxu0 %v3982
      %4005 = vmatprep.subr.bf16.mxu0 0
      %4006 = vmatpush1.bf16.msra.mxu0 %v3981
      %4007 = vmatprep.subr.bf16.mxu0 0
      %4008 = vmatpush1.bf16.msra.mxu0 %v3980
      %4009 = vmatprep.subr.bf16.mxu0 0
      %4010 = vmatpush1.bf16.msra.mxu0 %v3979
      %4011 = vmatprep.subr.bf16.mxu0 0
      %4012 = vmatpush2.bf16.msra.mxu0 0
      %4013 = vmatprep.subr.bf16.mxu0 0
      %4014 = vmatpush2.bf16.msra.mxu0 0
      %4015 = vmatprep.subr.bf16.mxu0 0
      %4016 = vmatpush2.bf16.msra.mxu0 0
      %4017 = vmatprep.subr.bf16.mxu0 0
      %4018 = vmatpush2.bf16.msra.mxu0 0
      %4019 = vmatprep.subr.bf16.mxu0 0
      %4020 = vmatpush2.bf16.msra.mxu0 0
      %4021 = vmatprep.subr.bf16.mxu0 0
      %4022 = vmatpush2.bf16.msra.mxu0 0
      %4023 = vmatprep.subr.bf16.mxu0 0
      %4024 = vmatpush2.bf16.msra.mxu0 0
      %4025 = vmatprep.subr.bf16.mxu0 0
      %4026 = vmatpush2.bf16.msra.mxu0 0
      %4027 = vmatprep.mubr.bf16.mxu0 0
      %4028 = vmatmul.mubr.bf16.gmra.mxu0 %v3937
      %v4029 = vpop.f32.mrf.mxu0
      %v4030 = vadd.f32 0.0, %v4029
      %v4031 = vpop.f32.mrf.mxu0
      %v4032 = vpop.f32.mrf.mxu0
      %v4033 = vadd.f32 0.0, %v4032
      %v4034 = vpop.f32.mrf.mxu0
      %4035 = vmatprep.mubr.bf16.mxu0 0
      %4036 = vmatmul.mubr.bf16.gmra.mxu0 %v3938
      %v4037 = vpop.f32.mrf.mxu0
      %v4038 = vadd.f32 0.0, %v4037
      %v4039 = vpop.f32.mrf.mxu0
      %v4040 = vpop.f32.mrf.mxu0
      %v4041 = vadd.f32 0.0, %v4040
      %v4042 = vpop.f32.mrf.mxu0
      %4043 = vmatprep.mubr.bf16.mxu0 0
      %4044 = vmatmul.mubr.bf16.gmra.mxu0 %v3939
      %v4045 = vpop.f32.mrf.mxu0
      %v4046 = vadd.f32 0.0, %v4045
      %v4047 = vpop.f32.mrf.mxu0
      %v4048 = vpop.f32.mrf.mxu0
      %v4049 = vadd.f32 0.0, %v4048
      %v4050 = vpop.f32.mrf.mxu0
      %4051 = vmatprep.mubr.bf16.mxu0 0
      %4052 = vmatmul.mubr.bf16.gmra.mxu0 %v3940
      %v4053 = vpop.f32.mrf.mxu0
      %v4054 = vadd.f32 0.0, %v4053
      %v4055 = vpop.f32.mrf.mxu0
      %v4056 = vpop.f32.mrf.mxu0
      %v4057 = vadd.f32 0.0, %v4056
      %v4058 = vpop.f32.mrf.mxu0
      %4059 = vmatprep.mubr.bf16.mxu0 0
      %4060 = vmatmul.mubr.bf16.gmra.mxu0 %v3941
      %v4061 = vpop.f32.mrf.mxu0
      %v4062 = vadd.f32 0.0, %v4061
      %v4063 = vpop.f32.mrf.mxu0
      %v4064 = vpop.f32.mrf.mxu0
      %v4065 = vpop.f32.mrf.mxu0
      %4066 = vdwg.mxu0
      %v4067 = vadd.f32 %v3893, %v4030
      %4069 = vrot.lane.b32.xlu0 %v4033, 127
      %v4070 = vpop.permute.xlu0 %4069
      %v4072 = vadd.f32 %v4067, %v4070
      %4074 = vrot.lane.b32.xlu0 %v4038, 126
      %v4075 = vpop.permute.xlu0 %4074
      %v4077 = vadd.f32 %v4072, %v4075
      %4079 = vrot.lane.b32.xlu0 %v4041, 118
      %v4080 = vpop.permute.xlu0 %4079
      %v4082 = vadd.f32 %v4077, %v4080
      %4084 = vrot.lane.b32.xlu0 %v4046, 117
      %v4085 = vpop.permute.xlu0 %4084
      %v4087 = vadd.f32 %v4082, %v4085
      %4089 = vrot.lane.b32.xlu0 %v4049, 116
      %v4090 = vpop.permute.xlu0 %4089
      %v4092 = vadd.f32 %v4087, %v4090
      %4094 = vrot.lane.b32.xlu0 %v4054, 108
      %v4095 = vpop.permute.xlu0 %4094
      %v4097 = vadd.f32 %v4092, %v4095
      %4099 = vrot.lane.b32.xlu0 %v4057, 107
      %v4100 = vpop.permute.xlu0 %4099
      %v4102 = vadd.f32 %v4097, %v4100
      %4104 = vrot.lane.b32.xlu0 %v4062, 106
      %v4105 = vpop.permute.xlu0 %4104
      %v4107 = vadd.f32 %v4102, %v4105
      %v4108 = vld [vmem:[%s971] sm:$0xf]
      %v4109 = vld [vmem:[%s971 + $0x4] sm:$0xf]
      %v4110 = vld [vmem:[%s971 + $0x8] sm:$0xf]
      %v4111 = vld [vmem:[%s971 + $0xc] sm:$0xf]
      %v4112 = vld [vmem:[%s971 + $0x10] sm:$0xf]
      %v4113 = vld [vmem:[%s971 + $0x14] sm:$0xf]
      %v4114 = vld [vmem:[%s971 + $0x18] sm:$0xf]
      %v4115 = vld [vmem:[%s971 + $0x1c] sm:$0xf]
      %v4116 = vld [vmem:[%s971 + $0x20] sm:$0xf]
      %v4117 = vld [vmem:[%s971 + $0x24] sm:$0xf]
      %v4118 = vld [vmem:[%s971 + $0x28] sm:$0xf]
      %v4119 = vld [vmem:[%s971 + $0x2c] sm:$0xf]
      %v4120 = vld [vmem:[%s971 + $0x30] sm:$0xf]
      %v4121 = vld [vmem:[%s971 + $0x34] sm:$0xf]
      %v4122 = vld [vmem:[%s971 + $0x38] sm:$0xf]
      %v4123 = vld [vmem:[%s971 + $0x3c] sm:$0xf]
      %v4124 = vld [vmem:[%s1489] sm:$0xf]
      %v4125 = vld [vmem:[%s1489 + $0x4] sm:$0xf]
      %v4126 = vld [vmem:[%s1489 + $0x8] sm:$0xf]
      %v4127 = vld [vmem:[%s1489 + $0xc] sm:$0xf]
      %v4128 = vld [vmem:[%s1489 + $0x10] sm:$0xf]
      %v4129 = vld [vmem:[%s1489 + $0x14] sm:$0xf]
      %v4130 = vld [vmem:[%s1489 + $0x18] sm:$0xf]
      %v4131 = vld [vmem:[%s1489 + $0x1c] sm:$0xf]
      %v4132 = vld [vmem:[%s1489 + $0x20] sm:$0xf]
      %v4142 = vunpack.c.l.b16 %v4124
      %v4143 = vunpack.c.l.b16 %v4125
      %v4144 = vunpack.c.l.b16 %v4126
      %v4145 = vunpack.c.l.b16 %v4127
      %v4146 = vunpack.c.l.b16 %v4128
      %v4147 = vunpack.c.l.b16 %v4129
      %v4148 = vunpack.c.l.b16 %v4130
      %v4149 = vunpack.c.l.b16 %v4131
      %v4150 = vunpack.c.l.b16 %v4132
      %v4151 = vpack.c.b16 %v4143, %v4142
      %v4152 = vpack.c.b16 %v4145, %v4144
      %v4153 = vpack.c.b16 %v4147, %v4146
      %v4154 = vpack.c.b16 %v4149, %v4148
      %v4155 = vpack.c.b16 %v4150, %v4150
      %v4177 = vunpack.c.l.b16 %v4108
      %v4178 = vunpack.c.l.b16 %v4109
      %v4179 = vunpack.c.l.b16 %v4110
      %v4180 = vunpack.c.l.b16 %v4111
      %v4181 = vunpack.c.l.b16 %v4112
      %v4182 = vunpack.c.l.b16 %v4113
      %v4183 = vunpack.c.l.b16 %v4114
      %v4184 = vunpack.c.l.b16 %v4115
      %v4185 = vunpack.c.l.b16 %v4116
      %v4186 = vunpack.c.l.b16 %v4117
      %v4187 = vunpack.c.l.b16 %v4118
      %v4188 = vunpack.c.l.b16 %v4119
      %v4189 = vunpack.c.l.b16 %v4120
      %v4190 = vunpack.c.l.b16 %v4121
      %v4191 = vunpack.c.l.b16 %v4122
      %v4192 = vunpack.c.l.b16 %v4123
      %v4193 = vpack.c.b16 %v4178, %v4177
      %v4194 = vpack.c.b16 %v4180, %v4179
      %v4195 = vpack.c.b16 %v4182, %v4181
      %v4196 = vpack.c.b16 %v4184, %v4183
      %v4197 = vpack.c.b16 %v4186, %v4185
      %v4198 = vpack.c.b16 %v4188, %v4187
      %v4199 = vpack.c.b16 %v4190, %v4189
      %v4200 = vpack.c.b16 %v4192, %v4191
      %4209 = vmatprep.subr.bf16.mxu0 0
      %4210 = vmatpush1.bf16.msra.mxu0 %v4200
      %4211 = vmatprep.subr.bf16.mxu0 0
      %4212 = vmatpush1.bf16.msra.mxu0 %v4199
      %4213 = vmatprep.subr.bf16.mxu0 0
      %4214 = vmatpush1.bf16.msra.mxu0 %v4198
      %4215 = vmatprep.subr.bf16.mxu0 0
      %4216 = vmatpush1.bf16.msra.mxu0 %v4197
      %4217 = vmatprep.subr.bf16.mxu0 0
      %4218 = vmatpush1.bf16.msra.mxu0 %v4196
      %4219 = vmatprep.subr.bf16.mxu0 0
      %4220 = vmatpush1.bf16.msra.mxu0 %v4195
      %4221 = vmatprep.subr.bf16.mxu0 0
      %4222 = vmatpush1.bf16.msra.mxu0 %v4194
      %4223 = vmatprep.subr.bf16.mxu0 0
      %4224 = vmatpush1.bf16.msra.mxu0 %v4193
      %4225 = vmatprep.subr.bf16.mxu0 0
      %4226 = vmatpush2.bf16.msra.mxu0 0
      %4227 = vmatprep.subr.bf16.mxu0 0
      %4228 = vmatpush2.bf16.msra.mxu0 0
      %4229 = vmatprep.subr.bf16.mxu0 0
      %4230 = vmatpush2.bf16.msra.mxu0 0
      %4231 = vmatprep.subr.bf16.mxu0 0
      %4232 = vmatpush2.bf16.msra.mxu0 0
      %4233 = vmatprep.subr.bf16.mxu0 0
      %4234 = vmatpush2.bf16.msra.mxu0 0
      %4235 = vmatprep.subr.bf16.mxu0 0
      %4236 = vmatpush2.bf16.msra.mxu0 0
      %4237 = vmatprep.subr.bf16.mxu0 0
      %4238 = vmatpush2.bf16.msra.mxu0 0
      %4239 = vmatprep.subr.bf16.mxu0 0
      %4240 = vmatpush2.bf16.msra.mxu0 0
      %4241 = vmatprep.mubr.bf16.mxu0 0
      %4242 = vmatmul.mubr.bf16.gmra.mxu0 %v4151
      %v4243 = vpop.f32.mrf.mxu0
      %v4244 = vadd.f32 0.0, %v4243
      %v4245 = vpop.f32.mrf.mxu0
      %v4246 = vpop.f32.mrf.mxu0
      %v4247 = vadd.f32 0.0, %v4246
      %v4248 = vpop.f32.mrf.mxu0
      %4249 = vmatprep.mubr.bf16.mxu0 0
      %4250 = vmatmul.mubr.bf16.gmra.mxu0 %v4152
      %v4251 = vpop.f32.mrf.mxu0
      %v4252 = vadd.f32 0.0, %v4251
      %v4253 = vpop.f32.mrf.mxu0
      %v4254 = vpop.f32.mrf.mxu0
      %v4255 = vadd.f32 0.0, %v4254
      %v4256 = vpop.f32.mrf.mxu0
      %4257 = vmatprep.mubr.bf16.mxu0 0
      %4258 = vmatmul.mubr.bf16.gmra.mxu0 %v4153
      %v4259 = vpop.f32.mrf.mxu0
      %v4260 = vadd.f32 0.0, %v4259
      %v4261 = vpop.f32.mrf.mxu0
      %v4262 = vpop.f32.mrf.mxu0
      %v4263 = vadd.f32 0.0, %v4262
      %v4264 = vpop.f32.mrf.mxu0
      %4265 = vmatprep.mubr.bf16.mxu0 0
      %4266 = vmatmul.mubr.bf16.gmra.mxu0 %v4154
      %v4267 = vpop.f32.mrf.mxu0
      %v4268 = vadd.f32 0.0, %v4267
      %v4269 = vpop.f32.mrf.mxu0
      %v4270 = vpop.f32.mrf.mxu0
      %v4271 = vadd.f32 0.0, %v4270
      %v4272 = vpop.f32.mrf.mxu0
      %4273 = vmatprep.mubr.bf16.mxu0 0
      %4274 = vmatmul.mubr.bf16.gmra.mxu0 %v4155
      %v4275 = vpop.f32.mrf.mxu0
      %v4276 = vadd.f32 0.0, %v4275
      %v4277 = vpop.f32.mrf.mxu0
      %v4278 = vpop.f32.mrf.mxu0
      %v4279 = vpop.f32.mrf.mxu0
      %4280 = vdwg.mxu0
      %v4281 = vadd.f32 %v4107, %v4244
      %4283 = vrot.lane.b32.xlu0 %v4247, 127
      %v4284 = vpop.permute.xlu0 %4283
      %v4286 = vadd.f32 %v4281, %v4284
      %4288 = vrot.lane.b32.xlu0 %v4252, 126
      %v4289 = vpop.permute.xlu0 %4288
      %v4291 = vadd.f32 %v4286, %v4289
      %4293 = vrot.lane.b32.xlu0 %v4255, 118
      %v4294 = vpop.permute.xlu0 %4293
      %v4296 = vadd.f32 %v4291, %v4294
      %4298 = vrot.lane.b32.xlu0 %v4260, 117
      %v4299 = vpop.permute.xlu0 %4298
      %v4301 = vadd.f32 %v4296, %v4299
      %4303 = vrot.lane.b32.xlu0 %v4263, 116
      %v4304 = vpop.permute.xlu0 %4303
      %v4306 = vadd.f32 %v4301, %v4304
      %4308 = vrot.lane.b32.xlu0 %v4268, 108
      %v4309 = vpop.permute.xlu0 %4308
      %v4311 = vadd.f32 %v4306, %v4309
      %4313 = vrot.lane.b32.xlu0 %v4271, 107
      %v4314 = vpop.permute.xlu0 %4313
      %v4316 = vadd.f32 %v4311, %v4314
      %4318 = vrot.lane.b32.xlu0 %v4276, 106
      %v4319 = vpop.permute.xlu0 %4318
      %v4321 = vadd.f32 %v4316, %v4319
      %v4322 = vadd.f32 %v4321, %v1691
      %s4323 = scalar_lea.vmem %s1021, 8
      %v4324 = vld [vmem:[%s4323] sm:$0x3]
      %v4325 = vunpack.c.l.bf16 %v4324
      %v4326 = vsub.f32 %v4325, %v1699
      %v4327 = vmul.f32 %v4326, %v1705
      %v4328 = vadd.f32 %v4322, 1.0
      %v4329 = vmul.f32 %v4327, %v4328
      %v4331 = vcombine.high %v4322, %v4322
      %v4333 = vadd.f32 %v4329, %v4331
      %s4334 = scalar_lea.vmem %s1039, 16
      %4335 = vst.msk [vmem:[%s4334] sm:$0xf] %vm1714, %v4333
      %v4336 = vld [vmem:[%s958] sm:$0xf]
      %v4337 = vld [vmem:[%s958 + $0x4] sm:$0xf]
      %v4338 = vld [vmem:[%s958 + $0x8] sm:$0xf]
      %v4339 = vld [vmem:[%s958 + $0xc] sm:$0xf]
      %v4340 = vld [vmem:[%s958 + $0x10] sm:$0xf]
      %v4341 = vld [vmem:[%s958 + $0x14] sm:$0xf]
      %v4342 = vld [vmem:[%s958 + $0x18] sm:$0xf]
      %v4343 = vld [vmem:[%s958 + $0x1c] sm:$0xf]
      %v4344 = vld [vmem:[%s958 + $0x20] sm:$0xf]
      %v4345 = vld [vmem:[%s958 + $0x24] sm:$0xf]
      %v4346 = vld [vmem:[%s958 + $0x28] sm:$0xf]
      %v4347 = vld [vmem:[%s958 + $0x2c] sm:$0xf]
      %v4348 = vld [vmem:[%s958 + $0x30] sm:$0xf]
      %v4349 = vld [vmem:[%s958 + $0x34] sm:$0xf]
      %v4350 = vld [vmem:[%s958 + $0x38] sm:$0xf]
      %v4351 = vld [vmem:[%s958 + $0x3c] sm:$0xf]
      %v4352 = vld [vmem:[%s10] sm:$0xf]
      %v4353 = vld [vmem:[%s10 + $0x4] sm:$0xf]
      %v4354 = vld [vmem:[%s10 + $0x8] sm:$0xf]
      %v4355 = vld [vmem:[%s10 + $0xc] sm:$0xf]
      %v4356 = vld [vmem:[%s10 + $0x10] sm:$0xf]
      %v4357 = vld [vmem:[%s10 + $0x14] sm:$0xf]
      %v4358 = vld [vmem:[%s10 + $0x18] sm:$0xf]
      %v4359 = vld [vmem:[%s10 + $0x1c] sm:$0xf]
      %v4360 = vld [vmem:[%s10 + $0x20] sm:$0xf]
      %v4370 = vunpack.c.l.b16 %v4352
      %v4371 = vunpack.c.l.b16 %v4353
      %v4372 = vunpack.c.l.b16 %v4354
      %v4373 = vunpack.c.l.b16 %v4355
      %v4374 = vunpack.c.l.b16 %v4356
      %v4375 = vunpack.c.l.b16 %v4357
      %v4376 = vunpack.c.l.b16 %v4358
      %v4377 = vunpack.c.l.b16 %v4359
      %v4378 = vunpack.c.l.b16 %v4360
      %v4379 = vpack.c.b16 %v4371, %v4370
      %v4380 = vpack.c.b16 %v4373, %v4372
      %v4381 = vpack.c.b16 %v4375, %v4374
      %v4382 = vpack.c.b16 %v4377, %v4376
      %v4383 = vpack.c.b16 %v4378, %v4378
      %v4405 = vunpack.c.l.b16 %v4336
      %v4406 = vunpack.c.l.b16 %v4337
      %v4407 = vunpack.c.l.b16 %v4338
      %v4408 = vunpack.c.l.b16 %v4339
      %v4409 = vunpack.c.l.b16 %v4340
      %v4410 = vunpack.c.l.b16 %v4341
      %v4411 = vunpack.c.l.b16 %v4342
      %v4412 = vunpack.c.l.b16 %v4343
      %v4413 = vunpack.c.l.b16 %v4344
      %v4414 = vunpack.c.l.b16 %v4345
      %v4415 = vunpack.c.l.b16 %v4346
      %v4416 = vunpack.c.l.b16 %v4347
      %v4417 = vunpack.c.l.b16 %v4348
      %v4418 = vunpack.c.l.b16 %v4349
      %v4419 = vunpack.c.l.b16 %v4350
      %v4420 = vunpack.c.l.b16 %v4351
      %v4421 = vpack.c.b16 %v4406, %v4405
      %v4422 = vpack.c.b16 %v4408, %v4407
      %v4423 = vpack.c.b16 %v4410, %v4409
      %v4424 = vpack.c.b16 %v4412, %v4411
      %v4425 = vpack.c.b16 %v4414, %v4413
      %v4426 = vpack.c.b16 %v4416, %v4415
      %v4427 = vpack.c.b16 %v4418, %v4417
      %v4428 = vpack.c.b16 %v4420, %v4419
      %4437 = vmatprep.subr.bf16.mxu0 0
      %4438 = vmatpush1.bf16.msra.mxu0 %v4428
      %4439 = vmatprep.subr.bf16.mxu0 0
      %4440 = vmatpush1.bf16.msra.mxu0 %v4427
      %4441 = vmatprep.subr.bf16.mxu0 0
      %4442 = vmatpush1.bf16.msra.mxu0 %v4426
      %4443 = vmatprep.subr.bf16.mxu0 0
      %4444 = vmatpush1.bf16.msra.mxu0 %v4425
      %4445 = vmatprep.subr.bf16.mxu0 0
      %4446 = vmatpush1.bf16.msra.mxu0 %v4424
      %4447 = vmatprep.subr.bf16.mxu0 0
      %4448 = vmatpush1.bf16.msra.mxu0 %v4423
      %4449 = vmatprep.subr.bf16.mxu0 0
      %4450 = vmatpush1.bf16.msra.mxu0 %v4422
      %4451 = vmatprep.subr.bf16.mxu0 0
      %4452 = vmatpush1.bf16.msra.mxu0 %v4421
      %4453 = vmatprep.subr.bf16.mxu0 0
      %4454 = vmatpush2.bf16.msra.mxu0 0
      %4455 = vmatprep.subr.bf16.mxu0 0
      %4456 = vmatpush2.bf16.msra.mxu0 0
      %4457 = vmatprep.subr.bf16.mxu0 0
      %4458 = vmatpush2.bf16.msra.mxu0 0
      %4459 = vmatprep.subr.bf16.mxu0 0
      %4460 = vmatpush2.bf16.msra.mxu0 0
      %4461 = vmatprep.subr.bf16.mxu0 0
      %4462 = vmatpush2.bf16.msra.mxu0 0
      %4463 = vmatprep.subr.bf16.mxu0 0
      %4464 = vmatpush2.bf16.msra.mxu0 0
      %4465 = vmatprep.subr.bf16.mxu0 0
      %4466 = vmatpush2.bf16.msra.mxu0 0
      %4467 = vmatprep.subr.bf16.mxu0 0
      %4468 = vmatpush2.bf16.msra.mxu0 0
      %4469 = vmatprep.mubr.bf16.mxu0 0
      %4470 = vmatmul.mubr.bf16.gmra.mxu0 %v4379
      %v4471 = vpop.f32.mrf.mxu0
      %v4472 = vadd.f32 0.0, %v4471
      %v4473 = vpop.f32.mrf.mxu0
      %v4474 = vpop.f32.mrf.mxu0
      %v4475 = vadd.f32 0.0, %v4474
      %v4476 = vpop.f32.mrf.mxu0
      %4477 = vmatprep.mubr.bf16.mxu0 0
      %4478 = vmatmul.mubr.bf16.gmra.mxu0 %v4380
      %v4479 = vpop.f32.mrf.mxu0
      %v4480 = vadd.f32 0.0, %v4479
      %v4481 = vpop.f32.mrf.mxu0
      %v4482 = vpop.f32.mrf.mxu0
      %v4483 = vadd.f32 0.0, %v4482
      %v4484 = vpop.f32.mrf.mxu0
      %4485 = vmatprep.mubr.bf16.mxu0 0
      %4486 = vmatmul.mubr.bf16.gmra.mxu0 %v4381
      %v4487 = vpop.f32.mrf.mxu0
      %v4488 = vadd.f32 0.0, %v4487
      %v4489 = vpop.f32.mrf.mxu0
      %v4490 = vpop.f32.mrf.mxu0
      %v4491 = vadd.f32 0.0, %v4490
      %v4492 = vpop.f32.mrf.mxu0
      %4493 = vmatprep.mubr.bf16.mxu0 0
      %4494 = vmatmul.mubr.bf16.gmra.mxu0 %v4382
      %v4495 = vpop.f32.mrf.mxu0
      %v4496 = vadd.f32 0.0, %v4495
      %v4497 = vpop.f32.mrf.mxu0
      %v4498 = vpop.f32.mrf.mxu0
      %v4499 = vadd.f32 0.0, %v4498
      %v4500 = vpop.f32.mrf.mxu0
      %4501 = vmatprep.mubr.bf16.mxu0 0
      %4502 = vmatmul.mubr.bf16.gmra.mxu0 %v4383
      %v4503 = vpop.f32.mrf.mxu0
      %v4504 = vadd.f32 0.0, %v4503
      %v4505 = vpop.f32.mrf.mxu0
      %v4506 = vpop.f32.mrf.mxu0
      %v4507 = vpop.f32.mrf.mxu0
      %4508 = vdwg.mxu0
      %4510 = vrot.lane.b32.xlu0 %v4475, 127
      %v4511 = vpop.permute.xlu0 %4510
      %v4513 = vadd.f32 %v4472, %v4511
      %4515 = vrot.lane.b32.xlu0 %v4480, 126
      %v4516 = vpop.permute.xlu0 %4515
      %v4518 = vadd.f32 %v4513, %v4516
      %4520 = vrot.lane.b32.xlu0 %v4483, 118
      %v4521 = vpop.permute.xlu0 %4520
      %v4523 = vadd.f32 %v4518, %v4521
      %4525 = vrot.lane.b32.xlu0 %v4488, 117
      %v4526 = vpop.permute.xlu0 %4525
      %v4528 = vadd.f32 %v4523, %v4526
      %4530 = vrot.lane.b32.xlu0 %v4491, 116
      %v4531 = vpop.permute.xlu0 %4530
      %v4533 = vadd.f32 %v4528, %v4531
      %4535 = vrot.lane.b32.xlu0 %v4496, 108
      %v4536 = vpop.permute.xlu0 %4535
      %v4538 = vadd.f32 %v4533, %v4536
      %4540 = vrot.lane.b32.xlu0 %v4499, 107
      %v4541 = vpop.permute.xlu0 %4540
      %v4543 = vadd.f32 %v4538, %v4541
      %4545 = vrot.lane.b32.xlu0 %v4504, 106
      %v4546 = vpop.permute.xlu0 %4545
      %v4548 = vadd.f32 %v4543, %v4546
      %v4549 = vld [vmem:[%s971] sm:$0xf]
      %v4550 = vld [vmem:[%s971 + $0x4] sm:$0xf]
      %v4551 = vld [vmem:[%s971 + $0x8] sm:$0xf]
      %v4552 = vld [vmem:[%s971 + $0xc] sm:$0xf]
      %v4553 = vld [vmem:[%s971 + $0x10] sm:$0xf]
      %v4554 = vld [vmem:[%s971 + $0x14] sm:$0xf]
      %v4555 = vld [vmem:[%s971 + $0x18] sm:$0xf]
      %v4556 = vld [vmem:[%s971 + $0x1c] sm:$0xf]
      %v4557 = vld [vmem:[%s971 + $0x20] sm:$0xf]
      %v4558 = vld [vmem:[%s971 + $0x24] sm:$0xf]
      %v4559 = vld [vmem:[%s971 + $0x28] sm:$0xf]
      %v4560 = vld [vmem:[%s971 + $0x2c] sm:$0xf]
      %v4561 = vld [vmem:[%s971 + $0x30] sm:$0xf]
      %v4562 = vld [vmem:[%s971 + $0x34] sm:$0xf]
      %v4563 = vld [vmem:[%s971 + $0x38] sm:$0xf]
      %v4564 = vld [vmem:[%s971 + $0x3c] sm:$0xf]
      %v4565 = vld [vmem:[%s1274] sm:$0xf]
      %v4566 = vld [vmem:[%s1274 + $0x4] sm:$0xf]
      %v4567 = vld [vmem:[%s1274 + $0x8] sm:$0xf]
      %v4568 = vld [vmem:[%s1274 + $0xc] sm:$0xf]
      %v4569 = vld [vmem:[%s1274 + $0x10] sm:$0xf]
      %v4570 = vld [vmem:[%s1274 + $0x14] sm:$0xf]
      %v4571 = vld [vmem:[%s1274 + $0x18] sm:$0xf]
      %v4572 = vld [vmem:[%s1274 + $0x1c] sm:$0xf]
      %v4573 = vld [vmem:[%s1274 + $0x20] sm:$0xf]
      %v4583 = vunpack.c.l.b16 %v4565
      %v4584 = vunpack.c.l.b16 %v4566
      %v4585 = vunpack.c.l.b16 %v4567
      %v4586 = vunpack.c.l.b16 %v4568
      %v4587 = vunpack.c.l.b16 %v4569
      %v4588 = vunpack.c.l.b16 %v4570
      %v4589 = vunpack.c.l.b16 %v4571
      %v4590 = vunpack.c.l.b16 %v4572
      %v4591 = vunpack.c.l.b16 %v4573
      %v4592 = vpack.c.b16 %v4584, %v4583
      %v4593 = vpack.c.b16 %v4586, %v4585
      %v4594 = vpack.c.b16 %v4588, %v4587
      %v4595 = vpack.c.b16 %v4590, %v4589
      %v4596 = vpack.c.b16 %v4591, %v4591
      %v4618 = vunpack.c.l.b16 %v4549
      %v4619 = vunpack.c.l.b16 %v4550
      %v4620 = vunpack.c.l.b16 %v4551
      %v4621 = vunpack.c.l.b16 %v4552
      %v4622 = vunpack.c.l.b16 %v4553
      %v4623 = vunpack.c.l.b16 %v4554
      %v4624 = vunpack.c.l.b16 %v4555
      %v4625 = vunpack.c.l.b16 %v4556
      %v4626 = vunpack.c.l.b16 %v4557
      %v4627 = vunpack.c.l.b16 %v4558
      %v4628 = vunpack.c.l.b16 %v4559
      %v4629 = vunpack.c.l.b16 %v4560
      %v4630 = vunpack.c.l.b16 %v4561
      %v4631 = vunpack.c.l.b16 %v4562
      %v4632 = vunpack.c.l.b16 %v4563
      %v4633 = vunpack.c.l.b16 %v4564
      %v4634 = vpack.c.b16 %v4619, %v4618
      %v4635 = vpack.c.b16 %v4621, %v4620
      %v4636 = vpack.c.b16 %v4623, %v4622
      %v4637 = vpack.c.b16 %v4625, %v4624
      %v4638 = vpack.c.b16 %v4627, %v4626
      %v4639 = vpack.c.b16 %v4629, %v4628
      %v4640 = vpack.c.b16 %v4631, %v4630
      %v4641 = vpack.c.b16 %v4633, %v4632
      %4650 = vmatprep.subr.bf16.mxu0 0
      %4651 = vmatpush1.bf16.msra.mxu0 %v4641
      %4652 = vmatprep.subr.bf16.mxu0 0
      %4653 = vmatpush1.bf16.msra.mxu0 %v4640
      %4654 = vmatprep.subr.bf16.mxu0 0
      %4655 = vmatpush1.bf16.msra.mxu0 %v4639
      %4656 = vmatprep.subr.bf16.mxu0 0
      %4657 = vmatpush1.bf16.msra.mxu0 %v4638
      %4658 = vmatprep.subr.bf16.mxu0 0
      %4659 = vmatpush1.bf16.msra.mxu0 %v4637
      %4660 = vmatprep.subr.bf16.mxu0 0
      %4661 = vmatpush1.bf16.msra.mxu0 %v4636
      %4662 = vmatprep.subr.bf16.mxu0 0
      %4663 = vmatpush1.bf16.msra.mxu0 %v4635
      %4664 = vmatprep.subr.bf16.mxu0 0
      %4665 = vmatpush1.bf16.msra.mxu0 %v4634
      %4666 = vmatprep.subr.bf16.mxu0 0
      %4667 = vmatpush2.bf16.msra.mxu0 0
      %4668 = vmatprep.subr.bf16.mxu0 0
      %4669 = vmatpush2.bf16.msra.mxu0 0
      %4670 = vmatprep.subr.bf16.mxu0 0
      %4671 = vmatpush2.bf16.msra.mxu0 0
      %4672 = vmatprep.subr.bf16.mxu0 0
      %4673 = vmatpush2.bf16.msra.mxu0 0
      %4674 = vmatprep.subr.bf16.mxu0 0
      %4675 = vmatpush2.bf16.msra.mxu0 0
      %4676 = vmatprep.subr.bf16.mxu0 0
      %4677 = vmatpush2.bf16.msra.mxu0 0
      %4678 = vmatprep.subr.bf16.mxu0 0
      %4679 = vmatpush2.bf16.msra.mxu0 0
      %4680 = vmatprep.subr.bf16.mxu0 0
      %4681 = vmatpush2.bf16.msra.mxu0 0
      %4682 = vmatprep.mubr.bf16.mxu0 0
      %4683 = vmatmul.mubr.bf16.gmra.mxu0 %v4592
      %v4684 = vpop.f32.mrf.mxu0
      %v4685 = vadd.f32 0.0, %v4684
      %v4686 = vpop.f32.mrf.mxu0
      %v4687 = vpop.f32.mrf.mxu0
      %v4688 = vadd.f32 0.0, %v4687
      %v4689 = vpop.f32.mrf.mxu0
      %4690 = vmatprep.mubr.bf16.mxu0 0
      %4691 = vmatmul.mubr.bf16.gmra.mxu0 %v4593
      %v4692 = vpop.f32.mrf.mxu0
      %v4693 = vadd.f32 0.0, %v4692
      %v4694 = vpop.f32.mrf.mxu0
      %v4695 = vpop.f32.mrf.mxu0
      %v4696 = vadd.f32 0.0, %v4695
      %v4697 = vpop.f32.mrf.mxu0
      %4698 = vmatprep.mubr.bf16.mxu0 0
      %4699 = vmatmul.mubr.bf16.gmra.mxu0 %v4594
      %v4700 = vpop.f32.mrf.mxu0
      %v4701 = vadd.f32 0.0, %v4700
      %v4702 = vpop.f32.mrf.mxu0
      %v4703 = vpop.f32.mrf.mxu0
      %v4704 = vadd.f32 0.0, %v4703
      %v4705 = vpop.f32.mrf.mxu0
      %4706 = vmatprep.mubr.bf16.mxu0 0
      %4707 = vmatmul.mubr.bf16.gmra.mxu0 %v4595
      %v4708 = vpop.f32.mrf.mxu0
      %v4709 = vadd.f32 0.0, %v4708
      %v4710 = vpop.f32.mrf.mxu0
      %v4711 = vpop.f32.mrf.mxu0
      %v4712 = vadd.f32 0.0, %v4711
      %v4713 = vpop.f32.mrf.mxu0
      %4714 = vmatprep.mubr.bf16.mxu0 0
      %4715 = vmatmul.mubr.bf16.gmra.mxu0 %v4596
      %v4716 = vpop.f32.mrf.mxu0
      %v4717 = vadd.f32 0.0, %v4716
      %v4718 = vpop.f32.mrf.mxu0
      %v4719 = vpop.f32.mrf.mxu0
      %v4720 = vpop.f32.mrf.mxu0
      %4721 = vdwg.mxu0
      %v4722 = vadd.f32 %v4548, %v4685
      %4724 = vrot.lane.b32.xlu0 %v4688, 127
      %v4725 = vpop.permute.xlu0 %4724
      %v4727 = vadd.f32 %v4722, %v4725
      %4729 = vrot.lane.b32.xlu0 %v4693, 126
      %v4730 = vpop.permute.xlu0 %4729
      %v4732 = vadd.f32 %v4727, %v4730
      %4734 = vrot.lane.b32.xlu0 %v4696, 118
      %v4735 = vpop.permute.xlu0 %4734
      %v4737 = vadd.f32 %v4732, %v4735
      %4739 = vrot.lane.b32.xlu0 %v4701, 117
      %v4740 = vpop.permute.xlu0 %4739
      %v4742 = vadd.f32 %v4737, %v4740
      %4744 = vrot.lane.b32.xlu0 %v4704, 116
      %v4745 = vpop.permute.xlu0 %4744
      %v4747 = vadd.f32 %v4742, %v4745
      %4749 = vrot.lane.b32.xlu0 %v4709, 108
      %v4750 = vpop.permute.xlu0 %4749
      %v4752 = vadd.f32 %v4747, %v4750
      %4754 = vrot.lane.b32.xlu0 %v4712, 107
      %v4755 = vpop.permute.xlu0 %4754
      %v4757 = vadd.f32 %v4752, %v4755
      %4759 = vrot.lane.b32.xlu0 %v4717, 106
      %v4760 = vpop.permute.xlu0 %4759
      %v4762 = vadd.f32 %v4757, %v4760
      %v4763 = vld [vmem:[%s984] sm:$0xf]
      %v4764 = vld [vmem:[%s984 + $0x4] sm:$0xf]
      %v4765 = vld [vmem:[%s984 + $0x8] sm:$0xf]
      %v4766 = vld [vmem:[%s984 + $0xc] sm:$0xf]
      %v4767 = vld [vmem:[%s984 + $0x10] sm:$0xf]
      %v4768 = vld [vmem:[%s984 + $0x14] sm:$0xf]
      %v4769 = vld [vmem:[%s984 + $0x18] sm:$0xf]
      %v4770 = vld [vmem:[%s984 + $0x1c] sm:$0xf]
      %v4771 = vld [vmem:[%s984 + $0x20] sm:$0xf]
      %v4772 = vld [vmem:[%s984 + $0x24] sm:$0xf]
      %v4773 = vld [vmem:[%s984 + $0x28] sm:$0xf]
      %v4774 = vld [vmem:[%s984 + $0x2c] sm:$0xf]
      %v4775 = vld [vmem:[%s984 + $0x30] sm:$0xf]
      %v4776 = vld [vmem:[%s984 + $0x34] sm:$0xf]
      %v4777 = vld [vmem:[%s984 + $0x38] sm:$0xf]
      %v4778 = vld [vmem:[%s984 + $0x3c] sm:$0xf]
      %v4779 = vld [vmem:[%s1489] sm:$0xf]
      %v4780 = vld [vmem:[%s1489 + $0x4] sm:$0xf]
      %v4781 = vld [vmem:[%s1489 + $0x8] sm:$0xf]
      %v4782 = vld [vmem:[%s1489 + $0xc] sm:$0xf]
      %v4783 = vld [vmem:[%s1489 + $0x10] sm:$0xf]
      %v4784 = vld [vmem:[%s1489 + $0x14] sm:$0xf]
      %v4785 = vld [vmem:[%s1489 + $0x18] sm:$0xf]
      %v4786 = vld [vmem:[%s1489 + $0x1c] sm:$0xf]
      %v4787 = vld [vmem:[%s1489 + $0x20] sm:$0xf]
      %v4797 = vunpack.c.l.b16 %v4779
      %v4798 = vunpack.c.l.b16 %v4780
      %v4799 = vunpack.c.l.b16 %v4781
      %v4800 = vunpack.c.l.b16 %v4782
      %v4801 = vunpack.c.l.b16 %v4783
      %v4802 = vunpack.c.l.b16 %v4784
      %v4803 = vunpack.c.l.b16 %v4785
      %v4804 = vunpack.c.l.b16 %v4786
      %v4805 = vunpack.c.l.b16 %v4787
      %v4806 = vpack.c.b16 %v4798, %v4797
      %v4807 = vpack.c.b16 %v4800, %v4799
      %v4808 = vpack.c.b16 %v4802, %v4801
      %v4809 = vpack.c.b16 %v4804, %v4803
      %v4810 = vpack.c.b16 %v4805, %v4805
      %v4832 = vunpack.c.l.b16 %v4763
      %v4833 = vunpack.c.l.b16 %v4764
      %v4834 = vunpack.c.l.b16 %v4765
      %v4835 = vunpack.c.l.b16 %v4766
      %v4836 = vunpack.c.l.b16 %v4767
      %v4837 = vunpack.c.l.b16 %v4768
      %v4838 = vunpack.c.l.b16 %v4769
      %v4839 = vunpack.c.l.b16 %v4770
      %v4840 = vunpack.c.l.b16 %v4771
      %v4841 = vunpack.c.l.b16 %v4772
      %v4842 = vunpack.c.l.b16 %v4773
      %v4843 = vunpack.c.l.b16 %v4774
      %v4844 = vunpack.c.l.b16 %v4775
      %v4845 = vunpack.c.l.b16 %v4776
      %v4846 = vunpack.c.l.b16 %v4777
      %v4847 = vunpack.c.l.b16 %v4778
      %v4848 = vpack.c.b16 %v4833, %v4832
      %v4849 = vpack.c.b16 %v4835, %v4834
      %v4850 = vpack.c.b16 %v4837, %v4836
      %v4851 = vpack.c.b16 %v4839, %v4838
      %v4852 = vpack.c.b16 %v4841, %v4840
      %v4853 = vpack.c.b16 %v4843, %v4842
      %v4854 = vpack.c.b16 %v4845, %v4844
      %v4855 = vpack.c.b16 %v4847, %v4846
      %4864 = vmatprep.subr.bf16.mxu0 0
      %4865 = vmatpush1.bf16.msra.mxu0 %v4855
      %4866 = vmatprep.subr.bf16.mxu0 0
      %4867 = vmatpush1.bf16.msra.mxu0 %v4854
      %4868 = vmatprep.subr.bf16.mxu0 0
      %4869 = vmatpush1.bf16.msra.mxu0 %v4853
      %4870 = vmatprep.subr.bf16.mxu0 0
      %4871 = vmatpush1.bf16.msra.mxu0 %v4852
      %4872 = vmatprep.subr.bf16.mxu0 0
      %4873 = vmatpush1.bf16.msra.mxu0 %v4851
      %4874 = vmatprep.subr.bf16.mxu0 0
      %4875 = vmatpush1.bf16.msra.mxu0 %v4850
      %4876 = vmatprep.subr.bf16.mxu0 0
      %4877 = vmatpush1.bf16.msra.mxu0 %v4849
      %4878 = vmatprep.subr.bf16.mxu0 0
      %4879 = vmatpush1.bf16.msra.mxu0 %v4848
      %4880 = vmatprep.subr.bf16.mxu0 0
      %4881 = vmatpush2.bf16.msra.mxu0 0
      %4882 = vmatprep.subr.bf16.mxu0 0
      %4883 = vmatpush2.bf16.msra.mxu0 0
      %4884 = vmatprep.subr.bf16.mxu0 0
      %4885 = vmatpush2.bf16.msra.mxu0 0
      %4886 = vmatprep.subr.bf16.mxu0 0
      %4887 = vmatpush2.bf16.msra.mxu0 0
      %4888 = vmatprep.subr.bf16.mxu0 0
      %4889 = vmatpush2.bf16.msra.mxu0 0
      %4890 = vmatprep.subr.bf16.mxu0 0
      %4891 = vmatpush2.bf16.msra.mxu0 0
      %4892 = vmatprep.subr.bf16.mxu0 0
      %4893 = vmatpush2.bf16.msra.mxu0 0
      %4894 = vmatprep.subr.bf16.mxu0 0
      %4895 = vmatpush2.bf16.msra.mxu0 0
      %4896 = vmatprep.mubr.bf16.mxu0 0
      %4897 = vmatmul.mubr.bf16.gmra.mxu0 %v4806
      %v4898 = vpop.f32.mrf.mxu0
      %v4899 = vadd.f32 0.0, %v4898
      %v4900 = vpop.f32.mrf.mxu0
      %v4901 = vpop.f32.mrf.mxu0
      %v4902 = vadd.f32 0.0, %v4901
      %v4903 = vpop.f32.mrf.mxu0
      %4904 = vmatprep.mubr.bf16.mxu0 0
      %4905 = vmatmul.mubr.bf16.gmra.mxu0 %v4807
      %v4906 = vpop.f32.mrf.mxu0
      %v4907 = vadd.f32 0.0, %v4906
      %v4908 = vpop.f32.mrf.mxu0
      %v4909 = vpop.f32.mrf.mxu0
      %v4910 = vadd.f32 0.0, %v4909
      %v4911 = vpop.f32.mrf.mxu0
      %4912 = vmatprep.mubr.bf16.mxu0 0
      %4913 = vmatmul.mubr.bf16.gmra.mxu0 %v4808
      %v4914 = vpop.f32.mrf.mxu0
      %v4915 = vadd.f32 0.0, %v4914
      %v4916 = vpop.f32.mrf.mxu0
      %v4917 = vpop.f32.mrf.mxu0
      %v4918 = vadd.f32 0.0, %v4917
      %v4919 = vpop.f32.mrf.mxu0
      %4920 = vmatprep.mubr.bf16.mxu0 0
      %4921 = vmatmul.mubr.bf16.gmra.mxu0 %v4809
      %v4922 = vpop.f32.mrf.mxu0
      %v4923 = vadd.f32 0.0, %v4922
      %v4924 = vpop.f32.mrf.mxu0
      %v4925 = vpop.f32.mrf.mxu0
      %v4926 = vadd.f32 0.0, %v4925
      %v4927 = vpop.f32.mrf.mxu0
      %4928 = vmatprep.mubr.bf16.mxu0 0
      %4929 = vmatmul.mubr.bf16.gmra.mxu0 %v4810
      %v4930 = vpop.f32.mrf.mxu0
      %v4931 = vadd.f32 0.0, %v4930
      %v4932 = vpop.f32.mrf.mxu0
      %v4933 = vpop.f32.mrf.mxu0
      %v4934 = vpop.f32.mrf.mxu0
      %4935 = vdwg.mxu0
      %v4936 = vadd.f32 %v4762, %v4899
      %4938 = vrot.lane.b32.xlu0 %v4902, 127
      %v4939 = vpop.permute.xlu0 %4938
      %v4941 = vadd.f32 %v4936, %v4939
      %4943 = vrot.lane.b32.xlu0 %v4907, 126
      %v4944 = vpop.permute.xlu0 %4943
      %v4946 = vadd.f32 %v4941, %v4944
      %4948 = vrot.lane.b32.xlu0 %v4910, 118
      %v4949 = vpop.permute.xlu0 %4948
      %v4951 = vadd.f32 %v4946, %v4949
      %4953 = vrot.lane.b32.xlu0 %v4915, 117
      %v4954 = vpop.permute.xlu0 %4953
      %v4956 = vadd.f32 %v4951, %v4954
      %4958 = vrot.lane.b32.xlu0 %v4918, 116
      %v4959 = vpop.permute.xlu0 %4958
      %v4961 = vadd.f32 %v4956, %v4959
      %4963 = vrot.lane.b32.xlu0 %v4923, 108
      %v4964 = vpop.permute.xlu0 %4963
      %v4966 = vadd.f32 %v4961, %v4964
      %4968 = vrot.lane.b32.xlu0 %v4926, 107
      %v4969 = vpop.permute.xlu0 %4968
      %v4971 = vadd.f32 %v4966, %v4969
      %4973 = vrot.lane.b32.xlu0 %v4931, 106
      %v4974 = vpop.permute.xlu0 %4973
      %v4976 = vadd.f32 %v4971, %v4974
      %v4977 = vadd.f32 %v4976, %v1691
      %s4978 = scalar_lea.vmem %s1021, 10
      %v4979 = vld [vmem:[%s4978] sm:$0x3]
      %v4980 = vunpack.c.l.bf16 %v4979
      %v4981 = vsub.f32 %v4980, %v1699
      %v4982 = vmul.f32 %v4981, %v1705
      %v4983 = vadd.f32 %v4977, 1.0
      %v4984 = vmul.f32 %v4982, %v4983
      %v4986 = vcombine.high %v4977, %v4977
      %v4988 = vadd.f32 %v4984, %v4986
      %s4989 = scalar_lea.vmem %s1039, 20
      %4990 = vst.msk [vmem:[%s4989] sm:$0xf] %vm1714, %v4988
      %v4991 = vld [vmem:[%s971] sm:$0xf]
      %v4992 = vld [vmem:[%s971 + $0x4] sm:$0xf]
      %v4993 = vld [vmem:[%s971 + $0x8] sm:$0xf]
      %v4994 = vld [vmem:[%s971 + $0xc] sm:$0xf]
      %v4995 = vld [vmem:[%s971 + $0x10] sm:$0xf]
      %v4996 = vld [vmem:[%s971 + $0x14] sm:$0xf]
      %v4997 = vld [vmem:[%s971 + $0x18] sm:$0xf]
      %v4998 = vld [vmem:[%s971 + $0x1c] sm:$0xf]
      %v4999 = vld [vmem:[%s971 + $0x20] sm:$0xf]
      %v5000 = vld [vmem:[%s971 + $0x24] sm:$0xf]
      %v5001 = vld [vmem:[%s971 + $0x28] sm:$0xf]
      %v5002 = vld [vmem:[%s971 + $0x2c] sm:$0xf]
      %v5003 = vld [vmem:[%s971 + $0x30] sm:$0xf]
      %v5004 = vld [vmem:[%s971 + $0x34] sm:$0xf]
      %v5005 = vld [vmem:[%s971 + $0x38] sm:$0xf]
      %v5006 = vld [vmem:[%s971 + $0x3c] sm:$0xf]
      %v5007 = vld [vmem:[%s10] sm:$0xf]
      %v5008 = vld [vmem:[%s10 + $0x4] sm:$0xf]
      %v5009 = vld [vmem:[%s10 + $0x8] sm:$0xf]
      %v5010 = vld [vmem:[%s10 + $0xc] sm:$0xf]
      %v5011 = vld [vmem:[%s10 + $0x10] sm:$0xf]
      %v5012 = vld [vmem:[%s10 + $0x14] sm:$0xf]
      %v5013 = vld [vmem:[%s10 + $0x18] sm:$0xf]
      %v5014 = vld [vmem:[%s10 + $0x1c] sm:$0xf]
      %v5015 = vld [vmem:[%s10 + $0x20] sm:$0xf]
      %v5025 = vunpack.c.l.b16 %v5007
      %v5026 = vunpack.c.l.b16 %v5008
      %v5027 = vunpack.c.l.b16 %v5009
      %v5028 = vunpack.c.l.b16 %v5010
      %v5029 = vunpack.c.l.b16 %v5011
      %v5030 = vunpack.c.l.b16 %v5012
      %v5031 = vunpack.c.l.b16 %v5013
      %v5032 = vunpack.c.l.b16 %v5014
      %v5033 = vunpack.c.l.b16 %v5015
      %v5034 = vpack.c.b16 %v5026, %v5025
      %v5035 = vpack.c.b16 %v5028, %v5027
      %v5036 = vpack.c.b16 %v5030, %v5029
      %v5037 = vpack.c.b16 %v5032, %v5031
      %v5038 = vpack.c.b16 %v5033, %v5033
      %v5060 = vunpack.c.l.b16 %v4991
      %v5061 = vunpack.c.l.b16 %v4992
      %v5062 = vunpack.c.l.b16 %v4993
      %v5063 = vunpack.c.l.b16 %v4994
      %v5064 = vunpack.c.l.b16 %v4995
      %v5065 = vunpack.c.l.b16 %v4996
      %v5066 = vunpack.c.l.b16 %v4997
      %v5067 = vunpack.c.l.b16 %v4998
      %v5068 = vunpack.c.l.b16 %v4999
      %v5069 = vunpack.c.l.b16 %v5000
      %v5070 = vunpack.c.l.b16 %v5001
      %v5071 = vunpack.c.l.b16 %v5002
      %v5072 = vunpack.c.l.b16 %v5003
      %v5073 = vunpack.c.l.b16 %v5004
      %v5074 = vunpack.c.l.b16 %v5005
      %v5075 = vunpack.c.l.b16 %v5006
      %v5076 = vpack.c.b16 %v5061, %v5060
      %v5077 = vpack.c.b16 %v5063, %v5062
      %v5078 = vpack.c.b16 %v5065, %v5064
      %v5079 = vpack.c.b16 %v5067, %v5066
      %v5080 = vpack.c.b16 %v5069, %v5068
      %v5081 = vpack.c.b16 %v5071, %v5070
      %v5082 = vpack.c.b16 %v5073, %v5072
      %v5083 = vpack.c.b16 %v5075, %v5074
      %5092 = vmatprep.subr.bf16.mxu0 0
      %5093 = vmatpush1.bf16.msra.mxu0 %v5083
      %5094 = vmatprep.subr.bf16.mxu0 0
      %5095 = vmatpush1.bf16.msra.mxu0 %v5082
      %5096 = vmatprep.subr.bf16.mxu0 0
      %5097 = vmatpush1.bf16.msra.mxu0 %v5081
      %5098 = vmatprep.subr.bf16.mxu0 0
      %5099 = vmatpush1.bf16.msra.mxu0 %v5080
      %5100 = vmatprep.subr.bf16.mxu0 0
      %5101 = vmatpush1.bf16.msra.mxu0 %v5079
      %5102 = vmatprep.subr.bf16.mxu0 0
      %5103 = vmatpush1.bf16.msra.mxu0 %v5078
      %5104 = vmatprep.subr.bf16.mxu0 0
      %5105 = vmatpush1.bf16.msra.mxu0 %v5077
      %5106 = vmatprep.subr.bf16.mxu0 0
      %5107 = vmatpush1.bf16.msra.mxu0 %v5076
      %5108 = vmatprep.subr.bf16.mxu0 0
      %5109 = vmatpush2.bf16.msra.mxu0 0
      %5110 = vmatprep.subr.bf16.mxu0 0
      %5111 = vmatpush2.bf16.msra.mxu0 0
      %5112 = vmatprep.subr.bf16.mxu0 0
      %5113 = vmatpush2.bf16.msra.mxu0 0
      %5114 = vmatprep.subr.bf16.mxu0 0
      %5115 = vmatpush2.bf16.msra.mxu0 0
      %5116 = vmatprep.subr.bf16.mxu0 0
      %5117 = vmatpush2.bf16.msra.mxu0 0
      %5118 = vmatprep.subr.bf16.mxu0 0
      %5119 = vmatpush2.bf16.msra.mxu0 0
      %5120 = vmatprep.subr.bf16.mxu0 0
      %5121 = vmatpush2.bf16.msra.mxu0 0
      %5122 = vmatprep.subr.bf16.mxu0 0
      %5123 = vmatpush2.bf16.msra.mxu0 0
      %5124 = vmatprep.mubr.bf16.mxu0 0
      %5125 = vmatmul.mubr.bf16.gmra.mxu0 %v5034
      %v5126 = vpop.f32.mrf.mxu0
      %v5127 = vadd.f32 0.0, %v5126
      %v5128 = vpop.f32.mrf.mxu0
      %v5129 = vpop.f32.mrf.mxu0
      %v5130 = vadd.f32 0.0, %v5129
      %v5131 = vpop.f32.mrf.mxu0
      %5132 = vmatprep.mubr.bf16.mxu0 0
      %5133 = vmatmul.mubr.bf16.gmra.mxu0 %v5035
      %v5134 = vpop.f32.mrf.mxu0
      %v5135 = vadd.f32 0.0, %v5134
      %v5136 = vpop.f32.mrf.mxu0
      %v5137 = vpop.f32.mrf.mxu0
      %v5138 = vadd.f32 0.0, %v5137
      %v5139 = vpop.f32.mrf.mxu0
      %5140 = vmatprep.mubr.bf16.mxu0 0
      %5141 = vmatmul.mubr.bf16.gmra.mxu0 %v5036
      %v5142 = vpop.f32.mrf.mxu0
      %v5143 = vadd.f32 0.0, %v5142
      %v5144 = vpop.f32.mrf.mxu0
      %v5145 = vpop.f32.mrf.mxu0
      %v5146 = vadd.f32 0.0, %v5145
      %v5147 = vpop.f32.mrf.mxu0
      %5148 = vmatprep.mubr.bf16.mxu0 0
      %5149 = vmatmul.mubr.bf16.gmra.mxu0 %v5037
      %v5150 = vpop.f32.mrf.mxu0
      %v5151 = vadd.f32 0.0, %v5150
      %v5152 = vpop.f32.mrf.mxu0
      %v5153 = vpop.f32.mrf.mxu0
      %v5154 = vadd.f32 0.0, %v5153
      %v5155 = vpop.f32.mrf.mxu0
      %5156 = vmatprep.mubr.bf16.mxu0 0
      %5157 = vmatmul.mubr.bf16.gmra.mxu0 %v5038
      %v5158 = vpop.f32.mrf.mxu0
      %v5159 = vadd.f32 0.0, %v5158
      %v5160 = vpop.f32.mrf.mxu0
      %v5161 = vpop.f32.mrf.mxu0
      %v5162 = vpop.f32.mrf.mxu0
      %5163 = vdwg.mxu0
      %5165 = vrot.lane.b32.xlu0 %v5130, 127
      %v5166 = vpop.permute.xlu0 %5165
      %v5168 = vadd.f32 %v5127, %v5166
      %5170 = vrot.lane.b32.xlu0 %v5135, 126
      %v5171 = vpop.permute.xlu0 %5170
      %v5173 = vadd.f32 %v5168, %v5171
      %5175 = vrot.lane.b32.xlu0 %v5138, 118
      %v5176 = vpop.permute.xlu0 %5175
      %v5178 = vadd.f32 %v5173, %v5176
      %5180 = vrot.lane.b32.xlu0 %v5143, 117
      %v5181 = vpop.permute.xlu0 %5180
      %v5183 = vadd.f32 %v5178, %v5181
      %5185 = vrot.lane.b32.xlu0 %v5146, 116
      %v5186 = vpop.permute.xlu0 %5185
      %v5188 = vadd.f32 %v5183, %v5186
      %5190 = vrot.lane.b32.xlu0 %v5151, 108
      %v5191 = vpop.permute.xlu0 %5190
      %v5193 = vadd.f32 %v5188, %v5191
      %5195 = vrot.lane.b32.xlu0 %v5154, 107
      %v5196 = vpop.permute.xlu0 %5195
      %v5198 = vadd.f32 %v5193, %v5196
      %5200 = vrot.lane.b32.xlu0 %v5159, 106
      %v5201 = vpop.permute.xlu0 %5200
      %v5203 = vadd.f32 %v5198, %v5201
      %v5204 = vld [vmem:[%s984] sm:$0xf]
      %v5205 = vld [vmem:[%s984 + $0x4] sm:$0xf]
      %v5206 = vld [vmem:[%s984 + $0x8] sm:$0xf]
      %v5207 = vld [vmem:[%s984 + $0xc] sm:$0xf]
      %v5208 = vld [vmem:[%s984 + $0x10] sm:$0xf]
      %v5209 = vld [vmem:[%s984 + $0x14] sm:$0xf]
      %v5210 = vld [vmem:[%s984 + $0x18] sm:$0xf]
      %v5211 = vld [vmem:[%s984 + $0x1c] sm:$0xf]
      %v5212 = vld [vmem:[%s984 + $0x20] sm:$0xf]
      %v5213 = vld [vmem:[%s984 + $0x24] sm:$0xf]
      %v5214 = vld [vmem:[%s984 + $0x28] sm:$0xf]
      %v5215 = vld [vmem:[%s984 + $0x2c] sm:$0xf]
      %v5216 = vld [vmem:[%s984 + $0x30] sm:$0xf]
      %v5217 = vld [vmem:[%s984 + $0x34] sm:$0xf]
      %v5218 = vld [vmem:[%s984 + $0x38] sm:$0xf]
      %v5219 = vld [vmem:[%s984 + $0x3c] sm:$0xf]
      %v5220 = vld [vmem:[%s1274] sm:$0xf]
      %v5221 = vld [vmem:[%s1274 + $0x4] sm:$0xf]
      %v5222 = vld [vmem:[%s1274 + $0x8] sm:$0xf]
      %v5223 = vld [vmem:[%s1274 + $0xc] sm:$0xf]
      %v5224 = vld [vmem:[%s1274 + $0x10] sm:$0xf]
      %v5225 = vld [vmem:[%s1274 + $0x14] sm:$0xf]
      %v5226 = vld [vmem:[%s1274 + $0x18] sm:$0xf]
      %v5227 = vld [vmem:[%s1274 + $0x1c] sm:$0xf]
      %v5228 = vld [vmem:[%s1274 + $0x20] sm:$0xf]
      %v5238 = vunpack.c.l.b16 %v5220
      %v5239 = vunpack.c.l.b16 %v5221
      %v5240 = vunpack.c.l.b16 %v5222
      %v5241 = vunpack.c.l.b16 %v5223
      %v5242 = vunpack.c.l.b16 %v5224
      %v5243 = vunpack.c.l.b16 %v5225
      %v5244 = vunpack.c.l.b16 %v5226
      %v5245 = vunpack.c.l.b16 %v5227
      %v5246 = vunpack.c.l.b16 %v5228
      %v5247 = vpack.c.b16 %v5239, %v5238
      %v5248 = vpack.c.b16 %v5241, %v5240
      %v5249 = vpack.c.b16 %v5243, %v5242
      %v5250 = vpack.c.b16 %v5245, %v5244
      %v5251 = vpack.c.b16 %v5246, %v5246
      %v5273 = vunpack.c.l.b16 %v5204
      %v5274 = vunpack.c.l.b16 %v5205
      %v5275 = vunpack.c.l.b16 %v5206
      %v5276 = vunpack.c.l.b16 %v5207
      %v5277 = vunpack.c.l.b16 %v5208
      %v5278 = vunpack.c.l.b16 %v5209
      %v5279 = vunpack.c.l.b16 %v5210
      %v5280 = vunpack.c.l.b16 %v5211
      %v5281 = vunpack.c.l.b16 %v5212
      %v5282 = vunpack.c.l.b16 %v5213
      %v5283 = vunpack.c.l.b16 %v5214
      %v5284 = vunpack.c.l.b16 %v5215
      %v5285 = vunpack.c.l.b16 %v5216
      %v5286 = vunpack.c.l.b16 %v5217
      %v5287 = vunpack.c.l.b16 %v5218
      %v5288 = vunpack.c.l.b16 %v5219
      %v5289 = vpack.c.b16 %v5274, %v5273
      %v5290 = vpack.c.b16 %v5276, %v5275
      %v5291 = vpack.c.b16 %v5278, %v5277
      %v5292 = vpack.c.b16 %v5280, %v5279
      %v5293 = vpack.c.b16 %v5282, %v5281
      %v5294 = vpack.c.b16 %v5284, %v5283
      %v5295 = vpack.c.b16 %v5286, %v5285
      %v5296 = vpack.c.b16 %v5288, %v5287
      %5305 = vmatprep.subr.bf16.mxu0 0
      %5306 = vmatpush1.bf16.msra.mxu0 %v5296
      %5307 = vmatprep.subr.bf16.mxu0 0
      %5308 = vmatpush1.bf16.msra.mxu0 %v5295
      %5309 = vmatprep.subr.bf16.mxu0 0
      %5310 = vmatpush1.bf16.msra.mxu0 %v5294
      %5311 = vmatprep.subr.bf16.mxu0 0
      %5312 = vmatpush1.bf16.msra.mxu0 %v5293
      %5313 = vmatprep.subr.bf16.mxu0 0
      %5314 = vmatpush1.bf16.msra.mxu0 %v5292
      %5315 = vmatprep.subr.bf16.mxu0 0
      %5316 = vmatpush1.bf16.msra.mxu0 %v5291
      %5317 = vmatprep.subr.bf16.mxu0 0
      %5318 = vmatpush1.bf16.msra.mxu0 %v5290
      %5319 = vmatprep.subr.bf16.mxu0 0
      %5320 = vmatpush1.bf16.msra.mxu0 %v5289
      %5321 = vmatprep.subr.bf16.mxu0 0
      %5322 = vmatpush2.bf16.msra.mxu0 0
      %5323 = vmatprep.subr.bf16.mxu0 0
      %5324 = vmatpush2.bf16.msra.mxu0 0
      %5325 = vmatprep.subr.bf16.mxu0 0
      %5326 = vmatpush2.bf16.msra.mxu0 0
      %5327 = vmatprep.subr.bf16.mxu0 0
      %5328 = vmatpush2.bf16.msra.mxu0 0
      %5329 = vmatprep.subr.bf16.mxu0 0
      %5330 = vmatpush2.bf16.msra.mxu0 0
      %5331 = vmatprep.subr.bf16.mxu0 0
      %5332 = vmatpush2.bf16.msra.mxu0 0
      %5333 = vmatprep.subr.bf16.mxu0 0
      %5334 = vmatpush2.bf16.msra.mxu0 0
      %5335 = vmatprep.subr.bf16.mxu0 0
      %5336 = vmatpush2.bf16.msra.mxu0 0
      %5337 = vmatprep.mubr.bf16.mxu0 0
      %5338 = vmatmul.mubr.bf16.gmra.mxu0 %v5247
      %v5339 = vpop.f32.mrf.mxu0
      %v5340 = vadd.f32 0.0, %v5339
      %v5341 = vpop.f32.mrf.mxu0
      %v5342 = vpop.f32.mrf.mxu0
      %v5343 = vadd.f32 0.0, %v5342
      %v5344 = vpop.f32.mrf.mxu0
      %5345 = vmatprep.mubr.bf16.mxu0 0
      %5346 = vmatmul.mubr.bf16.gmra.mxu0 %v5248
      %v5347 = vpop.f32.mrf.mxu0
      %v5348 = vadd.f32 0.0, %v5347
      %v5349 = vpop.f32.mrf.mxu0
      %v5350 = vpop.f32.mrf.mxu0
      %v5351 = vadd.f32 0.0, %v5350
      %v5352 = vpop.f32.mrf.mxu0
      %5353 = vmatprep.mubr.bf16.mxu0 0
      %5354 = vmatmul.mubr.bf16.gmra.mxu0 %v5249
      %v5355 = vpop.f32.mrf.mxu0
      %v5356 = vadd.f32 0.0, %v5355
      %v5357 = vpop.f32.mrf.mxu0
      %v5358 = vpop.f32.mrf.mxu0
      %v5359 = vadd.f32 0.0, %v5358
      %v5360 = vpop.f32.mrf.mxu0
      %5361 = vmatprep.mubr.bf16.mxu0 0
      %5362 = vmatmul.mubr.bf16.gmra.mxu0 %v5250
      %v5363 = vpop.f32.mrf.mxu0
      %v5364 = vadd.f32 0.0, %v5363
      %v5365 = vpop.f32.mrf.mxu0
      %v5366 = vpop.f32.mrf.mxu0
      %v5367 = vadd.f32 0.0, %v5366
      %v5368 = vpop.f32.mrf.mxu0
      %5369 = vmatprep.mubr.bf16.mxu0 0
      %5370 = vmatmul.mubr.bf16.gmra.mxu0 %v5251
      %v5371 = vpop.f32.mrf.mxu0
      %v5372 = vadd.f32 0.0, %v5371
      %v5373 = vpop.f32.mrf.mxu0
      %v5374 = vpop.f32.mrf.mxu0
      %v5375 = vpop.f32.mrf.mxu0
      %5376 = vdwg.mxu0
      %v5377 = vadd.f32 %v5203, %v5340
      %5379 = vrot.lane.b32.xlu0 %v5343, 127
      %v5380 = vpop.permute.xlu0 %5379
      %v5382 = vadd.f32 %v5377, %v5380
      %5384 = vrot.lane.b32.xlu0 %v5348, 126
      %v5385 = vpop.permute.xlu0 %5384
      %v5387 = vadd.f32 %v5382, %v5385
      %5389 = vrot.lane.b32.xlu0 %v5351, 118
      %v5390 = vpop.permute.xlu0 %5389
      %v5392 = vadd.f32 %v5387, %v5390
      %5394 = vrot.lane.b32.xlu0 %v5356, 117
      %v5395 = vpop.permute.xlu0 %5394
      %v5397 = vadd.f32 %v5392, %v5395
      %5399 = vrot.lane.b32.xlu0 %v5359, 116
      %v5400 = vpop.permute.xlu0 %5399
      %v5402 = vadd.f32 %v5397, %v5400
      %5404 = vrot.lane.b32.xlu0 %v5364, 108
      %v5405 = vpop.permute.xlu0 %5404
      %v5407 = vadd.f32 %v5402, %v5405
      %5409 = vrot.lane.b32.xlu0 %v5367, 107
      %v5410 = vpop.permute.xlu0 %5409
      %v5412 = vadd.f32 %v5407, %v5410
      %5414 = vrot.lane.b32.xlu0 %v5372, 106
      %v5415 = vpop.permute.xlu0 %5414
      %v5417 = vadd.f32 %v5412, %v5415
      %v5418 = vld [vmem:[%s997] sm:$0xf]
      %v5419 = vld [vmem:[%s997 + $0x4] sm:$0xf]
      %v5420 = vld [vmem:[%s997 + $0x8] sm:$0xf]
      %v5421 = vld [vmem:[%s997 + $0xc] sm:$0xf]
      %v5422 = vld [vmem:[%s997 + $0x10] sm:$0xf]
      %v5423 = vld [vmem:[%s997 + $0x14] sm:$0xf]
      %v5424 = vld [vmem:[%s997 + $0x18] sm:$0xf]
      %v5425 = vld [vmem:[%s997 + $0x1c] sm:$0xf]
      %v5426 = vld [vmem:[%s997 + $0x20] sm:$0xf]
      %v5427 = vld [vmem:[%s997 + $0x24] sm:$0xf]
      %v5428 = vld [vmem:[%s997 + $0x28] sm:$0xf]
      %v5429 = vld [vmem:[%s997 + $0x2c] sm:$0xf]
      %v5430 = vld [vmem:[%s997 + $0x30] sm:$0xf]
      %v5431 = vld [vmem:[%s997 + $0x34] sm:$0xf]
      %v5432 = vld [vmem:[%s997 + $0x38] sm:$0xf]
      %v5433 = vld [vmem:[%s997 + $0x3c] sm:$0xf]
      %v5434 = vld [vmem:[%s1489] sm:$0xf]
      %v5435 = vld [vmem:[%s1489 + $0x4] sm:$0xf]
      %v5436 = vld [vmem:[%s1489 + $0x8] sm:$0xf]
      %v5437 = vld [vmem:[%s1489 + $0xc] sm:$0xf]
      %v5438 = vld [vmem:[%s1489 + $0x10] sm:$0xf]
      %v5439 = vld [vmem:[%s1489 + $0x14] sm:$0xf]
      %v5440 = vld [vmem:[%s1489 + $0x18] sm:$0xf]
      %v5441 = vld [vmem:[%s1489 + $0x1c] sm:$0xf]
      %v5442 = vld [vmem:[%s1489 + $0x20] sm:$0xf]
      %v5452 = vunpack.c.l.b16 %v5434
      %v5453 = vunpack.c.l.b16 %v5435
      %v5454 = vunpack.c.l.b16 %v5436
      %v5455 = vunpack.c.l.b16 %v5437
      %v5456 = vunpack.c.l.b16 %v5438
      %v5457 = vunpack.c.l.b16 %v5439
      %v5458 = vunpack.c.l.b16 %v5440
      %v5459 = vunpack.c.l.b16 %v5441
      %v5460 = vunpack.c.l.b16 %v5442
      %v5461 = vpack.c.b16 %v5453, %v5452
      %v5462 = vpack.c.b16 %v5455, %v5454
      %v5463 = vpack.c.b16 %v5457, %v5456
      %v5464 = vpack.c.b16 %v5459, %v5458
      %v5465 = vpack.c.b16 %v5460, %v5460
      %v5487 = vunpack.c.l.b16 %v5418
      %v5488 = vunpack.c.l.b16 %v5419
      %v5489 = vunpack.c.l.b16 %v5420
      %v5490 = vunpack.c.l.b16 %v5421
      %v5491 = vunpack.c.l.b16 %v5422
      %v5492 = vunpack.c.l.b16 %v5423
      %v5493 = vunpack.c.l.b16 %v5424
      %v5494 = vunpack.c.l.b16 %v5425
      %v5495 = vunpack.c.l.b16 %v5426
      %v5496 = vunpack.c.l.b16 %v5427
      %v5497 = vunpack.c.l.b16 %v5428
      %v5498 = vunpack.c.l.b16 %v5429
      %v5499 = vunpack.c.l.b16 %v5430
      %v5500 = vunpack.c.l.b16 %v5431
      %v5501 = vunpack.c.l.b16 %v5432
      %v5502 = vunpack.c.l.b16 %v5433
      %v5503 = vpack.c.b16 %v5488, %v5487
      %v5504 = vpack.c.b16 %v5490, %v5489
      %v5505 = vpack.c.b16 %v5492, %v5491
      %v5506 = vpack.c.b16 %v5494, %v5493
      %v5507 = vpack.c.b16 %v5496, %v5495
      %v5508 = vpack.c.b16 %v5498, %v5497
      %v5509 = vpack.c.b16 %v5500, %v5499
      %v5510 = vpack.c.b16 %v5502, %v5501
      %5519 = vmatprep.subr.bf16.mxu0 0
      %5520 = vmatpush1.bf16.msra.mxu0 %v5510
      %5521 = vmatprep.subr.bf16.mxu0 0
      %5522 = vmatpush1.bf16.msra.mxu0 %v5509
      %5523 = vmatprep.subr.bf16.mxu0 0
      %5524 = vmatpush1.bf16.msra.mxu0 %v5508
      %5525 = vmatprep.subr.bf16.mxu0 0
      %5526 = vmatpush1.bf16.msra.mxu0 %v5507
      %5527 = vmatprep.subr.bf16.mxu0 0
      %5528 = vmatpush1.bf16.msra.mxu0 %v5506
      %5529 = vmatprep.subr.bf16.mxu0 0
      %5530 = vmatpush1.bf16.msra.mxu0 %v5505
      %5531 = vmatprep.subr.bf16.mxu0 0
      %5532 = vmatpush1.bf16.msra.mxu0 %v5504
      %5533 = vmatprep.subr.bf16.mxu0 0
      %5534 = vmatpush1.bf16.msra.mxu0 %v5503
      %5535 = vmatprep.subr.bf16.mxu0 0
      %5536 = vmatpush2.bf16.msra.mxu0 0
      %5537 = vmatprep.subr.bf16.mxu0 0
      %5538 = vmatpush2.bf16.msra.mxu0 0
      %5539 = vmatprep.subr.bf16.mxu0 0
      %5540 = vmatpush2.bf16.msra.mxu0 0
      %5541 = vmatprep.subr.bf16.mxu0 0
      %5542 = vmatpush2.bf16.msra.mxu0 0
      %5543 = vmatprep.subr.bf16.mxu0 0
      %5544 = vmatpush2.bf16.msra.mxu0 0
      %5545 = vmatprep.subr.bf16.mxu0 0
      %5546 = vmatpush2.bf16.msra.mxu0 0
      %5547 = vmatprep.subr.bf16.mxu0 0
      %5548 = vmatpush2.bf16.msra.mxu0 0
      %5549 = vmatprep.subr.bf16.mxu0 0
      %5550 = vmatpush2.bf16.msra.mxu0 0
      %5551 = vmatprep.mubr.bf16.mxu0 0
      %5552 = vmatmul.mubr.bf16.gmra.mxu0 %v5461
      %v5553 = vpop.f32.mrf.mxu0
      %v5554 = vadd.f32 0.0, %v5553
      %v5555 = vpop.f32.mrf.mxu0
      %v5556 = vpop.f32.mrf.mxu0
      %v5557 = vadd.f32 0.0, %v5556
      %v5558 = vpop.f32.mrf.mxu0
      %5559 = vmatprep.mubr.bf16.mxu0 0
      %5560 = vmatmul.mubr.bf16.gmra.mxu0 %v5462
      %v5561 = vpop.f32.mrf.mxu0
      %v5562 = vadd.f32 0.0, %v5561
      %v5563 = vpop.f32.mrf.mxu0
      %v5564 = vpop.f32.mrf.mxu0
      %v5565 = vadd.f32 0.0, %v5564
      %v5566 = vpop.f32.mrf.mxu0
      %5567 = vmatprep.mubr.bf16.mxu0 0
      %5568 = vmatmul.mubr.bf16.gmra.mxu0 %v5463
      %v5569 = vpop.f32.mrf.mxu0
      %v5570 = vadd.f32 0.0, %v5569
      %v5571 = vpop.f32.mrf.mxu0
      %v5572 = vpop.f32.mrf.mxu0
      %v5573 = vadd.f32 0.0, %v5572
      %v5574 = vpop.f32.mrf.mxu0
      %5575 = vmatprep.mubr.bf16.mxu0 0
      %5576 = vmatmul.mubr.bf16.gmra.mxu0 %v5464
      %v5577 = vpop.f32.mrf.mxu0
      %v5578 = vadd.f32 0.0, %v5577
      %v5579 = vpop.f32.mrf.mxu0
      %v5580 = vpop.f32.mrf.mxu0
      %v5581 = vadd.f32 0.0, %v5580
      %v5582 = vpop.f32.mrf.mxu0
      %5583 = vmatprep.mubr.bf16.mxu0 0
      %5584 = vmatmul.mubr.bf16.gmra.mxu0 %v5465
      %v5585 = vpop.f32.mrf.mxu0
      %v5586 = vadd.f32 0.0, %v5585
      %v5587 = vpop.f32.mrf.mxu0
      %v5588 = vpop.f32.mrf.mxu0
      %v5589 = vpop.f32.mrf.mxu0
      %5590 = vdwg.mxu0
      %v5591 = vadd.f32 %v5417, %v5554
      %5593 = vrot.lane.b32.xlu0 %v5557, 127
      %v5594 = vpop.permute.xlu0 %5593
      %v5596 = vadd.f32 %v5591, %v5594
      %5598 = vrot.lane.b32.xlu0 %v5562, 126
      %v5599 = vpop.permute.xlu0 %5598
      %v5601 = vadd.f32 %v5596, %v5599
      %5603 = vrot.lane.b32.xlu0 %v5565, 118
      %v5604 = vpop.permute.xlu0 %5603
      %v5606 = vadd.f32 %v5601, %v5604
      %5608 = vrot.lane.b32.xlu0 %v5570, 117
      %v5609 = vpop.permute.xlu0 %5608
      %v5611 = vadd.f32 %v5606, %v5609
      %5613 = vrot.lane.b32.xlu0 %v5573, 116
      %v5614 = vpop.permute.xlu0 %5613
      %v5616 = vadd.f32 %v5611, %v5614
      %5618 = vrot.lane.b32.xlu0 %v5578, 108
      %v5619 = vpop.permute.xlu0 %5618
      %v5621 = vadd.f32 %v5616, %v5619
      %5623 = vrot.lane.b32.xlu0 %v5581, 107
      %v5624 = vpop.permute.xlu0 %5623
      %v5626 = vadd.f32 %v5621, %v5624
      %5628 = vrot.lane.b32.xlu0 %v5586, 106
      %v5629 = vpop.permute.xlu0 %5628
      %v5631 = vadd.f32 %v5626, %v5629
      %v5632 = vadd.f32 %v5631, %v1691
      %s5633 = scalar_lea.vmem %s1021, 12
      %v5634 = vld [vmem:[%s5633] sm:$0x3]
      %v5635 = vunpack.c.l.bf16 %v5634
      %v5636 = vsub.f32 %v5635, %v1699
      %v5637 = vmul.f32 %v5636, %v1705
      %v5638 = vadd.f32 %v5632, 1.0
      %v5639 = vmul.f32 %v5637, %v5638
      %v5641 = vcombine.high %v5632, %v5632
      %v5643 = vadd.f32 %v5639, %v5641
      %s5644 = scalar_lea.vmem %s1039, 24
      %5645 = vst.msk [vmem:[%s5644] sm:$0xf] %vm1714, %v5643
      %v5646 = vld [vmem:[%s984] sm:$0xf]
      %v5647 = vld [vmem:[%s984 + $0x4] sm:$0xf]
      %v5648 = vld [vmem:[%s984 + $0x8] sm:$0xf]
      %v5649 = vld [vmem:[%s984 + $0xc] sm:$0xf]
      %v5650 = vld [vmem:[%s984 + $0x10] sm:$0xf]
      %v5651 = vld [vmem:[%s984 + $0x14] sm:$0xf]
      %v5652 = vld [vmem:[%s984 + $0x18] sm:$0xf]
      %v5653 = vld [vmem:[%s984 + $0x1c] sm:$0xf]
      %v5654 = vld [vmem:[%s984 + $0x20] sm:$0xf]
      %v5655 = vld [vmem:[%s984 + $0x24] sm:$0xf]
      %v5656 = vld [vmem:[%s984 + $0x28] sm:$0xf]
      %v5657 = vld [vmem:[%s984 + $0x2c] sm:$0xf]
      %v5658 = vld [vmem:[%s984 + $0x30] sm:$0xf]
      %v5659 = vld [vmem:[%s984 + $0x34] sm:$0xf]
      %v5660 = vld [vmem:[%s984 + $0x38] sm:$0xf]
      %v5661 = vld [vmem:[%s984 + $0x3c] sm:$0xf]
      %v5662 = vld [vmem:[%s10] sm:$0xf]
      %v5663 = vld [vmem:[%s10 + $0x4] sm:$0xf]
      %v5664 = vld [vmem:[%s10 + $0x8] sm:$0xf]
      %v5665 = vld [vmem:[%s10 + $0xc] sm:$0xf]
      %v5666 = vld [vmem:[%s10 + $0x10] sm:$0xf]
      %v5667 = vld [vmem:[%s10 + $0x14] sm:$0xf]
      %v5668 = vld [vmem:[%s10 + $0x18] sm:$0xf]
      %v5669 = vld [vmem:[%s10 + $0x1c] sm:$0xf]
      %v5670 = vld [vmem:[%s10 + $0x20] sm:$0xf]
      %v5680 = vunpack.c.l.b16 %v5662
      %v5681 = vunpack.c.l.b16 %v5663
      %v5682 = vunpack.c.l.b16 %v5664
      %v5683 = vunpack.c.l.b16 %v5665
      %v5684 = vunpack.c.l.b16 %v5666
      %v5685 = vunpack.c.l.b16 %v5667
      %v5686 = vunpack.c.l.b16 %v5668
      %v5687 = vunpack.c.l.b16 %v5669
      %v5688 = vunpack.c.l.b16 %v5670
      %v5689 = vpack.c.b16 %v5681, %v5680
      %v5690 = vpack.c.b16 %v5683, %v5682
      %v5691 = vpack.c.b16 %v5685, %v5684
      %v5692 = vpack.c.b16 %v5687, %v5686
      %v5693 = vpack.c.b16 %v5688, %v5688
      %v5715 = vunpack.c.l.b16 %v5646
      %v5716 = vunpack.c.l.b16 %v5647
      %v5717 = vunpack.c.l.b16 %v5648
      %v5718 = vunpack.c.l.b16 %v5649
      %v5719 = vunpack.c.l.b16 %v5650
      %v5720 = vunpack.c.l.b16 %v5651
      %v5721 = vunpack.c.l.b16 %v5652
      %v5722 = vunpack.c.l.b16 %v5653
      %v5723 = vunpack.c.l.b16 %v5654
      %v5724 = vunpack.c.l.b16 %v5655
      %v5725 = vunpack.c.l.b16 %v5656
      %v5726 = vunpack.c.l.b16 %v5657
      %v5727 = vunpack.c.l.b16 %v5658
      %v5728 = vunpack.c.l.b16 %v5659
      %v5729 = vunpack.c.l.b16 %v5660
      %v5730 = vunpack.c.l.b16 %v5661
      %v5731 = vpack.c.b16 %v5716, %v5715
      %v5732 = vpack.c.b16 %v5718, %v5717
      %v5733 = vpack.c.b16 %v5720, %v5719
      %v5734 = vpack.c.b16 %v5722, %v5721
      %v5735 = vpack.c.b16 %v5724, %v5723
      %v5736 = vpack.c.b16 %v5726, %v5725
      %v5737 = vpack.c.b16 %v5728, %v5727
      %v5738 = vpack.c.b16 %v5730, %v5729
      %5747 = vmatprep.subr.bf16.mxu0 0
      %5748 = vmatpush1.bf16.msra.mxu0 %v5738
      %5749 = vmatprep.subr.bf16.mxu0 0
      %5750 = vmatpush1.bf16.msra.mxu0 %v5737
      %5751 = vmatprep.subr.bf16.mxu0 0
      %5752 = vmatpush1.bf16.msra.mxu0 %v5736
      %5753 = vmatprep.subr.bf16.mxu0 0
      %5754 = vmatpush1.bf16.msra.mxu0 %v5735
      %5755 = vmatprep.subr.bf16.mxu0 0
      %5756 = vmatpush1.bf16.msra.mxu0 %v5734
      %5757 = vmatprep.subr.bf16.mxu0 0
      %5758 = vmatpush1.bf16.msra.mxu0 %v5733
      %5759 = vmatprep.subr.bf16.mxu0 0
      %5760 = vmatpush1.bf16.msra.mxu0 %v5732
      %5761 = vmatprep.subr.bf16.mxu0 0
      %5762 = vmatpush1.bf16.msra.mxu0 %v5731
      %5763 = vmatprep.subr.bf16.mxu0 0
      %5764 = vmatpush2.bf16.msra.mxu0 0
      %5765 = vmatprep.subr.bf16.mxu0 0
      %5766 = vmatpush2.bf16.msra.mxu0 0
      %5767 = vmatprep.subr.bf16.mxu0 0
      %5768 = vmatpush2.bf16.msra.mxu0 0
      %5769 = vmatprep.subr.bf16.mxu0 0
      %5770 = vmatpush2.bf16.msra.mxu0 0
      %5771 = vmatprep.subr.bf16.mxu0 0
      %5772 = vmatpush2.bf16.msra.mxu0 0
      %5773 = vmatprep.subr.bf16.mxu0 0
      %5774 = vmatpush2.bf16.msra.mxu0 0
      %5775 = vmatprep.subr.bf16.mxu0 0
      %5776 = vmatpush2.bf16.msra.mxu0 0
      %5777 = vmatprep.subr.bf16.mxu0 0
      %5778 = vmatpush2.bf16.msra.mxu0 0
      %5779 = vmatprep.mubr.bf16.mxu0 0
      %5780 = vmatmul.mubr.bf16.gmra.mxu0 %v5689
      %v5781 = vpop.f32.mrf.mxu0
      %v5782 = vadd.f32 0.0, %v5781
      %v5783 = vpop.f32.mrf.mxu0
      %v5784 = vpop.f32.mrf.mxu0
      %v5785 = vadd.f32 0.0, %v5784
      %v5786 = vpop.f32.mrf.mxu0
      %5787 = vmatprep.mubr.bf16.mxu0 0
      %5788 = vmatmul.mubr.bf16.gmra.mxu0 %v5690
      %v5789 = vpop.f32.mrf.mxu0
      %v5790 = vadd.f32 0.0, %v5789
      %v5791 = vpop.f32.mrf.mxu0
      %v5792 = vpop.f32.mrf.mxu0
      %v5793 = vadd.f32 0.0, %v5792
      %v5794 = vpop.f32.mrf.mxu0
      %5795 = vmatprep.mubr.bf16.mxu0 0
      %5796 = vmatmul.mubr.bf16.gmra.mxu0 %v5691
      %v5797 = vpop.f32.mrf.mxu0
      %v5798 = vadd.f32 0.0, %v5797
      %v5799 = vpop.f32.mrf.mxu0
      %v5800 = vpop.f32.mrf.mxu0
      %v5801 = vadd.f32 0.0, %v5800
      %v5802 = vpop.f32.mrf.mxu0
      %5803 = vmatprep.mubr.bf16.mxu0 0
      %5804 = vmatmul.mubr.bf16.gmra.mxu0 %v5692
      %v5805 = vpop.f32.mrf.mxu0
      %v5806 = vadd.f32 0.0, %v5805
      %v5807 = vpop.f32.mrf.mxu0
      %v5808 = vpop.f32.mrf.mxu0
      %v5809 = vadd.f32 0.0, %v5808
      %v5810 = vpop.f32.mrf.mxu0
      %5811 = vmatprep.mubr.bf16.mxu0 0
      %5812 = vmatmul.mubr.bf16.gmra.mxu0 %v5693
      %v5813 = vpop.f32.mrf.mxu0
      %v5814 = vadd.f32 0.0, %v5813
      %v5815 = vpop.f32.mrf.mxu0
      %v5816 = vpop.f32.mrf.mxu0
      %v5817 = vpop.f32.mrf.mxu0
      %5818 = vdwg.mxu0
      %5820 = vrot.lane.b32.xlu0 %v5785, 127
      %v5821 = vpop.permute.xlu0 %5820
      %v5823 = vadd.f32 %v5782, %v5821
      %5825 = vrot.lane.b32.xlu0 %v5790, 126
      %v5826 = vpop.permute.xlu0 %5825
      %v5828 = vadd.f32 %v5823, %v5826
      %5830 = vrot.lane.b32.xlu0 %v5793, 118
      %v5831 = vpop.permute.xlu0 %5830
      %v5833 = vadd.f32 %v5828, %v5831
      %5835 = vrot.lane.b32.xlu0 %v5798, 117
      %v5836 = vpop.permute.xlu0 %5835
      %v5838 = vadd.f32 %v5833, %v5836
      %5840 = vrot.lane.b32.xlu0 %v5801, 116
      %v5841 = vpop.permute.xlu0 %5840
      %v5843 = vadd.f32 %v5838, %v5841
      %5845 = vrot.lane.b32.xlu0 %v5806, 108
      %v5846 = vpop.permute.xlu0 %5845
      %v5848 = vadd.f32 %v5843, %v5846
      %5850 = vrot.lane.b32.xlu0 %v5809, 107
      %v5851 = vpop.permute.xlu0 %5850
      %v5853 = vadd.f32 %v5848, %v5851
      %5855 = vrot.lane.b32.xlu0 %v5814, 106
      %v5856 = vpop.permute.xlu0 %5855
      %v5858 = vadd.f32 %v5853, %v5856
      %v5859 = vld [vmem:[%s997] sm:$0xf]
      %v5860 = vld [vmem:[%s997 + $0x4] sm:$0xf]
      %v5861 = vld [vmem:[%s997 + $0x8] sm:$0xf]
      %v5862 = vld [vmem:[%s997 + $0xc] sm:$0xf]
      %v5863 = vld [vmem:[%s997 + $0x10] sm:$0xf]
      %v5864 = vld [vmem:[%s997 + $0x14] sm:$0xf]
      %v5865 = vld [vmem:[%s997 + $0x18] sm:$0xf]
      %v5866 = vld [vmem:[%s997 + $0x1c] sm:$0xf]
      %v5867 = vld [vmem:[%s997 + $0x20] sm:$0xf]
      %v5868 = vld [vmem:[%s997 + $0x24] sm:$0xf]
      %v5869 = vld [vmem:[%s997 + $0x28] sm:$0xf]
      %v5870 = vld [vmem:[%s997 + $0x2c] sm:$0xf]
      %v5871 = vld [vmem:[%s997 + $0x30] sm:$0xf]
      %v5872 = vld [vmem:[%s997 + $0x34] sm:$0xf]
      %v5873 = vld [vmem:[%s997 + $0x38] sm:$0xf]
      %v5874 = vld [vmem:[%s997 + $0x3c] sm:$0xf]
      %v5875 = vld [vmem:[%s1274] sm:$0xf]
      %v5876 = vld [vmem:[%s1274 + $0x4] sm:$0xf]
      %v5877 = vld [vmem:[%s1274 + $0x8] sm:$0xf]
      %v5878 = vld [vmem:[%s1274 + $0xc] sm:$0xf]
      %v5879 = vld [vmem:[%s1274 + $0x10] sm:$0xf]
      %v5880 = vld [vmem:[%s1274 + $0x14] sm:$0xf]
      %v5881 = vld [vmem:[%s1274 + $0x18] sm:$0xf]
      %v5882 = vld [vmem:[%s1274 + $0x1c] sm:$0xf]
      %v5883 = vld [vmem:[%s1274 + $0x20] sm:$0xf]
      %v5893 = vunpack.c.l.b16 %v5875
      %v5894 = vunpack.c.l.b16 %v5876
      %v5895 = vunpack.c.l.b16 %v5877
      %v5896 = vunpack.c.l.b16 %v5878
      %v5897 = vunpack.c.l.b16 %v5879
      %v5898 = vunpack.c.l.b16 %v5880
      %v5899 = vunpack.c.l.b16 %v5881
      %v5900 = vunpack.c.l.b16 %v5882
      %v5901 = vunpack.c.l.b16 %v5883
      %v5902 = vpack.c.b16 %v5894, %v5893
      %v5903 = vpack.c.b16 %v5896, %v5895
      %v5904 = vpack.c.b16 %v5898, %v5897
      %v5905 = vpack.c.b16 %v5900, %v5899
      %v5906 = vpack.c.b16 %v5901, %v5901
      %v5928 = vunpack.c.l.b16 %v5859
      %v5929 = vunpack.c.l.b16 %v5860
      %v5930 = vunpack.c.l.b16 %v5861
      %v5931 = vunpack.c.l.b16 %v5862
      %v5932 = vunpack.c.l.b16 %v5863
      %v5933 = vunpack.c.l.b16 %v5864
      %v5934 = vunpack.c.l.b16 %v5865
      %v5935 = vunpack.c.l.b16 %v5866
      %v5936 = vunpack.c.l.b16 %v5867
      %v5937 = vunpack.c.l.b16 %v5868
      %v5938 = vunpack.c.l.b16 %v5869
      %v5939 = vunpack.c.l.b16 %v5870
      %v5940 = vunpack.c.l.b16 %v5871
      %v5941 = vunpack.c.l.b16 %v5872
      %v5942 = vunpack.c.l.b16 %v5873
      %v5943 = vunpack.c.l.b16 %v5874
      %v5944 = vpack.c.b16 %v5929, %v5928
      %v5945 = vpack.c.b16 %v5931, %v5930
      %v5946 = vpack.c.b16 %v5933, %v5932
      %v5947 = vpack.c.b16 %v5935, %v5934
      %v5948 = vpack.c.b16 %v5937, %v5936
      %v5949 = vpack.c.b16 %v5939, %v5938
      %v5950 = vpack.c.b16 %v5941, %v5940
      %v5951 = vpack.c.b16 %v5943, %v5942
      %5960 = vmatprep.subr.bf16.mxu0 0
      %5961 = vmatpush1.bf16.msra.mxu0 %v5951
      %5962 = vmatprep.subr.bf16.mxu0 0
      %5963 = vmatpush1.bf16.msra.mxu0 %v5950
      %5964 = vmatprep.subr.bf16.mxu0 0
      %5965 = vmatpush1.bf16.msra.mxu0 %v5949
      %5966 = vmatprep.subr.bf16.mxu0 0
      %5967 = vmatpush1.bf16.msra.mxu0 %v5948
      %5968 = vmatprep.subr.bf16.mxu0 0
      %5969 = vmatpush1.bf16.msra.mxu0 %v5947
      %5970 = vmatprep.subr.bf16.mxu0 0
      %5971 = vmatpush1.bf16.msra.mxu0 %v5946
      %5972 = vmatprep.subr.bf16.mxu0 0
      %5973 = vmatpush1.bf16.msra.mxu0 %v5945
      %5974 = vmatprep.subr.bf16.mxu0 0
      %5975 = vmatpush1.bf16.msra.mxu0 %v5944
      %5976 = vmatprep.subr.bf16.mxu0 0
      %5977 = vmatpush2.bf16.msra.mxu0 0
      %5978 = vmatprep.subr.bf16.mxu0 0
      %5979 = vmatpush2.bf16.msra.mxu0 0
      %5980 = vmatprep.subr.bf16.mxu0 0
      %5981 = vmatpush2.bf16.msra.mxu0 0
      %5982 = vmatprep.subr.bf16.mxu0 0
      %5983 = vmatpush2.bf16.msra.mxu0 0
      %5984 = vmatprep.subr.bf16.mxu0 0
      %5985 = vmatpush2.bf16.msra.mxu0 0
      %5986 = vmatprep.subr.bf16.mxu0 0
      %5987 = vmatpush2.bf16.msra.mxu0 0
      %5988 = vmatprep.subr.bf16.mxu0 0
      %5989 = vmatpush2.bf16.msra.mxu0 0
      %5990 = vmatprep.subr.bf16.mxu0 0
      %5991 = vmatpush2.bf16.msra.mxu0 0
      %5992 = vmatprep.mubr.bf16.mxu0 0
      %5993 = vmatmul.mubr.bf16.gmra.mxu0 %v5902
      %v5994 = vpop.f32.mrf.mxu0
      %v5995 = vadd.f32 0.0, %v5994
      %v5996 = vpop.f32.mrf.mxu0
      %v5997 = vpop.f32.mrf.mxu0
      %v5998 = vadd.f32 0.0, %v5997
      %v5999 = vpop.f32.mrf.mxu0
      %6000 = vmatprep.mubr.bf16.mxu0 0
      %6001 = vmatmul.mubr.bf16.gmra.mxu0 %v5903
      %v6002 = vpop.f32.mrf.mxu0
      %v6003 = vadd.f32 0.0, %v6002
      %v6004 = vpop.f32.mrf.mxu0
      %v6005 = vpop.f32.mrf.mxu0
      %v6006 = vadd.f32 0.0, %v6005
      %v6007 = vpop.f32.mrf.mxu0
      %6008 = vmatprep.mubr.bf16.mxu0 0
      %6009 = vmatmul.mubr.bf16.gmra.mxu0 %v5904
      %v6010 = vpop.f32.mrf.mxu0
      %v6011 = vadd.f32 0.0, %v6010
      %v6012 = vpop.f32.mrf.mxu0
      %v6013 = vpop.f32.mrf.mxu0
      %v6014 = vadd.f32 0.0, %v6013
      %v6015 = vpop.f32.mrf.mxu0
      %6016 = vmatprep.mubr.bf16.mxu0 0
      %6017 = vmatmul.mubr.bf16.gmra.mxu0 %v5905
      %v6018 = vpop.f32.mrf.mxu0
      %v6019 = vadd.f32 0.0, %v6018
      %v6020 = vpop.f32.mrf.mxu0
      %v6021 = vpop.f32.mrf.mxu0
      %v6022 = vadd.f32 0.0, %v6021
      %v6023 = vpop.f32.mrf.mxu0
      %6024 = vmatprep.mubr.bf16.mxu0 0
      %6025 = vmatmul.mubr.bf16.gmra.mxu0 %v5906
      %v6026 = vpop.f32.mrf.mxu0
      %v6027 = vadd.f32 0.0, %v6026
      %v6028 = vpop.f32.mrf.mxu0
      %v6029 = vpop.f32.mrf.mxu0
      %v6030 = vpop.f32.mrf.mxu0
      %6031 = vdwg.mxu0
      %v6032 = vadd.f32 %v5858, %v5995
      %6034 = vrot.lane.b32.xlu0 %v5998, 127
      %v6035 = vpop.permute.xlu0 %6034
      %v6037 = vadd.f32 %v6032, %v6035
      %6039 = vrot.lane.b32.xlu0 %v6003, 126
      %v6040 = vpop.permute.xlu0 %6039
      %v6042 = vadd.f32 %v6037, %v6040
      %6044 = vrot.lane.b32.xlu0 %v6006, 118
      %v6045 = vpop.permute.xlu0 %6044
      %v6047 = vadd.f32 %v6042, %v6045
      %6049 = vrot.lane.b32.xlu0 %v6011, 117
      %v6050 = vpop.permute.xlu0 %6049
      %v6052 = vadd.f32 %v6047, %v6050
      %6054 = vrot.lane.b32.xlu0 %v6014, 116
      %v6055 = vpop.permute.xlu0 %6054
      %v6057 = vadd.f32 %v6052, %v6055
      %6059 = vrot.lane.b32.xlu0 %v6019, 108
      %v6060 = vpop.permute.xlu0 %6059
      %v6062 = vadd.f32 %v6057, %v6060
      %6064 = vrot.lane.b32.xlu0 %v6022, 107
      %v6065 = vpop.permute.xlu0 %6064
      %v6067 = vadd.f32 %v6062, %v6065
      %6069 = vrot.lane.b32.xlu0 %v6027, 106
      %v6070 = vpop.permute.xlu0 %6069
      %v6072 = vadd.f32 %v6067, %v6070
      %v6073 = vld [vmem:[%s1010] sm:$0xf]
      %v6074 = vld [vmem:[%s1010 + $0x4] sm:$0xf]
      %v6075 = vld [vmem:[%s1010 + $0x8] sm:$0xf]
      %v6076 = vld [vmem:[%s1010 + $0xc] sm:$0xf]
      %v6077 = vld [vmem:[%s1010 + $0x10] sm:$0xf]
      %v6078 = vld [vmem:[%s1010 + $0x14] sm:$0xf]
      %v6079 = vld [vmem:[%s1010 + $0x18] sm:$0xf]
      %v6080 = vld [vmem:[%s1010 + $0x1c] sm:$0xf]
      %v6081 = vld [vmem:[%s1010 + $0x20] sm:$0xf]
      %v6082 = vld [vmem:[%s1010 + $0x24] sm:$0xf]
      %v6083 = vld [vmem:[%s1010 + $0x28] sm:$0xf]
      %v6084 = vld [vmem:[%s1010 + $0x2c] sm:$0xf]
      %v6085 = vld [vmem:[%s1010 + $0x30] sm:$0xf]
      %v6086 = vld [vmem:[%s1010 + $0x34] sm:$0xf]
      %v6087 = vld [vmem:[%s1010 + $0x38] sm:$0xf]
      %v6088 = vld [vmem:[%s1010 + $0x3c] sm:$0xf]
      %v6089 = vld [vmem:[%s1489] sm:$0xf]
      %v6090 = vld [vmem:[%s1489 + $0x4] sm:$0xf]
      %v6091 = vld [vmem:[%s1489 + $0x8] sm:$0xf]
      %v6092 = vld [vmem:[%s1489 + $0xc] sm:$0xf]
      %v6093 = vld [vmem:[%s1489 + $0x10] sm:$0xf]
      %v6094 = vld [vmem:[%s1489 + $0x14] sm:$0xf]
      %v6095 = vld [vmem:[%s1489 + $0x18] sm:$0xf]
      %v6096 = vld [vmem:[%s1489 + $0x1c] sm:$0xf]
      %v6097 = vld [vmem:[%s1489 + $0x20] sm:$0xf]
      %v6107 = vunpack.c.l.b16 %v6089
      %v6108 = vunpack.c.l.b16 %v6090
      %v6109 = vunpack.c.l.b16 %v6091
      %v6110 = vunpack.c.l.b16 %v6092
      %v6111 = vunpack.c.l.b16 %v6093
      %v6112 = vunpack.c.l.b16 %v6094
      %v6113 = vunpack.c.l.b16 %v6095
      %v6114 = vunpack.c.l.b16 %v6096
      %v6115 = vunpack.c.l.b16 %v6097
      %v6116 = vpack.c.b16 %v6108, %v6107
      %v6117 = vpack.c.b16 %v6110, %v6109
      %v6118 = vpack.c.b16 %v6112, %v6111
      %v6119 = vpack.c.b16 %v6114, %v6113
      %v6120 = vpack.c.b16 %v6115, %v6115
      %v6142 = vunpack.c.l.b16 %v6073
      %v6143 = vunpack.c.l.b16 %v6074
      %v6144 = vunpack.c.l.b16 %v6075
      %v6145 = vunpack.c.l.b16 %v6076
      %v6146 = vunpack.c.l.b16 %v6077
      %v6147 = vunpack.c.l.b16 %v6078
      %v6148 = vunpack.c.l.b16 %v6079
      %v6149 = vunpack.c.l.b16 %v6080
      %v6150 = vunpack.c.l.b16 %v6081
      %v6151 = vunpack.c.l.b16 %v6082
      %v6152 = vunpack.c.l.b16 %v6083
      %v6153 = vunpack.c.l.b16 %v6084
      %v6154 = vunpack.c.l.b16 %v6085
      %v6155 = vunpack.c.l.b16 %v6086
      %v6156 = vunpack.c.l.b16 %v6087
      %v6157 = vunpack.c.l.b16 %v6088
      %v6158 = vpack.c.b16 %v6143, %v6142
      %v6159 = vpack.c.b16 %v6145, %v6144
      %v6160 = vpack.c.b16 %v6147, %v6146
      %v6161 = vpack.c.b16 %v6149, %v6148
      %v6162 = vpack.c.b16 %v6151, %v6150
      %v6163 = vpack.c.b16 %v6153, %v6152
      %v6164 = vpack.c.b16 %v6155, %v6154
      %v6165 = vpack.c.b16 %v6157, %v6156
      %6174 = vmatprep.subr.bf16.mxu0 0
      %6175 = vmatpush1.bf16.msra.mxu0 %v6165
      %6176 = vmatprep.subr.bf16.mxu0 0
      %6177 = vmatpush1.bf16.msra.mxu0 %v6164
      %6178 = vmatprep.subr.bf16.mxu0 0
      %6179 = vmatpush1.bf16.msra.mxu0 %v6163
      %6180 = vmatprep.subr.bf16.mxu0 0
      %6181 = vmatpush1.bf16.msra.mxu0 %v6162
      %6182 = vmatprep.subr.bf16.mxu0 0
      %6183 = vmatpush1.bf16.msra.mxu0 %v6161
      %6184 = vmatprep.subr.bf16.mxu0 0
      %6185 = vmatpush1.bf16.msra.mxu0 %v6160
      %6186 = vmatprep.subr.bf16.mxu0 0
      %6187 = vmatpush1.bf16.msra.mxu0 %v6159
      %6188 = vmatprep.subr.bf16.mxu0 0
      %6189 = vmatpush1.bf16.msra.mxu0 %v6158
      %6190 = vmatprep.subr.bf16.mxu0 0
      %6191 = vmatpush2.bf16.msra.mxu0 0
      %6192 = vmatprep.subr.bf16.mxu0 0
      %6193 = vmatpush2.bf16.msra.mxu0 0
      %6194 = vmatprep.subr.bf16.mxu0 0
      %6195 = vmatpush2.bf16.msra.mxu0 0
      %6196 = vmatprep.subr.bf16.mxu0 0
      %6197 = vmatpush2.bf16.msra.mxu0 0
      %6198 = vmatprep.subr.bf16.mxu0 0
      %6199 = vmatpush2.bf16.msra.mxu0 0
      %6200 = vmatprep.subr.bf16.mxu0 0
      %6201 = vmatpush2.bf16.msra.mxu0 0
      %6202 = vmatprep.subr.bf16.mxu0 0
      %6203 = vmatpush2.bf16.msra.mxu0 0
      %6204 = vmatprep.subr.bf16.mxu0 0
      %6205 = vmatpush2.bf16.msra.mxu0 0
      %6206 = vmatprep.mubr.bf16.mxu0 0
      %6207 = vmatmul.mubr.bf16.gmra.mxu0 %v6116
      %v6208 = vpop.f32.mrf.mxu0
      %v6209 = vadd.f32 0.0, %v6208
      %v6210 = vpop.f32.mrf.mxu0
      %v6211 = vpop.f32.mrf.mxu0
      %v6212 = vadd.f32 0.0, %v6211
      %v6213 = vpop.f32.mrf.mxu0
      %6214 = vmatprep.mubr.bf16.mxu0 0
      %6215 = vmatmul.mubr.bf16.gmra.mxu0 %v6117
      %v6216 = vpop.f32.mrf.mxu0
      %v6217 = vadd.f32 0.0, %v6216
      %v6218 = vpop.f32.mrf.mxu0
      %v6219 = vpop.f32.mrf.mxu0
      %v6220 = vadd.f32 0.0, %v6219
      %v6221 = vpop.f32.mrf.mxu0
      %6222 = vmatprep.mubr.bf16.mxu0 0
      %6223 = vmatmul.mubr.bf16.gmra.mxu0 %v6118
      %v6224 = vpop.f32.mrf.mxu0
      %v6225 = vadd.f32 0.0, %v6224
      %v6226 = vpop.f32.mrf.mxu0
      %v6227 = vpop.f32.mrf.mxu0
      %v6228 = vadd.f32 0.0, %v6227
      %v6229 = vpop.f32.mrf.mxu0
      %6230 = vmatprep.mubr.bf16.mxu0 0
      %6231 = vmatmul.mubr.bf16.gmra.mxu0 %v6119
      %v6232 = vpop.f32.mrf.mxu0
      %v6233 = vadd.f32 0.0, %v6232
      %v6234 = vpop.f32.mrf.mxu0
      %v6235 = vpop.f32.mrf.mxu0
      %v6236 = vadd.f32 0.0, %v6235
      %v6237 = vpop.f32.mrf.mxu0
      %6238 = vmatprep.mubr.bf16.mxu0 0
      %6239 = vmatmul.mubr.bf16.gmra.mxu0 %v6120
      %v6240 = vpop.f32.mrf.mxu0
      %v6241 = vadd.f32 0.0, %v6240
      %v6242 = vpop.f32.mrf.mxu0
      %v6243 = vpop.f32.mrf.mxu0
      %v6244 = vpop.f32.mrf.mxu0
      %6245 = vdwg.mxu0
      %v6246 = vadd.f32 %v6072, %v6209
      %6248 = vrot.lane.b32.xlu0 %v6212, 127
      %v6249 = vpop.permute.xlu0 %6248
      %v6251 = vadd.f32 %v6246, %v6249
      %6253 = vrot.lane.b32.xlu0 %v6217, 126
      %v6254 = vpop.permute.xlu0 %6253
      %v6256 = vadd.f32 %v6251, %v6254
      %6258 = vrot.lane.b32.xlu0 %v6220, 118
      %v6259 = vpop.permute.xlu0 %6258
      %v6261 = vadd.f32 %v6256, %v6259
      %6263 = vrot.lane.b32.xlu0 %v6225, 117
      %v6264 = vpop.permute.xlu0 %6263
      %v6266 = vadd.f32 %v6261, %v6264
      %6268 = vrot.lane.b32.xlu0 %v6228, 116
      %v6269 = vpop.permute.xlu0 %6268
      %v6271 = vadd.f32 %v6266, %v6269
      %6273 = vrot.lane.b32.xlu0 %v6233, 108
      %v6274 = vpop.permute.xlu0 %6273
      %v6276 = vadd.f32 %v6271, %v6274
      %6278 = vrot.lane.b32.xlu0 %v6236, 107
      %v6279 = vpop.permute.xlu0 %6278
      %v6281 = vadd.f32 %v6276, %v6279
      %6283 = vrot.lane.b32.xlu0 %v6241, 106
      %v6284 = vpop.permute.xlu0 %6283
      %v6286 = vadd.f32 %v6281, %v6284
      %v6287 = vadd.f32 %v6286, %v1691
      %s6288 = scalar_lea.vmem %s1021, 14
      %v6289 = vld [vmem:[%s6288] sm:$0x3]
      %v6290 = vunpack.c.l.bf16 %v6289
      %v6291 = vsub.f32 %v6290, %v1699
      %v6292 = vmul.f32 %v6291, %v1705
      %v6293 = vadd.f32 %v6287, 1.0
      %v6294 = vmul.f32 %v6292, %v6293
      %v6296 = vcombine.high %v6287, %v6287
      %v6298 = vadd.f32 %v6294, %v6296
      %s6299 = scalar_lea.vmem %s1039, 28
      %6300 = vst.msk [vmem:[%s6299] sm:$0xf] %vm1714, %v6298
      %s6301 = smul.u32 8, %s31
      %p6302 = scmp.lt.s32.totalorder %s30, 1
      %s6303 = scalar_select %p6302, %s30, 1
      %p6304 = scmp.lt.s32.totalorder %s6301, 7
      %s6305 = scalar_select %p6304, %s6301, 7
      %s6306 = smul.addr %s6303, 8
      %s6307 = sadd.s32 %s6305, %s6306
      %s6308 = smul.addr %s6307, 4
      %s6309 = scalar_lea.vmem %s15, %s6308
      // Predicated region
      $region81: #{a_call__.5} parent=79 // pred_check
        %p6310 = pneg %p498
      $region82: #{a_call__.5} parent=79 // pred_check_branch
        %6312 = sbr.rel (%p6310) target = $region84
      $region83: #{a_call__.5} parent=79 // pred_region
        %s6313 = smul.u32 8, %s31
      $region84: #{a_call__.5} parent=79 // pred_fallthru
        _
    $region80: #{a_call__.5} parent=5 // pred_fallthru
      _
    %p6314 = scmp.le.s32.totalorder 2, %s21
    // Predicated region
    $region85: #{a_call__.5} parent=5 // pred_check
      %p6315 = pneg %p6314
    $region86: #{a_call__.5} parent=5 // pred_check_branch
      %6317 = sbr.rel (%p6315) target = $region88
    $region87: #{a_call__.5} parent=5 // pred_region
      %s6318 = ssub.s32 %s21, 2
      // Predicated region
      $region89: #{a_call__.5} parent=87 // pred_check
        %p6319 = pneg %p504
      $region90: #{a_call__.5} parent=87 // pred_check_branch
        %6321 = sbr.rel (%p6319) target = $region92
      $region91: #{a_call__.5} parent=87 // pred_region
        %s6322 = smul.u32 8, %s33
        %p6323 = scmp.lt.s32.totalorder %s32, 1
        %s6324 = scalar_select %p6323, %s32, 1
        %p6325 = scmp.lt.s32.totalorder %s6322, 7
        %s6326 = scalar_select %p6325, %s6322, 7
        %s6327 = smul.addr %s6324, 8
        %s6328 = sadd.s32 %s6326, %s6327
        %s6329 = smul.addr %s6328, 4
        %s6330 = scalar_lea.vmem %s15, %s6329
      $region92: #{a_call__.5} parent=87 // pred_fallthru
        _
    $region88: #{a_call__.5} parent=5 // pred_fallthru
      _
  $region6: #{a_call__.5} parent=0 // loop_footer
    %s25 = sadd.s32 1, %s21
  $region7: #{a_call__.5} parent=0 // loop_footer_branch
    %20 = sbr.rel target = $region3
  $region8: #{a_call__.5} parent=0 // loop_exit
    _

</llo_original>
